<compile_context>
chip_gen: v7x
topology: tpu7x:2x2x1
jax: 0.10.0
libtpu: 0.0.40
codegen_flags: <defaults>
</compile_context>

<pallas_src>
import functools

import jax
import jax.numpy as jnp
from jax.experimental import pallas as pl
from jax.experimental.pallas import tpu as pltpu

H = 128        # LSTM / attention hidden size
NH = 4         # attention heads
HD = H // NH   # head dim (32)
FC1 = 64
OUT = 3
FC1_PAD = 128  # lane-dense padding for fc1 width
OUT_PAD = 128  # lane-dense padding for the output


def _sigmoid(x):
    # 1 EUP push (tanh) instead of 2 (exp + reciprocal).
    return 0.5 * jnp.tanh(0.5 * x) + 0.5


def model_kernel(x_ref,                        # (T*Bp, D) time-major, flattened
                 wih0_ref, whh0_ref, b0_ref,   # LSTM layer 0 (b0 = b_ih0 + b_hh0)
                 wih1_ref, whh1_ref, b1_ref,   # LSTM layer 1 (b1 = b_ih1 + b_hh1)
                 wqkv_ref, bqkv_ref,           # MHA in_proj (scale folded into Q)
                 wo_ref, bo_ref,               # MHA out_proj
                 w1_ref, b1f_ref,              # fc1 (padded to 128 cols)
                 w2_ref, b2f_ref,              # fc2 (padded to 128x128)
                 out_ref,                      # (Bp, OUT_PAD) lane-dense
                 xp_ref,                       # VMEM scratch (T*Bp, 4H)
                 *, b_real):                   # static: real (unpadded) batch
    B = out_ref.shape[0]
    T = x_ref.shape[0] // B

    # ---- hoisted layer-0 input projection (one matmul, bias folded once) ----
    xp_ref[...] = (jnp.dot(x_ref[...], wih0_ref[...],
                           preferred_element_type=jnp.float32) + b0_ref[...])

    def gates_to_hc(gates, c):
        i = _sigmoid(gates[:, 0:H])
        f = _sigmoid(gates[:, H:2 * H])
        g = jnp.tanh(gates[:, 2 * H:3 * H])
        o = _sigmoid(gates[:, 3 * H:4 * H])
        c_new = f * c + i * g
        return o * jnp.tanh(c_new), c_new

    zeros = jnp.zeros((B, H), jnp.float32)
    h1, c1, h2, c2 = zeros, zeros, zeros, zeros

    # Fully unrolled recurrence (T small & static).  Layer-0 step t+1 depends
    # only on h1(t), so it can overlap layer-1 step t.  Three MXU pushes/step,
    # weights read from refs at the dot sites to keep vreg pressure low.
    for t in range(T):
        g0 = xp_ref[pl.ds(t * B, B), :] + jnp.dot(
            h1, whh0_ref[...], preferred_element_type=jnp.float32)
        h1, c1 = gates_to_hc(g0, c1)

        g1 = (jnp.dot(h1, wih1_ref[...], preferred_element_type=jnp.float32)
              + jnp.dot(h2, whh1_ref[...], preferred_element_type=jnp.float32)
              + b1_ref[...])
        h2, c2 = gates_to_hc(g1, c2)

    z = h2  # == lstm_out[:, -1, :]  (Bp, H)

    # ---- MultiheadAttention over the batch axis (batch_first=False quirk) ---
    # 1/sqrt(HD) already folded into the Q columns of wqkv/bqkv.
    qkv = (jnp.dot(z, wqkv_ref[...], preferred_element_type=jnp.float32)
           + bqkv_ref[...])
    q = qkv[:, 0:H]
    k = qkv[:, H:2 * H]
    v = qkv[:, 2 * H:3 * H]

    # Padded batch rows must not participate as keys (attention mixes batch).
    key_mask = jax.lax.broadcasted_iota(jnp.int32, (B, B), 1) < b_real
    neg_big = jnp.float32(-1e30)
    lane = jax.lax.broadcasted_iota(jnp.int32, (1, H), 1)

    attn = jnp.broadcast_to(bo_ref[...], (B, H))
    for hh in range(NH):
        # Full 128-lane masked contractions: exact, no unaligned 32-lane slices.
        m = ((lane >= hh * HD) & (lane < (hh + 1) * HD)).astype(jnp.float32)
        scores = jax.lax.dot_general(
            q * m, k, (((1,), (1,)), ((), ())),
            preferred_element_type=jnp.float32)              # (Bp, Bp)
        scores = jnp.where(key_mask, scores, neg_big)
        scores = scores - jnp.max(scores, axis=-1, keepdims=True)
        p = jnp.exp(scores)
        p = p * pl.reciprocal(jnp.sum(p, axis=-1, keepdims=True), approx=True)
        oh = jnp.dot(p, v * m, preferred_element_type=jnp.float32)  # (Bp, H), zero outside head cols
        attn = attn + jnp.dot(oh, wo_ref[...],
                              preferred_element_type=jnp.float32)

    # ---- fc1 + ReLU + fc2 (lane-dense 128-wide slabs) ----------------------
    hfc = jnp.maximum(
        jnp.dot(attn, w1_ref[...], preferred_element_type=jnp.float32)
        + b1f_ref[...], 0.0)
    out_ref[...] = (jnp.dot(hfc, w2_ref[...], preferred_element_type=jnp.float32)
                    + b2f_ref[...])


def make_params(input_dim, key):
    """Raw (PyTorch-layout-equivalent) parameters, pre-transposed to (in, out)."""
    ks = jax.random.split(key, 14)

    def u(k, shape, bound):
        return jax.random.uniform(k, shape, jnp.float32, -bound, bound)

    kl = 1.0 / jnp.sqrt(jnp.float32(H))
    ka = 1.0 / jnp.sqrt(jnp.float32(H))
    k1 = 1.0 / jnp.sqrt(jnp.float32(H))
    k2 = 1.0 / jnp.sqrt(jnp.float32(FC1))

    return dict(
        wih0=u(ks[0], (input_dim, 4 * H), kl),
        whh0=u(ks[1], (H, 4 * H), kl),
        b0=u(ks[2], (1, 4 * H), kl),          # combined b_ih + b_hh
        wih1=u(ks[3], (H, 4 * H), kl),
        whh1=u(ks[4], (H, 4 * H), kl),
        b1=u(ks[5], (1, 4 * H), kl),
        wqkv=u(ks[6], (H, 3 * H), ka),
        bqkv=u(ks[7], (1, 3 * H), ka),
        wo=u(ks[8], (H, H), ka),
        bo=u(ks[9], (1, H), ka),
        w1=u(ks[10], (H, FC1), k1),
        b1f=u(ks[11], (1, FC1), k1),
        w2=u(ks[12], (FC1, OUT), k2),
        b2f=u(ks[13], (1, OUT), k2),
    )


def prepare_params(p):
    """One-time kernel-side parameter prep (run once, outside the fwd path):
       * fold 1/sqrt(head_dim) into the Q columns of the MHA in_proj,
       * zero-pad fc1 to 128 output lanes and fc2 to 128x128 (exact)."""
    scale = 1.0 / (HD ** 0.5)
    wqkv = p["wqkv"].at[:, 0:H].multiply(scale)
    bqkv = p["bqkv"].at[:, 0:H].multiply(scale)

    w1p = jnp.zeros((H, FC1_PAD), jnp.float32).at[:, :FC1].set(p["w1"])
    b1fp = jnp.zeros((1, FC1_PAD), jnp.float32).at[:, :FC1].set(p["b1f"])
    w2p = jnp.zeros((FC1_PAD, OUT_PAD), jnp.float32).at[:FC1, :OUT].set(p["w2"])
    b2fp = jnp.zeros((1, OUT_PAD), jnp.float32).at[:, :OUT].set(p["b2f"])

    return dict(
        wih0=p["wih0"], whh0=p["whh0"], b0=p["b0"],
        wih1=p["wih1"], whh1=p["whh1"], b1=p["b1"],
        wqkv=wqkv, bqkv=bqkv, wo=p["wo"], bo=p["bo"],
        w1=w1p, b1f=b1fp, w2=w2p, b2f=b2fp,
    )


def predictive_maintenance_forward(x, prepared):
    """x: (B, T, D) float32, batch_first like PyTorch.  `prepared` comes from
    prepare_params() (called once, outside the steady-state path)."""
    B, T, D = x.shape
    B_pad = max(8, ((B + 7) // 8) * 8)        # pad batch to a full sublane
    # TODO(synk): for large batches, add a leading batch grid axis
    # (dimension_semantics=("parallel",)) for the LSTM portion on v7x.

    x_p = jnp.pad(x, ((0, B_pad - B), (0, 0), (0, 0)))
    x_flat = jnp.transpose(x_p, (1, 0, 2)).reshape(T * B_pad, D)  # time-major

    inputs = [
        x_flat,
        prepared["wih0"], prepared["whh0"], prepared["b0"],
        prepared["wih1"], prepared["whh1"], prepared["b1"],
        prepared["wqkv"], prepared["bqkv"],
        prepared["wo"], prepared["bo"],
        prepared["w1"], prepared["b1f"],
        prepared["w2"], prepared["b2f"],
    ]

    kernel = functools.partial(model_kernel, b_real=B)
    out = pl.pallas_call(
        kernel,
        out_shape=jax.ShapeDtypeStruct((B_pad, OUT_PAD), jnp.float32),
        in_specs=[pl.BlockSpec(memory_space=pltpu.MemorySpace.VMEM)] * len(inputs),
        out_specs=pl.BlockSpec(memory_space=pltpu.MemorySpace.VMEM),
        scratch_shapes=[pltpu.VMEM((T * B_pad, 4 * H), jnp.float32)],
    )(*inputs)
    return out[:B, :OUT]


def reference_forward(x, p):
    """Pure-JAX mirror of the PyTorch forward (incl. the batch_first quirk)."""
    B, T, D = x.shape

    def cell(x_t, h, c, wih, whh, b):
        g = x_t @ wih + h @ whh + b[0]
        i = jax.nn.sigmoid(g[:, 0:H])
        f = jax.nn.sigmoid(g[:, H:2 * H])
        gg = jnp.tanh(g[:, 2 * H:3 * H])
        o = jax.nn.sigmoid(g[:, 3 * H:4 * H])
        c = f * c + i * gg
        return o * jnp.tanh(c), c

    h1 = c1 = h2 = c2 = jnp.zeros((B, H), jnp.float32)
    seq = []
    for t in range(T):
        h1, c1 = cell(x[:, t, :], h1, c1, p["wih0"], p["whh0"], p["b0"])
        h2, c2 = cell(h1, h2, c2, p["wih1"], p["whh1"], p["b1"])
        seq.append(h2)
    lstm_out = jnp.stack(seq, axis=1)                    # (B, T, H)

    # MHA with batch_first=False: dim0 = L (=B), dim1 = N (=T)
    qkv = lstm_out @ p["wqkv"] + p["bqkv"][0]            # (B, T, 3H)
    q, k, v = qkv[..., 0:H], qkv[..., H:2 * H], qkv[..., 2 * H:3 * H]
    qh = q.reshape(B, T, NH, HD)
    kh = k.reshape(B, T, NH, HD)
    vh = v.reshape(B, T, NH, HD)
    scores = jnp.einsum("lnhd,mnhd->nhlm", qh, kh) / (HD ** 0.5)
    attw = jax.nn.softmax(scores, axis=-1)
    o = jnp.einsum("nhlm,mnhd->lnhd", attw, vh).reshape(B, T, H)
    attn_out = o @ p["wo"] + p["bo"][0]                  # (B, T, H)

    z = attn_out[:, -1, :]                               # (B, H)
    h = jnp.maximum(z @ p["w1"] + p["b1f"][0], 0.0)
    return h @ p["w2"] + p["b2f"][0]


if __name__ == "__main__":
    B, T, D = 2, 8, 16
    key = jax.random.PRNGKey(0)
    kx, kp = jax.random.split(key)
    x = jax.random.normal(kx, (B, T, D), jnp.float32)
    params = make_params(D, kp)
    prepared = prepare_params(params)   # one-time prep, outside the fwd path

    out = jax.block_until_ready(predictive_maintenance_forward(x, prepared))
    ref = jax.block_until_ready(reference_forward(x, params))

    if not jnp.allclose(out, ref, atol=1e-2, rtol=1e-2):
        raise AssertionError(f"mismatch: pallas={out} ref={ref}")

    print("KERNEL_OK")
</pallas_src>

<mosaic_0001>
module attributes {stable_mosaic.version = 11 : i64} {
  func.func @model_kernel(%arg0: memref<64x16xf32, #tpu.memory_space<vmem>>, %arg1: memref<16x512xf32, #tpu.memory_space<vmem>>, %arg2: memref<128x512xf32, #tpu.memory_space<vmem>>, %arg3: memref<1x512xf32, #tpu.memory_space<vmem>>, %arg4: memref<128x512xf32, #tpu.memory_space<vmem>>, %arg5: memref<128x512xf32, #tpu.memory_space<vmem>>, %arg6: memref<1x512xf32, #tpu.memory_space<vmem>>, %arg7: memref<128x384xf32, #tpu.memory_space<vmem>>, %arg8: memref<1x384xf32, #tpu.memory_space<vmem>>, %arg9: memref<128x128xf32, #tpu.memory_space<vmem>>, %arg10: memref<1x128xf32, #tpu.memory_space<vmem>>, %arg11: memref<128x128xf32, #tpu.memory_space<vmem>>, %arg12: memref<1x128xf32, #tpu.memory_space<vmem>>, %arg13: memref<128x128xf32, #tpu.memory_space<vmem>>, %arg14: memref<1x128xf32, #tpu.memory_space<vmem>>, %arg15: memref<8x128xf32, #tpu.memory_space<vmem>>, %arg16: memref<64x512xf32, #tpu.memory_space<vmem>>) attributes {dimension_semantics = [], scalar_prefetch = 0 : i64, scratch_operands = 1 : i64, tpu.core_type = #tpu.core_type<tc>} {
    %c0 = arith.constant 0 : index
    %c0_0 = arith.constant 0 : index
    %0 = vector.load %arg0[%c0, %c0_0] : memref<64x16xf32, #tpu.memory_space<vmem>>, vector<64x16xf32>
    %c0_1 = arith.constant 0 : index
    %c0_2 = arith.constant 0 : index
    %1 = vector.load %arg1[%c0_1, %c0_2] : memref<16x512xf32, #tpu.memory_space<vmem>>, vector<16x512xf32>
    %cst = arith.constant dense<0.000000e+00> : vector<64x512xf32>
    %2 = tpu.matmul %0, %1, %cst {dimension_numbers = #tpu.dot_dimension_numbers<[1], [0], [0], [1], [0, 0, 1, 1], [], []>} : vector<64x16xf32>, vector<16x512xf32>, vector<64x512xf32> -> vector<64x512xf32>
    %c0_3 = arith.constant 0 : index
    %c0_4 = arith.constant 0 : index
    %3 = vector.load %arg3[%c0_3, %c0_4] : memref<1x512xf32, #tpu.memory_space<vmem>>, vector<1x512xf32>
    %4 = vector.broadcast %3 : vector<1x512xf32> to vector<64x512xf32>
    %5 = arith.addf %2, %4 : vector<64x512xf32>
    %c0_5 = arith.constant 0 : index
    %c0_6 = arith.constant 0 : index
    %6 = vector.load %arg16[%c0_5, %c0_6] : memref<64x512xf32, #tpu.memory_space<vmem>>, vector<64x512xf32>
    tpu.vector_store %arg16[%c0_5, %c0_6], %5 {strides = array<i32>} : memref<64x512xf32, #tpu.memory_space<vmem>>, vector<64x512xf32>,
    %cst_7 = arith.constant 0.000000e+00 : f32
    %7 = vector.broadcast %cst_7 : f32 to vector<8x128xf32>
    %c0_8 = arith.constant 0 : index
    %c0_9 = arith.constant 0 : index
    %8 = vector.load %arg16[%c0_8, %c0_9] : memref<64x512xf32, #tpu.memory_space<vmem>>, vector<8x512xf32>
    %c0_10 = arith.constant 0 : index
    %c0_11 = arith.constant 0 : index
    %9 = vector.load %arg2[%c0_10, %c0_11] : memref<128x512xf32, #tpu.memory_space<vmem>>, vector<128x512xf32>
    %cst_12 = arith.constant dense<0.000000e+00> : vector<8x512xf32>
    %10 = tpu.matmul %7, %9, %cst_12 {dimension_numbers = #tpu.dot_dimension_numbers<[1], [0], [0], [1], [0, 0, 1, 1], [], []>} : vector<8x128xf32>, vector<128x512xf32>, vector<8x512xf32> -> vector<8x512xf32>
    %11 = arith.addf %8, %10 : vector<8x512xf32>
    %12 = vector.extract_strided_slice %11 {offsets = [0, 0], sizes = [8, 128], strides = [1, 1]} : vector<8x512xf32> to vector<8x128xf32>
    %cst_13 = arith.constant 5.000000e-01 : f32
    %13 = vector.broadcast %cst_13 : f32 to vector<8x128xf32>
    %14 = arith.mulf %13, %12 : vector<8x128xf32>
    %15 = math.tanh %14 : vector<8x128xf32>
    %cst_14 = arith.constant 5.000000e-01 : f32
    %16 = vector.broadcast %cst_14 : f32 to vector<8x128xf32>
    %17 = arith.mulf %16, %15 : vector<8x128xf32>
    %cst_15 = arith.constant 5.000000e-01 : f32
    %18 = vector.broadcast %cst_15 : f32 to vector<8x128xf32>
    %19 = arith.addf %17, %18 : vector<8x128xf32>
    %20 = vector.extract_strided_slice %11 {offsets = [0, 128], sizes = [8, 128], strides = [1, 1]} : vector<8x512xf32> to vector<8x128xf32>
    %cst_16 = arith.constant 5.000000e-01 : f32
    %21 = vector.broadcast %cst_16 : f32 to vector<8x128xf32>
    %22 = arith.mulf %21, %20 : vector<8x128xf32>
    %23 = math.tanh %22 : vector<8x128xf32>
    %cst_17 = arith.constant 5.000000e-01 : f32
    %24 = vector.broadcast %cst_17 : f32 to vector<8x128xf32>
    %25 = arith.mulf %24, %23 : vector<8x128xf32>
    %cst_18 = arith.constant 5.000000e-01 : f32
    %26 = vector.broadcast %cst_18 : f32 to vector<8x128xf32>
    %27 = arith.addf %25, %26 : vector<8x128xf32>
    %28 = vector.extract_strided_slice %11 {offsets = [0, 256], sizes = [8, 128], strides = [1, 1]} : vector<8x512xf32> to vector<8x128xf32>
    %29 = math.tanh %28 : vector<8x128xf32>
    %30 = vector.extract_strided_slice %11 {offsets = [0, 384], sizes = [8, 128], strides = [1, 1]} : vector<8x512xf32> to vector<8x128xf32>
    %cst_19 = arith.constant 5.000000e-01 : f32
    %31 = vector.broadcast %cst_19 : f32 to vector<8x128xf32>
    %32 = arith.mulf %31, %30 : vector<8x128xf32>
    %33 = math.tanh %32 : vector<8x128xf32>
    %cst_20 = arith.constant 5.000000e-01 : f32
    %34 = vector.broadcast %cst_20 : f32 to vector<8x128xf32>
    %35 = arith.mulf %34, %33 : vector<8x128xf32>
    %cst_21 = arith.constant 5.000000e-01 : f32
    %36 = vector.broadcast %cst_21 : f32 to vector<8x128xf32>
    %37 = arith.addf %35, %36 : vector<8x128xf32>
    %38 = arith.mulf %27, %7 : vector<8x128xf32>
    %39 = arith.mulf %19, %29 : vector<8x128xf32>
    %40 = arith.addf %38, %39 : vector<8x128xf32>
    %41 = math.tanh %40 : vector<8x128xf32>
    %42 = arith.mulf %37, %41 : vector<8x128xf32>
    %c0_22 = arith.constant 0 : index
    %c0_23 = arith.constant 0 : index
    %43 = vector.load %arg4[%c0_22, %c0_23] : memref<128x512xf32, #tpu.memory_space<vmem>>, vector<128x512xf32>
    %cst_24 = arith.constant dense<0.000000e+00> : vector<8x512xf32>
    %44 = tpu.matmul %42, %43, %cst_24 {dimension_numbers = #tpu.dot_dimension_numbers<[1], [0], [0], [1], [0, 0, 1, 1], [], []>} : vector<8x128xf32>, vector<128x512xf32>, vector<8x512xf32> -> vector<8x512xf32>
    %c0_25 = arith.constant 0 : index
    %c0_26 = arith.constant 0 : index
    %45 = vector.load %arg5[%c0_25, %c0_26] : memref<128x512xf32, #tpu.memory_space<vmem>>, vector<128x512xf32>
    %cst_27 = arith.constant dense<0.000000e+00> : vector<8x512xf32>
    %46 = tpu.matmul %7, %45, %cst_27 {dimension_numbers = #tpu.dot_dimension_numbers<[1], [0], [0], [1], [0, 0, 1, 1], [], []>} : vector<8x128xf32>, vector<128x512xf32>, vector<8x512xf32> -> vector<8x512xf32>
    %47 = arith.addf %44, %46 : vector<8x512xf32>
    %c0_28 = arith.constant 0 : index
    %c0_29 = arith.constant 0 : index
    %48 = vector.load %arg6[%c0_28, %c0_29] : memref<1x512xf32, #tpu.memory_space<vmem>>, vector<1x512xf32>
    %49 = vector.broadcast %48 : vector<1x512xf32> to vector<8x512xf32>
    %50 = arith.addf %47, %49 : vector<8x512xf32>
    %51 = vector.extract_strided_slice %50 {offsets = [0, 0], sizes = [8, 128], strides = [1, 1]} : vector<8x512xf32> to vector<8x128xf32>
    %cst_30 = arith.constant 5.000000e-01 : f32
    %52 = vector.broadcast %cst_30 : f32 to vector<8x128xf32>
    %53 = arith.mulf %52, %51 : vector<8x128xf32>
    %54 = math.tanh %53 : vector<8x128xf32>
    %cst_31 = arith.constant 5.000000e-01 : f32
    %55 = vector.broadcast %cst_31 : f32 to vector<8x128xf32>
    %56 = arith.mulf %55, %54 : vector<8x128xf32>
    %cst_32 = arith.constant 5.000000e-01 : f32
    %57 = vector.broadcast %cst_32 : f32 to vector<8x128xf32>
    %58 = arith.addf %56, %57 : vector<8x128xf32>
    %59 = vector.extract_strided_slice %50 {offsets = [0, 128], sizes = [8, 128], strides = [1, 1]} : vector<8x512xf32> to vector<8x128xf32>
    %cst_33 = arith.constant 5.000000e-01 : f32
    %60 = vector.broadcast %cst_33 : f32 to vector<8x128xf32>
    %61 = arith.mulf %60, %59 : vector<8x128xf32>
    %62 = math.tanh %61 : vector<8x128xf32>
    %cst_34 = arith.constant 5.000000e-01 : f32
    %63 = vector.broadcast %cst_34 : f32 to vector<8x128xf32>
    %64 = arith.mulf %63, %62 : vector<8x128xf32>
    %cst_35 = arith.constant 5.000000e-01 : f32
    %65 = vector.broadcast %cst_35 : f32 to vector<8x128xf32>
    %66 = arith.addf %64, %65 : vector<8x128xf32>
    %67 = vector.extract_strided_slice %50 {offsets = [0, 256], sizes = [8, 128], strides = [1, 1]} : vector<8x512xf32> to vector<8x128xf32>
    %68 = math.tanh %67 : vector<8x128xf32>
    %69 = vector.extract_strided_slice %50 {offsets = [0, 384], sizes = [8, 128], strides = [1, 1]} : vector<8x512xf32> to vector<8x128xf32>
    %cst_36 = arith.constant 5.000000e-01 : f32
    %70 = vector.broadcast %cst_36 : f32 to vector<8x128xf32>
    %71 = arith.mulf %70, %69 : vector<8x128xf32>
    %72 = math.tanh %71 : vector<8x128xf32>
    %cst_37 = arith.constant 5.000000e-01 : f32
    %73 = vector.broadcast %cst_37 : f32 to vector<8x128xf32>
    %74 = arith.mulf %73, %72 : vector<8x128xf32>
    %cst_38 = arith.constant 5.000000e-01 : f32
    %75 = vector.broadcast %cst_38 : f32 to vector<8x128xf32>
    %76 = arith.addf %74, %75 : vector<8x128xf32>
    %77 = arith.mulf %66, %7 : vector<8x128xf32>
    %78 = arith.mulf %58, %68 : vector<8x128xf32>
    %79 = arith.addf %77, %78 : vector<8x128xf32>
    %80 = math.tanh %79 : vector<8x128xf32>
    %81 = arith.mulf %76, %80 : vector<8x128xf32>
    %c8 = arith.constant 8 : index
    %c0_39 = arith.constant 0 : index
    %82 = vector.load %arg16[%c8, %c0_39] : memref<64x512xf32, #tpu.memory_space<vmem>>, vector<8x512xf32>
    %c0_40 = arith.constant 0 : index
    %c0_41 = arith.constant 0 : index
    %83 = vector.load %arg2[%c0_40, %c0_41] : memref<128x512xf32, #tpu.memory_space<vmem>>, vector<128x512xf32>
    %cst_42 = arith.constant dense<0.000000e+00> : vector<8x512xf32>
    %84 = tpu.matmul %42, %83, %cst_42 {dimension_numbers = #tpu.dot_dimension_numbers<[1], [0], [0], [1], [0, 0, 1, 1], [], []>} : vector<8x128xf32>, vector<128x512xf32>, vector<8x512xf32> -> vector<8x512xf32>
    %85 = arith.addf %82, %84 : vector<8x512xf32>
    %86 = vector.extract_strided_slice %85 {offsets = [0, 0], sizes = [8, 128], strides = [1, 1]} : vector<8x512xf32> to vector<8x128xf32>
    %cst_43 = arith.constant 5.000000e-01 : f32
    %87 = vector.broadcast %cst_43 : f32 to vector<8x128xf32>
    %88 = arith.mulf %87, %86 : vector<8x128xf32>
    %89 = math.tanh %88 : vector<8x128xf32>
    %cst_44 = arith.constant 5.000000e-01 : f32
    %90 = vector.broadcast %cst_44 : f32 to vector<8x128xf32>
    %91 = arith.mulf %90, %89 : vector<8x128xf32>
    %cst_45 = arith.constant 5.000000e-01 : f32
    %92 = vector.broadcast %cst_45 : f32 to vector<8x128xf32>
    %93 = arith.addf %91, %92 : vector<8x128xf32>
    %94 = vector.extract_strided_slice %85 {offsets = [0, 128], sizes = [8, 128], strides = [1, 1]} : vector<8x512xf32> to vector<8x128xf32>
    %cst_46 = arith.constant 5.000000e-01 : f32
    %95 = vector.broadcast %cst_46 : f32 to vector<8x128xf32>
    %96 = arith.mulf %95, %94 : vector<8x128xf32>
    %97 = math.tanh %96 : vector<8x128xf32>
    %cst_47 = arith.constant 5.000000e-01 : f32
    %98 = vector.broadcast %cst_47 : f32 to vector<8x128xf32>
    %99 = arith.mulf %98, %97 : vector<8x128xf32>
    %cst_48 = arith.constant 5.000000e-01 : f32
    %100 = vector.broadcast %cst_48 : f32 to vector<8x128xf32>
    %101 = arith.addf %99, %100 : vector<8x128xf32>
    %102 = vector.extract_strided_slice %85 {offsets = [0, 256], sizes = [8, 128], strides = [1, 1]} : vector<8x512xf32> to vector<8x128xf32>
    %103 = math.tanh %102 : vector<8x128xf32>
    %104 = vector.extract_strided_slice %85 {offsets = [0, 384], sizes = [8, 128], strides = [1, 1]} : vector<8x512xf32> to vector<8x128xf32>
    %cst_49 = arith.constant 5.000000e-01 : f32
    %105 = vector.broadcast %cst_49 : f32 to vector<8x128xf32>
    %106 = arith.mulf %105, %104 : vector<8x128xf32>
    %107 = math.tanh %106 : vector<8x128xf32>
    %cst_50 = arith.constant 5.000000e-01 : f32
    %108 = vector.broadcast %cst_50 : f32 to vector<8x128xf32>
    %109 = arith.mulf %108, %107 : vector<8x128xf32>
    %cst_51 = arith.constant 5.000000e-01 : f32
    %110 = vector.broadcast %cst_51 : f32 to vector<8x128xf32>
    %111 = arith.addf %109, %110 : vector<8x128xf32>
    %112 = arith.mulf %101, %40 : vector<8x128xf32>
    %113 = arith.mulf %93, %103 : vector<8x128xf32>
    %114 = arith.addf %112, %113 : vector<8x128xf32>
    %115 = math.tanh %114 : vector<8x128xf32>
    %116 = arith.mulf %111, %115 : vector<8x128xf32>
    %c0_52 = arith.constant 0 : index
    %c0_53 = arith.constant 0 : index
    %117 = vector.load %arg4[%c0_52, %c0_53] : memref<128x512xf32, #tpu.memory_space<vmem>>, vector<128x512xf32>
    %cst_54 = arith.constant dense<0.000000e+00> : vector<8x512xf32>
    %118 = tpu.matmul %116, %117, %cst_54 {dimension_numbers = #tpu.dot_dimension_numbers<[1], [0], [0], [1], [0, 0, 1, 1], [], []>} : vector<8x128xf32>, vector<128x512xf32>, vector<8x512xf32> -> vector<8x512xf32>
    %c0_55 = arith.constant 0 : index
    %c0_56 = arith.constant 0 : index
    %119 = vector.load %arg5[%c0_55, %c0_56] : memref<128x512xf32, #tpu.memory_space<vmem>>, vector<128x512xf32>
    %cst_57 = arith.constant dense<0.000000e+00> : vector<8x512xf32>
    %120 = tpu.matmul %81, %119, %cst_57 {dimension_numbers = #tpu.dot_dimension_numbers<[1], [0], [0], [1], [0, 0, 1, 1], [], []>} : vector<8x128xf32>, vector<128x512xf32>, vector<8x512xf32> -> vector<8x512xf32>
    %121 = arith.addf %118, %120 : vector<8x512xf32>
    %c0_58 = arith.constant 0 : index
    %c0_59 = arith.constant 0 : index
    %122 = vector.load %arg6[%c0_58, %c0_59] : memref<1x512xf32, #tpu.memory_space<vmem>>, vector<1x512xf32>
    %123 = vector.broadcast %122 : vector<1x512xf32> to vector<8x512xf32>
    %124 = arith.addf %121, %123 : vector<8x512xf32>
    %125 = vector.extract_strided_slice %124 {offsets = [0, 0], sizes = [8, 128], strides = [1, 1]} : vector<8x512xf32> to vector<8x128xf32>
    %cst_60 = arith.constant 5.000000e-01 : f32
    %126 = vector.broadcast %cst_60 : f32 to vector<8x128xf32>
    %127 = arith.mulf %126, %125 : vector<8x128xf32>
    %128 = math.tanh %127 : vector<8x128xf32>
    %cst_61 = arith.constant 5.000000e-01 : f32
    %129 = vector.broadcast %cst_61 : f32 to vector<8x128xf32>
    %130 = arith.mulf %129, %128 : vector<8x128xf32>
    %cst_62 = arith.constant 5.000000e-01 : f32
    %131 = vector.broadcast %cst_62 : f32 to vector<8x128xf32>
    %132 = arith.addf %130, %131 : vector<8x128xf32>
    %133 = vector.extract_strided_slice %124 {offsets = [0, 128], sizes = [8, 128], strides = [1, 1]} : vector<8x512xf32> to vector<8x128xf32>
    %cst_63 = arith.constant 5.000000e-01 : f32
    %134 = vector.broadcast %cst_63 : f32 to vector<8x128xf32>
    %135 = arith.mulf %134, %133 : vector<8x128xf32>
    %136 = math.tanh %135 : vector<8x128xf32>
    %cst_64 = arith.constant 5.000000e-01 : f32
    %137 = vector.broadcast %cst_64 : f32 to vector<8x128xf32>
    %138 = arith.mulf %137, %136 : vector<8x128xf32>
    %cst_65 = arith.constant 5.000000e-01 : f32
    %139 = vector.broadcast %cst_65 : f32 to vector<8x128xf32>
    %140 = arith.addf %138, %139 : vector<8x128xf32>
    %141 = vector.extract_strided_slice %124 {offsets = [0, 256], sizes = [8, 128], strides = [1, 1]} : vector<8x512xf32> to vector<8x128xf32>
    %142 = math.tanh %141 : vector<8x128xf32>
    %143 = vector.extract_strided_slice %124 {offsets = [0, 384], sizes = [8, 128], strides = [1, 1]} : vector<8x512xf32> to vector<8x128xf32>
    %cst_66 = arith.constant 5.000000e-01 : f32
    %144 = vector.broadcast %cst_66 : f32 to vector<8x128xf32>
    %145 = arith.mulf %144, %143 : vector<8x128xf32>
    %146 = math.tanh %145 : vector<8x128xf32>
    %cst_67 = arith.constant 5.000000e-01 : f32
    %147 = vector.broadcast %cst_67 : f32 to vector<8x128xf32>
    %148 = arith.mulf %147, %146 : vector<8x128xf32>
    %cst_68 = arith.constant 5.000000e-01 : f32
    %149 = vector.broadcast %cst_68 : f32 to vector<8x128xf32>
    %150 = arith.addf %148, %149 : vector<8x128xf32>
    %151 = arith.mulf %140, %79 : vector<8x128xf32>
    %152 = arith.mulf %132, %142 : vector<8x128xf32>
    %153 = arith.addf %151, %152 : vector<8x128xf32>
    %154 = math.tanh %153 : vector<8x128xf32>
    %155 = arith.mulf %150, %154 : vector<8x128xf32>
    %c16 = arith.constant 16 : index
    %c0_69 = arith.constant 0 : index
    %156 = vector.load %arg16[%c16, %c0_69] : memref<64x512xf32, #tpu.memory_space<vmem>>, vector<8x512xf32>
    %c0_70 = arith.constant 0 : index
    %c0_71 = arith.constant 0 : index
    %157 = vector.load %arg2[%c0_70, %c0_71] : memref<128x512xf32, #tpu.memory_space<vmem>>, vector<128x512xf32>
    %cst_72 = arith.constant dense<0.000000e+00> : vector<8x512xf32>
    %158 = tpu.matmul %116, %157, %cst_72 {dimension_numbers = #tpu.dot_dimension_numbers<[1], [0], [0], [1], [0, 0, 1, 1], [], []>} : vector<8x128xf32>, vector<128x512xf32>, vector<8x512xf32> -> vector<8x512xf32>
    %159 = arith.addf %156, %158 : vector<8x512xf32>
    %160 = vector.extract_strided_slice %159 {offsets = [0, 0], sizes = [8, 128], strides = [1, 1]} : vector<8x512xf32> to vector<8x128xf32>
    %cst_73 = arith.constant 5.000000e-01 : f32
    %161 = vector.broadcast %cst_73 : f32 to vector<8x128xf32>
    %162 = arith.mulf %161, %160 : vector<8x128xf32>
    %163 = math.tanh %162 : vector<8x128xf32>
    %cst_74 = arith.constant 5.000000e-01 : f32
    %164 = vector.broadcast %cst_74 : f32 to vector<8x128xf32>
    %165 = arith.mulf %164, %163 : vector<8x128xf32>
    %cst_75 = arith.constant 5.000000e-01 : f32
    %166 = vector.broadcast %cst_75 : f32 to vector<8x128xf32>
    %167 = arith.addf %165, %166 : vector<8x128xf32>
    %168 = vector.extract_strided_slice %159 {offsets = [0, 128], sizes = [8, 128], strides = [1, 1]} : vector<8x512xf32> to vector<8x128xf32>
    %cst_76 = arith.constant 5.000000e-01 : f32
    %169 = vector.broadcast %cst_76 : f32 to vector<8x128xf32>
    %170 = arith.mulf %169, %168 : vector<8x128xf32>
    %171 = math.tanh %170 : vector<8x128xf32>
    %cst_77 = arith.constant 5.000000e-01 : f32
    %172 = vector.broadcast %cst_77 : f32 to vector<8x128xf32>
    %173 = arith.mulf %172, %171 : vector<8x128xf32>
    %cst_78 = arith.constant 5.000000e-01 : f32
    %174 = vector.broadcast %cst_78 : f32 to vector<8x128xf32>
    %175 = arith.addf %173, %174 : vector<8x128xf32>
    %176 = vector.extract_strided_slice %159 {offsets = [0, 256], sizes = [8, 128], strides = [1, 1]} : vector<8x512xf32> to vector<8x128xf32>
    %177 = math.tanh %176 : vector<8x128xf32>
    %178 = vector.extract_strided_slice %159 {offsets = [0, 384], sizes = [8, 128], strides = [1, 1]} : vector<8x512xf32> to vector<8x128xf32>
    %cst_79 = arith.constant 5.000000e-01 : f32
    %179 = vector.broadcast %cst_79 : f32 to vector<8x128xf32>
    %180 = arith.mulf %179, %178 : vector<8x128xf32>
    %181 = math.tanh %180 : vector<8x128xf32>
    %cst_80 = arith.constant 5.000000e-01 : f32
    %182 = vector.broadcast %cst_80 : f32 to vector<8x128xf32>
    %183 = arith.mulf %182, %181 : vector<8x128xf32>
    %cst_81 = arith.constant 5.000000e-01 : f32
    %184 = vector.broadcast %cst_81 : f32 to vector<8x128xf32>
    %185 = arith.addf %183, %184 : vector<8x128xf32>
    %186 = arith.mulf %175, %114 : vector<8x128xf32>
    %187 = arith.mulf %167, %177 : vector<8x128xf32>
    %188 = arith.addf %186, %187 : vector<8x128xf32>
    %189 = math.tanh %188 : vector<8x128xf32>
    %190 = arith.mulf %185, %189 : vector<8x128xf32>
    %c0_82 = arith.constant 0 : index
    %c0_83 = arith.constant 0 : index
    %191 = vector.load %arg4[%c0_82, %c0_83] : memref<128x512xf32, #tpu.memory_space<vmem>>, vector<128x512xf32>
    %cst_84 = arith.constant dense<0.000000e+00> : vector<8x512xf32>
    %192 = tpu.matmul %190, %191, %cst_84 {dimension_numbers = #tpu.dot_dimension_numbers<[1], [0], [0], [1], [0, 0, 1, 1], [], []>} : vector<8x128xf32>, vector<128x512xf32>, vector<8x512xf32> -> vector<8x512xf32>
    %c0_85 = arith.constant 0 : index
    %c0_86 = arith.constant 0 : index
    %193 = vector.load %arg5[%c0_85, %c0_86] : memref<128x512xf32, #tpu.memory_space<vmem>>, vector<128x512xf32>
    %cst_87 = arith.constant dense<0.000000e+00> : vector<8x512xf32>
    %194 = tpu.matmul %155, %193, %cst_87 {dimension_numbers = #tpu.dot_dimension_numbers<[1], [0], [0], [1], [0, 0, 1, 1], [], []>} : vector<8x128xf32>, vector<128x512xf32>, vector<8x512xf32> -> vector<8x512xf32>
    %195 = arith.addf %192, %194 : vector<8x512xf32>
    %c0_88 = arith.constant 0 : index
    %c0_89 = arith.constant 0 : index
    %196 = vector.load %arg6[%c0_88, %c0_89] : memref<1x512xf32, #tpu.memory_space<vmem>>, vector<1x512xf32>
    %197 = vector.broadcast %196 : vector<1x512xf32> to vector<8x512xf32>
    %198 = arith.addf %195, %197 : vector<8x512xf32>
    %199 = vector.extract_strided_slice %198 {offsets = [0, 0], sizes = [8, 128], strides = [1, 1]} : vector<8x512xf32> to vector<8x128xf32>
    %cst_90 = arith.constant 5.000000e-01 : f32
    %200 = vector.broadcast %cst_90 : f32 to vector<8x128xf32>
    %201 = arith.mulf %200, %199 : vector<8x128xf32>
    %202 = math.tanh %201 : vector<8x128xf32>
    %cst_91 = arith.constant 5.000000e-01 : f32
    %203 = vector.broadcast %cst_91 : f32 to vector<8x128xf32>
    %204 = arith.mulf %203, %202 : vector<8x128xf32>
    %cst_92 = arith.constant 5.000000e-01 : f32
    %205 = vector.broadcast %cst_92 : f32 to vector<8x128xf32>
    %206 = arith.addf %204, %205 : vector<8x128xf32>
    %207 = vector.extract_strided_slice %198 {offsets = [0, 128], sizes = [8, 128], strides = [1, 1]} : vector<8x512xf32> to vector<8x128xf32>
    %cst_93 = arith.constant 5.000000e-01 : f32
    %208 = vector.broadcast %cst_93 : f32 to vector<8x128xf32>
    %209 = arith.mulf %208, %207 : vector<8x128xf32>
    %210 = math.tanh %209 : vector<8x128xf32>
    %cst_94 = arith.constant 5.000000e-01 : f32
    %211 = vector.broadcast %cst_94 : f32 to vector<8x128xf32>
    %212 = arith.mulf %211, %210 : vector<8x128xf32>
    %cst_95 = arith.constant 5.000000e-01 : f32
    %213 = vector.broadcast %cst_95 : f32 to vector<8x128xf32>
    %214 = arith.addf %212, %213 : vector<8x128xf32>
    %215 = vector.extract_strided_slice %198 {offsets = [0, 256], sizes = [8, 128], strides = [1, 1]} : vector<8x512xf32> to vector<8x128xf32>
    %216 = math.tanh %215 : vector<8x128xf32>
    %217 = vector.extract_strided_slice %198 {offsets = [0, 384], sizes = [8, 128], strides = [1, 1]} : vector<8x512xf32> to vector<8x128xf32>
    %cst_96 = arith.constant 5.000000e-01 : f32
    %218 = vector.broadcast %cst_96 : f32 to vector<8x128xf32>
    %219 = arith.mulf %218, %217 : vector<8x128xf32>
    %220 = math.tanh %219 : vector<8x128xf32>
    %cst_97 = arith.constant 5.000000e-01 : f32
    %221 = vector.broadcast %cst_97 : f32 to vector<8x128xf32>
    %222 = arith.mulf %221, %220 : vector<8x128xf32>
    %cst_98 = arith.constant 5.000000e-01 : f32
    %223 = vector.broadcast %cst_98 : f32 to vector<8x128xf32>
    %224 = arith.addf %222, %223 : vector<8x128xf32>
    %225 = arith.mulf %214, %153 : vector<8x128xf32>
    %226 = arith.mulf %206, %216 : vector<8x128xf32>
    %227 = arith.addf %225, %226 : vector<8x128xf32>
    %228 = math.tanh %227 : vector<8x128xf32>
    %229 = arith.mulf %224, %228 : vector<8x128xf32>
    %c24 = arith.constant 24 : index
    %c0_99 = arith.constant 0 : index
    %230 = vector.load %arg16[%c24, %c0_99] : memref<64x512xf32, #tpu.memory_space<vmem>>, vector<8x512xf32>
    %c0_100 = arith.constant 0 : index
    %c0_101 = arith.constant 0 : index
    %231 = vector.load %arg2[%c0_100, %c0_101] : memref<128x512xf32, #tpu.memory_space<vmem>>, vector<128x512xf32>
    %cst_102 = arith.constant dense<0.000000e+00> : vector<8x512xf32>
    %232 = tpu.matmul %190, %231, %cst_102 {dimension_numbers = #tpu.dot_dimension_numbers<[1], [0], [0], [1], [0, 0, 1, 1], [], []>} : vector<8x128xf32>, vector<128x512xf32>, vector<8x512xf32> -> vector<8x512xf32>
    %233 = arith.addf %230, %232 : vector<8x512xf32>
    %234 = vector.extract_strided_slice %233 {offsets = [0, 0], sizes = [8, 128], strides = [1, 1]} : vector<8x512xf32> to vector<8x128xf32>
    %cst_103 = arith.constant 5.000000e-01 : f32
    %235 = vector.broadcast %cst_103 : f32 to vector<8x128xf32>
    %236 = arith.mulf %235, %234 : vector<8x128xf32>
    %237 = math.tanh %236 : vector<8x128xf32>
    %cst_104 = arith.constant 5.000000e-01 : f32
    %238 = vector.broadcast %cst_104 : f32 to vector<8x128xf32>
    %239 = arith.mulf %238, %237 : vector<8x128xf32>
    %cst_105 = arith.constant 5.000000e-01 : f32
    %240 = vector.broadcast %cst_105 : f32 to vector<8x128xf32>
    %241 = arith.addf %239, %240 : vector<8x128xf32>
    %242 = vector.extract_strided_slice %233 {offsets = [0, 128], sizes = [8, 128], strides = [1, 1]} : vector<8x512xf32> to vector<8x128xf32>
    %cst_106 = arith.constant 5.000000e-01 : f32
    %243 = vector.broadcast %cst_106 : f32 to vector<8x128xf32>
    %244 = arith.mulf %243, %242 : vector<8x128xf32>
    %245 = math.tanh %244 : vector<8x128xf32>
    %cst_107 = arith.constant 5.000000e-01 : f32
    %246 = vector.broadcast %cst_107 : f32 to vector<8x128xf32>
    %247 = arith.mulf %246, %245 : vector<8x128xf32>
    %cst_108 = arith.constant 5.000000e-01 : f32
    %248 = vector.broadcast %cst_108 : f32 to vector<8x128xf32>
    %249 = arith.addf %247, %248 : vector<8x128xf32>
    %250 = vector.extract_strided_slice %233 {offsets = [0, 256], sizes = [8, 128], strides = [1, 1]} : vector<8x512xf32> to vector<8x128xf32>
    %251 = math.tanh %250 : vector<8x128xf32>
    %252 = vector.extract_strided_slice %233 {offsets = [0, 384], sizes = [8, 128], strides = [1, 1]} : vector<8x512xf32> to vector<8x128xf32>
    %cst_109 = arith.constant 5.000000e-01 : f32
    %253 = vector.broadcast %cst_109 : f32 to vector<8x128xf32>
    %254 = arith.mulf %253, %252 : vector<8x128xf32>
    %255 = math.tanh %254 : vector<8x128xf32>
    %cst_110 = arith.constant 5.000000e-01 : f32
    %256 = vector.broadcast %cst_110 : f32 to vector<8x128xf32>
    %257 = arith.mulf %256, %255 : vector<8x128xf32>
    %cst_111 = arith.constant 5.000000e-01 : f32
    %258 = vector.broadcast %cst_111 : f32 to vector<8x128xf32>
    %259 = arith.addf %257, %258 : vector<8x128xf32>
    %260 = arith.mulf %249, %188 : vector<8x128xf32>
    %261 = arith.mulf %241, %251 : vector<8x128xf32>
    %262 = arith.addf %260, %261 : vector<8x128xf32>
    %263 = math.tanh %262 : vector<8x128xf32>
    %264 = arith.mulf %259, %263 : vector<8x128xf32>
    %c0_112 = arith.constant 0 : index
    %c0_113 = arith.constant 0 : index
    %265 = vector.load %arg4[%c0_112, %c0_113] : memref<128x512xf32, #tpu.memory_space<vmem>>, vector<128x512xf32>
    %cst_114 = arith.constant dense<0.000000e+00> : vector<8x512xf32>
    %266 = tpu.matmul %264, %265, %cst_114 {dimension_numbers = #tpu.dot_dimension_numbers<[1], [0], [0], [1], [0, 0, 1, 1], [], []>} : vector<8x128xf32>, vector<128x512xf32>, vector<8x512xf32> -> vector<8x512xf32>
    %c0_115 = arith.constant 0 : index
    %c0_116 = arith.constant 0 : index
    %267 = vector.load %arg5[%c0_115, %c0_116] : memref<128x512xf32, #tpu.memory_space<vmem>>, vector<128x512xf32>
    %cst_117 = arith.constant dense<0.000000e+00> : vector<8x512xf32>
    %268 = tpu.matmul %229, %267, %cst_117 {dimension_numbers = #tpu.dot_dimension_numbers<[1], [0], [0], [1], [0, 0, 1, 1], [], []>} : vector<8x128xf32>, vector<128x512xf32>, vector<8x512xf32> -> vector<8x512xf32>
    %269 = arith.addf %266, %268 : vector<8x512xf32>
    %c0_118 = arith.constant 0 : index
    %c0_119 = arith.constant 0 : index
    %270 = vector.load %arg6[%c0_118, %c0_119] : memref<1x512xf32, #tpu.memory_space<vmem>>, vector<1x512xf32>
    %271 = vector.broadcast %270 : vector<1x512xf32> to vector<8x512xf32>
    %272 = arith.addf %269, %271 : vector<8x512xf32>
    %273 = vector.extract_strided_slice %272 {offsets = [0, 0], sizes = [8, 128], strides = [1, 1]} : vector<8x512xf32> to vector<8x128xf32>
    %cst_120 = arith.constant 5.000000e-01 : f32
    %274 = vector.broadcast %cst_120 : f32 to vector<8x128xf32>
    %275 = arith.mulf %274, %273 : vector<8x128xf32>
    %276 = math.tanh %275 : vector<8x128xf32>
    %cst_121 = arith.constant 5.000000e-01 : f32
    %277 = vector.broadcast %cst_121 : f32 to vector<8x128xf32>
    %278 = arith.mulf %277, %276 : vector<8x128xf32>
    %cst_122 = arith.constant 5.000000e-01 : f32
    %279 = vector.broadcast %cst_122 : f32 to vector<8x128xf32>
    %280 = arith.addf %278, %279 : vector<8x128xf32>
    %281 = vector.extract_strided_slice %272 {offsets = [0, 128], sizes = [8, 128], strides = [1, 1]} : vector<8x512xf32> to vector<8x128xf32>
    %cst_123 = arith.constant 5.000000e-01 : f32
    %282 = vector.broadcast %cst_123 : f32 to vector<8x128xf32>
    %283 = arith.mulf %282, %281 : vector<8x128xf32>
    %284 = math.tanh %283 : vector<8x128xf32>
    %cst_124 = arith.constant 5.000000e-01 : f32
    %285 = vector.broadcast %cst_124 : f32 to vector<8x128xf32>
    %286 = arith.mulf %285, %284 : vector<8x128xf32>
    %cst_125 = arith.constant 5.000000e-01 : f32
    %287 = vector.broadcast %cst_125 : f32 to vector<8x128xf32>
    %288 = arith.addf %286, %287 : vector<8x128xf32>
    %289 = vector.extract_strided_slice %272 {offsets = [0, 256], sizes = [8, 128], strides = [1, 1]} : vector<8x512xf32> to vector<8x128xf32>
    %290 = math.tanh %289 : vector<8x128xf32>
    %291 = vector.extract_strided_slice %272 {offsets = [0, 384], sizes = [8, 128], strides = [1, 1]} : vector<8x512xf32> to vector<8x128xf32>
    %cst_126 = arith.constant 5.000000e-01 : f32
    %292 = vector.broadcast %cst_126 : f32 to vector<8x128xf32>
    %293 = arith.mulf %292, %291 : vector<8x128xf32>
    %294 = math.tanh %293 : vector<8x128xf32>
    %cst_127 = arith.constant 5.000000e-01 : f32
    %295 = vector.broadcast %cst_127 : f32 to vector<8x128xf32>
    %296 = arith.mulf %295, %294 : vector<8x128xf32>
    %cst_128 = arith.constant 5.000000e-01 : f32
    %297 = vector.broadcast %cst_128 : f32 to vector<8x128xf32>
    %298 = arith.addf %296, %297 : vector<8x128xf32>
    %299 = arith.mulf %288, %227 : vector<8x128xf32>
    %300 = arith.mulf %280, %290 : vector<8x128xf32>
    %301 = arith.addf %299, %300 : vector<8x128xf32>
    %302 = math.tanh %301 : vector<8x128xf32>
    %303 = arith.mulf %298, %302 : vector<8x128xf32>
    %c32 = arith.constant 32 : index
    %c0_129 = arith.constant 0 : index
    %304 = vector.load %arg16[%c32, %c0_129] : memref<64x512xf32, #tpu.memory_space<vmem>>, vector<8x512xf32>
    %c0_130 = arith.constant 0 : index
    %c0_131 = arith.constant 0 : index
    %305 = vector.load %arg2[%c0_130, %c0_131] : memref<128x512xf32, #tpu.memory_space<vmem>>, vector<128x512xf32>
    %cst_132 = arith.constant dense<0.000000e+00> : vector<8x512xf32>
    %306 = tpu.matmul %264, %305, %cst_132 {dimension_numbers = #tpu.dot_dimension_numbers<[1], [0], [0], [1], [0, 0, 1, 1], [], []>} : vector<8x128xf32>, vector<128x512xf32>, vector<8x512xf32> -> vector<8x512xf32>
    %307 = arith.addf %304, %306 : vector<8x512xf32>
    %308 = vector.extract_strided_slice %307 {offsets = [0, 0], sizes = [8, 128], strides = [1, 1]} : vector<8x512xf32> to vector<8x128xf32>
    %cst_133 = arith.constant 5.000000e-01 : f32
    %309 = vector.broadcast %cst_133 : f32 to vector<8x128xf32>
    %310 = arith.mulf %309, %308 : vector<8x128xf32>
    %311 = math.tanh %310 : vector<8x128xf32>
    %cst_134 = arith.constant 5.000000e-01 : f32
    %312 = vector.broadcast %cst_134 : f32 to vector<8x128xf32>
    %313 = arith.mulf %312, %311 : vector<8x128xf32>
    %cst_135 = arith.constant 5.000000e-01 : f32
    %314 = vector.broadcast %cst_135 : f32 to vector<8x128xf32>
    %315 = arith.addf %313, %314 : vector<8x128xf32>
    %316 = vector.extract_strided_slice %307 {offsets = [0, 128], sizes = [8, 128], strides = [1, 1]} : vector<8x512xf32> to vector<8x128xf32>
    %cst_136 = arith.constant 5.000000e-01 : f32
    %317 = vector.broadcast %cst_136 : f32 to vector<8x128xf32>
    %318 = arith.mulf %317, %316 : vector<8x128xf32>
    %319 = math.tanh %318 : vector<8x128xf32>
    %cst_137 = arith.constant 5.000000e-01 : f32
    %320 = vector.broadcast %cst_137 : f32 to vector<8x128xf32>
    %321 = arith.mulf %320, %319 : vector<8x128xf32>
    %cst_138 = arith.constant 5.000000e-01 : f32
    %322 = vector.broadcast %cst_138 : f32 to vector<8x128xf32>
    %323 = arith.addf %321, %322 : vector<8x128xf32>
    %324 = vector.extract_strided_slice %307 {offsets = [0, 256], sizes = [8, 128], strides = [1, 1]} : vector<8x512xf32> to vector<8x128xf32>
    %325 = math.tanh %324 : vector<8x128xf32>
    %326 = vector.extract_strided_slice %307 {offsets = [0, 384], sizes = [8, 128], strides = [1, 1]} : vector<8x512xf32> to vector<8x128xf32>
    %cst_139 = arith.constant 5.000000e-01 : f32
    %327 = vector.broadcast %cst_139 : f32 to vector<8x128xf32>
    %328 = arith.mulf %327, %326 : vector<8x128xf32>
    %329 = math.tanh %328 : vector<8x128xf32>
    %cst_140 = arith.constant 5.000000e-01 : f32
    %330 = vector.broadcast %cst_140 : f32 to vector<8x128xf32>
    %331 = arith.mulf %330, %329 : vector<8x128xf32>
    %cst_141 = arith.constant 5.000000e-01 : f32
    %332 = vector.broadcast %cst_141 : f32 to vector<8x128xf32>
    %333 = arith.addf %331, %332 : vector<8x128xf32>
    %334 = arith.mulf %323, %262 : vector<8x128xf32>
    %335 = arith.mulf %315, %325 : vector<8x128xf32>
    %336 = arith.addf %334, %335 : vector<8x128xf32>
    %337 = math.tanh %336 : vector<8x128xf32>
    %338 = arith.mulf %333, %337 : vector<8x128xf32>
    %c0_142 = arith.constant 0 : index
    %c0_143 = arith.constant 0 : index
    %339 = vector.load %arg4[%c0_142, %c0_143] : memref<128x512xf32, #tpu.memory_space<vmem>>, vector<128x512xf32>
    %cst_144 = arith.constant dense<0.000000e+00> : vector<8x512xf32>
    %340 = tpu.matmul %338, %339, %cst_144 {dimension_numbers = #tpu.dot_dimension_numbers<[1], [0], [0], [1], [0, 0, 1, 1], [], []>} : vector<8x128xf32>, vector<128x512xf32>, vector<8x512xf32> -> vector<8x512xf32>
    %c0_145 = arith.constant 0 : index
    %c0_146 = arith.constant 0 : index
    %341 = vector.load %arg5[%c0_145, %c0_146] : memref<128x512xf32, #tpu.memory_space<vmem>>, vector<128x512xf32>
    %cst_147 = arith.constant dense<0.000000e+00> : vector<8x512xf32>
    %342 = tpu.matmul %303, %341, %cst_147 {dimension_numbers = #tpu.dot_dimension_numbers<[1], [0], [0], [1], [0, 0, 1, 1], [], []>} : vector<8x128xf32>, vector<128x512xf32>, vector<8x512xf32> -> vector<8x512xf32>
    %343 = arith.addf %340, %342 : vector<8x512xf32>
    %c0_148 = arith.constant 0 : index
    %c0_149 = arith.constant 0 : index
    %344 = vector.load %arg6[%c0_148, %c0_149] : memref<1x512xf32, #tpu.memory_space<vmem>>, vector<1x512xf32>
    %345 = vector.broadcast %344 : vector<1x512xf32> to vector<8x512xf32>
    %346 = arith.addf %343, %345 : vector<8x512xf32>
    %347 = vector.extract_strided_slice %346 {offsets = [0, 0], sizes = [8, 128], strides = [1, 1]} : vector<8x512xf32> to vector<8x128xf32>
    %cst_150 = arith.constant 5.000000e-01 : f32
    %348 = vector.broadcast %cst_150 : f32 to vector<8x128xf32>
    %349 = arith.mulf %348, %347 : vector<8x128xf32>
    %350 = math.tanh %349 : vector<8x128xf32>
    %cst_151 = arith.constant 5.000000e-01 : f32
    %351 = vector.broadcast %cst_151 : f32 to vector<8x128xf32>
    %352 = arith.mulf %351, %350 : vector<8x128xf32>
    %cst_152 = arith.constant 5.000000e-01 : f32
    %353 = vector.broadcast %cst_152 : f32 to vector<8x128xf32>
    %354 = arith.addf %352, %353 : vector<8x128xf32>
    %355 = vector.extract_strided_slice %346 {offsets = [0, 128], sizes = [8, 128], strides = [1, 1]} : vector<8x512xf32> to vector<8x128xf32>
    %cst_153 = arith.constant 5.000000e-01 : f32
    %356 = vector.broadcast %cst_153 : f32 to vector<8x128xf32>
    %357 = arith.mulf %356, %355 : vector<8x128xf32>
    %358 = math.tanh %357 : vector<8x128xf32>
    %cst_154 = arith.constant 5.000000e-01 : f32
    %359 = vector.broadcast %cst_154 : f32 to vector<8x128xf32>
    %360 = arith.mulf %359, %358 : vector<8x128xf32>
    %cst_155 = arith.constant 5.000000e-01 : f32
    %361 = vector.broadcast %cst_155 : f32 to vector<8x128xf32>
    %362 = arith.addf %360, %361 : vector<8x128xf32>
    %363 = vector.extract_strided_slice %346 {offsets = [0, 256], sizes = [8, 128], strides = [1, 1]} : vector<8x512xf32> to vector<8x128xf32>
    %364 = math.tanh %363 : vector<8x128xf32>
    %365 = vector.extract_strided_slice %346 {offsets = [0, 384], sizes = [8, 128], strides = [1, 1]} : vector<8x512xf32> to vector<8x128xf32>
    %cst_156 = arith.constant 5.000000e-01 : f32
    %366 = vector.broadcast %cst_156 : f32 to vector<8x128xf32>
    %367 = arith.mulf %366, %365 : vector<8x128xf32>
    %368 = math.tanh %367 : vector<8x128xf32>
    %cst_157 = arith.constant 5.000000e-01 : f32
    %369 = vector.broadcast %cst_157 : f32 to vector<8x128xf32>
    %370 = arith.mulf %369, %368 : vector<8x128xf32>
    %cst_158 = arith.constant 5.000000e-01 : f32
    %371 = vector.broadcast %cst_158 : f32 to vector<8x128xf32>
    %372 = arith.addf %370, %371 : vector<8x128xf32>
    %373 = arith.mulf %362, %301 : vector<8x128xf32>
    %374 = arith.mulf %354, %364 : vector<8x128xf32>
    %375 = arith.addf %373, %374 : vector<8x128xf32>
    %376 = math.tanh %375 : vector<8x128xf32>
    %377 = arith.mulf %372, %376 : vector<8x128xf32>
    %c40 = arith.constant 40 : index
    %c0_159 = arith.constant 0 : index
    %378 = vector.load %arg16[%c40, %c0_159] : memref<64x512xf32, #tpu.memory_space<vmem>>, vector<8x512xf32>
    %c0_160 = arith.constant 0 : index
    %c0_161 = arith.constant 0 : index
    %379 = vector.load %arg2[%c0_160, %c0_161] : memref<128x512xf32, #tpu.memory_space<vmem>>, vector<128x512xf32>
    %cst_162 = arith.constant dense<0.000000e+00> : vector<8x512xf32>
    %380 = tpu.matmul %338, %379, %cst_162 {dimension_numbers = #tpu.dot_dimension_numbers<[1], [0], [0], [1], [0, 0, 1, 1], [], []>} : vector<8x128xf32>, vector<128x512xf32>, vector<8x512xf32> -> vector<8x512xf32>
    %381 = arith.addf %378, %380 : vector<8x512xf32>
    %382 = vector.extract_strided_slice %381 {offsets = [0, 0], sizes = [8, 128], strides = [1, 1]} : vector<8x512xf32> to vector<8x128xf32>
    %cst_163 = arith.constant 5.000000e-01 : f32
    %383 = vector.broadcast %cst_163 : f32 to vector<8x128xf32>
    %384 = arith.mulf %383, %382 : vector<8x128xf32>
    %385 = math.tanh %384 : vector<8x128xf32>
    %cst_164 = arith.constant 5.000000e-01 : f32
    %386 = vector.broadcast %cst_164 : f32 to vector<8x128xf32>
    %387 = arith.mulf %386, %385 : vector<8x128xf32>
    %cst_165 = arith.constant 5.000000e-01 : f32
    %388 = vector.broadcast %cst_165 : f32 to vector<8x128xf32>
    %389 = arith.addf %387, %388 : vector<8x128xf32>
    %390 = vector.extract_strided_slice %381 {offsets = [0, 128], sizes = [8, 128], strides = [1, 1]} : vector<8x512xf32> to vector<8x128xf32>
    %cst_166 = arith.constant 5.000000e-01 : f32
    %391 = vector.broadcast %cst_166 : f32 to vector<8x128xf32>
    %392 = arith.mulf %391, %390 : vector<8x128xf32>
    %393 = math.tanh %392 : vector<8x128xf32>
    %cst_167 = arith.constant 5.000000e-01 : f32
    %394 = vector.broadcast %cst_167 : f32 to vector<8x128xf32>
    %395 = arith.mulf %394, %393 : vector<8x128xf32>
    %cst_168 = arith.constant 5.000000e-01 : f32
    %396 = vector.broadcast %cst_168 : f32 to vector<8x128xf32>
    %397 = arith.addf %395, %396 : vector<8x128xf32>
    %398 = vector.extract_strided_slice %381 {offsets = [0, 256], sizes = [8, 128], strides = [1, 1]} : vector<8x512xf32> to vector<8x128xf32>
    %399 = math.tanh %398 : vector<8x128xf32>
    %400 = vector.extract_strided_slice %381 {offsets = [0, 384], sizes = [8, 128], strides = [1, 1]} : vector<8x512xf32> to vector<8x128xf32>
    %cst_169 = arith.constant 5.000000e-01 : f32
    %401 = vector.broadcast %cst_169 : f32 to vector<8x128xf32>
    %402 = arith.mulf %401, %400 : vector<8x128xf32>
    %403 = math.tanh %402 : vector<8x128xf32>
    %cst_170 = arith.constant 5.000000e-01 : f32
    %404 = vector.broadcast %cst_170 : f32 to vector<8x128xf32>
    %405 = arith.mulf %404, %403 : vector<8x128xf32>
    %cst_171 = arith.constant 5.000000e-01 : f32
    %406 = vector.broadcast %cst_171 : f32 to vector<8x128xf32>
    %407 = arith.addf %405, %406 : vector<8x128xf32>
    %408 = arith.mulf %397, %336 : vector<8x128xf32>
    %409 = arith.mulf %389, %399 : vector<8x128xf32>
    %410 = arith.addf %408, %409 : vector<8x128xf32>
    %411 = math.tanh %410 : vector<8x128xf32>
    %412 = arith.mulf %407, %411 : vector<8x128xf32>
    %c0_172 = arith.constant 0 : index
    %c0_173 = arith.constant 0 : index
    %413 = vector.load %arg4[%c0_172, %c0_173] : memref<128x512xf32, #tpu.memory_space<vmem>>, vector<128x512xf32>
    %cst_174 = arith.constant dense<0.000000e+00> : vector<8x512xf32>
    %414 = tpu.matmul %412, %413, %cst_174 {dimension_numbers = #tpu.dot_dimension_numbers<[1], [0], [0], [1], [0, 0, 1, 1], [], []>} : vector<8x128xf32>, vector<128x512xf32>, vector<8x512xf32> -> vector<8x512xf32>
    %c0_175 = arith.constant 0 : index
    %c0_176 = arith.constant 0 : index
    %415 = vector.load %arg5[%c0_175, %c0_176] : memref<128x512xf32, #tpu.memory_space<vmem>>, vector<128x512xf32>
    %cst_177 = arith.constant dense<0.000000e+00> : vector<8x512xf32>
    %416 = tpu.matmul %377, %415, %cst_177 {dimension_numbers = #tpu.dot_dimension_numbers<[1], [0], [0], [1], [0, 0, 1, 1], [], []>} : vector<8x128xf32>, vector<128x512xf32>, vector<8x512xf32> -> vector<8x512xf32>
    %417 = arith.addf %414, %416 : vector<8x512xf32>
    %c0_178 = arith.constant 0 : index
    %c0_179 = arith.constant 0 : index
    %418 = vector.load %arg6[%c0_178, %c0_179] : memref<1x512xf32, #tpu.memory_space<vmem>>, vector<1x512xf32>
    %419 = vector.broadcast %418 : vector<1x512xf32> to vector<8x512xf32>
    %420 = arith.addf %417, %419 : vector<8x512xf32>
    %421 = vector.extract_strided_slice %420 {offsets = [0, 0], sizes = [8, 128], strides = [1, 1]} : vector<8x512xf32> to vector<8x128xf32>
    %cst_180 = arith.constant 5.000000e-01 : f32
    %422 = vector.broadcast %cst_180 : f32 to vector<8x128xf32>
    %423 = arith.mulf %422, %421 : vector<8x128xf32>
    %424 = math.tanh %423 : vector<8x128xf32>
    %cst_181 = arith.constant 5.000000e-01 : f32
    %425 = vector.broadcast %cst_181 : f32 to vector<8x128xf32>
    %426 = arith.mulf %425, %424 : vector<8x128xf32>
    %cst_182 = arith.constant 5.000000e-01 : f32
    %427 = vector.broadcast %cst_182 : f32 to vector<8x128xf32>
    %428 = arith.addf %426, %427 : vector<8x128xf32>
    %429 = vector.extract_strided_slice %420 {offsets = [0, 128], sizes = [8, 128], strides = [1, 1]} : vector<8x512xf32> to vector<8x128xf32>
    %cst_183 = arith.constant 5.000000e-01 : f32
    %430 = vector.broadcast %cst_183 : f32 to vector<8x128xf32>
    %431 = arith.mulf %430, %429 : vector<8x128xf32>
    %432 = math.tanh %431 : vector<8x128xf32>
    %cst_184 = arith.constant 5.000000e-01 : f32
    %433 = vector.broadcast %cst_184 : f32 to vector<8x128xf32>
    %434 = arith.mulf %433, %432 : vector<8x128xf32>
    %cst_185 = arith.constant 5.000000e-01 : f32
    %435 = vector.broadcast %cst_185 : f32 to vector<8x128xf32>
    %436 = arith.addf %434, %435 : vector<8x128xf32>
    %437 = vector.extract_strided_slice %420 {offsets = [0, 256], sizes = [8, 128], strides = [1, 1]} : vector<8x512xf32> to vector<8x128xf32>
    %438 = math.tanh %437 : vector<8x128xf32>
    %439 = vector.extract_strided_slice %420 {offsets = [0, 384], sizes = [8, 128], strides = [1, 1]} : vector<8x512xf32> to vector<8x128xf32>
    %cst_186 = arith.constant 5.000000e-01 : f32
    %440 = vector.broadcast %cst_186 : f32 to vector<8x128xf32>
    %441 = arith.mulf %440, %439 : vector<8x128xf32>
    %442 = math.tanh %441 : vector<8x128xf32>
    %cst_187 = arith.constant 5.000000e-01 : f32
    %443 = vector.broadcast %cst_187 : f32 to vector<8x128xf32>
    %444 = arith.mulf %443, %442 : vector<8x128xf32>
    %cst_188 = arith.constant 5.000000e-01 : f32
    %445 = vector.broadcast %cst_188 : f32 to vector<8x128xf32>
    %446 = arith.addf %444, %445 : vector<8x128xf32>
    %447 = arith.mulf %436, %375 : vector<8x128xf32>
    %448 = arith.mulf %428, %438 : vector<8x128xf32>
    %449 = arith.addf %447, %448 : vector<8x128xf32>
    %450 = math.tanh %449 : vector<8x128xf32>
    %451 = arith.mulf %446, %450 : vector<8x128xf32>
    %c48 = arith.constant 48 : index
    %c0_189 = arith.constant 0 : index
    %452 = vector.load %arg16[%c48, %c0_189] : memref<64x512xf32, #tpu.memory_space<vmem>>, vector<8x512xf32>
    %c0_190 = arith.constant 0 : index
    %c0_191 = arith.constant 0 : index
    %453 = vector.load %arg2[%c0_190, %c0_191] : memref<128x512xf32, #tpu.memory_space<vmem>>, vector<128x512xf32>
    %cst_192 = arith.constant dense<0.000000e+00> : vector<8x512xf32>
    %454 = tpu.matmul %412, %453, %cst_192 {dimension_numbers = #tpu.dot_dimension_numbers<[1], [0], [0], [1], [0, 0, 1, 1], [], []>} : vector<8x128xf32>, vector<128x512xf32>, vector<8x512xf32> -> vector<8x512xf32>
    %455 = arith.addf %452, %454 : vector<8x512xf32>
    %456 = vector.extract_strided_slice %455 {offsets = [0, 0], sizes = [8, 128], strides = [1, 1]} : vector<8x512xf32> to vector<8x128xf32>
    %cst_193 = arith.constant 5.000000e-01 : f32
    %457 = vector.broadcast %cst_193 : f32 to vector<8x128xf32>
    %458 = arith.mulf %457, %456 : vector<8x128xf32>
    %459 = math.tanh %458 : vector<8x128xf32>
    %cst_194 = arith.constant 5.000000e-01 : f32
    %460 = vector.broadcast %cst_194 : f32 to vector<8x128xf32>
    %461 = arith.mulf %460, %459 : vector<8x128xf32>
    %cst_195 = arith.constant 5.000000e-01 : f32
    %462 = vector.broadcast %cst_195 : f32 to vector<8x128xf32>
    %463 = arith.addf %461, %462 : vector<8x128xf32>
    %464 = vector.extract_strided_slice %455 {offsets = [0, 128], sizes = [8, 128], strides = [1, 1]} : vector<8x512xf32> to vector<8x128xf32>
    %cst_196 = arith.constant 5.000000e-01 : f32
    %465 = vector.broadcast %cst_196 : f32 to vector<8x128xf32>
    %466 = arith.mulf %465, %464 : vector<8x128xf32>
    %467 = math.tanh %466 : vector<8x128xf32>
    %cst_197 = arith.constant 5.000000e-01 : f32
    %468 = vector.broadcast %cst_197 : f32 to vector<8x128xf32>
    %469 = arith.mulf %468, %467 : vector<8x128xf32>
    %cst_198 = arith.constant 5.000000e-01 : f32
    %470 = vector.broadcast %cst_198 : f32 to vector<8x128xf32>
    %471 = arith.addf %469, %470 : vector<8x128xf32>
    %472 = vector.extract_strided_slice %455 {offsets = [0, 256], sizes = [8, 128], strides = [1, 1]} : vector<8x512xf32> to vector<8x128xf32>
    %473 = math.tanh %472 : vector<8x128xf32>
    %474 = vector.extract_strided_slice %455 {offsets = [0, 384], sizes = [8, 128], strides = [1, 1]} : vector<8x512xf32> to vector<8x128xf32>
    %cst_199 = arith.constant 5.000000e-01 : f32
    %475 = vector.broadcast %cst_199 : f32 to vector<8x128xf32>
    %476 = arith.mulf %475, %474 : vector<8x128xf32>
    %477 = math.tanh %476 : vector<8x128xf32>
    %cst_200 = arith.constant 5.000000e-01 : f32
    %478 = vector.broadcast %cst_200 : f32 to vector<8x128xf32>
    %479 = arith.mulf %478, %477 : vector<8x128xf32>
    %cst_201 = arith.constant 5.000000e-01 : f32
    %480 = vector.broadcast %cst_201 : f32 to vector<8x128xf32>
    %481 = arith.addf %479, %480 : vector<8x128xf32>
    %482 = arith.mulf %471, %410 : vector<8x128xf32>
    %483 = arith.mulf %463, %473 : vector<8x128xf32>
    %484 = arith.addf %482, %483 : vector<8x128xf32>
    %485 = math.tanh %484 : vector<8x128xf32>
    %486 = arith.mulf %481, %485 : vector<8x128xf32>
    %c0_202 = arith.constant 0 : index
    %c0_203 = arith.constant 0 : index
    %487 = vector.load %arg4[%c0_202, %c0_203] : memref<128x512xf32, #tpu.memory_space<vmem>>, vector<128x512xf32>
    %cst_204 = arith.constant dense<0.000000e+00> : vector<8x512xf32>
    %488 = tpu.matmul %486, %487, %cst_204 {dimension_numbers = #tpu.dot_dimension_numbers<[1], [0], [0], [1], [0, 0, 1, 1], [], []>} : vector<8x128xf32>, vector<128x512xf32>, vector<8x512xf32> -> vector<8x512xf32>
    %c0_205 = arith.constant 0 : index
    %c0_206 = arith.constant 0 : index
    %489 = vector.load %arg5[%c0_205, %c0_206] : memref<128x512xf32, #tpu.memory_space<vmem>>, vector<128x512xf32>
    %cst_207 = arith.constant dense<0.000000e+00> : vector<8x512xf32>
    %490 = tpu.matmul %451, %489, %cst_207 {dimension_numbers = #tpu.dot_dimension_numbers<[1], [0], [0], [1], [0, 0, 1, 1], [], []>} : vector<8x128xf32>, vector<128x512xf32>, vector<8x512xf32> -> vector<8x512xf32>
    %491 = arith.addf %488, %490 : vector<8x512xf32>
    %c0_208 = arith.constant 0 : index
    %c0_209 = arith.constant 0 : index
    %492 = vector.load %arg6[%c0_208, %c0_209] : memref<1x512xf32, #tpu.memory_space<vmem>>, vector<1x512xf32>
    %493 = vector.broadcast %492 : vector<1x512xf32> to vector<8x512xf32>
    %494 = arith.addf %491, %493 : vector<8x512xf32>
    %495 = vector.extract_strided_slice %494 {offsets = [0, 0], sizes = [8, 128], strides = [1, 1]} : vector<8x512xf32> to vector<8x128xf32>
    %cst_210 = arith.constant 5.000000e-01 : f32
    %496 = vector.broadcast %cst_210 : f32 to vector<8x128xf32>
    %497 = arith.mulf %496, %495 : vector<8x128xf32>
    %498 = math.tanh %497 : vector<8x128xf32>
    %cst_211 = arith.constant 5.000000e-01 : f32
    %499 = vector.broadcast %cst_211 : f32 to vector<8x128xf32>
    %500 = arith.mulf %499, %498 : vector<8x128xf32>
    %cst_212 = arith.constant 5.000000e-01 : f32
    %501 = vector.broadcast %cst_212 : f32 to vector<8x128xf32>
    %502 = arith.addf %500, %501 : vector<8x128xf32>
    %503 = vector.extract_strided_slice %494 {offsets = [0, 128], sizes = [8, 128], strides = [1, 1]} : vector<8x512xf32> to vector<8x128xf32>
    %cst_213 = arith.constant 5.000000e-01 : f32
    %504 = vector.broadcast %cst_213 : f32 to vector<8x128xf32>
    %505 = arith.mulf %504, %503 : vector<8x128xf32>
    %506 = math.tanh %505 : vector<8x128xf32>
    %cst_214 = arith.constant 5.000000e-01 : f32
    %507 = vector.broadcast %cst_214 : f32 to vector<8x128xf32>
    %508 = arith.mulf %507, %506 : vector<8x128xf32>
    %cst_215 = arith.constant 5.000000e-01 : f32
    %509 = vector.broadcast %cst_215 : f32 to vector<8x128xf32>
    %510 = arith.addf %508, %509 : vector<8x128xf32>
    %511 = vector.extract_strided_slice %494 {offsets = [0, 256], sizes = [8, 128], strides = [1, 1]} : vector<8x512xf32> to vector<8x128xf32>
    %512 = math.tanh %511 : vector<8x128xf32>
    %513 = vector.extract_strided_slice %494 {offsets = [0, 384], sizes = [8, 128], strides = [1, 1]} : vector<8x512xf32> to vector<8x128xf32>
    %cst_216 = arith.constant 5.000000e-01 : f32
    %514 = vector.broadcast %cst_216 : f32 to vector<8x128xf32>
    %515 = arith.mulf %514, %513 : vector<8x128xf32>
    %516 = math.tanh %515 : vector<8x128xf32>
    %cst_217 = arith.constant 5.000000e-01 : f32
    %517 = vector.broadcast %cst_217 : f32 to vector<8x128xf32>
    %518 = arith.mulf %517, %516 : vector<8x128xf32>
    %cst_218 = arith.constant 5.000000e-01 : f32
    %519 = vector.broadcast %cst_218 : f32 to vector<8x128xf32>
    %520 = arith.addf %518, %519 : vector<8x128xf32>
    %521 = arith.mulf %510, %449 : vector<8x128xf32>
    %522 = arith.mulf %502, %512 : vector<8x128xf32>
    %523 = arith.addf %521, %522 : vector<8x128xf32>
    %524 = math.tanh %523 : vector<8x128xf32>
    %525 = arith.mulf %520, %524 : vector<8x128xf32>
    %c56 = arith.constant 56 : index
    %c0_219 = arith.constant 0 : index
    %526 = vector.load %arg16[%c56, %c0_219] : memref<64x512xf32, #tpu.memory_space<vmem>>, vector<8x512xf32>
    %c0_220 = arith.constant 0 : index
    %c0_221 = arith.constant 0 : index
    %527 = vector.load %arg2[%c0_220, %c0_221] : memref<128x512xf32, #tpu.memory_space<vmem>>, vector<128x512xf32>
    %cst_222 = arith.constant dense<0.000000e+00> : vector<8x512xf32>
    %528 = tpu.matmul %486, %527, %cst_222 {dimension_numbers = #tpu.dot_dimension_numbers<[1], [0], [0], [1], [0, 0, 1, 1], [], []>} : vector<8x128xf32>, vector<128x512xf32>, vector<8x512xf32> -> vector<8x512xf32>
    %529 = arith.addf %526, %528 : vector<8x512xf32>
    %530 = vector.extract_strided_slice %529 {offsets = [0, 0], sizes = [8, 128], strides = [1, 1]} : vector<8x512xf32> to vector<8x128xf32>
    %cst_223 = arith.constant 5.000000e-01 : f32
    %531 = vector.broadcast %cst_223 : f32 to vector<8x128xf32>
    %532 = arith.mulf %531, %530 : vector<8x128xf32>
    %533 = math.tanh %532 : vector<8x128xf32>
    %cst_224 = arith.constant 5.000000e-01 : f32
    %534 = vector.broadcast %cst_224 : f32 to vector<8x128xf32>
    %535 = arith.mulf %534, %533 : vector<8x128xf32>
    %cst_225 = arith.constant 5.000000e-01 : f32
    %536 = vector.broadcast %cst_225 : f32 to vector<8x128xf32>
    %537 = arith.addf %535, %536 : vector<8x128xf32>
    %538 = vector.extract_strided_slice %529 {offsets = [0, 128], sizes = [8, 128], strides = [1, 1]} : vector<8x512xf32> to vector<8x128xf32>
    %cst_226 = arith.constant 5.000000e-01 : f32
    %539 = vector.broadcast %cst_226 : f32 to vector<8x128xf32>
    %540 = arith.mulf %539, %538 : vector<8x128xf32>
    %541 = math.tanh %540 : vector<8x128xf32>
    %cst_227 = arith.constant 5.000000e-01 : f32
    %542 = vector.broadcast %cst_227 : f32 to vector<8x128xf32>
    %543 = arith.mulf %542, %541 : vector<8x128xf32>
    %cst_228 = arith.constant 5.000000e-01 : f32
    %544 = vector.broadcast %cst_228 : f32 to vector<8x128xf32>
    %545 = arith.addf %543, %544 : vector<8x128xf32>
    %546 = vector.extract_strided_slice %529 {offsets = [0, 256], sizes = [8, 128], strides = [1, 1]} : vector<8x512xf32> to vector<8x128xf32>
    %547 = math.tanh %546 : vector<8x128xf32>
    %548 = vector.extract_strided_slice %529 {offsets = [0, 384], sizes = [8, 128], strides = [1, 1]} : vector<8x512xf32> to vector<8x128xf32>
    %cst_229 = arith.constant 5.000000e-01 : f32
    %549 = vector.broadcast %cst_229 : f32 to vector<8x128xf32>
    %550 = arith.mulf %549, %548 : vector<8x128xf32>
    %551 = math.tanh %550 : vector<8x128xf32>
    %cst_230 = arith.constant 5.000000e-01 : f32
    %552 = vector.broadcast %cst_230 : f32 to vector<8x128xf32>
    %553 = arith.mulf %552, %551 : vector<8x128xf32>
    %cst_231 = arith.constant 5.000000e-01 : f32
    %554 = vector.broadcast %cst_231 : f32 to vector<8x128xf32>
    %555 = arith.addf %553, %554 : vector<8x128xf32>
    %556 = arith.mulf %545, %484 : vector<8x128xf32>
    %557 = arith.mulf %537, %547 : vector<8x128xf32>
    %558 = arith.addf %556, %557 : vector<8x128xf32>
    %559 = math.tanh %558 : vector<8x128xf32>
    %560 = arith.mulf %555, %559 : vector<8x128xf32>
    %c0_232 = arith.constant 0 : index
    %c0_233 = arith.constant 0 : index
    %561 = vector.load %arg4[%c0_232, %c0_233] : memref<128x512xf32, #tpu.memory_space<vmem>>, vector<128x512xf32>
    %cst_234 = arith.constant dense<0.000000e+00> : vector<8x512xf32>
    %562 = tpu.matmul %560, %561, %cst_234 {dimension_numbers = #tpu.dot_dimension_numbers<[1], [0], [0], [1], [0, 0, 1, 1], [], []>} : vector<8x128xf32>, vector<128x512xf32>, vector<8x512xf32> -> vector<8x512xf32>
    %c0_235 = arith.constant 0 : index
    %c0_236 = arith.constant 0 : index
    %563 = vector.load %arg5[%c0_235, %c0_236] : memref<128x512xf32, #tpu.memory_space<vmem>>, vector<128x512xf32>
    %cst_237 = arith.constant dense<0.000000e+00> : vector<8x512xf32>
    %564 = tpu.matmul %525, %563, %cst_237 {dimension_numbers = #tpu.dot_dimension_numbers<[1], [0], [0], [1], [0, 0, 1, 1], [], []>} : vector<8x128xf32>, vector<128x512xf32>, vector<8x512xf32> -> vector<8x512xf32>
    %565 = arith.addf %562, %564 : vector<8x512xf32>
    %c0_238 = arith.constant 0 : index
    %c0_239 = arith.constant 0 : index
    %566 = vector.load %arg6[%c0_238, %c0_239] : memref<1x512xf32, #tpu.memory_space<vmem>>, vector<1x512xf32>
    %567 = vector.broadcast %566 : vector<1x512xf32> to vector<8x512xf32>
    %568 = arith.addf %565, %567 : vector<8x512xf32>
    %569 = vector.extract_strided_slice %568 {offsets = [0, 0], sizes = [8, 128], strides = [1, 1]} : vector<8x512xf32> to vector<8x128xf32>
    %cst_240 = arith.constant 5.000000e-01 : f32
    %570 = vector.broadcast %cst_240 : f32 to vector<8x128xf32>
    %571 = arith.mulf %570, %569 : vector<8x128xf32>
    %572 = math.tanh %571 : vector<8x128xf32>
    %cst_241 = arith.constant 5.000000e-01 : f32
    %573 = vector.broadcast %cst_241 : f32 to vector<8x128xf32>
    %574 = arith.mulf %573, %572 : vector<8x128xf32>
    %cst_242 = arith.constant 5.000000e-01 : f32
    %575 = vector.broadcast %cst_242 : f32 to vector<8x128xf32>
    %576 = arith.addf %574, %575 : vector<8x128xf32>
    %577 = vector.extract_strided_slice %568 {offsets = [0, 128], sizes = [8, 128], strides = [1, 1]} : vector<8x512xf32> to vector<8x128xf32>
    %cst_243 = arith.constant 5.000000e-01 : f32
    %578 = vector.broadcast %cst_243 : f32 to vector<8x128xf32>
    %579 = arith.mulf %578, %577 : vector<8x128xf32>
    %580 = math.tanh %579 : vector<8x128xf32>
    %cst_244 = arith.constant 5.000000e-01 : f32
    %581 = vector.broadcast %cst_244 : f32 to vector<8x128xf32>
    %582 = arith.mulf %581, %580 : vector<8x128xf32>
    %cst_245 = arith.constant 5.000000e-01 : f32
    %583 = vector.broadcast %cst_245 : f32 to vector<8x128xf32>
    %584 = arith.addf %582, %583 : vector<8x128xf32>
    %585 = vector.extract_strided_slice %568 {offsets = [0, 256], sizes = [8, 128], strides = [1, 1]} : vector<8x512xf32> to vector<8x128xf32>
    %586 = math.tanh %585 : vector<8x128xf32>
    %587 = vector.extract_strided_slice %568 {offsets = [0, 384], sizes = [8, 128], strides = [1, 1]} : vector<8x512xf32> to vector<8x128xf32>
    %cst_246 = arith.constant 5.000000e-01 : f32
    %588 = vector.broadcast %cst_246 : f32 to vector<8x128xf32>
    %589 = arith.mulf %588, %587 : vector<8x128xf32>
    %590 = math.tanh %589 : vector<8x128xf32>
    %cst_247 = arith.constant 5.000000e-01 : f32
    %591 = vector.broadcast %cst_247 : f32 to vector<8x128xf32>
    %592 = arith.mulf %591, %590 : vector<8x128xf32>
    %cst_248 = arith.constant 5.000000e-01 : f32
    %593 = vector.broadcast %cst_248 : f32 to vector<8x128xf32>
    %594 = arith.addf %592, %593 : vector<8x128xf32>
    %595 = arith.mulf %584, %523 : vector<8x128xf32>
    %596 = arith.mulf %576, %586 : vector<8x128xf32>
    %597 = arith.addf %595, %596 : vector<8x128xf32>
    %598 = math.tanh %597 : vector<8x128xf32>
    %599 = arith.mulf %594, %598 : vector<8x128xf32>
    %c0_249 = arith.constant 0 : index
    %c0_250 = arith.constant 0 : index
    %600 = vector.load %arg7[%c0_249, %c0_250] : memref<128x384xf32, #tpu.memory_space<vmem>>, vector<128x384xf32>
    %cst_251 = arith.constant dense<0.000000e+00> : vector<8x384xf32>
    %601 = tpu.matmul %599, %600, %cst_251 {dimension_numbers = #tpu.dot_dimension_numbers<[1], [0], [0], [1], [0, 0, 1, 1], [], []>} : vector<8x128xf32>, vector<128x384xf32>, vector<8x384xf32> -> vector<8x384xf32>
    %c0_252 = arith.constant 0 : index
    %c0_253 = arith.constant 0 : index
    %602 = vector.load %arg8[%c0_252, %c0_253] : memref<1x384xf32, #tpu.memory_space<vmem>>, vector<1x384xf32>
    %603 = vector.broadcast %602 : vector<1x384xf32> to vector<8x384xf32>
    %604 = arith.addf %601, %603 : vector<8x384xf32>
    %605 = vector.extract_strided_slice %604 {offsets = [0, 0], sizes = [8, 128], strides = [1, 1]} : vector<8x384xf32> to vector<8x128xf32>
    %606 = vector.extract_strided_slice %604 {offsets = [0, 128], sizes = [8, 128], strides = [1, 1]} : vector<8x384xf32> to vector<8x128xf32>
    %607 = vector.extract_strided_slice %604 {offsets = [0, 256], sizes = [8, 128], strides = [1, 1]} : vector<8x384xf32> to vector<8x128xf32>
    %608 = tpu.iota {dimensions = array<i32: 1>} : vector<8x8xi32>
    %c2_i32 = arith.constant 2 : i32
    %609 = vector.broadcast %c2_i32 : i32 to vector<8x8xi32>
    %610 = arith.cmpi slt, %608, %609 : vector<8x8xi32>
    %611 = tpu.iota {dimensions = array<i32: 1>} : vector<1x128xi32>
    %c0_254 = arith.constant 0 : index
    %c0_255 = arith.constant 0 : index
    %612 = vector.load %arg10[%c0_254, %c0_255] : memref<1x128xf32, #tpu.memory_space<vmem>>, vector<1x128xf32>
    %613 = vector.shape_cast %612 : vector<1x128xf32> to vector<1x128xf32>
    %614 = vector.broadcast %613 : vector<1x128xf32> to vector<8x128xf32>
    %c0_i32 = arith.constant 0 : i32
    %615 = vector.broadcast %c0_i32 : i32 to vector<1x128xi32>
    %616 = arith.cmpi sge, %611, %615 : vector<1x128xi32>
    %c32_i32 = arith.constant 32 : i32
    %617 = vector.broadcast %c32_i32 : i32 to vector<1x128xi32>
    %618 = arith.cmpi slt, %611, %617 : vector<1x128xi32>
    %619 = arith.andi %616, %618 : vector<1x128xi1>
    %620 = arith.extui %619 : vector<1x128xi1> to vector<1x128xi32>
    %621 = arith.sitofp %620 : vector<1x128xi32> to vector<1x128xf32>
    %622 = vector.broadcast %621 : vector<1x128xf32> to vector<8x128xf32>
    %623 = arith.mulf %605, %622 : vector<8x128xf32>
    %cst_256 = arith.constant dense<0.000000e+00> : vector<8x8xf32>
    %624 = tpu.matmul %623, %606, %cst_256 {dimension_numbers = #tpu.dot_dimension_numbers<[1], [1], [0], [0], [0, 0, 1, 0], [], []>} : vector<8x128xf32>, vector<8x128xf32>, vector<8x8xf32> -> vector<8x8xf32>
    %cst_257 = arith.constant -1.000000e+30 : f32
    %625 = vector.broadcast %cst_257 : f32 to vector<8x8xf32>
    %626 = arith.select %610, %624, %625 : vector<8x8xi1>, vector<8x8xf32>
    %cst_258 = arith.constant dense<0xFF800000> : vector<8xf32>
    %627 = vector.multi_reduction <maximumf>, %626, %cst_258 [1] : vector<8x8xf32> to vector<8xf32>
    %628 = vector.shape_cast %627 : vector<8xf32> to vector<8x1xf32>
    %629 = vector.broadcast %628 : vector<8x1xf32> to vector<8x8xf32>
    %630 = arith.subf %626, %629 : vector<8x8xf32>
    %631 = math.exp %630 : vector<8x8xf32>
    %cst_259 = arith.constant dense<0.000000e+00> : vector<8xf32>
    %632 = vector.multi_reduction <add>, %631, %cst_259 [1] : vector<8x8xf32> to vector<8xf32>
    %633 = vector.shape_cast %632 : vector<8xf32> to vector<8x1xf32>
    %634 = tpu.reciprocal %633 {approx = true} : vector<8x1xf32> -> vector<8x1xf32>
    %635 = vector.broadcast %634 : vector<8x1xf32> to vector<8x8xf32>
    %636 = arith.mulf %631, %635 : vector<8x8xf32>
    %637 = vector.broadcast %621 : vector<1x128xf32> to vector<8x128xf32>
    %638 = arith.mulf %607, %637 : vector<8x128xf32>
    %cst_260 = arith.constant dense<0.000000e+00> : vector<8x128xf32>
    %639 = tpu.matmul %636, %638, %cst_260 {dimension_numbers = #tpu.dot_dimension_numbers<[1], [0], [0], [1], [0, 0, 1, 1], [], []>} : vector<8x8xf32>, vector<8x128xf32>, vector<8x128xf32> -> vector<8x128xf32>
    %c0_261 = arith.constant 0 : index
    %c0_262 = arith.constant 0 : index
    %640 = vector.load %arg9[%c0_261, %c0_262] : memref<128x128xf32, #tpu.memory_space<vmem>>, vector<128x128xf32>
    %cst_263 = arith.constant dense<0.000000e+00> : vector<8x128xf32>
    %641 = tpu.matmul %639, %640, %cst_263 {dimension_numbers = #tpu.dot_dimension_numbers<[1], [0], [0], [1], [0, 0, 1, 1], [], []>} : vector<8x128xf32>, vector<128x128xf32>, vector<8x128xf32> -> vector<8x128xf32>
    %642 = arith.addf %614, %641 : vector<8x128xf32>
    %c32_i32_264 = arith.constant 32 : i32
    %643 = vector.broadcast %c32_i32_264 : i32 to vector<1x128xi32>
    %644 = arith.cmpi sge, %611, %643 : vector<1x128xi32>
    %c64_i32 = arith.constant 64 : i32
    %645 = vector.broadcast %c64_i32 : i32 to vector<1x128xi32>
    %646 = arith.cmpi slt, %611, %645 : vector<1x128xi32>
    %647 = arith.andi %644, %646 : vector<1x128xi1>
    %648 = arith.extui %647 : vector<1x128xi1> to vector<1x128xi32>
    %649 = arith.sitofp %648 : vector<1x128xi32> to vector<1x128xf32>
    %650 = vector.broadcast %649 : vector<1x128xf32> to vector<8x128xf32>
    %651 = arith.mulf %605, %650 : vector<8x128xf32>
    %cst_265 = arith.constant dense<0.000000e+00> : vector<8x8xf32>
    %652 = tpu.matmul %651, %606, %cst_265 {dimension_numbers = #tpu.dot_dimension_numbers<[1], [1], [0], [0], [0, 0, 1, 0], [], []>} : vector<8x128xf32>, vector<8x128xf32>, vector<8x8xf32> -> vector<8x8xf32>
    %cst_266 = arith.constant -1.000000e+30 : f32
    %653 = vector.broadcast %cst_266 : f32 to vector<8x8xf32>
    %654 = arith.select %610, %652, %653 : vector<8x8xi1>, vector<8x8xf32>
    %cst_267 = arith.constant dense<0xFF800000> : vector<8xf32>
    %655 = vector.multi_reduction <maximumf>, %654, %cst_267 [1] : vector<8x8xf32> to vector<8xf32>
    %656 = vector.shape_cast %655 : vector<8xf32> to vector<8x1xf32>
    %657 = vector.broadcast %656 : vector<8x1xf32> to vector<8x8xf32>
    %658 = arith.subf %654, %657 : vector<8x8xf32>
    %659 = math.exp %658 : vector<8x8xf32>
    %cst_268 = arith.constant dense<0.000000e+00> : vector<8xf32>
    %660 = vector.multi_reduction <add>, %659, %cst_268 [1] : vector<8x8xf32> to vector<8xf32>
    %661 = vector.shape_cast %660 : vector<8xf32> to vector<8x1xf32>
    %662 = tpu.reciprocal %661 {approx = true} : vector<8x1xf32> -> vector<8x1xf32>
    %663 = vector.broadcast %662 : vector<8x1xf32> to vector<8x8xf32>
    %664 = arith.mulf %659, %663 : vector<8x8xf32>
    %665 = vector.broadcast %649 : vector<1x128xf32> to vector<8x128xf32>
    %666 = arith.mulf %607, %665 : vector<8x128xf32>
    %cst_269 = arith.constant dense<0.000000e+00> : vector<8x128xf32>
    %667 = tpu.matmul %664, %666, %cst_269 {dimension_numbers = #tpu.dot_dimension_numbers<[1], [0], [0], [1], [0, 0, 1, 1], [], []>} : vector<8x8xf32>, vector<8x128xf32>, vector<8x128xf32> -> vector<8x128xf32>
    %c0_270 = arith.constant 0 : index
    %c0_271 = arith.constant 0 : index
    %668 = vector.load %arg9[%c0_270, %c0_271] : memref<128x128xf32, #tpu.memory_space<vmem>>, vector<128x128xf32>
    %cst_272 = arith.constant dense<0.000000e+00> : vector<8x128xf32>
    %669 = tpu.matmul %667, %668, %cst_272 {dimension_numbers = #tpu.dot_dimension_numbers<[1], [0], [0], [1], [0, 0, 1, 1], [], []>} : vector<8x128xf32>, vector<128x128xf32>, vector<8x128xf32> -> vector<8x128xf32>
    %670 = arith.addf %642, %669 : vector<8x128xf32>
    %c64_i32_273 = arith.constant 64 : i32
    %671 = vector.broadcast %c64_i32_273 : i32 to vector<1x128xi32>
    %672 = arith.cmpi sge, %611, %671 : vector<1x128xi32>
    %c96_i32 = arith.constant 96 : i32
    %673 = vector.broadcast %c96_i32 : i32 to vector<1x128xi32>
    %674 = arith.cmpi slt, %611, %673 : vector<1x128xi32>
    %675 = arith.andi %672, %674 : vector<1x128xi1>
    %676 = arith.extui %675 : vector<1x128xi1> to vector<1x128xi32>
    %677 = arith.sitofp %676 : vector<1x128xi32> to vector<1x128xf32>
    %678 = vector.broadcast %677 : vector<1x128xf32> to vector<8x128xf32>
    %679 = arith.mulf %605, %678 : vector<8x128xf32>
    %cst_274 = arith.constant dense<0.000000e+00> : vector<8x8xf32>
    %680 = tpu.matmul %679, %606, %cst_274 {dimension_numbers = #tpu.dot_dimension_numbers<[1], [1], [0], [0], [0, 0, 1, 0], [], []>} : vector<8x128xf32>, vector<8x128xf32>, vector<8x8xf32> -> vector<8x8xf32>
    %cst_275 = arith.constant -1.000000e+30 : f32
    %681 = vector.broadcast %cst_275 : f32 to vector<8x8xf32>
    %682 = arith.select %610, %680, %681 : vector<8x8xi1>, vector<8x8xf32>
    %cst_276 = arith.constant dense<0xFF800000> : vector<8xf32>
    %683 = vector.multi_reduction <maximumf>, %682, %cst_276 [1] : vector<8x8xf32> to vector<8xf32>
    %684 = vector.shape_cast %683 : vector<8xf32> to vector<8x1xf32>
    %685 = vector.broadcast %684 : vector<8x1xf32> to vector<8x8xf32>
    %686 = arith.subf %682, %685 : vector<8x8xf32>
    %687 = math.exp %686 : vector<8x8xf32>
    %cst_277 = arith.constant dense<0.000000e+00> : vector<8xf32>
    %688 = vector.multi_reduction <add>, %687, %cst_277 [1] : vector<8x8xf32> to vector<8xf32>
    %689 = vector.shape_cast %688 : vector<8xf32> to vector<8x1xf32>
    %690 = tpu.reciprocal %689 {approx = true} : vector<8x1xf32> -> vector<8x1xf32>
    %691 = vector.broadcast %690 : vector<8x1xf32> to vector<8x8xf32>
    %692 = arith.mulf %687, %691 : vector<8x8xf32>
    %693 = vector.broadcast %677 : vector<1x128xf32> to vector<8x128xf32>
    %694 = arith.mulf %607, %693 : vector<8x128xf32>
    %cst_278 = arith.constant dense<0.000000e+00> : vector<8x128xf32>
    %695 = tpu.matmul %692, %694, %cst_278 {dimension_numbers = #tpu.dot_dimension_numbers<[1], [0], [0], [1], [0, 0, 1, 1], [], []>} : vector<8x8xf32>, vector<8x128xf32>, vector<8x128xf32> -> vector<8x128xf32>
    %c0_279 = arith.constant 0 : index
    %c0_280 = arith.constant 0 : index
    %696 = vector.load %arg9[%c0_279, %c0_280] : memref<128x128xf32, #tpu.memory_space<vmem>>, vector<128x128xf32>
    %cst_281 = arith.constant dense<0.000000e+00> : vector<8x128xf32>
    %697 = tpu.matmul %695, %696, %cst_281 {dimension_numbers = #tpu.dot_dimension_numbers<[1], [0], [0], [1], [0, 0, 1, 1], [], []>} : vector<8x128xf32>, vector<128x128xf32>, vector<8x128xf32> -> vector<8x128xf32>
    %698 = arith.addf %670, %697 : vector<8x128xf32>
    %c96_i32_282 = arith.constant 96 : i32
    %699 = vector.broadcast %c96_i32_282 : i32 to vector<1x128xi32>
    %700 = arith.cmpi sge, %611, %699 : vector<1x128xi32>
    %c128_i32 = arith.constant 128 : i32
    %701 = vector.broadcast %c128_i32 : i32 to vector<1x128xi32>
    %702 = arith.cmpi slt, %611, %701 : vector<1x128xi32>
    %703 = arith.andi %700, %702 : vector<1x128xi1>
    %704 = arith.extui %703 : vector<1x128xi1> to vector<1x128xi32>
    %705 = arith.sitofp %704 : vector<1x128xi32> to vector<1x128xf32>
    %706 = vector.broadcast %705 : vector<1x128xf32> to vector<8x128xf32>
    %707 = arith.mulf %605, %706 : vector<8x128xf32>
    %cst_283 = arith.constant dense<0.000000e+00> : vector<8x8xf32>
    %708 = tpu.matmul %707, %606, %cst_283 {dimension_numbers = #tpu.dot_dimension_numbers<[1], [1], [0], [0], [0, 0, 1, 0], [], []>} : vector<8x128xf32>, vector<8x128xf32>, vector<8x8xf32> -> vector<8x8xf32>
    %cst_284 = arith.constant -1.000000e+30 : f32
    %709 = vector.broadcast %cst_284 : f32 to vector<8x8xf32>
    %710 = arith.select %610, %708, %709 : vector<8x8xi1>, vector<8x8xf32>
    %cst_285 = arith.constant dense<0xFF800000> : vector<8xf32>
    %711 = vector.multi_reduction <maximumf>, %710, %cst_285 [1] : vector<8x8xf32> to vector<8xf32>
    %712 = vector.shape_cast %711 : vector<8xf32> to vector<8x1xf32>
    %713 = vector.broadcast %712 : vector<8x1xf32> to vector<8x8xf32>
    %714 = arith.subf %710, %713 : vector<8x8xf32>
    %715 = math.exp %714 : vector<8x8xf32>
    %cst_286 = arith.constant dense<0.000000e+00> : vector<8xf32>
    %716 = vector.multi_reduction <add>, %715, %cst_286 [1] : vector<8x8xf32> to vector<8xf32>
    %717 = vector.shape_cast %716 : vector<8xf32> to vector<8x1xf32>
    %718 = tpu.reciprocal %717 {approx = true} : vector<8x1xf32> -> vector<8x1xf32>
    %719 = vector.broadcast %718 : vector<8x1xf32> to vector<8x8xf32>
    %720 = arith.mulf %715, %719 : vector<8x8xf32>
    %721 = vector.broadcast %705 : vector<1x128xf32> to vector<8x128xf32>
    %722 = arith.mulf %607, %721 : vector<8x128xf32>
    %cst_287 = arith.constant dense<0.000000e+00> : vector<8x128xf32>
    %723 = tpu.matmul %720, %722, %cst_287 {dimension_numbers = #tpu.dot_dimension_numbers<[1], [0], [0], [1], [0, 0, 1, 1], [], []>} : vector<8x8xf32>, vector<8x128xf32>, vector<8x128xf32> -> vector<8x128xf32>
    %c0_288 = arith.constant 0 : index
    %c0_289 = arith.constant 0 : index
    %724 = vector.load %arg9[%c0_288, %c0_289] : memref<128x128xf32, #tpu.memory_space<vmem>>, vector<128x128xf32>
    %cst_290 = arith.constant dense<0.000000e+00> : vector<8x128xf32>
    %725 = tpu.matmul %723, %724, %cst_290 {dimension_numbers = #tpu.dot_dimension_numbers<[1], [0], [0], [1], [0, 0, 1, 1], [], []>} : vector<8x128xf32>, vector<128x128xf32>, vector<8x128xf32> -> vector<8x128xf32>
    %726 = arith.addf %698, %725 : vector<8x128xf32>
    %c0_291 = arith.constant 0 : index
    %c0_292 = arith.constant 0 : index
    %727 = vector.load %arg11[%c0_291, %c0_292] : memref<128x128xf32, #tpu.memory_space<vmem>>, vector<128x128xf32>
    %cst_293 = arith.constant dense<0.000000e+00> : vector<8x128xf32>
    %728 = tpu.matmul %726, %727, %cst_293 {dimension_numbers = #tpu.dot_dimension_numbers<[1], [0], [0], [1], [0, 0, 1, 1], [], []>} : vector<8x128xf32>, vector<128x128xf32>, vector<8x128xf32> -> vector<8x128xf32>
    %c0_294 = arith.constant 0 : index
    %c0_295 = arith.constant 0 : index
    %729 = vector.load %arg12[%c0_294, %c0_295] : memref<1x128xf32, #tpu.memory_space<vmem>>, vector<1x128xf32>
    %730 = vector.broadcast %729 : vector<1x128xf32> to vector<8x128xf32>
    %731 = arith.addf %728, %730 : vector<8x128xf32>
    %cst_296 = arith.constant 0.000000e+00 : f32
    %732 = vector.broadcast %cst_296 : f32 to vector<8x128xf32>
    %733 = arith.maximumf %731, %732 : vector<8x128xf32>
    %c0_297 = arith.constant 0 : index
    %c0_298 = arith.constant 0 : index
    %734 = vector.load %arg13[%c0_297, %c0_298] : memref<128x128xf32, #tpu.memory_space<vmem>>, vector<128x128xf32>
    %cst_299 = arith.constant dense<0.000000e+00> : vector<8x128xf32>
    %735 = tpu.matmul %733, %734, %cst_299 {dimension_numbers = #tpu.dot_dimension_numbers<[1], [0], [0], [1], [0, 0, 1, 1], [], []>} : vector<8x128xf32>, vector<128x128xf32>, vector<8x128xf32> -> vector<8x128xf32>
    %c0_300 = arith.constant 0 : index
    %c0_301 = arith.constant 0 : index
    %736 = vector.load %arg14[%c0_300, %c0_301] : memref<1x128xf32, #tpu.memory_space<vmem>>, vector<1x128xf32>
    %737 = vector.broadcast %736 : vector<1x128xf32> to vector<8x128xf32>
    %738 = arith.addf %735, %737 : vector<8x128xf32>
    %c0_302 = arith.constant 0 : index
    %c0_303 = arith.constant 0 : index
    %739 = vector.load %arg15[%c0_302, %c0_303] : memref<8x128xf32, #tpu.memory_space<vmem>>, vector<8x128xf32>
    tpu.vector_store %arg15[%c0_302, %c0_303], %738 {strides = array<i32>} : memref<8x128xf32, #tpu.memory_space<vmem>>, vector<8x128xf32>,
    return
  }
}

</mosaic_0001>

<llo_original>
// kernel: tpu_custom_call.1
$region0: #{tpu_custom_call.1}
  #allocation0 [shape = 'u32[]', space=smem, size = 0x4, offset = 0x4, fixed_abs, tag = 'smem constant byte address 0x4 - core index']
  #allocation1 [shape = 'u32[144,128]{1,0:T(1,128)}', space=vmem, size = 0x12000, scoped, tag = 'internal scratch']
  #allocation2 [shape = 'f32[64,512]{1,0:T(8,128)}', space=vmem, size = 0x20000, scoped, tag = 'scratch operand']
  %s0 = inlined_call_operand.vmem [shape: f32[64,16], index: 0, kind: input, shape index: {}]
  %s1 = inlined_call_operand.hbm [shape: f32[16,512], index: 1, kind: input, shape index: {}]
  %s2 = inlined_call_operand.hbm [shape: f32[128,512], index: 2, kind: input, shape index: {}]
  %s3 = inlined_call_operand.hbm [shape: f32[1,512], index: 3, kind: input, shape index: {}]
  %s4 = inlined_call_operand.hbm [shape: f32[128,512], index: 4, kind: input, shape index: {}]
  %s5 = inlined_call_operand.hbm [shape: f32[128,512], index: 5, kind: input, shape index: {}]
  %s6 = inlined_call_operand.hbm [shape: f32[1,512], index: 6, kind: input, shape index: {}]
  %s7 = inlined_call_operand.hbm [shape: f32[128,384], index: 7, kind: input, shape index: {}]
  %s8 = inlined_call_operand.hbm [shape: f32[1,384], index: 8, kind: input, shape index: {}]
  %s9 = inlined_call_operand.hbm [shape: f32[128,128], index: 9, kind: input, shape index: {}]
  %s10 = inlined_call_operand.vmem [shape: f32[1,128], index: 10, kind: input, shape index: {}]
  %s11 = inlined_call_operand.hbm [shape: f32[128,128], index: 11, kind: input, shape index: {}]
  %s12 = inlined_call_operand.hbm [shape: f32[1,128], index: 12, kind: input, shape index: {}]
  %s13 = inlined_call_operand.vmem [shape: f32[128,128], index: 13, kind: input, shape index: {}]
  %s14 = inlined_call_operand.vmem [shape: f32[1,128], index: 14, kind: input, shape index: {}]
  %s15 = inlined_call_operand.hbm [shape: f32[8,128], index: 15, kind: output, shape index: {}]
  %s16 = sld [smem:[#allocation0]]
  $region114: #{tpu_custom_call.1} parent=0
    _
  %s18 = ssub.s32 1, %s16
  %s19 = scalar_select 0, %s18, %s16
  $region1: #{tpu_custom_call.1} parent=0
    #allocation3 [shape = 'u8[32768]{0}', space=vmem, size = 0x8000, scoped, tag = 'input window, operand 1, single buffered']
    #allocation4 [shape = 's32[1]{0}', space=sflag, size = 0x4, scoped, tag = 'scoped memory for tpu_custom_call.1']
    #allocation5 [shape = 's32[1]{0}', space=sflag, size = 0x4, scoped, tag = 'scoped memory for tpu_custom_call.1']
    #allocation6 [shape = 'u8[262144]{0}', space=vmem, size = 0x40000, scoped, tag = 'input window, operand 2, single buffered']
    #allocation7 [shape = 's32[1]{0}', space=sflag, size = 0x4, scoped, tag = 'scoped memory for tpu_custom_call.1']
    #allocation8 [shape = 'u8[2048]{0}', space=vmem, size = 0x800, scoped, tag = 'input window, operand 3, single buffered']
    #allocation9 [shape = 'u8[262144]{0}', space=vmem, size = 0x40000, scoped, tag = 'input window, operand 4, single buffered']
    #allocation10 [shape = 's32[1]{0}', space=sflag, size = 0x4, scoped, tag = 'scoped memory for tpu_custom_call.1']
    #allocation11 [shape = 'u8[262144]{0}', space=vmem, size = 0x40000, scoped, tag = 'input window, operand 5, single buffered']
    #allocation12 [shape = 'u8[2048]{0}', space=vmem, size = 0x800, scoped, tag = 'input window, operand 6, single buffered']
    #allocation13 [shape = 's32[1]{0}', space=sflag, size = 0x4, scoped, tag = 'scoped memory for tpu_custom_call.1']
    #allocation14 [shape = 'u8[196608]{0}', space=vmem, size = 0x30000, scoped, tag = 'input window, operand 7, single buffered']
    #allocation15 [shape = 'u8[1536]{0}', space=vmem, size = 0x800, scoped, tag = 'input window, operand 8, single buffered']
    #allocation16 [shape = 's32[1]{0}', space=sflag, size = 0x4, scoped, tag = 'scoped memory for tpu_custom_call.1']
    #allocation17 [shape = 'u8[65536]{0}', space=vmem, size = 0x10000, scoped, tag = 'input window, operand 9, single buffered']
    #allocation18 [shape = 'u8[65536]{0}', space=vmem, size = 0x10000, scoped, tag = 'input window, operand 11, single buffered']
    #allocation19 [shape = 's32[1]{0}', space=sflag, size = 0x4, scoped, tag = 'scoped memory for tpu_custom_call.1']
    #allocation20 [shape = 'u8[512]{0}', space=vmem, size = 0x400, scoped, tag = 'input window, operand 12, single buffered']
    #allocation21 [shape = 'u8[4096]{0}', space=vmem, size = 0x1000, scoped, tag = 'output window, operand 0, single buffered']
    %20 = vsyncpa [#allocation4], 0
    %21 = vsyncpa [#allocation7], 0
    %22 = vsyncpa [#allocation10], 0
    %23 = vsyncpa [#allocation13], 0
    %24 = vsyncpa [#allocation16], 0
    %25 = vsyncpa [#allocation19], 0
    %26 = vsyncpa [#allocation5], 0
    // Predicated region
    $region2: #{tpu_custom_call.1} parent=1 // pred_check
      _
    $region3: #{tpu_custom_call.1} parent=1 // pred_check_branch
      %28 = sbr.rel (0) target = $region5
    $region4: #{tpu_custom_call.1} parent=1 // pred_region
      _
    $region5: #{tpu_custom_call.1} parent=1 // pred_fallthru
      _
    // Predicated region
    $region6: #{tpu_custom_call.1} parent=1 // pred_check
      _
    $region7: #{tpu_custom_call.1} parent=1 // pred_check_branch
      %30 = sbr.rel (0) target = $region9
    $region8: #{tpu_custom_call.1} parent=1 // pred_region
      %s32 = ssub.s32 1024, 1024
      %33 = vsyncadd [#allocation4], %s32
      %s34 = sshll.u32 [#allocation3], 4
      %s35 = int_to_ptr.vmem [resolvable:$true] %s34
      %40 = dma.hbm_to_vmem [thread:$0]  %s1, 1024, %s35, [#allocation4], 512, 512, 32
    $region9: #{tpu_custom_call.1} parent=1 // pred_fallthru
      _
    // Predicated region
    $region10: #{tpu_custom_call.1} parent=1 // pred_check
      _
    $region11: #{tpu_custom_call.1} parent=1 // pred_check_branch
      %42 = sbr.rel (0) target = $region13
    $region12: #{tpu_custom_call.1} parent=1 // pred_region
      %s44 = ssub.s32 8192, 8192
      %45 = vsyncadd [#allocation7], %s44
      %s46 = sshll.u32 [#allocation6], 4
      %s47 = int_to_ptr.vmem [resolvable:$true] %s46
      %52 = dma.hbm_to_vmem [thread:$0]  %s2, 8192, %s47, [#allocation7], 512, 512, 32
    $region13: #{tpu_custom_call.1} parent=1 // pred_fallthru
      _
    // Predicated region
    $region14: #{tpu_custom_call.1} parent=1 // pred_check
      _
    $region15: #{tpu_custom_call.1} parent=1 // pred_check_branch
      %54 = sbr.rel (0) target = $region17
    $region16: #{tpu_custom_call.1} parent=1 // pred_region
      %s56 = ssub.s32 64, 64
      %57 = vsyncadd [#allocation7], %s56
      %s59 = sshll.u32 [#allocation8], 4
      %s60 = int_to_ptr.vmem [resolvable:$true] %s59
      %62 = dma.hbm_to_vmem [thread:$0]  %s3, 64, %s60, [#allocation7]
    $region17: #{tpu_custom_call.1} parent=1 // pred_fallthru
      _
    // Predicated region
    $region18: #{tpu_custom_call.1} parent=1 // pred_check
      _
    $region19: #{tpu_custom_call.1} parent=1 // pred_check_branch
      %64 = sbr.rel (0) target = $region21
    $region20: #{tpu_custom_call.1} parent=1 // pred_region
      %s66 = ssub.s32 8192, 8192
      %67 = vsyncadd [#allocation10], %s66
      %s68 = sshll.u32 [#allocation9], 4
      %s69 = int_to_ptr.vmem [resolvable:$true] %s68
      %74 = dma.hbm_to_vmem [thread:$0]  %s4, 8192, %s69, [#allocation10], 512, 512, 32
    $region21: #{tpu_custom_call.1} parent=1 // pred_fallthru
      _
    // Predicated region
    $region22: #{tpu_custom_call.1} parent=1 // pred_check
      _
    $region23: #{tpu_custom_call.1} parent=1 // pred_check_branch
      %76 = sbr.rel (0) target = $region25
    $region24: #{tpu_custom_call.1} parent=1 // pred_region
      %s78 = ssub.s32 8192, 8192
      %79 = vsyncadd [#allocation10], %s78
      %s80 = sshll.u32 [#allocation11], 4
      %s81 = int_to_ptr.vmem [resolvable:$true] %s80
      %86 = dma.hbm_to_vmem [thread:$0]  %s5, 8192, %s81, [#allocation10], 512, 512, 32
    $region25: #{tpu_custom_call.1} parent=1 // pred_fallthru
      _
    // Predicated region
    $region26: #{tpu_custom_call.1} parent=1 // pred_check
      _
    $region27: #{tpu_custom_call.1} parent=1 // pred_check_branch
      %88 = sbr.rel (0) target = $region29
    $region28: #{tpu_custom_call.1} parent=1 // pred_region
      %s90 = ssub.s32 64, 64
      %91 = vsyncadd [#allocation13], %s90
      %s93 = sshll.u32 [#allocation12], 4
      %s94 = int_to_ptr.vmem [resolvable:$true] %s93
      %96 = dma.hbm_to_vmem [thread:$0]  %s6, 64, %s94, [#allocation13]
    $region29: #{tpu_custom_call.1} parent=1 // pred_fallthru
      _
    // Predicated region
    $region30: #{tpu_custom_call.1} parent=1 // pred_check
      _
    $region31: #{tpu_custom_call.1} parent=1 // pred_check_branch
      %98 = sbr.rel (0) target = $region33
    $region32: #{tpu_custom_call.1} parent=1 // pred_region
      %s100 = ssub.s32 6144, 6144
      %101 = vsyncadd [#allocation13], %s100
      %s102 = sshll.u32 [#allocation14], 4
      %s103 = int_to_ptr.vmem [resolvable:$true] %s102
      %108 = dma.hbm_to_vmem [thread:$0]  %s7, 6144, %s103, [#allocation13], 384, 384, 24
    $region33: #{tpu_custom_call.1} parent=1 // pred_fallthru
      _
    // Predicated region
    $region34: #{tpu_custom_call.1} parent=1 // pred_check
      _
    $region35: #{tpu_custom_call.1} parent=1 // pred_check_branch
      %110 = sbr.rel (0) target = $region37
    $region36: #{tpu_custom_call.1} parent=1 // pred_region
      %s112 = ssub.s32 48, 48
      %113 = vsyncadd [#allocation16], %s112
      %s115 = sshll.u32 [#allocation15], 4
      %s116 = int_to_ptr.vmem [resolvable:$true] %s115
      %118 = dma.hbm_to_vmem [thread:$0]  %s8, 48, %s116, [#allocation16]
    $region37: #{tpu_custom_call.1} parent=1 // pred_fallthru
      _
    // Predicated region
    $region38: #{tpu_custom_call.1} parent=1 // pred_check
      _
    $region39: #{tpu_custom_call.1} parent=1 // pred_check_branch
      %120 = sbr.rel (0) target = $region41
    $region40: #{tpu_custom_call.1} parent=1 // pred_region
      %s122 = ssub.s32 2048, 2048
      %123 = vsyncadd [#allocation16], %s122
      %s124 = sshll.u32 [#allocation17], 4
      %s125 = int_to_ptr.vmem [resolvable:$true] %s124
      %130 = dma.hbm_to_vmem [thread:$0]  %s9, 2048, %s125, [#allocation16], 128, 128, 8
    $region41: #{tpu_custom_call.1} parent=1 // pred_fallthru
      _
    // Predicated region
    $region42: #{tpu_custom_call.1} parent=1 // pred_check
      _
    $region43: #{tpu_custom_call.1} parent=1 // pred_check_branch
      %132 = sbr.rel (0) target = $region45
    $region44: #{tpu_custom_call.1} parent=1 // pred_region
      _
    $region45: #{tpu_custom_call.1} parent=1 // pred_fallthru
      _
    // Predicated region
    $region46: #{tpu_custom_call.1} parent=1 // pred_check
      _
    $region47: #{tpu_custom_call.1} parent=1 // pred_check_branch
      %134 = sbr.rel (0) target = $region49
    $region48: #{tpu_custom_call.1} parent=1 // pred_region
      %s136 = ssub.s32 2048, 2048
      %137 = vsyncadd [#allocation19], %s136
      %s138 = sshll.u32 [#allocation18], 4
      %s139 = int_to_ptr.vmem [resolvable:$true] %s138
      %144 = dma.hbm_to_vmem [thread:$0]  %s11, 2048, %s139, [#allocation19], 128, 128, 8
    $region49: #{tpu_custom_call.1} parent=1 // pred_fallthru
      _
    // Predicated region
    $region50: #{tpu_custom_call.1} parent=1 // pred_check
      _
    $region51: #{tpu_custom_call.1} parent=1 // pred_check_branch
      %146 = sbr.rel (0) target = $region53
    $region52: #{tpu_custom_call.1} parent=1 // pred_region
      %s148 = ssub.s32 16, 16
      %149 = vsyncadd [#allocation19], %s148
      %s151 = sshll.u32 [#allocation20], 4
      %s152 = int_to_ptr.vmem [resolvable:$true] %s151
      %154 = dma.hbm_to_vmem [thread:$0]  %s12, 16, %s152, [#allocation19]
    $region53: #{tpu_custom_call.1} parent=1 // pred_fallthru
      _
    // Predicated region
    $region54: #{tpu_custom_call.1} parent=1 // pred_check
      _
    $region55: #{tpu_custom_call.1} parent=1 // pred_check_branch
      %156 = sbr.rel (0) target = $region57
    $region56: #{tpu_custom_call.1} parent=1 // pred_region
      _
    $region57: #{tpu_custom_call.1} parent=1 // pred_fallthru
      _
    // Predicated region
    $region58: #{tpu_custom_call.1} parent=1 // pred_check
      _
    $region59: #{tpu_custom_call.1} parent=1 // pred_check_branch
      %158 = sbr.rel (0) target = $region61
    $region60: #{tpu_custom_call.1} parent=1 // pred_region
      _
    $region61: #{tpu_custom_call.1} parent=1 // pred_fallthru
      _
    // Predicated region
    $region62: #{tpu_custom_call.1} parent=1 // pred_check
      _
    $region63: #{tpu_custom_call.1} parent=1 // pred_check_branch
      %160 = sbr.rel (0) target = $region65
    $region64: #{tpu_custom_call.1} parent=1 // pred_region
      %161 = dma.done [#allocation4], 1024
    $region65: #{tpu_custom_call.1} parent=1 // pred_fallthru
      _
    // Predicated region
    $region66: #{tpu_custom_call.1} parent=1 // pred_check
      _
    $region67: #{tpu_custom_call.1} parent=1 // pred_check_branch
      %163 = sbr.rel (0) target = $region69
    $region68: #{tpu_custom_call.1} parent=1 // pred_region
      %164 = dma.done [#allocation7], 8192
    $region69: #{tpu_custom_call.1} parent=1 // pred_fallthru
      _
    // Predicated region
    $region70: #{tpu_custom_call.1} parent=1 // pred_check
      _
    $region71: #{tpu_custom_call.1} parent=1 // pred_check_branch
      %166 = sbr.rel (0) target = $region73
    $region72: #{tpu_custom_call.1} parent=1 // pred_region
      %167 = dma.done [#allocation7], 64
    $region73: #{tpu_custom_call.1} parent=1 // pred_fallthru
      _
    // Predicated region
    $region74: #{tpu_custom_call.1} parent=1 // pred_check
      _
    $region75: #{tpu_custom_call.1} parent=1 // pred_check_branch
      %169 = sbr.rel (0) target = $region77
    $region76: #{tpu_custom_call.1} parent=1 // pred_region
      %170 = dma.done [#allocation10], 8192
    $region77: #{tpu_custom_call.1} parent=1 // pred_fallthru
      _
    // Predicated region
    $region78: #{tpu_custom_call.1} parent=1 // pred_check
      _
    $region79: #{tpu_custom_call.1} parent=1 // pred_check_branch
      %172 = sbr.rel (0) target = $region81
    $region80: #{tpu_custom_call.1} parent=1 // pred_region
      %173 = dma.done [#allocation10], 8192
    $region81: #{tpu_custom_call.1} parent=1 // pred_fallthru
      _
    // Predicated region
    $region82: #{tpu_custom_call.1} parent=1 // pred_check
      _
    $region83: #{tpu_custom_call.1} parent=1 // pred_check_branch
      %175 = sbr.rel (0) target = $region85
    $region84: #{tpu_custom_call.1} parent=1 // pred_region
      %176 = dma.done [#allocation13], 64
    $region85: #{tpu_custom_call.1} parent=1 // pred_fallthru
      _
    // Predicated region
    $region86: #{tpu_custom_call.1} parent=1 // pred_check
      _
    $region87: #{tpu_custom_call.1} parent=1 // pred_check_branch
      %178 = sbr.rel (0) target = $region89
    $region88: #{tpu_custom_call.1} parent=1 // pred_region
      %179 = dma.done [#allocation13], 6144
    $region89: #{tpu_custom_call.1} parent=1 // pred_fallthru
      _
    // Predicated region
    $region90: #{tpu_custom_call.1} parent=1 // pred_check
      _
    $region91: #{tpu_custom_call.1} parent=1 // pred_check_branch
      %181 = sbr.rel (0) target = $region93
    $region92: #{tpu_custom_call.1} parent=1 // pred_region
      %182 = dma.done [#allocation16], 48
    $region93: #{tpu_custom_call.1} parent=1 // pred_fallthru
      _
    // Predicated region
    $region94: #{tpu_custom_call.1} parent=1 // pred_check
      _
    $region95: #{tpu_custom_call.1} parent=1 // pred_check_branch
      %184 = sbr.rel (0) target = $region97
    $region96: #{tpu_custom_call.1} parent=1 // pred_region
      %185 = dma.done [#allocation16], 2048
    $region97: #{tpu_custom_call.1} parent=1 // pred_fallthru
      _
    // Predicated region
    $region98: #{tpu_custom_call.1} parent=1 // pred_check
      _
    $region99: #{tpu_custom_call.1} parent=1 // pred_check_branch
      %187 = sbr.rel (0) target = $region101
    $region100: #{tpu_custom_call.1} parent=1 // pred_region
      %188 = dma.done [#allocation19], 2048
    $region101: #{tpu_custom_call.1} parent=1 // pred_fallthru
      _
    // Predicated region
    $region102: #{tpu_custom_call.1} parent=1 // pred_check
      _
    $region103: #{tpu_custom_call.1} parent=1 // pred_check_branch
      %190 = sbr.rel (0) target = $region105
    $region104: #{tpu_custom_call.1} parent=1 // pred_region
      %191 = dma.done [#allocation19], 16
    $region105: #{tpu_custom_call.1} parent=1 // pred_fallthru
      _
    %v192 = vld [vmem:[%s0] sm:$0xff]
    %v193 = vld [vmem:[%s0 + $0x8] sm:$0xff]
    %v194 = vld [vmem:[%s0 + $0x10] sm:$0xff]
    %v195 = vld [vmem:[%s0 + $0x18] sm:$0xff]
    %v196 = vld [vmem:[%s0 + $0x20] sm:$0xff]
    %v197 = vld [vmem:[%s0 + $0x28] sm:$0xff]
    %v198 = vld [vmem:[%s0 + $0x30] sm:$0xff]
    %v199 = vld [vmem:[%s0 + $0x38] sm:$0xff]
    %v200 = vld [vmem:[#allocation3] sm:$0xff]
    %v201 = vld [vmem:[#allocation3 + $0x8] sm:$0xff]
    %v202 = vld [vmem:[#allocation3 + $0x10] sm:$0xff]
    %v203 = vld [vmem:[#allocation3 + $0x18] sm:$0xff]
    %v204 = vld [vmem:[#allocation3 + $0x20] sm:$0xff]
    %v205 = vld [vmem:[#allocation3 + $0x28] sm:$0xff]
    %v206 = vld [vmem:[#allocation3 + $0x30] sm:$0xff]
    %v207 = vld [vmem:[#allocation3 + $0x38] sm:$0xff]
    %v208 = vld [vmem:[#allocation8] sm:$0xf]
    %v210 = vlaneseq
    %v211 = vshrl.u32 %v210, 7
    %v212 = vsub.s32 0, %v211
    %v213 = vrot.slane %v208, %v212
    %v214 = vlaneseq
    %v215 = vshrl.u32 %v214, 7
    %v216 = vsub.s32 1, %v215
    %v217 = vrot.slane %v208, %v216
    %v218 = vlaneseq
    %v219 = vshrl.u32 %v218, 7
    %v220 = vsub.s32 2, %v219
    %v221 = vrot.slane %v208, %v220
    %v222 = vlaneseq
    %v223 = vshrl.u32 %v222, 7
    %v224 = vsub.s32 3, %v223
    %v225 = vrot.slane %v208, %v224
    %vm230 = vcmask 130048
    %v232 = vsel %vm230, %v192, 0
    %v235 = vsel %vm230, %v193, 0
    %v238 = vsel %vm230, %v194, 0
    %v241 = vsel %vm230, %v195, 0
    %v244 = vsel %vm230, %v196, 0
    %v247 = vsel %vm230, %v197, 0
    %v250 = vsel %vm230, %v198, 0
    %v253 = vsel %vm230, %v199, 0
    %255 = vmatprep.subr.mxu0 %v201
    %256 = vmatpush1.msra.mxu0 %v200
    %257 = vmatprep.subr.mxu0 %v205
    %258 = vmatpush1.msra.mxu0 %v204
    %259 = vmatprep.subr.mxu0 0.0
    %260 = vmatpush1.msra.mxu0 0.0
    %261 = vmatprep.subr.mxu0 0.0
    %262 = vmatpush1.msra.mxu0 0.0
    %263 = vmatprep.subr.mxu0 0.0
    %264 = vmatpush1.msra.mxu0 0.0
    %265 = vmatprep.subr.mxu0 0.0
    %266 = vmatpush1.msra.mxu0 0.0
    %267 = vmatprep.subr.mxu0 0.0
    %268 = vmatpush1.msra.mxu0 0.0
    %269 = vmatprep.subr.mxu0 0.0
    %270 = vmatpush1.msra.mxu0 0.0
    %271 = vmatprep.subr.mxu0 0.0
    %272 = vmatpush1.msra.mxu0 0.0
    %273 = vmatprep.subr.mxu0 0.0
    %274 = vmatpush1.msra.mxu0 0.0
    %275 = vmatprep.subr.mxu0 0.0
    %276 = vmatpush1.msra.mxu0 0.0
    %277 = vmatprep.subr.mxu0 0.0
    %278 = vmatpush1.msra.mxu0 0.0
    %279 = vmatprep.subr.mxu0 0.0
    %280 = vmatpush1.msra.mxu0 0.0
    %281 = vmatprep.subr.mxu0 0.0
    %282 = vmatpush1.msra.mxu0 0.0
    %283 = vmatprep.subr.mxu0 0.0
    %284 = vmatpush1.msra.mxu0 0.0
    %285 = vmatprep.subr.mxu0 0.0
    %286 = vmatpush1.msra.mxu0 0.0
    %287 = vmatprep.subr.mxu0 0.0
    %288 = vmatpush1.msra.mxu0 0.0
    %289 = vmatprep.subr.mxu0 0.0
    %290 = vmatpush1.msra.mxu0 0.0
    %291 = vmatprep.subr.mxu0 0.0
    %292 = vmatpush1.msra.mxu0 0.0
    %293 = vmatprep.subr.mxu0 0.0
    %294 = vmatpush1.msra.mxu0 0.0
    %295 = vmatprep.subr.mxu0 0.0
    %296 = vmatpush1.msra.mxu0 0.0
    %297 = vmatprep.subr.mxu0 0.0
    %298 = vmatpush1.msra.mxu0 0.0
    %299 = vmatprep.subr.mxu0 0.0
    %300 = vmatpush1.msra.mxu0 0.0
    %301 = vmatprep.subr.mxu0 0.0
    %302 = vmatpush1.msra.mxu0 0.0
    %303 = vmatprep.subr.mxu0 0.0
    %304 = vmatpush1.msra.mxu0 0.0
    %305 = vmatprep.subr.mxu0 0.0
    %306 = vmatpush1.msra.mxu0 0.0
    %307 = vmatprep.subr.mxu0 0.0
    %308 = vmatpush1.msra.mxu0 0.0
    %309 = vmatprep.subr.mxu0 0.0
    %310 = vmatpush1.msra.mxu0 0.0
    %311 = vmatprep.subr.mxu0 0.0
    %312 = vmatpush1.msra.mxu0 0.0
    %313 = vmatprep.subr.mxu0 0.0
    %314 = vmatpush1.msra.mxu0 0.0
    %315 = vmatprep.subr.mxu0 0.0
    %316 = vmatpush1.msra.mxu0 0.0
    %317 = vmatprep.subr.mxu0 0.0
    %318 = vmatpush1.msra.mxu0 0.0
    %319 = vmatprep.mubr.f32.mxu0 0.0
    %320 = vmatmul.mubr.f32.gmra.mrb[0].mxu0 %v232
    %v321 = vpop.f32.mrb[0].mxu0
    %v322 = vadd.f32 %v213, %v321
    %v323 = vpop.f32.mrb[0].mxu0
    %v324 = vadd.f32 %v217, %v323
    %325 = vmatprep.mubr.f32.mxu0 0.0
    %326 = vmatmul.mubr.f32.gmra.mrb[0].mxu0 %v235
    %v327 = vpop.f32.mrb[0].mxu0
    %v328 = vadd.f32 %v213, %v327
    %v329 = vpop.f32.mrb[0].mxu0
    %v330 = vadd.f32 %v217, %v329
    %331 = vmatprep.mubr.f32.mxu0 0.0
    %332 = vmatmul.mubr.f32.gmra.mrb[0].mxu0 %v238
    %v333 = vpop.f32.mrb[0].mxu0
    %v334 = vadd.f32 %v213, %v333
    %v335 = vpop.f32.mrb[0].mxu0
    %v336 = vadd.f32 %v217, %v335
    %337 = vmatprep.mubr.f32.mxu0 0.0
    %338 = vmatmul.mubr.f32.gmra.mrb[0].mxu0 %v241
    %v339 = vpop.f32.mrb[0].mxu0
    %v340 = vadd.f32 %v213, %v339
    %v341 = vpop.f32.mrb[0].mxu0
    %v342 = vadd.f32 %v217, %v341
    %343 = vmatprep.mubr.f32.mxu0 0.0
    %344 = vmatmul.mubr.f32.gmra.mrb[0].mxu0 %v244
    %v345 = vpop.f32.mrb[0].mxu0
    %v346 = vadd.f32 %v213, %v345
    %v347 = vpop.f32.mrb[0].mxu0
    %v348 = vadd.f32 %v217, %v347
    %349 = vmatprep.mubr.f32.mxu0 0.0
    %350 = vmatmul.mubr.f32.gmra.mrb[0].mxu0 %v247
    %v351 = vpop.f32.mrb[0].mxu0
    %v352 = vadd.f32 %v213, %v351
    %v353 = vpop.f32.mrb[0].mxu0
    %v354 = vadd.f32 %v217, %v353
    %355 = vmatprep.mubr.f32.mxu0 0.0
    %356 = vmatmul.mubr.f32.gmra.mrb[0].mxu0 %v250
    %v357 = vpop.f32.mrb[0].mxu0
    %v358 = vadd.f32 %v213, %v357
    %v359 = vpop.f32.mrb[0].mxu0
    %v360 = vadd.f32 %v217, %v359
    %361 = vmatprep.mubr.f32.mxu0 0.0
    %362 = vmatmul.mubr.f32.gmra.mrb[0].mxu0 %v253
    %v363 = vpop.f32.mrb[0].mxu0
    %v364 = vadd.f32 %v213, %v363
    %v365 = vpop.f32.mrb[0].mxu0
    %v366 = vadd.f32 %v217, %v365
    %367 = vdwg.mxu0
    %368 = vmatprep.subr.mxu0 %v203
    %369 = vmatpush1.msra.mxu0 %v202
    %370 = vmatprep.subr.mxu0 %v207
    %371 = vmatpush1.msra.mxu0 %v206
    %372 = vmatprep.subr.mxu0 0.0
    %373 = vmatpush1.msra.mxu0 0.0
    %374 = vmatprep.subr.mxu0 0.0
    %375 = vmatpush1.msra.mxu0 0.0
    %376 = vmatprep.subr.mxu0 0.0
    %377 = vmatpush1.msra.mxu0 0.0
    %378 = vmatprep.subr.mxu0 0.0
    %379 = vmatpush1.msra.mxu0 0.0
    %380 = vmatprep.subr.mxu0 0.0
    %381 = vmatpush1.msra.mxu0 0.0
    %382 = vmatprep.subr.mxu0 0.0
    %383 = vmatpush1.msra.mxu0 0.0
    %384 = vmatprep.subr.mxu0 0.0
    %385 = vmatpush1.msra.mxu0 0.0
    %386 = vmatprep.subr.mxu0 0.0
    %387 = vmatpush1.msra.mxu0 0.0
    %388 = vmatprep.subr.mxu0 0.0
    %389 = vmatpush1.msra.mxu0 0.0
    %390 = vmatprep.subr.mxu0 0.0
    %391 = vmatpush1.msra.mxu0 0.0
    %392 = vmatprep.subr.mxu0 0.0
    %393 = vmatpush1.msra.mxu0 0.0
    %394 = vmatprep.subr.mxu0 0.0
    %395 = vmatpush1.msra.mxu0 0.0
    %396 = vmatprep.subr.mxu0 0.0
    %397 = vmatpush1.msra.mxu0 0.0
    %398 = vmatprep.subr.mxu0 0.0
    %399 = vmatpush1.msra.mxu0 0.0
    %400 = vmatprep.subr.mxu0 0.0
    %401 = vmatpush1.msra.mxu0 0.0
    %402 = vmatprep.subr.mxu0 0.0
    %403 = vmatpush1.msra.mxu0 0.0
    %404 = vmatprep.subr.mxu0 0.0
    %405 = vmatpush1.msra.mxu0 0.0
    %406 = vmatprep.subr.mxu0 0.0
    %407 = vmatpush1.msra.mxu0 0.0
    %408 = vmatprep.subr.mxu0 0.0
    %409 = vmatpush1.msra.mxu0 0.0
    %410 = vmatprep.subr.mxu0 0.0
    %411 = vmatpush1.msra.mxu0 0.0
    %412 = vmatprep.subr.mxu0 0.0
    %413 = vmatpush1.msra.mxu0 0.0
    %414 = vmatprep.subr.mxu0 0.0
    %415 = vmatpush1.msra.mxu0 0.0
    %416 = vmatprep.subr.mxu0 0.0
    %417 = vmatpush1.msra.mxu0 0.0
    %418 = vmatprep.subr.mxu0 0.0
    %419 = vmatpush1.msra.mxu0 0.0
    %420 = vmatprep.subr.mxu0 0.0
    %421 = vmatpush1.msra.mxu0 0.0
    %422 = vmatprep.subr.mxu0 0.0
    %423 = vmatpush1.msra.mxu0 0.0
    %424 = vmatprep.subr.mxu0 0.0
    %425 = vmatpush1.msra.mxu0 0.0
    %426 = vmatprep.subr.mxu0 0.0
    %427 = vmatpush1.msra.mxu0 0.0
    %428 = vmatprep.subr.mxu0 0.0
    %429 = vmatpush1.msra.mxu0 0.0
    %430 = vmatprep.subr.mxu0 0.0
    %431 = vmatpush1.msra.mxu0 0.0
    %432 = vmatprep.mubr.f32.mxu0 0.0
    %433 = vmatmul.mubr.f32.gmra.mrb[0].mxu0 %v232
    %v434 = vpop.f32.mrb[0].mxu0
    %v435 = vadd.f32 %v221, %v434
    %v436 = vpop.f32.mrb[0].mxu0
    %v437 = vadd.f32 %v225, %v436
    %438 = vmatprep.mubr.f32.mxu0 0.0
    %439 = vmatmul.mubr.f32.gmra.mrb[0].mxu0 %v235
    %v440 = vpop.f32.mrb[0].mxu0
    %v441 = vadd.f32 %v221, %v440
    %v442 = vpop.f32.mrb[0].mxu0
    %v443 = vadd.f32 %v225, %v442
    %444 = vmatprep.mubr.f32.mxu0 0.0
    %445 = vmatmul.mubr.f32.gmra.mrb[0].mxu0 %v238
    %v446 = vpop.f32.mrb[0].mxu0
    %v447 = vadd.f32 %v221, %v446
    %v448 = vpop.f32.mrb[0].mxu0
    %v449 = vadd.f32 %v225, %v448
    %450 = vmatprep.mubr.f32.mxu0 0.0
    %451 = vmatmul.mubr.f32.gmra.mrb[0].mxu0 %v241
    %v452 = vpop.f32.mrb[0].mxu0
    %v453 = vadd.f32 %v221, %v452
    %v454 = vpop.f32.mrb[0].mxu0
    %v455 = vadd.f32 %v225, %v454
    %456 = vmatprep.mubr.f32.mxu0 0.0
    %457 = vmatmul.mubr.f32.gmra.mrb[0].mxu0 %v244
    %v458 = vpop.f32.mrb[0].mxu0
    %v459 = vadd.f32 %v221, %v458
    %v460 = vpop.f32.mrb[0].mxu0
    %v461 = vadd.f32 %v225, %v460
    %462 = vmatprep.mubr.f32.mxu0 0.0
    %463 = vmatmul.mubr.f32.gmra.mrb[0].mxu0 %v247
    %v464 = vpop.f32.mrb[0].mxu0
    %v465 = vadd.f32 %v221, %v464
    %v466 = vpop.f32.mrb[0].mxu0
    %v467 = vadd.f32 %v225, %v466
    %468 = vmatprep.mubr.f32.mxu0 0.0
    %469 = vmatmul.mubr.f32.gmra.mrb[0].mxu0 %v250
    %v470 = vpop.f32.mrb[0].mxu0
    %v471 = vadd.f32 %v221, %v470
    %v472 = vpop.f32.mrb[0].mxu0
    %v473 = vadd.f32 %v225, %v472
    %474 = vmatprep.mubr.f32.mxu0 0.0
    %475 = vmatmul.mubr.f32.gmra.mrb[0].mxu0 %v253
    %v476 = vpop.f32.mrb[0].mxu0
    %v477 = vadd.f32 %v221, %v476
    %v478 = vpop.f32.mrb[0].mxu0
    %v479 = vadd.f32 %v225, %v478
    %480 = vdwg.mxu0
    %481 = vst [vmem:[#allocation2] sm:$0xff] %v322
    %482 = vst [vmem:[#allocation2 + $0x8] sm:$0xff] %v324
    %483 = vst [vmem:[#allocation2 + $0x10] sm:$0xff] %v435
    %484 = vst [vmem:[#allocation2 + $0x18] sm:$0xff] %v437
    %485 = vst [vmem:[#allocation2 + $0x20] sm:$0xff] %v328
    %486 = vst [vmem:[#allocation2 + $0x28] sm:$0xff] %v330
    %487 = vst [vmem:[#allocation2 + $0x30] sm:$0xff] %v441
    %488 = vst [vmem:[#allocation2 + $0x38] sm:$0xff] %v443
    %489 = vst [vmem:[#allocation2 + $0x40] sm:$0xff] %v334
    %490 = vst [vmem:[#allocation2 + $0x48] sm:$0xff] %v336
    %491 = vst [vmem:[#allocation2 + $0x50] sm:$0xff] %v447
    %492 = vst [vmem:[#allocation2 + $0x58] sm:$0xff] %v449
    %493 = vst [vmem:[#allocation2 + $0x60] sm:$0xff] %v340
    %494 = vst [vmem:[#allocation2 + $0x68] sm:$0xff] %v342
    %495 = vst [vmem:[#allocation2 + $0x70] sm:$0xff] %v453
    %496 = vst [vmem:[#allocation2 + $0x78] sm:$0xff] %v455
    %497 = vst [vmem:[#allocation2 + $0x80] sm:$0xff] %v346
    %498 = vst [vmem:[#allocation2 + $0x88] sm:$0xff] %v348
    %499 = vst [vmem:[#allocation2 + $0x90] sm:$0xff] %v459
    %500 = vst [vmem:[#allocation2 + $0x98] sm:$0xff] %v461
    %501 = vst [vmem:[#allocation2 + $0xa0] sm:$0xff] %v352
    %502 = vst [vmem:[#allocation2 + $0xa8] sm:$0xff] %v354
    %503 = vst [vmem:[#allocation2 + $0xb0] sm:$0xff] %v465
    %504 = vst [vmem:[#allocation2 + $0xb8] sm:$0xff] %v467
    %505 = vst [vmem:[#allocation2 + $0xc0] sm:$0xff] %v358
    %506 = vst [vmem:[#allocation2 + $0xc8] sm:$0xff] %v360
    %507 = vst [vmem:[#allocation2 + $0xd0] sm:$0xff] %v471
    %508 = vst [vmem:[#allocation2 + $0xd8] sm:$0xff] %v473
    %509 = vst [vmem:[#allocation2 + $0xe0] sm:$0xff] %v364
    %510 = vst [vmem:[#allocation2 + $0xe8] sm:$0xff] %v366
    %511 = vst [vmem:[#allocation2 + $0xf0] sm:$0xff] %v477
    %512 = vst [vmem:[#allocation2 + $0xf8] sm:$0xff] %v479
    %v513 = vld [vmem:[#allocation2] sm:$0xff]
    %v514 = vld [vmem:[#allocation2 + $0x8] sm:$0xff]
    %v515 = vld [vmem:[#allocation2 + $0x10] sm:$0xff]
    %v516 = vld [vmem:[#allocation2 + $0x18] sm:$0xff]
    %v517 = vld [vmem:[#allocation6] sm:$0xff]
    %v518 = vld [vmem:[#allocation6 + $0x8] sm:$0xff]
    %v519 = vld [vmem:[#allocation6 + $0x10] sm:$0xff]
    %v520 = vld [vmem:[#allocation6 + $0x18] sm:$0xff]
    %v521 = vld [vmem:[#allocation6 + $0x20] sm:$0xff]
    %v522 = vld [vmem:[#allocation6 + $0x28] sm:$0xff]
    %v523 = vld [vmem:[#allocation6 + $0x30] sm:$0xff]
    %v524 = vld [vmem:[#allocation6 + $0x38] sm:$0xff]
    %v525 = vld [vmem:[#allocation6 + $0x40] sm:$0xff]
    %v526 = vld [vmem:[#allocation6 + $0x48] sm:$0xff]
    %v527 = vld [vmem:[#allocation6 + $0x50] sm:$0xff]
    %v528 = vld [vmem:[#allocation6 + $0x58] sm:$0xff]
    %v529 = vld [vmem:[#allocation6 + $0x60] sm:$0xff]
    %v530 = vld [vmem:[#allocation6 + $0x68] sm:$0xff]
    %v531 = vld [vmem:[#allocation6 + $0x70] sm:$0xff]
    %v532 = vld [vmem:[#allocation6 + $0x78] sm:$0xff]
    %v533 = vld [vmem:[#allocation6 + $0x80] sm:$0xff]
    %v534 = vld [vmem:[#allocation6 + $0x88] sm:$0xff]
    %v535 = vld [vmem:[#allocation6 + $0x90] sm:$0xff]
    %v536 = vld [vmem:[#allocation6 + $0x98] sm:$0xff]
    %v537 = vld [vmem:[#allocation6 + $0xa0] sm:$0xff]
    %v538 = vld [vmem:[#allocation6 + $0xa8] sm:$0xff]
    %v539 = vld [vmem:[#allocation6 + $0xb0] sm:$0xff]
    %v540 = vld [vmem:[#allocation6 + $0xb8] sm:$0xff]
    %v541 = vld [vmem:[#allocation6 + $0xc0] sm:$0xff]
    %v542 = vld [vmem:[#allocation6 + $0xc8] sm:$0xff]
    %v543 = vld [vmem:[#allocation6 + $0xd0] sm:$0xff]
    %v544 = vld [vmem:[#allocation6 + $0xd8] sm:$0xff]
    %v545 = vld [vmem:[#allocation6 + $0xe0] sm:$0xff]
    %v546 = vld [vmem:[#allocation6 + $0xe8] sm:$0xff]
    %v547 = vld [vmem:[#allocation6 + $0xf0] sm:$0xff]
    %v548 = vld [vmem:[#allocation6 + $0xf8] sm:$0xff]
    %v549 = vld [vmem:[#allocation6 + $0x100] sm:$0xff]
    %v550 = vld [vmem:[#allocation6 + $0x108] sm:$0xff]
    %v551 = vld [vmem:[#allocation6 + $0x110] sm:$0xff]
    %v552 = vld [vmem:[#allocation6 + $0x118] sm:$0xff]
    %v553 = vld [vmem:[#allocation6 + $0x120] sm:$0xff]
    %v554 = vld [vmem:[#allocation6 + $0x128] sm:$0xff]
    %v555 = vld [vmem:[#allocation6 + $0x130] sm:$0xff]
    %v556 = vld [vmem:[#allocation6 + $0x138] sm:$0xff]
    %v557 = vld [vmem:[#allocation6 + $0x140] sm:$0xff]
    %v558 = vld [vmem:[#allocation6 + $0x148] sm:$0xff]
    %v559 = vld [vmem:[#allocation6 + $0x150] sm:$0xff]
    %v560 = vld [vmem:[#allocation6 + $0x158] sm:$0xff]
    %v561 = vld [vmem:[#allocation6 + $0x160] sm:$0xff]
    %v562 = vld [vmem:[#allocation6 + $0x168] sm:$0xff]
    %v563 = vld [vmem:[#allocation6 + $0x170] sm:$0xff]
    %v564 = vld [vmem:[#allocation6 + $0x178] sm:$0xff]
    %v565 = vld [vmem:[#allocation6 + $0x180] sm:$0xff]
    %v566 = vld [vmem:[#allocation6 + $0x188] sm:$0xff]
    %v567 = vld [vmem:[#allocation6 + $0x190] sm:$0xff]
    %v568 = vld [vmem:[#allocation6 + $0x198] sm:$0xff]
    %v569 = vld [vmem:[#allocation6 + $0x1a0] sm:$0xff]
    %v570 = vld [vmem:[#allocation6 + $0x1a8] sm:$0xff]
    %v571 = vld [vmem:[#allocation6 + $0x1b0] sm:$0xff]
    %v572 = vld [vmem:[#allocation6 + $0x1b8] sm:$0xff]
    %v573 = vld [vmem:[#allocation6 + $0x1c0] sm:$0xff]
    %v574 = vld [vmem:[#allocation6 + $0x1c8] sm:$0xff]
    %v575 = vld [vmem:[#allocation6 + $0x1d0] sm:$0xff]
    %v576 = vld [vmem:[#allocation6 + $0x1d8] sm:$0xff]
    %v577 = vld [vmem:[#allocation6 + $0x1e0] sm:$0xff]
    %v578 = vld [vmem:[#allocation6 + $0x1e8] sm:$0xff]
    %v579 = vld [vmem:[#allocation6 + $0x1f0] sm:$0xff]
    %v580 = vld [vmem:[#allocation6 + $0x1f8] sm:$0xff]
    %581 = vmatprep.subr.mxu0 %v518
    %582 = vmatpush1.msra.mxu0 %v517
    %583 = vmatprep.subr.mxu0 %v522
    %584 = vmatpush1.msra.mxu0 %v521
    %585 = vmatprep.subr.mxu0 %v526
    %586 = vmatpush1.msra.mxu0 %v525
    %587 = vmatprep.subr.mxu0 %v530
    %588 = vmatpush1.msra.mxu0 %v529
    %589 = vmatprep.subr.mxu0 %v534
    %590 = vmatpush1.msra.mxu0 %v533
    %591 = vmatprep.subr.mxu0 %v538
    %592 = vmatpush1.msra.mxu0 %v537
    %593 = vmatprep.subr.mxu0 %v542
    %594 = vmatpush1.msra.mxu0 %v541
    %595 = vmatprep.subr.mxu0 %v546
    %596 = vmatpush1.msra.mxu0 %v545
    %597 = vmatprep.subr.mxu0 %v550
    %598 = vmatpush1.msra.mxu0 %v549
    %599 = vmatprep.subr.mxu0 %v554
    %600 = vmatpush1.msra.mxu0 %v553
    %601 = vmatprep.subr.mxu0 %v558
    %602 = vmatpush1.msra.mxu0 %v557
    %603 = vmatprep.subr.mxu0 %v562
    %604 = vmatpush1.msra.mxu0 %v561
    %605 = vmatprep.subr.mxu0 %v566
    %606 = vmatpush1.msra.mxu0 %v565
    %607 = vmatprep.subr.mxu0 %v570
    %608 = vmatpush1.msra.mxu0 %v569
    %609 = vmatprep.subr.mxu0 %v574
    %610 = vmatpush1.msra.mxu0 %v573
    %611 = vmatprep.subr.mxu0 %v578
    %612 = vmatpush1.msra.mxu0 %v577
    %613 = vmatprep.subr.mxu0 0.0
    %614 = vmatpush1.msra.mxu0 0.0
    %615 = vmatprep.subr.mxu0 0.0
    %616 = vmatpush1.msra.mxu0 0.0
    %617 = vmatprep.subr.mxu0 0.0
    %618 = vmatpush1.msra.mxu0 0.0
    %619 = vmatprep.subr.mxu0 0.0
    %620 = vmatpush1.msra.mxu0 0.0
    %621 = vmatprep.subr.mxu0 0.0
    %622 = vmatpush1.msra.mxu0 0.0
    %623 = vmatprep.subr.mxu0 0.0
    %624 = vmatpush1.msra.mxu0 0.0
    %625 = vmatprep.subr.mxu0 0.0
    %626 = vmatpush1.msra.mxu0 0.0
    %627 = vmatprep.subr.mxu0 0.0
    %628 = vmatpush1.msra.mxu0 0.0
    %629 = vmatprep.subr.mxu0 0.0
    %630 = vmatpush1.msra.mxu0 0.0
    %631 = vmatprep.subr.mxu0 0.0
    %632 = vmatpush1.msra.mxu0 0.0
    %633 = vmatprep.subr.mxu0 0.0
    %634 = vmatpush1.msra.mxu0 0.0
    %635 = vmatprep.subr.mxu0 0.0
    %636 = vmatpush1.msra.mxu0 0.0
    %637 = vmatprep.subr.mxu0 0.0
    %638 = vmatpush1.msra.mxu0 0.0
    %639 = vmatprep.subr.mxu0 0.0
    %640 = vmatpush1.msra.mxu0 0.0
    %641 = vmatprep.subr.mxu0 0.0
    %642 = vmatpush1.msra.mxu0 0.0
    %643 = vmatprep.subr.mxu0 0.0
    %644 = vmatpush1.msra.mxu0 0.0
    %645 = vmatprep.mubr.f32.mxu0 0.0
    %646 = vmatmul.mubr.f32.gmra.mrb[0].mxu0 0.0
    %v647 = vpop.f32.mrb[0].mxu0
    %v648 = vadd.f32 0.0, %v647
    %v649 = vpop.f32.mrb[0].mxu0
    %v650 = vadd.f32 0.0, %v649
    %651 = vdwg.mxu0
    %652 = vmatprep.subr.mxu0 %v520
    %653 = vmatpush1.msra.mxu0 %v519
    %654 = vmatprep.subr.mxu0 %v524
    %655 = vmatpush1.msra.mxu0 %v523
    %656 = vmatprep.subr.mxu0 %v528
    %657 = vmatpush1.msra.mxu0 %v527
    %658 = vmatprep.subr.mxu0 %v532
    %659 = vmatpush1.msra.mxu0 %v531
    %660 = vmatprep.subr.mxu0 %v536
    %661 = vmatpush1.msra.mxu0 %v535
    %662 = vmatprep.subr.mxu0 %v540
    %663 = vmatpush1.msra.mxu0 %v539
    %664 = vmatprep.subr.mxu0 %v544
    %665 = vmatpush1.msra.mxu0 %v543
    %666 = vmatprep.subr.mxu0 %v548
    %667 = vmatpush1.msra.mxu0 %v547
    %668 = vmatprep.subr.mxu0 %v552
    %669 = vmatpush1.msra.mxu0 %v551
    %670 = vmatprep.subr.mxu0 %v556
    %671 = vmatpush1.msra.mxu0 %v555
    %672 = vmatprep.subr.mxu0 %v560
    %673 = vmatpush1.msra.mxu0 %v559
    %674 = vmatprep.subr.mxu0 %v564
    %675 = vmatpush1.msra.mxu0 %v563
    %676 = vmatprep.subr.mxu0 %v568
    %677 = vmatpush1.msra.mxu0 %v567
    %678 = vmatprep.subr.mxu0 %v572
    %679 = vmatpush1.msra.mxu0 %v571
    %680 = vmatprep.subr.mxu0 %v576
    %681 = vmatpush1.msra.mxu0 %v575
    %682 = vmatprep.subr.mxu0 %v580
    %683 = vmatpush1.msra.mxu0 %v579
    %684 = vmatprep.subr.mxu0 0.0
    %685 = vmatpush1.msra.mxu0 0.0
    %686 = vmatprep.subr.mxu0 0.0
    %687 = vmatpush1.msra.mxu0 0.0
    %688 = vmatprep.subr.mxu0 0.0
    %689 = vmatpush1.msra.mxu0 0.0
    %690 = vmatprep.subr.mxu0 0.0
    %691 = vmatpush1.msra.mxu0 0.0
    %692 = vmatprep.subr.mxu0 0.0
    %693 = vmatpush1.msra.mxu0 0.0
    %694 = vmatprep.subr.mxu0 0.0
    %695 = vmatpush1.msra.mxu0 0.0
    %696 = vmatprep.subr.mxu0 0.0
    %697 = vmatpush1.msra.mxu0 0.0
    %698 = vmatprep.subr.mxu0 0.0
    %699 = vmatpush1.msra.mxu0 0.0
    %700 = vmatprep.subr.mxu0 0.0
    %701 = vmatpush1.msra.mxu0 0.0
    %702 = vmatprep.subr.mxu0 0.0
    %703 = vmatpush1.msra.mxu0 0.0
    %704 = vmatprep.subr.mxu0 0.0
    %705 = vmatpush1.msra.mxu0 0.0
    %706 = vmatprep.subr.mxu0 0.0
    %707 = vmatpush1.msra.mxu0 0.0
    %708 = vmatprep.subr.mxu0 0.0
    %709 = vmatpush1.msra.mxu0 0.0
    %710 = vmatprep.subr.mxu0 0.0
    %711 = vmatpush1.msra.mxu0 0.0
    %712 = vmatprep.subr.mxu0 0.0
    %713 = vmatpush1.msra.mxu0 0.0
    %714 = vmatprep.subr.mxu0 0.0
    %715 = vmatpush1.msra.mxu0 0.0
    %716 = vmatprep.mubr.f32.mxu0 0.0
    %717 = vmatmul.mubr.f32.gmra.mrb[0].mxu0 0.0
    %v718 = vpop.f32.mrb[0].mxu0
    %v719 = vadd.f32 0.0, %v718
    %v720 = vpop.f32.mrb[0].mxu0
    %v721 = vadd.f32 0.0, %v720
    %722 = vdwg.mxu0
    %v723 = vadd.f32 %v513, %v648
    %v724 = vadd.f32 %v514, %v650
    %v725 = vadd.f32 %v515, %v719
    %v726 = vadd.f32 %v516, %v721
    %v727 = vmul.f32 %v723, 0.5
    %v728 = vtanh.pop %v727
    %v729 = vmul.f32 %v728, 0.5
    %v730 = vadd.f32 %v729, 0.5
    %v731 = vmul.f32 %v724, 0.5
    %v732 = vtanh.pop %v731
    %v733 = vmul.f32 %v732, 0.5
    %v734 = vadd.f32 %v733, 0.5
    %v735 = vtanh.pop %v725
    %v736 = vmul.f32 %v726, 0.5
    %v737 = vtanh.pop %v736
    %v738 = vmul.f32 %v737, 0.5
    %v739 = vadd.f32 %v738, 0.5
    %v740 = vmul.f32 %v734, 0.0
    %v741 = vmul.f32 %v730, %v735
    %v742 = vadd.f32 %v740, %v741
    %v743 = vtanh.pop %v742
    %v744 = vmul.f32 %v739, %v743
    %v745 = vld [vmem:[#allocation9] sm:$0xff]
    %v746 = vld [vmem:[#allocation9 + $0x8] sm:$0xff]
    %v747 = vld [vmem:[#allocation9 + $0x10] sm:$0xff]
    %v748 = vld [vmem:[#allocation9 + $0x18] sm:$0xff]
    %v749 = vld [vmem:[#allocation9 + $0x20] sm:$0xff]
    %v750 = vld [vmem:[#allocation9 + $0x28] sm:$0xff]
    %v751 = vld [vmem:[#allocation9 + $0x30] sm:$0xff]
    %v752 = vld [vmem:[#allocation9 + $0x38] sm:$0xff]
    %v753 = vld [vmem:[#allocation9 + $0x40] sm:$0xff]
    %v754 = vld [vmem:[#allocation9 + $0x48] sm:$0xff]
    %v755 = vld [vmem:[#allocation9 + $0x50] sm:$0xff]
    %v756 = vld [vmem:[#allocation9 + $0x58] sm:$0xff]
    %v757 = vld [vmem:[#allocation9 + $0x60] sm:$0xff]
    %v758 = vld [vmem:[#allocation9 + $0x68] sm:$0xff]
    %v759 = vld [vmem:[#allocation9 + $0x70] sm:$0xff]
    %v760 = vld [vmem:[#allocation9 + $0x78] sm:$0xff]
    %v761 = vld [vmem:[#allocation9 + $0x80] sm:$0xff]
    %v762 = vld [vmem:[#allocation9 + $0x88] sm:$0xff]
    %v763 = vld [vmem:[#allocation9 + $0x90] sm:$0xff]
    %v764 = vld [vmem:[#allocation9 + $0x98] sm:$0xff]
    %v765 = vld [vmem:[#allocation9 + $0xa0] sm:$0xff]
    %v766 = vld [vmem:[#allocation9 + $0xa8] sm:$0xff]
    %v767 = vld [vmem:[#allocation9 + $0xb0] sm:$0xff]
    %v768 = vld [vmem:[#allocation9 + $0xb8] sm:$0xff]
    %v769 = vld [vmem:[#allocation9 + $0xc0] sm:$0xff]
    %v770 = vld [vmem:[#allocation9 + $0xc8] sm:$0xff]
    %v771 = vld [vmem:[#allocation9 + $0xd0] sm:$0xff]
    %v772 = vld [vmem:[#allocation9 + $0xd8] sm:$0xff]
    %v773 = vld [vmem:[#allocation9 + $0xe0] sm:$0xff]
    %v774 = vld [vmem:[#allocation9 + $0xe8] sm:$0xff]
    %v775 = vld [vmem:[#allocation9 + $0xf0] sm:$0xff]
    %v776 = vld [vmem:[#allocation9 + $0xf8] sm:$0xff]
    %v777 = vld [vmem:[#allocation9 + $0x100] sm:$0xff]
    %v778 = vld [vmem:[#allocation9 + $0x108] sm:$0xff]
    %v779 = vld [vmem:[#allocation9 + $0x110] sm:$0xff]
    %v780 = vld [vmem:[#allocation9 + $0x118] sm:$0xff]
    %v781 = vld [vmem:[#allocation9 + $0x120] sm:$0xff]
    %v782 = vld [vmem:[#allocation9 + $0x128] sm:$0xff]
    %v783 = vld [vmem:[#allocation9 + $0x130] sm:$0xff]
    %v784 = vld [vmem:[#allocation9 + $0x138] sm:$0xff]
    %v785 = vld [vmem:[#allocation9 + $0x140] sm:$0xff]
    %v786 = vld [vmem:[#allocation9 + $0x148] sm:$0xff]
    %v787 = vld [vmem:[#allocation9 + $0x150] sm:$0xff]
    %v788 = vld [vmem:[#allocation9 + $0x158] sm:$0xff]
    %v789 = vld [vmem:[#allocation9 + $0x160] sm:$0xff]
    %v790 = vld [vmem:[#allocation9 + $0x168] sm:$0xff]
    %v791 = vld [vmem:[#allocation9 + $0x170] sm:$0xff]
    %v792 = vld [vmem:[#allocation9 + $0x178] sm:$0xff]
    %v793 = vld [vmem:[#allocation9 + $0x180] sm:$0xff]
    %v794 = vld [vmem:[#allocation9 + $0x188] sm:$0xff]
    %v795 = vld [vmem:[#allocation9 + $0x190] sm:$0xff]
    %v796 = vld [vmem:[#allocation9 + $0x198] sm:$0xff]
    %v797 = vld [vmem:[#allocation9 + $0x1a0] sm:$0xff]
    %v798 = vld [vmem:[#allocation9 + $0x1a8] sm:$0xff]
    %v799 = vld [vmem:[#allocation9 + $0x1b0] sm:$0xff]
    %v800 = vld [vmem:[#allocation9 + $0x1b8] sm:$0xff]
    %v801 = vld [vmem:[#allocation9 + $0x1c0] sm:$0xff]
    %v802 = vld [vmem:[#allocation9 + $0x1c8] sm:$0xff]
    %v803 = vld [vmem:[#allocation9 + $0x1d0] sm:$0xff]
    %v804 = vld [vmem:[#allocation9 + $0x1d8] sm:$0xff]
    %v805 = vld [vmem:[#allocation9 + $0x1e0] sm:$0xff]
    %v806 = vld [vmem:[#allocation9 + $0x1e8] sm:$0xff]
    %v807 = vld [vmem:[#allocation9 + $0x1f0] sm:$0xff]
    %v808 = vld [vmem:[#allocation9 + $0x1f8] sm:$0xff]
    %v809 = vld [vmem:[#allocation11] sm:$0xff]
    %v810 = vld [vmem:[#allocation11 + $0x8] sm:$0xff]
    %v811 = vld [vmem:[#allocation11 + $0x10] sm:$0xff]
    %v812 = vld [vmem:[#allocation11 + $0x18] sm:$0xff]
    %v813 = vld [vmem:[#allocation11 + $0x20] sm:$0xff]
    %v814 = vld [vmem:[#allocation11 + $0x28] sm:$0xff]
    %v815 = vld [vmem:[#allocation11 + $0x30] sm:$0xff]
    %v816 = vld [vmem:[#allocation11 + $0x38] sm:$0xff]
    %v817 = vld [vmem:[#allocation11 + $0x40] sm:$0xff]
    %v818 = vld [vmem:[#allocation11 + $0x48] sm:$0xff]
    %v819 = vld [vmem:[#allocation11 + $0x50] sm:$0xff]
    %v820 = vld [vmem:[#allocation11 + $0x58] sm:$0xff]
    %v821 = vld [vmem:[#allocation11 + $0x60] sm:$0xff]
    %v822 = vld [vmem:[#allocation11 + $0x68] sm:$0xff]
    %v823 = vld [vmem:[#allocation11 + $0x70] sm:$0xff]
    %v824 = vld [vmem:[#allocation11 + $0x78] sm:$0xff]
    %v825 = vld [vmem:[#allocation11 + $0x80] sm:$0xff]
    %v826 = vld [vmem:[#allocation11 + $0x88] sm:$0xff]
    %v827 = vld [vmem:[#allocation11 + $0x90] sm:$0xff]
    %v828 = vld [vmem:[#allocation11 + $0x98] sm:$0xff]
    %v829 = vld [vmem:[#allocation11 + $0xa0] sm:$0xff]
    %v830 = vld [vmem:[#allocation11 + $0xa8] sm:$0xff]
    %v831 = vld [vmem:[#allocation11 + $0xb0] sm:$0xff]
    %v832 = vld [vmem:[#allocation11 + $0xb8] sm:$0xff]
    %v833 = vld [vmem:[#allocation11 + $0xc0] sm:$0xff]
    %v834 = vld [vmem:[#allocation11 + $0xc8] sm:$0xff]
    %v835 = vld [vmem:[#allocation11 + $0xd0] sm:$0xff]
    %v836 = vld [vmem:[#allocation11 + $0xd8] sm:$0xff]
    %v837 = vld [vmem:[#allocation11 + $0xe0] sm:$0xff]
    %v838 = vld [vmem:[#allocation11 + $0xe8] sm:$0xff]
    %v839 = vld [vmem:[#allocation11 + $0xf0] sm:$0xff]
    %v840 = vld [vmem:[#allocation11 + $0xf8] sm:$0xff]
    %v841 = vld [vmem:[#allocation11 + $0x100] sm:$0xff]
    %v842 = vld [vmem:[#allocation11 + $0x108] sm:$0xff]
    %v843 = vld [vmem:[#allocation11 + $0x110] sm:$0xff]
    %v844 = vld [vmem:[#allocation11 + $0x118] sm:$0xff]
    %v845 = vld [vmem:[#allocation11 + $0x120] sm:$0xff]
    %v846 = vld [vmem:[#allocation11 + $0x128] sm:$0xff]
    %v847 = vld [vmem:[#allocation11 + $0x130] sm:$0xff]
    %v848 = vld [vmem:[#allocation11 + $0x138] sm:$0xff]
    %v849 = vld [vmem:[#allocation11 + $0x140] sm:$0xff]
    %v850 = vld [vmem:[#allocation11 + $0x148] sm:$0xff]
    %v851 = vld [vmem:[#allocation11 + $0x150] sm:$0xff]
    %v852 = vld [vmem:[#allocation11 + $0x158] sm:$0xff]
    %v853 = vld [vmem:[#allocation11 + $0x160] sm:$0xff]
    %v854 = vld [vmem:[#allocation11 + $0x168] sm:$0xff]
    %v855 = vld [vmem:[#allocation11 + $0x170] sm:$0xff]
    %v856 = vld [vmem:[#allocation11 + $0x178] sm:$0xff]
    %v857 = vld [vmem:[#allocation11 + $0x180] sm:$0xff]
    %v858 = vld [vmem:[#allocation11 + $0x188] sm:$0xff]
    %v859 = vld [vmem:[#allocation11 + $0x190] sm:$0xff]
    %v860 = vld [vmem:[#allocation11 + $0x198] sm:$0xff]
    %v861 = vld [vmem:[#allocation11 + $0x1a0] sm:$0xff]
    %v862 = vld [vmem:[#allocation11 + $0x1a8] sm:$0xff]
    %v863 = vld [vmem:[#allocation11 + $0x1b0] sm:$0xff]
    %v864 = vld [vmem:[#allocation11 + $0x1b8] sm:$0xff]
    %v865 = vld [vmem:[#allocation11 + $0x1c0] sm:$0xff]
    %v866 = vld [vmem:[#allocation11 + $0x1c8] sm:$0xff]
    %v867 = vld [vmem:[#allocation11 + $0x1d0] sm:$0xff]
    %v868 = vld [vmem:[#allocation11 + $0x1d8] sm:$0xff]
    %v869 = vld [vmem:[#allocation11 + $0x1e0] sm:$0xff]
    %v870 = vld [vmem:[#allocation11 + $0x1e8] sm:$0xff]
    %v871 = vld [vmem:[#allocation11 + $0x1f0] sm:$0xff]
    %v872 = vld [vmem:[#allocation11 + $0x1f8] sm:$0xff]
    %873 = vmatprep.subr.mxu0 %v810
    %874 = vmatpush1.msra.mxu0 %v809
    %875 = vmatprep.subr.mxu0 %v814
    %876 = vmatpush1.msra.mxu0 %v813
    %877 = vmatprep.subr.mxu0 %v818
    %878 = vmatpush1.msra.mxu0 %v817
    %879 = vmatprep.subr.mxu0 %v822
    %880 = vmatpush1.msra.mxu0 %v821
    %881 = vmatprep.subr.mxu0 %v826
    %882 = vmatpush1.msra.mxu0 %v825
    %883 = vmatprep.subr.mxu0 %v830
    %884 = vmatpush1.msra.mxu0 %v829
    %885 = vmatprep.subr.mxu0 %v834
    %886 = vmatpush1.msra.mxu0 %v833
    %887 = vmatprep.subr.mxu0 %v838
    %888 = vmatpush1.msra.mxu0 %v837
    %889 = vmatprep.subr.mxu0 %v842
    %890 = vmatpush1.msra.mxu0 %v841
    %891 = vmatprep.subr.mxu0 %v846
    %892 = vmatpush1.msra.mxu0 %v845
    %893 = vmatprep.subr.mxu0 %v850
    %894 = vmatpush1.msra.mxu0 %v849
    %895 = vmatprep.subr.mxu0 %v854
    %896 = vmatpush1.msra.mxu0 %v853
    %897 = vmatprep.subr.mxu0 %v858
    %898 = vmatpush1.msra.mxu0 %v857
    %899 = vmatprep.subr.mxu0 %v862
    %900 = vmatpush1.msra.mxu0 %v861
    %901 = vmatprep.subr.mxu0 %v866
    %902 = vmatpush1.msra.mxu0 %v865
    %903 = vmatprep.subr.mxu0 %v870
    %904 = vmatpush1.msra.mxu0 %v869
    %905 = vmatprep.subr.mxu0 0.0
    %906 = vmatpush1.msra.mxu0 0.0
    %907 = vmatprep.subr.mxu0 0.0
    %908 = vmatpush1.msra.mxu0 0.0
    %909 = vmatprep.subr.mxu0 0.0
    %910 = vmatpush1.msra.mxu0 0.0
    %911 = vmatprep.subr.mxu0 0.0
    %912 = vmatpush1.msra.mxu0 0.0
    %913 = vmatprep.subr.mxu0 0.0
    %914 = vmatpush1.msra.mxu0 0.0
    %915 = vmatprep.subr.mxu0 0.0
    %916 = vmatpush1.msra.mxu0 0.0
    %917 = vmatprep.subr.mxu0 0.0
    %918 = vmatpush1.msra.mxu0 0.0
    %919 = vmatprep.subr.mxu0 0.0
    %920 = vmatpush1.msra.mxu0 0.0
    %921 = vmatprep.subr.mxu0 0.0
    %922 = vmatpush1.msra.mxu0 0.0
    %923 = vmatprep.subr.mxu0 0.0
    %924 = vmatpush1.msra.mxu0 0.0
    %925 = vmatprep.subr.mxu0 0.0
    %926 = vmatpush1.msra.mxu0 0.0
    %927 = vmatprep.subr.mxu0 0.0
    %928 = vmatpush1.msra.mxu0 0.0
    %929 = vmatprep.subr.mxu0 0.0
    %930 = vmatpush1.msra.mxu0 0.0
    %931 = vmatprep.subr.mxu0 0.0
    %932 = vmatpush1.msra.mxu0 0.0
    %933 = vmatprep.subr.mxu0 0.0
    %934 = vmatpush1.msra.mxu0 0.0
    %935 = vmatprep.subr.mxu0 0.0
    %936 = vmatpush1.msra.mxu0 0.0
    %937 = vmatprep.mubr.f32.mxu0 0.0
    %938 = vmatmul.mubr.f32.gmra.mrb[0].mxu0 0.0
    %v939 = vpop.f32.mrb[0].mxu0
    %v940 = vadd.f32 0.0, %v939
    %v941 = vpop.f32.mrb[0].mxu0
    %v942 = vadd.f32 0.0, %v941
    %943 = vdwg.mxu0
    %944 = vmatprep.subr.mxu0 %v812
    %945 = vmatpush1.msra.mxu0 %v811
    %946 = vmatprep.subr.mxu0 %v816
    %947 = vmatpush1.msra.mxu0 %v815
    %948 = vmatprep.subr.mxu0 %v820
    %949 = vmatpush1.msra.mxu0 %v819
    %950 = vmatprep.subr.mxu0 %v824
    %951 = vmatpush1.msra.mxu0 %v823
    %952 = vmatprep.subr.mxu0 %v828
    %953 = vmatpush1.msra.mxu0 %v827
    %954 = vmatprep.subr.mxu0 %v832
    %955 = vmatpush1.msra.mxu0 %v831
    %956 = vmatprep.subr.mxu0 %v836
    %957 = vmatpush1.msra.mxu0 %v835
    %958 = vmatprep.subr.mxu0 %v840
    %959 = vmatpush1.msra.mxu0 %v839
    %960 = vmatprep.subr.mxu0 %v844
    %961 = vmatpush1.msra.mxu0 %v843
    %962 = vmatprep.subr.mxu0 %v848
    %963 = vmatpush1.msra.mxu0 %v847
    %964 = vmatprep.subr.mxu0 %v852
    %965 = vmatpush1.msra.mxu0 %v851
    %966 = vmatprep.subr.mxu0 %v856
    %967 = vmatpush1.msra.mxu0 %v855
    %968 = vmatprep.subr.mxu0 %v860
    %969 = vmatpush1.msra.mxu0 %v859
    %970 = vmatprep.subr.mxu0 %v864
    %971 = vmatpush1.msra.mxu0 %v863
    %972 = vmatprep.subr.mxu0 %v868
    %973 = vmatpush1.msra.mxu0 %v867
    %974 = vmatprep.subr.mxu0 %v872
    %975 = vmatpush1.msra.mxu0 %v871
    %976 = vmatprep.subr.mxu0 0.0
    %977 = vmatpush1.msra.mxu0 0.0
    %978 = vmatprep.subr.mxu0 0.0
    %979 = vmatpush1.msra.mxu0 0.0
    %980 = vmatprep.subr.mxu0 0.0
    %981 = vmatpush1.msra.mxu0 0.0
    %982 = vmatprep.subr.mxu0 0.0
    %983 = vmatpush1.msra.mxu0 0.0
    %984 = vmatprep.subr.mxu0 0.0
    %985 = vmatpush1.msra.mxu0 0.0
    %986 = vmatprep.subr.mxu0 0.0
    %987 = vmatpush1.msra.mxu0 0.0
    %988 = vmatprep.subr.mxu0 0.0
    %989 = vmatpush1.msra.mxu0 0.0
    %990 = vmatprep.subr.mxu0 0.0
    %991 = vmatpush1.msra.mxu0 0.0
    %992 = vmatprep.subr.mxu0 0.0
    %993 = vmatpush1.msra.mxu0 0.0
    %994 = vmatprep.subr.mxu0 0.0
    %995 = vmatpush1.msra.mxu0 0.0
    %996 = vmatprep.subr.mxu0 0.0
    %997 = vmatpush1.msra.mxu0 0.0
    %998 = vmatprep.subr.mxu0 0.0
    %999 = vmatpush1.msra.mxu0 0.0
    %1000 = vmatprep.subr.mxu0 0.0
    %1001 = vmatpush1.msra.mxu0 0.0
    %1002 = vmatprep.subr.mxu0 0.0
    %1003 = vmatpush1.msra.mxu0 0.0
    %1004 = vmatprep.subr.mxu0 0.0
    %1005 = vmatpush1.msra.mxu0 0.0
    %1006 = vmatprep.subr.mxu0 0.0
    %1007 = vmatpush1.msra.mxu0 0.0
    %1008 = vmatprep.mubr.f32.mxu0 0.0
    %1009 = vmatmul.mubr.f32.gmra.mrb[0].mxu0 0.0
    %v1010 = vpop.f32.mrb[0].mxu0
    %v1011 = vadd.f32 0.0, %v1010
    %v1012 = vpop.f32.mrb[0].mxu0
    %v1013 = vadd.f32 0.0, %v1012
    %1014 = vdwg.mxu0
    %1015 = vmatprep.subr.mxu0 %v746
    %1016 = vmatpush1.msra.mxu0 %v745
    %1017 = vmatprep.subr.mxu0 %v750
    %1018 = vmatpush1.msra.mxu0 %v749
    %1019 = vmatprep.subr.mxu0 %v754
    %1020 = vmatpush1.msra.mxu0 %v753
    %1021 = vmatprep.subr.mxu0 %v758
    %1022 = vmatpush1.msra.mxu0 %v757
    %1023 = vmatprep.subr.mxu0 %v762
    %1024 = vmatpush1.msra.mxu0 %v761
    %1025 = vmatprep.subr.mxu0 %v766
    %1026 = vmatpush1.msra.mxu0 %v765
    %1027 = vmatprep.subr.mxu0 %v770
    %1028 = vmatpush1.msra.mxu0 %v769
    %1029 = vmatprep.subr.mxu0 %v774
    %1030 = vmatpush1.msra.mxu0 %v773
    %1031 = vmatprep.subr.mxu0 %v778
    %1032 = vmatpush1.msra.mxu0 %v777
    %1033 = vmatprep.subr.mxu0 %v782
    %1034 = vmatpush1.msra.mxu0 %v781
    %1035 = vmatprep.subr.mxu0 %v786
    %1036 = vmatpush1.msra.mxu0 %v785
    %1037 = vmatprep.subr.mxu0 %v790
    %1038 = vmatpush1.msra.mxu0 %v789
    %1039 = vmatprep.subr.mxu0 %v794
    %1040 = vmatpush1.msra.mxu0 %v793
    %1041 = vmatprep.subr.mxu0 %v798
    %1042 = vmatpush1.msra.mxu0 %v797
    %1043 = vmatprep.subr.mxu0 %v802
    %1044 = vmatpush1.msra.mxu0 %v801
    %1045 = vmatprep.subr.mxu0 %v806
    %1046 = vmatpush1.msra.mxu0 %v805
    %1047 = vmatprep.subr.mxu0 0.0
    %1048 = vmatpush1.msra.mxu0 0.0
    %1049 = vmatprep.subr.mxu0 0.0
    %1050 = vmatpush1.msra.mxu0 0.0
    %1051 = vmatprep.subr.mxu0 0.0
    %1052 = vmatpush1.msra.mxu0 0.0
    %1053 = vmatprep.subr.mxu0 0.0
    %1054 = vmatpush1.msra.mxu0 0.0
    %1055 = vmatprep.subr.mxu0 0.0
    %1056 = vmatpush1.msra.mxu0 0.0
    %1057 = vmatprep.subr.mxu0 0.0
    %1058 = vmatpush1.msra.mxu0 0.0
    %1059 = vmatprep.subr.mxu0 0.0
    %1060 = vmatpush1.msra.mxu0 0.0
    %1061 = vmatprep.subr.mxu0 0.0
    %1062 = vmatpush1.msra.mxu0 0.0
    %1063 = vmatprep.subr.mxu0 0.0
    %1064 = vmatpush1.msra.mxu0 0.0
    %1065 = vmatprep.subr.mxu0 0.0
    %1066 = vmatpush1.msra.mxu0 0.0
    %1067 = vmatprep.subr.mxu0 0.0
    %1068 = vmatpush1.msra.mxu0 0.0
    %1069 = vmatprep.subr.mxu0 0.0
    %1070 = vmatpush1.msra.mxu0 0.0
    %1071 = vmatprep.subr.mxu0 0.0
    %1072 = vmatpush1.msra.mxu0 0.0
    %1073 = vmatprep.subr.mxu0 0.0
    %1074 = vmatpush1.msra.mxu0 0.0
    %1075 = vmatprep.subr.mxu0 0.0
    %1076 = vmatpush1.msra.mxu0 0.0
    %1077 = vmatprep.subr.mxu0 0.0
    %1078 = vmatpush1.msra.mxu0 0.0
    %1079 = vmatprep.mubr.f32.mxu0 0.0
    %1080 = vmatmul.mubr.f32.gmra.mrb[0].mxu0 %v744
    %v1081 = vpop.f32.mrb[0].mxu0
    %v1082 = vadd.f32 %v940, %v1081
    %v1083 = vpop.f32.mrb[0].mxu0
    %v1084 = vadd.f32 %v942, %v1083
    %1085 = vdwg.mxu0
    %1086 = vmatprep.subr.mxu0 %v748
    %1087 = vmatpush1.msra.mxu0 %v747
    %1088 = vmatprep.subr.mxu0 %v752
    %1089 = vmatpush1.msra.mxu0 %v751
    %1090 = vmatprep.subr.mxu0 %v756
    %1091 = vmatpush1.msra.mxu0 %v755
    %1092 = vmatprep.subr.mxu0 %v760
    %1093 = vmatpush1.msra.mxu0 %v759
    %1094 = vmatprep.subr.mxu0 %v764
    %1095 = vmatpush1.msra.mxu0 %v763
    %1096 = vmatprep.subr.mxu0 %v768
    %1097 = vmatpush1.msra.mxu0 %v767
    %1098 = vmatprep.subr.mxu0 %v772
    %1099 = vmatpush1.msra.mxu0 %v771
    %1100 = vmatprep.subr.mxu0 %v776
    %1101 = vmatpush1.msra.mxu0 %v775
    %1102 = vmatprep.subr.mxu0 %v780
    %1103 = vmatpush1.msra.mxu0 %v779
    %1104 = vmatprep.subr.mxu0 %v784
    %1105 = vmatpush1.msra.mxu0 %v783
    %1106 = vmatprep.subr.mxu0 %v788
    %1107 = vmatpush1.msra.mxu0 %v787
    %1108 = vmatprep.subr.mxu0 %v792
    %1109 = vmatpush1.msra.mxu0 %v791
    %1110 = vmatprep.subr.mxu0 %v796
    %1111 = vmatpush1.msra.mxu0 %v795
    %1112 = vmatprep.subr.mxu0 %v800
    %1113 = vmatpush1.msra.mxu0 %v799
    %1114 = vmatprep.subr.mxu0 %v804
    %1115 = vmatpush1.msra.mxu0 %v803
    %1116 = vmatprep.subr.mxu0 %v808
    %1117 = vmatpush1.msra.mxu0 %v807
    %1118 = vmatprep.subr.mxu0 0.0
    %1119 = vmatpush1.msra.mxu0 0.0
    %1120 = vmatprep.subr.mxu0 0.0
    %1121 = vmatpush1.msra.mxu0 0.0
    %1122 = vmatprep.subr.mxu0 0.0
    %1123 = vmatpush1.msra.mxu0 0.0
    %1124 = vmatprep.subr.mxu0 0.0
    %1125 = vmatpush1.msra.mxu0 0.0
    %1126 = vmatprep.subr.mxu0 0.0
    %1127 = vmatpush1.msra.mxu0 0.0
    %1128 = vmatprep.subr.mxu0 0.0
    %1129 = vmatpush1.msra.mxu0 0.0
    %1130 = vmatprep.subr.mxu0 0.0
    %1131 = vmatpush1.msra.mxu0 0.0
    %1132 = vmatprep.subr.mxu0 0.0
    %1133 = vmatpush1.msra.mxu0 0.0
    %1134 = vmatprep.subr.mxu0 0.0
    %1135 = vmatpush1.msra.mxu0 0.0
    %1136 = vmatprep.subr.mxu0 0.0
    %1137 = vmatpush1.msra.mxu0 0.0
    %1138 = vmatprep.subr.mxu0 0.0
    %1139 = vmatpush1.msra.mxu0 0.0
    %1140 = vmatprep.subr.mxu0 0.0
    %1141 = vmatpush1.msra.mxu0 0.0
    %1142 = vmatprep.subr.mxu0 0.0
    %1143 = vmatpush1.msra.mxu0 0.0
    %1144 = vmatprep.subr.mxu0 0.0
    %1145 = vmatpush1.msra.mxu0 0.0
    %1146 = vmatprep.subr.mxu0 0.0
    %1147 = vmatpush1.msra.mxu0 0.0
    %1148 = vmatprep.subr.mxu0 0.0
    %1149 = vmatpush1.msra.mxu0 0.0
    %1150 = vmatprep.mubr.f32.mxu0 0.0
    %1151 = vmatmul.mubr.f32.gmra.mrb[0].mxu0 %v744
    %v1152 = vpop.f32.mrb[0].mxu0
    %v1153 = vadd.f32 %v1011, %v1152
    %v1154 = vpop.f32.mrb[0].mxu0
    %v1155 = vadd.f32 %v1013, %v1154
    %1156 = vdwg.mxu0
    %v1157 = vld [vmem:[#allocation12] sm:$0xf]
    %v1159 = vlaneseq
    %v1160 = vshrl.u32 %v1159, 7
    %v1161 = vsub.s32 0, %v1160
    %v1162 = vrot.slane %v1157, %v1161
    %v1163 = vlaneseq
    %v1164 = vshrl.u32 %v1163, 7
    %v1165 = vsub.s32 1, %v1164
    %v1166 = vrot.slane %v1157, %v1165
    %v1167 = vlaneseq
    %v1168 = vshrl.u32 %v1167, 7
    %v1169 = vsub.s32 2, %v1168
    %v1170 = vrot.slane %v1157, %v1169
    %v1171 = vlaneseq
    %v1172 = vshrl.u32 %v1171, 7
    %v1173 = vsub.s32 3, %v1172
    %v1174 = vrot.slane %v1157, %v1173
    %v1179 = vadd.f32 %v1082, %v1162
    %v1180 = vadd.f32 %v1084, %v1166
    %v1181 = vadd.f32 %v1153, %v1170
    %v1182 = vadd.f32 %v1155, %v1174
    %v1183 = vmul.f32 %v1179, 0.5
    %v1184 = vtanh.pop %v1183
    %v1185 = vmul.f32 %v1184, 0.5
    %v1186 = vadd.f32 %v1185, 0.5
    %v1187 = vmul.f32 %v1180, 0.5
    %v1188 = vtanh.pop %v1187
    %v1189 = vmul.f32 %v1188, 0.5
    %v1190 = vadd.f32 %v1189, 0.5
    %v1191 = vtanh.pop %v1181
    %v1192 = vmul.f32 %v1182, 0.5
    %v1193 = vtanh.pop %v1192
    %v1194 = vmul.f32 %v1193, 0.5
    %v1195 = vadd.f32 %v1194, 0.5
    %v1196 = vmul.f32 %v1190, 0.0
    %v1197 = vmul.f32 %v1186, %v1191
    %v1198 = vadd.f32 %v1196, %v1197
    %v1199 = vtanh.pop %v1198
    %v1200 = vmul.f32 %v1195, %v1199
    %v1201 = vld [vmem:[#allocation2 + $0x20] sm:$0xff]
    %v1202 = vld [vmem:[#allocation2 + $0x28] sm:$0xff]
    %v1203 = vld [vmem:[#allocation2 + $0x30] sm:$0xff]
    %v1204 = vld [vmem:[#allocation2 + $0x38] sm:$0xff]
    %1205 = vmatprep.subr.mxu0 %v518
    %1206 = vmatpush1.msra.mxu0 %v517
    %1207 = vmatprep.subr.mxu0 %v522
    %1208 = vmatpush1.msra.mxu0 %v521
    %1209 = vmatprep.subr.mxu0 %v526
    %1210 = vmatpush1.msra.mxu0 %v525
    %1211 = vmatprep.subr.mxu0 %v530
    %1212 = vmatpush1.msra.mxu0 %v529
    %1213 = vmatprep.subr.mxu0 %v534
    %1214 = vmatpush1.msra.mxu0 %v533
    %1215 = vmatprep.subr.mxu0 %v538
    %1216 = vmatpush1.msra.mxu0 %v537
    %1217 = vmatprep.subr.mxu0 %v542
    %1218 = vmatpush1.msra.mxu0 %v541
    %1219 = vmatprep.subr.mxu0 %v546
    %1220 = vmatpush1.msra.mxu0 %v545
    %1221 = vmatprep.subr.mxu0 %v550
    %1222 = vmatpush1.msra.mxu0 %v549
    %1223 = vmatprep.subr.mxu0 %v554
    %1224 = vmatpush1.msra.mxu0 %v553
    %1225 = vmatprep.subr.mxu0 %v558
    %1226 = vmatpush1.msra.mxu0 %v557
    %1227 = vmatprep.subr.mxu0 %v562
    %1228 = vmatpush1.msra.mxu0 %v561
    %1229 = vmatprep.subr.mxu0 %v566
    %1230 = vmatpush1.msra.mxu0 %v565
    %1231 = vmatprep.subr.mxu0 %v570
    %1232 = vmatpush1.msra.mxu0 %v569
    %1233 = vmatprep.subr.mxu0 %v574
    %1234 = vmatpush1.msra.mxu0 %v573
    %1235 = vmatprep.subr.mxu0 %v578
    %1236 = vmatpush1.msra.mxu0 %v577
    %1237 = vmatprep.subr.mxu0 0.0
    %1238 = vmatpush1.msra.mxu0 0.0
    %1239 = vmatprep.subr.mxu0 0.0
    %1240 = vmatpush1.msra.mxu0 0.0
    %1241 = vmatprep.subr.mxu0 0.0
    %1242 = vmatpush1.msra.mxu0 0.0
    %1243 = vmatprep.subr.mxu0 0.0
    %1244 = vmatpush1.msra.mxu0 0.0
    %1245 = vmatprep.subr.mxu0 0.0
    %1246 = vmatpush1.msra.mxu0 0.0
    %1247 = vmatprep.subr.mxu0 0.0
    %1248 = vmatpush1.msra.mxu0 0.0
    %1249 = vmatprep.subr.mxu0 0.0
    %1250 = vmatpush1.msra.mxu0 0.0
    %1251 = vmatprep.subr.mxu0 0.0
    %1252 = vmatpush1.msra.mxu0 0.0
    %1253 = vmatprep.subr.mxu0 0.0
    %1254 = vmatpush1.msra.mxu0 0.0
    %1255 = vmatprep.subr.mxu0 0.0
    %1256 = vmatpush1.msra.mxu0 0.0
    %1257 = vmatprep.subr.mxu0 0.0
    %1258 = vmatpush1.msra.mxu0 0.0
    %1259 = vmatprep.subr.mxu0 0.0
    %1260 = vmatpush1.msra.mxu0 0.0
    %1261 = vmatprep.subr.mxu0 0.0
    %1262 = vmatpush1.msra.mxu0 0.0
    %1263 = vmatprep.subr.mxu0 0.0
    %1264 = vmatpush1.msra.mxu0 0.0
    %1265 = vmatprep.subr.mxu0 0.0
    %1266 = vmatpush1.msra.mxu0 0.0
    %1267 = vmatprep.subr.mxu0 0.0
    %1268 = vmatpush1.msra.mxu0 0.0
    %1269 = vmatprep.mubr.f32.mxu0 0.0
    %1270 = vmatmul.mubr.f32.gmra.mrb[0].mxu0 %v744
    %v1271 = vpop.f32.mrb[0].mxu0
    %v1272 = vadd.f32 0.0, %v1271
    %v1273 = vpop.f32.mrb[0].mxu0
    %v1274 = vadd.f32 0.0, %v1273
    %1275 = vdwg.mxu0
    %1276 = vmatprep.subr.mxu0 %v520
    %1277 = vmatpush1.msra.mxu0 %v519
    %1278 = vmatprep.subr.mxu0 %v524
    %1279 = vmatpush1.msra.mxu0 %v523
    %1280 = vmatprep.subr.mxu0 %v528
    %1281 = vmatpush1.msra.mxu0 %v527
    %1282 = vmatprep.subr.mxu0 %v532
    %1283 = vmatpush1.msra.mxu0 %v531
    %1284 = vmatprep.subr.mxu0 %v536
    %1285 = vmatpush1.msra.mxu0 %v535
    %1286 = vmatprep.subr.mxu0 %v540
    %1287 = vmatpush1.msra.mxu0 %v539
    %1288 = vmatprep.subr.mxu0 %v544
    %1289 = vmatpush1.msra.mxu0 %v543
    %1290 = vmatprep.subr.mxu0 %v548
    %1291 = vmatpush1.msra.mxu0 %v547
    %1292 = vmatprep.subr.mxu0 %v552
    %1293 = vmatpush1.msra.mxu0 %v551
    %1294 = vmatprep.subr.mxu0 %v556
    %1295 = vmatpush1.msra.mxu0 %v555
    %1296 = vmatprep.subr.mxu0 %v560
    %1297 = vmatpush1.msra.mxu0 %v559
    %1298 = vmatprep.subr.mxu0 %v564
    %1299 = vmatpush1.msra.mxu0 %v563
    %1300 = vmatprep.subr.mxu0 %v568
    %1301 = vmatpush1.msra.mxu0 %v567
    %1302 = vmatprep.subr.mxu0 %v572
    %1303 = vmatpush1.msra.mxu0 %v571
    %1304 = vmatprep.subr.mxu0 %v576
    %1305 = vmatpush1.msra.mxu0 %v575
    %1306 = vmatprep.subr.mxu0 %v580
    %1307 = vmatpush1.msra.mxu0 %v579
    %1308 = vmatprep.subr.mxu0 0.0
    %1309 = vmatpush1.msra.mxu0 0.0
    %1310 = vmatprep.subr.mxu0 0.0
    %1311 = vmatpush1.msra.mxu0 0.0
    %1312 = vmatprep.subr.mxu0 0.0
    %1313 = vmatpush1.msra.mxu0 0.0
    %1314 = vmatprep.subr.mxu0 0.0
    %1315 = vmatpush1.msra.mxu0 0.0
    %1316 = vmatprep.subr.mxu0 0.0
    %1317 = vmatpush1.msra.mxu0 0.0
    %1318 = vmatprep.subr.mxu0 0.0
    %1319 = vmatpush1.msra.mxu0 0.0
    %1320 = vmatprep.subr.mxu0 0.0
    %1321 = vmatpush1.msra.mxu0 0.0
    %1322 = vmatprep.subr.mxu0 0.0
    %1323 = vmatpush1.msra.mxu0 0.0
    %1324 = vmatprep.subr.mxu0 0.0
    %1325 = vmatpush1.msra.mxu0 0.0
    %1326 = vmatprep.subr.mxu0 0.0
    %1327 = vmatpush1.msra.mxu0 0.0
    %1328 = vmatprep.subr.mxu0 0.0
    %1329 = vmatpush1.msra.mxu0 0.0
    %1330 = vmatprep.subr.mxu0 0.0
    %1331 = vmatpush1.msra.mxu0 0.0
    %1332 = vmatprep.subr.mxu0 0.0
    %1333 = vmatpush1.msra.mxu0 0.0
    %1334 = vmatprep.subr.mxu0 0.0
    %1335 = vmatpush1.msra.mxu0 0.0
    %1336 = vmatprep.subr.mxu0 0.0
    %1337 = vmatpush1.msra.mxu0 0.0
    %1338 = vmatprep.subr.mxu0 0.0
    %1339 = vmatpush1.msra.mxu0 0.0
    %1340 = vmatprep.mubr.f32.mxu0 0.0
    %1341 = vmatmul.mubr.f32.gmra.mrb[0].mxu0 %v744
    %v1342 = vpop.f32.mrb[0].mxu0
    %v1343 = vadd.f32 0.0, %v1342
    %v1344 = vpop.f32.mrb[0].mxu0
    %v1345 = vadd.f32 0.0, %v1344
    %1346 = vdwg.mxu0
    %v1347 = vadd.f32 %v1201, %v1272
    %v1348 = vadd.f32 %v1202, %v1274
    %v1349 = vadd.f32 %v1203, %v1343
    %v1350 = vadd.f32 %v1204, %v1345
    %v1351 = vmul.f32 %v1347, 0.5
    %v1352 = vtanh.pop %v1351
    %v1353 = vmul.f32 %v1352, 0.5
    %v1354 = vadd.f32 %v1353, 0.5
    %v1355 = vmul.f32 %v1348, 0.5
    %v1356 = vtanh.pop %v1355
    %v1357 = vmul.f32 %v1356, 0.5
    %v1358 = vadd.f32 %v1357, 0.5
    %v1359 = vtanh.pop %v1349
    %v1360 = vmul.f32 %v1350, 0.5
    %v1361 = vtanh.pop %v1360
    %v1362 = vmul.f32 %v1361, 0.5
    %v1363 = vadd.f32 %v1362, 0.5
    %v1364 = vmul.f32 %v1358, %v742
    %v1365 = vmul.f32 %v1354, %v1359
    %v1366 = vadd.f32 %v1364, %v1365
    %v1367 = vtanh.pop %v1366
    %v1368 = vmul.f32 %v1363, %v1367
    %1369 = vmatprep.subr.mxu0 %v810
    %1370 = vmatpush1.msra.mxu0 %v809
    %1371 = vmatprep.subr.mxu0 %v814
    %1372 = vmatpush1.msra.mxu0 %v813
    %1373 = vmatprep.subr.mxu0 %v818
    %1374 = vmatpush1.msra.mxu0 %v817
    %1375 = vmatprep.subr.mxu0 %v822
    %1376 = vmatpush1.msra.mxu0 %v821
    %1377 = vmatprep.subr.mxu0 %v826
    %1378 = vmatpush1.msra.mxu0 %v825
    %1379 = vmatprep.subr.mxu0 %v830
    %1380 = vmatpush1.msra.mxu0 %v829
    %1381 = vmatprep.subr.mxu0 %v834
    %1382 = vmatpush1.msra.mxu0 %v833
    %1383 = vmatprep.subr.mxu0 %v838
    %1384 = vmatpush1.msra.mxu0 %v837
    %1385 = vmatprep.subr.mxu0 %v842
    %1386 = vmatpush1.msra.mxu0 %v841
    %1387 = vmatprep.subr.mxu0 %v846
    %1388 = vmatpush1.msra.mxu0 %v845
    %1389 = vmatprep.subr.mxu0 %v850
    %1390 = vmatpush1.msra.mxu0 %v849
    %1391 = vmatprep.subr.mxu0 %v854
    %1392 = vmatpush1.msra.mxu0 %v853
    %1393 = vmatprep.subr.mxu0 %v858
    %1394 = vmatpush1.msra.mxu0 %v857
    %1395 = vmatprep.subr.mxu0 %v862
    %1396 = vmatpush1.msra.mxu0 %v861
    %1397 = vmatprep.subr.mxu0 %v866
    %1398 = vmatpush1.msra.mxu0 %v865
    %1399 = vmatprep.subr.mxu0 %v870
    %1400 = vmatpush1.msra.mxu0 %v869
    %1401 = vmatprep.subr.mxu0 0.0
    %1402 = vmatpush1.msra.mxu0 0.0
    %1403 = vmatprep.subr.mxu0 0.0
    %1404 = vmatpush1.msra.mxu0 0.0
    %1405 = vmatprep.subr.mxu0 0.0
    %1406 = vmatpush1.msra.mxu0 0.0
    %1407 = vmatprep.subr.mxu0 0.0
    %1408 = vmatpush1.msra.mxu0 0.0
    %1409 = vmatprep.subr.mxu0 0.0
    %1410 = vmatpush1.msra.mxu0 0.0
    %1411 = vmatprep.subr.mxu0 0.0
    %1412 = vmatpush1.msra.mxu0 0.0
    %1413 = vmatprep.subr.mxu0 0.0
    %1414 = vmatpush1.msra.mxu0 0.0
    %1415 = vmatprep.subr.mxu0 0.0
    %1416 = vmatpush1.msra.mxu0 0.0
    %1417 = vmatprep.subr.mxu0 0.0
    %1418 = vmatpush1.msra.mxu0 0.0
    %1419 = vmatprep.subr.mxu0 0.0
    %1420 = vmatpush1.msra.mxu0 0.0
    %1421 = vmatprep.subr.mxu0 0.0
    %1422 = vmatpush1.msra.mxu0 0.0
    %1423 = vmatprep.subr.mxu0 0.0
    %1424 = vmatpush1.msra.mxu0 0.0
    %1425 = vmatprep.subr.mxu0 0.0
    %1426 = vmatpush1.msra.mxu0 0.0
    %1427 = vmatprep.subr.mxu0 0.0
    %1428 = vmatpush1.msra.mxu0 0.0
    %1429 = vmatprep.subr.mxu0 0.0
    %1430 = vmatpush1.msra.mxu0 0.0
    %1431 = vmatprep.subr.mxu0 0.0
    %1432 = vmatpush1.msra.mxu0 0.0
    %1433 = vmatprep.mubr.f32.mxu0 0.0
    %1434 = vmatmul.mubr.f32.gmra.mrb[0].mxu0 %v1200
    %v1435 = vpop.f32.mrb[0].mxu0
    %v1436 = vadd.f32 0.0, %v1435
    %v1437 = vpop.f32.mrb[0].mxu0
    %v1438 = vadd.f32 0.0, %v1437
    %1439 = vdwg.mxu0
    %1440 = vmatprep.subr.mxu0 %v812
    %1441 = vmatpush1.msra.mxu0 %v811
    %1442 = vmatprep.subr.mxu0 %v816
    %1443 = vmatpush1.msra.mxu0 %v815
    %1444 = vmatprep.subr.mxu0 %v820
    %1445 = vmatpush1.msra.mxu0 %v819
    %1446 = vmatprep.subr.mxu0 %v824
    %1447 = vmatpush1.msra.mxu0 %v823
    %1448 = vmatprep.subr.mxu0 %v828
    %1449 = vmatpush1.msra.mxu0 %v827
    %1450 = vmatprep.subr.mxu0 %v832
    %1451 = vmatpush1.msra.mxu0 %v831
    %1452 = vmatprep.subr.mxu0 %v836
    %1453 = vmatpush1.msra.mxu0 %v835
    %1454 = vmatprep.subr.mxu0 %v840
    %1455 = vmatpush1.msra.mxu0 %v839
    %1456 = vmatprep.subr.mxu0 %v844
    %1457 = vmatpush1.msra.mxu0 %v843
    %1458 = vmatprep.subr.mxu0 %v848
    %1459 = vmatpush1.msra.mxu0 %v847
    %1460 = vmatprep.subr.mxu0 %v852
    %1461 = vmatpush1.msra.mxu0 %v851
    %1462 = vmatprep.subr.mxu0 %v856
    %1463 = vmatpush1.msra.mxu0 %v855
    %1464 = vmatprep.subr.mxu0 %v860
    %1465 = vmatpush1.msra.mxu0 %v859
    %1466 = vmatprep.subr.mxu0 %v864
    %1467 = vmatpush1.msra.mxu0 %v863
    %1468 = vmatprep.subr.mxu0 %v868
    %1469 = vmatpush1.msra.mxu0 %v867
    %1470 = vmatprep.subr.mxu0 %v872
    %1471 = vmatpush1.msra.mxu0 %v871
    %1472 = vmatprep.subr.mxu0 0.0
    %1473 = vmatpush1.msra.mxu0 0.0
    %1474 = vmatprep.subr.mxu0 0.0
    %1475 = vmatpush1.msra.mxu0 0.0
    %1476 = vmatprep.subr.mxu0 0.0
    %1477 = vmatpush1.msra.mxu0 0.0
    %1478 = vmatprep.subr.mxu0 0.0
    %1479 = vmatpush1.msra.mxu0 0.0
    %1480 = vmatprep.subr.mxu0 0.0
    %1481 = vmatpush1.msra.mxu0 0.0
    %1482 = vmatprep.subr.mxu0 0.0
    %1483 = vmatpush1.msra.mxu0 0.0
    %1484 = vmatprep.subr.mxu0 0.0
    %1485 = vmatpush1.msra.mxu0 0.0
    %1486 = vmatprep.subr.mxu0 0.0
    %1487 = vmatpush1.msra.mxu0 0.0
    %1488 = vmatprep.subr.mxu0 0.0
    %1489 = vmatpush1.msra.mxu0 0.0
    %1490 = vmatprep.subr.mxu0 0.0
    %1491 = vmatpush1.msra.mxu0 0.0
    %1492 = vmatprep.subr.mxu0 0.0
    %1493 = vmatpush1.msra.mxu0 0.0
    %1494 = vmatprep.subr.mxu0 0.0
    %1495 = vmatpush1.msra.mxu0 0.0
    %1496 = vmatprep.subr.mxu0 0.0
    %1497 = vmatpush1.msra.mxu0 0.0
    %1498 = vmatprep.subr.mxu0 0.0
    %1499 = vmatpush1.msra.mxu0 0.0
    %1500 = vmatprep.subr.mxu0 0.0
    %1501 = vmatpush1.msra.mxu0 0.0
    %1502 = vmatprep.subr.mxu0 0.0
    %1503 = vmatpush1.msra.mxu0 0.0
    %1504 = vmatprep.mubr.f32.mxu0 0.0
    %1505 = vmatmul.mubr.f32.gmra.mrb[0].mxu0 %v1200
    %v1506 = vpop.f32.mrb[0].mxu0
    %v1507 = vadd.f32 0.0, %v1506
    %v1508 = vpop.f32.mrb[0].mxu0
    %v1509 = vadd.f32 0.0, %v1508
    %1510 = vdwg.mxu0
    %1511 = vmatprep.subr.mxu0 %v746
    %1512 = vmatpush1.msra.mxu0 %v745
    %1513 = vmatprep.subr.mxu0 %v750
    %1514 = vmatpush1.msra.mxu0 %v749
    %1515 = vmatprep.subr.mxu0 %v754
    %1516 = vmatpush1.msra.mxu0 %v753
    %1517 = vmatprep.subr.mxu0 %v758
    %1518 = vmatpush1.msra.mxu0 %v757
    %1519 = vmatprep.subr.mxu0 %v762
    %1520 = vmatpush1.msra.mxu0 %v761
    %1521 = vmatprep.subr.mxu0 %v766
    %1522 = vmatpush1.msra.mxu0 %v765
    %1523 = vmatprep.subr.mxu0 %v770
    %1524 = vmatpush1.msra.mxu0 %v769
    %1525 = vmatprep.subr.mxu0 %v774
    %1526 = vmatpush1.msra.mxu0 %v773
    %1527 = vmatprep.subr.mxu0 %v778
    %1528 = vmatpush1.msra.mxu0 %v777
    %1529 = vmatprep.subr.mxu0 %v782
    %1530 = vmatpush1.msra.mxu0 %v781
    %1531 = vmatprep.subr.mxu0 %v786
    %1532 = vmatpush1.msra.mxu0 %v785
    %1533 = vmatprep.subr.mxu0 %v790
    %1534 = vmatpush1.msra.mxu0 %v789
    %1535 = vmatprep.subr.mxu0 %v794
    %1536 = vmatpush1.msra.mxu0 %v793
    %1537 = vmatprep.subr.mxu0 %v798
    %1538 = vmatpush1.msra.mxu0 %v797
    %1539 = vmatprep.subr.mxu0 %v802
    %1540 = vmatpush1.msra.mxu0 %v801
    %1541 = vmatprep.subr.mxu0 %v806
    %1542 = vmatpush1.msra.mxu0 %v805
    %1543 = vmatprep.subr.mxu0 0.0
    %1544 = vmatpush1.msra.mxu0 0.0
    %1545 = vmatprep.subr.mxu0 0.0
    %1546 = vmatpush1.msra.mxu0 0.0
    %1547 = vmatprep.subr.mxu0 0.0
    %1548 = vmatpush1.msra.mxu0 0.0
    %1549 = vmatprep.subr.mxu0 0.0
    %1550 = vmatpush1.msra.mxu0 0.0
    %1551 = vmatprep.subr.mxu0 0.0
    %1552 = vmatpush1.msra.mxu0 0.0
    %1553 = vmatprep.subr.mxu0 0.0
    %1554 = vmatpush1.msra.mxu0 0.0
    %1555 = vmatprep.subr.mxu0 0.0
    %1556 = vmatpush1.msra.mxu0 0.0
    %1557 = vmatprep.subr.mxu0 0.0
    %1558 = vmatpush1.msra.mxu0 0.0
    %1559 = vmatprep.subr.mxu0 0.0
    %1560 = vmatpush1.msra.mxu0 0.0
    %1561 = vmatprep.subr.mxu0 0.0
    %1562 = vmatpush1.msra.mxu0 0.0
    %1563 = vmatprep.subr.mxu0 0.0
    %1564 = vmatpush1.msra.mxu0 0.0
    %1565 = vmatprep.subr.mxu0 0.0
    %1566 = vmatpush1.msra.mxu0 0.0
    %1567 = vmatprep.subr.mxu0 0.0
    %1568 = vmatpush1.msra.mxu0 0.0
    %1569 = vmatprep.subr.mxu0 0.0
    %1570 = vmatpush1.msra.mxu0 0.0
    %1571 = vmatprep.subr.mxu0 0.0
    %1572 = vmatpush1.msra.mxu0 0.0
    %1573 = vmatprep.subr.mxu0 0.0
    %1574 = vmatpush1.msra.mxu0 0.0
    %1575 = vmatprep.mubr.f32.mxu0 0.0
    %1576 = vmatmul.mubr.f32.gmra.mrb[0].mxu0 %v1368
    %v1577 = vpop.f32.mrb[0].mxu0
    %v1578 = vadd.f32 %v1436, %v1577
    %v1579 = vpop.f32.mrb[0].mxu0
    %v1580 = vadd.f32 %v1438, %v1579
    %1581 = vdwg.mxu0
    %1582 = vmatprep.subr.mxu0 %v748
    %1583 = vmatpush1.msra.mxu0 %v747
    %1584 = vmatprep.subr.mxu0 %v752
    %1585 = vmatpush1.msra.mxu0 %v751
    %1586 = vmatprep.subr.mxu0 %v756
    %1587 = vmatpush1.msra.mxu0 %v755
    %1588 = vmatprep.subr.mxu0 %v760
    %1589 = vmatpush1.msra.mxu0 %v759
    %1590 = vmatprep.subr.mxu0 %v764
    %1591 = vmatpush1.msra.mxu0 %v763
    %1592 = vmatprep.subr.mxu0 %v768
    %1593 = vmatpush1.msra.mxu0 %v767
    %1594 = vmatprep.subr.mxu0 %v772
    %1595 = vmatpush1.msra.mxu0 %v771
    %1596 = vmatprep.subr.mxu0 %v776
    %1597 = vmatpush1.msra.mxu0 %v775
    %1598 = vmatprep.subr.mxu0 %v780
    %1599 = vmatpush1.msra.mxu0 %v779
    %1600 = vmatprep.subr.mxu0 %v784
    %1601 = vmatpush1.msra.mxu0 %v783
    %1602 = vmatprep.subr.mxu0 %v788
    %1603 = vmatpush1.msra.mxu0 %v787
    %1604 = vmatprep.subr.mxu0 %v792
    %1605 = vmatpush1.msra.mxu0 %v791
    %1606 = vmatprep.subr.mxu0 %v796
    %1607 = vmatpush1.msra.mxu0 %v795
    %1608 = vmatprep.subr.mxu0 %v800
    %1609 = vmatpush1.msra.mxu0 %v799
    %1610 = vmatprep.subr.mxu0 %v804
    %1611 = vmatpush1.msra.mxu0 %v803
    %1612 = vmatprep.subr.mxu0 %v808
    %1613 = vmatpush1.msra.mxu0 %v807
    %1614 = vmatprep.subr.mxu0 0.0
    %1615 = vmatpush1.msra.mxu0 0.0
    %1616 = vmatprep.subr.mxu0 0.0
    %1617 = vmatpush1.msra.mxu0 0.0
    %1618 = vmatprep.subr.mxu0 0.0
    %1619 = vmatpush1.msra.mxu0 0.0
    %1620 = vmatprep.subr.mxu0 0.0
    %1621 = vmatpush1.msra.mxu0 0.0
    %1622 = vmatprep.subr.mxu0 0.0
    %1623 = vmatpush1.msra.mxu0 0.0
    %1624 = vmatprep.subr.mxu0 0.0
    %1625 = vmatpush1.msra.mxu0 0.0
    %1626 = vmatprep.subr.mxu0 0.0
    %1627 = vmatpush1.msra.mxu0 0.0
    %1628 = vmatprep.subr.mxu0 0.0
    %1629 = vmatpush1.msra.mxu0 0.0
    %1630 = vmatprep.subr.mxu0 0.0
    %1631 = vmatpush1.msra.mxu0 0.0
    %1632 = vmatprep.subr.mxu0 0.0
    %1633 = vmatpush1.msra.mxu0 0.0
    %1634 = vmatprep.subr.mxu0 0.0
    %1635 = vmatpush1.msra.mxu0 0.0
    %1636 = vmatprep.subr.mxu0 0.0
    %1637 = vmatpush1.msra.mxu0 0.0
    %1638 = vmatprep.subr.mxu0 0.0
    %1639 = vmatpush1.msra.mxu0 0.0
    %1640 = vmatprep.subr.mxu0 0.0
    %1641 = vmatpush1.msra.mxu0 0.0
    %1642 = vmatprep.subr.mxu0 0.0
    %1643 = vmatpush1.msra.mxu0 0.0
    %1644 = vmatprep.subr.mxu0 0.0
    %1645 = vmatpush1.msra.mxu0 0.0
    %1646 = vmatprep.mubr.f32.mxu0 0.0
    %1647 = vmatmul.mubr.f32.gmra.mrb[0].mxu0 %v1368
    %v1648 = vpop.f32.mrb[0].mxu0
    %v1649 = vadd.f32 %v1507, %v1648
    %v1650 = vpop.f32.mrb[0].mxu0
    %v1651 = vadd.f32 %v1509, %v1650
    %1652 = vdwg.mxu0
    %v1653 = vadd.f32 %v1578, %v1162
    %v1654 = vadd.f32 %v1580, %v1166
    %v1655 = vadd.f32 %v1649, %v1170
    %v1656 = vadd.f32 %v1651, %v1174
    %v1657 = vmul.f32 %v1653, 0.5
    %v1658 = vtanh.pop %v1657
    %v1659 = vmul.f32 %v1658, 0.5
    %v1660 = vadd.f32 %v1659, 0.5
    %v1661 = vmul.f32 %v1654, 0.5
    %v1662 = vtanh.pop %v1661
    %v1663 = vmul.f32 %v1662, 0.5
    %v1664 = vadd.f32 %v1663, 0.5
    %v1665 = vtanh.pop %v1655
    %v1666 = vmul.f32 %v1656, 0.5
    %v1667 = vtanh.pop %v1666
    %v1668 = vmul.f32 %v1667, 0.5
    %v1669 = vadd.f32 %v1668, 0.5
    %v1670 = vmul.f32 %v1664, %v1198
    %v1671 = vmul.f32 %v1660, %v1665
    %v1672 = vadd.f32 %v1670, %v1671
    %v1673 = vtanh.pop %v1672
    %v1674 = vmul.f32 %v1669, %v1673
    %v1675 = vld [vmem:[#allocation2 + $0x40] sm:$0xff]
    %v1676 = vld [vmem:[#allocation2 + $0x48] sm:$0xff]
    %v1677 = vld [vmem:[#allocation2 + $0x50] sm:$0xff]
    %v1678 = vld [vmem:[#allocation2 + $0x58] sm:$0xff]
    %1679 = vmatprep.subr.mxu0 %v518
    %1680 = vmatpush1.msra.mxu0 %v517
    %1681 = vmatprep.subr.mxu0 %v522
    %1682 = vmatpush1.msra.mxu0 %v521
    %1683 = vmatprep.subr.mxu0 %v526
    %1684 = vmatpush1.msra.mxu0 %v525
    %1685 = vmatprep.subr.mxu0 %v530
    %1686 = vmatpush1.msra.mxu0 %v529
    %1687 = vmatprep.subr.mxu0 %v534
    %1688 = vmatpush1.msra.mxu0 %v533
    %1689 = vmatprep.subr.mxu0 %v538
    %1690 = vmatpush1.msra.mxu0 %v537
    %1691 = vmatprep.subr.mxu0 %v542
    %1692 = vmatpush1.msra.mxu0 %v541
    %1693 = vmatprep.subr.mxu0 %v546
    %1694 = vmatpush1.msra.mxu0 %v545
    %1695 = vmatprep.subr.mxu0 %v550
    %1696 = vmatpush1.msra.mxu0 %v549
    %1697 = vmatprep.subr.mxu0 %v554
    %1698 = vmatpush1.msra.mxu0 %v553
    %1699 = vmatprep.subr.mxu0 %v558
    %1700 = vmatpush1.msra.mxu0 %v557
    %1701 = vmatprep.subr.mxu0 %v562
    %1702 = vmatpush1.msra.mxu0 %v561
    %1703 = vmatprep.subr.mxu0 %v566
    %1704 = vmatpush1.msra.mxu0 %v565
    %1705 = vmatprep.subr.mxu0 %v570
    %1706 = vmatpush1.msra.mxu0 %v569
    %1707 = vmatprep.subr.mxu0 %v574
    %1708 = vmatpush1.msra.mxu0 %v573
    %1709 = vmatprep.subr.mxu0 %v578
    %1710 = vmatpush1.msra.mxu0 %v577
    %1711 = vmatprep.subr.mxu0 0.0
    %1712 = vmatpush1.msra.mxu0 0.0
    %1713 = vmatprep.subr.mxu0 0.0
    %1714 = vmatpush1.msra.mxu0 0.0
    %1715 = vmatprep.subr.mxu0 0.0
    %1716 = vmatpush1.msra.mxu0 0.0
    %1717 = vmatprep.subr.mxu0 0.0
    %1718 = vmatpush1.msra.mxu0 0.0
    %1719 = vmatprep.subr.mxu0 0.0
    %1720 = vmatpush1.msra.mxu0 0.0
    %1721 = vmatprep.subr.mxu0 0.0
    %1722 = vmatpush1.msra.mxu0 0.0
    %1723 = vmatprep.subr.mxu0 0.0
    %1724 = vmatpush1.msra.mxu0 0.0
    %1725 = vmatprep.subr.mxu0 0.0
    %1726 = vmatpush1.msra.mxu0 0.0
    %1727 = vmatprep.subr.mxu0 0.0
    %1728 = vmatpush1.msra.mxu0 0.0
    %1729 = vmatprep.subr.mxu0 0.0
    %1730 = vmatpush1.msra.mxu0 0.0
    %1731 = vmatprep.subr.mxu0 0.0
    %1732 = vmatpush1.msra.mxu0 0.0
    %1733 = vmatprep.subr.mxu0 0.0
    %1734 = vmatpush1.msra.mxu0 0.0
    %1735 = vmatprep.subr.mxu0 0.0
    %1736 = vmatpush1.msra.mxu0 0.0
    %1737 = vmatprep.subr.mxu0 0.0
    %1738 = vmatpush1.msra.mxu0 0.0
    %1739 = vmatprep.subr.mxu0 0.0
    %1740 = vmatpush1.msra.mxu0 0.0
    %1741 = vmatprep.subr.mxu0 0.0
    %1742 = vmatpush1.msra.mxu0 0.0
    %1743 = vmatprep.mubr.f32.mxu0 0.0
    %1744 = vmatmul.mubr.f32.gmra.mrb[0].mxu0 %v1368
    %v1745 = vpop.f32.mrb[0].mxu0
    %v1746 = vadd.f32 0.0, %v1745
    %v1747 = vpop.f32.mrb[0].mxu0
    %v1748 = vadd.f32 0.0, %v1747
    %1749 = vdwg.mxu0
    %1750 = vmatprep.subr.mxu0 %v520
    %1751 = vmatpush1.msra.mxu0 %v519
    %1752 = vmatprep.subr.mxu0 %v524
    %1753 = vmatpush1.msra.mxu0 %v523
    %1754 = vmatprep.subr.mxu0 %v528
    %1755 = vmatpush1.msra.mxu0 %v527
    %1756 = vmatprep.subr.mxu0 %v532
    %1757 = vmatpush1.msra.mxu0 %v531
    %1758 = vmatprep.subr.mxu0 %v536
    %1759 = vmatpush1.msra.mxu0 %v535
    %1760 = vmatprep.subr.mxu0 %v540
    %1761 = vmatpush1.msra.mxu0 %v539
    %1762 = vmatprep.subr.mxu0 %v544
    %1763 = vmatpush1.msra.mxu0 %v543
    %1764 = vmatprep.subr.mxu0 %v548
    %1765 = vmatpush1.msra.mxu0 %v547
    %1766 = vmatprep.subr.mxu0 %v552
    %1767 = vmatpush1.msra.mxu0 %v551
    %1768 = vmatprep.subr.mxu0 %v556
    %1769 = vmatpush1.msra.mxu0 %v555
    %1770 = vmatprep.subr.mxu0 %v560
    %1771 = vmatpush1.msra.mxu0 %v559
    %1772 = vmatprep.subr.mxu0 %v564
    %1773 = vmatpush1.msra.mxu0 %v563
    %1774 = vmatprep.subr.mxu0 %v568
    %1775 = vmatpush1.msra.mxu0 %v567
    %1776 = vmatprep.subr.mxu0 %v572
    %1777 = vmatpush1.msra.mxu0 %v571
    %1778 = vmatprep.subr.mxu0 %v576
    %1779 = vmatpush1.msra.mxu0 %v575
    %1780 = vmatprep.subr.mxu0 %v580
    %1781 = vmatpush1.msra.mxu0 %v579
    %1782 = vmatprep.subr.mxu0 0.0
    %1783 = vmatpush1.msra.mxu0 0.0
    %1784 = vmatprep.subr.mxu0 0.0
    %1785 = vmatpush1.msra.mxu0 0.0
    %1786 = vmatprep.subr.mxu0 0.0
    %1787 = vmatpush1.msra.mxu0 0.0
    %1788 = vmatprep.subr.mxu0 0.0
    %1789 = vmatpush1.msra.mxu0 0.0
    %1790 = vmatprep.subr.mxu0 0.0
    %1791 = vmatpush1.msra.mxu0 0.0
    %1792 = vmatprep.subr.mxu0 0.0
    %1793 = vmatpush1.msra.mxu0 0.0
    %1794 = vmatprep.subr.mxu0 0.0
    %1795 = vmatpush1.msra.mxu0 0.0
    %1796 = vmatprep.subr.mxu0 0.0
    %1797 = vmatpush1.msra.mxu0 0.0
    %1798 = vmatprep.subr.mxu0 0.0
    %1799 = vmatpush1.msra.mxu0 0.0
    %1800 = vmatprep.subr.mxu0 0.0
    %1801 = vmatpush1.msra.mxu0 0.0
    %1802 = vmatprep.subr.mxu0 0.0
    %1803 = vmatpush1.msra.mxu0 0.0
    %1804 = vmatprep.subr.mxu0 0.0
    %1805 = vmatpush1.msra.mxu0 0.0
    %1806 = vmatprep.subr.mxu0 0.0
    %1807 = vmatpush1.msra.mxu0 0.0
    %1808 = vmatprep.subr.mxu0 0.0
    %1809 = vmatpush1.msra.mxu0 0.0
    %1810 = vmatprep.subr.mxu0 0.0
    %1811 = vmatpush1.msra.mxu0 0.0
    %1812 = vmatprep.subr.mxu0 0.0
    %1813 = vmatpush1.msra.mxu0 0.0
    %1814 = vmatprep.mubr.f32.mxu0 0.0
    %1815 = vmatmul.mubr.f32.gmra.mrb[0].mxu0 %v1368
    %v1816 = vpop.f32.mrb[0].mxu0
    %v1817 = vadd.f32 0.0, %v1816
    %v1818 = vpop.f32.mrb[0].mxu0
    %v1819 = vadd.f32 0.0, %v1818
    %1820 = vdwg.mxu0
    %v1821 = vadd.f32 %v1675, %v1746
    %v1822 = vadd.f32 %v1676, %v1748
    %v1823 = vadd.f32 %v1677, %v1817
    %v1824 = vadd.f32 %v1678, %v1819
    %v1825 = vmul.f32 %v1821, 0.5
    %v1826 = vtanh.pop %v1825
    %v1827 = vmul.f32 %v1826, 0.5
    %v1828 = vadd.f32 %v1827, 0.5
    %v1829 = vmul.f32 %v1822, 0.5
    %v1830 = vtanh.pop %v1829
    %v1831 = vmul.f32 %v1830, 0.5
    %v1832 = vadd.f32 %v1831, 0.5
    %v1833 = vtanh.pop %v1823
    %v1834 = vmul.f32 %v1824, 0.5
    %v1835 = vtanh.pop %v1834
    %v1836 = vmul.f32 %v1835, 0.5
    %v1837 = vadd.f32 %v1836, 0.5
    %v1838 = vmul.f32 %v1832, %v1366
    %v1839 = vmul.f32 %v1828, %v1833
    %v1840 = vadd.f32 %v1838, %v1839
    %v1841 = vtanh.pop %v1840
    %v1842 = vmul.f32 %v1837, %v1841
    %1843 = vmatprep.subr.mxu0 %v810
    %1844 = vmatpush1.msra.mxu0 %v809
    %1845 = vmatprep.subr.mxu0 %v814
    %1846 = vmatpush1.msra.mxu0 %v813
    %1847 = vmatprep.subr.mxu0 %v818
    %1848 = vmatpush1.msra.mxu0 %v817
    %1849 = vmatprep.subr.mxu0 %v822
    %1850 = vmatpush1.msra.mxu0 %v821
    %1851 = vmatprep.subr.mxu0 %v826
    %1852 = vmatpush1.msra.mxu0 %v825
    %1853 = vmatprep.subr.mxu0 %v830
    %1854 = vmatpush1.msra.mxu0 %v829
    %1855 = vmatprep.subr.mxu0 %v834
    %1856 = vmatpush1.msra.mxu0 %v833
    %1857 = vmatprep.subr.mxu0 %v838
    %1858 = vmatpush1.msra.mxu0 %v837
    %1859 = vmatprep.subr.mxu0 %v842
    %1860 = vmatpush1.msra.mxu0 %v841
    %1861 = vmatprep.subr.mxu0 %v846
    %1862 = vmatpush1.msra.mxu0 %v845
    %1863 = vmatprep.subr.mxu0 %v850
    %1864 = vmatpush1.msra.mxu0 %v849
    %1865 = vmatprep.subr.mxu0 %v854
    %1866 = vmatpush1.msra.mxu0 %v853
    %1867 = vmatprep.subr.mxu0 %v858
    %1868 = vmatpush1.msra.mxu0 %v857
    %1869 = vmatprep.subr.mxu0 %v862
    %1870 = vmatpush1.msra.mxu0 %v861
    %1871 = vmatprep.subr.mxu0 %v866
    %1872 = vmatpush1.msra.mxu0 %v865
    %1873 = vmatprep.subr.mxu0 %v870
    %1874 = vmatpush1.msra.mxu0 %v869
    %1875 = vmatprep.subr.mxu0 0.0
    %1876 = vmatpush1.msra.mxu0 0.0
    %1877 = vmatprep.subr.mxu0 0.0
    %1878 = vmatpush1.msra.mxu0 0.0
    %1879 = vmatprep.subr.mxu0 0.0
    %1880 = vmatpush1.msra.mxu0 0.0
    %1881 = vmatprep.subr.mxu0 0.0
    %1882 = vmatpush1.msra.mxu0 0.0
    %1883 = vmatprep.subr.mxu0 0.0
    %1884 = vmatpush1.msra.mxu0 0.0
    %1885 = vmatprep.subr.mxu0 0.0
    %1886 = vmatpush1.msra.mxu0 0.0
    %1887 = vmatprep.subr.mxu0 0.0
    %1888 = vmatpush1.msra.mxu0 0.0
    %1889 = vmatprep.subr.mxu0 0.0
    %1890 = vmatpush1.msra.mxu0 0.0
    %1891 = vmatprep.subr.mxu0 0.0
    %1892 = vmatpush1.msra.mxu0 0.0
    %1893 = vmatprep.subr.mxu0 0.0
    %1894 = vmatpush1.msra.mxu0 0.0
    %1895 = vmatprep.subr.mxu0 0.0
    %1896 = vmatpush1.msra.mxu0 0.0
    %1897 = vmatprep.subr.mxu0 0.0
    %1898 = vmatpush1.msra.mxu0 0.0
    %1899 = vmatprep.subr.mxu0 0.0
    %1900 = vmatpush1.msra.mxu0 0.0
    %1901 = vmatprep.subr.mxu0 0.0
    %1902 = vmatpush1.msra.mxu0 0.0
    %1903 = vmatprep.subr.mxu0 0.0
    %1904 = vmatpush1.msra.mxu0 0.0
    %1905 = vmatprep.subr.mxu0 0.0
    %1906 = vmatpush1.msra.mxu0 0.0
    %1907 = vmatprep.mubr.f32.mxu0 0.0
    %1908 = vmatmul.mubr.f32.gmra.mrb[0].mxu0 %v1674
    %v1909 = vpop.f32.mrb[0].mxu0
    %v1910 = vadd.f32 0.0, %v1909
    %v1911 = vpop.f32.mrb[0].mxu0
    %v1912 = vadd.f32 0.0, %v1911
    %1913 = vdwg.mxu0
    %1914 = vmatprep.subr.mxu0 %v812
    %1915 = vmatpush1.msra.mxu0 %v811
    %1916 = vmatprep.subr.mxu0 %v816
    %1917 = vmatpush1.msra.mxu0 %v815
    %1918 = vmatprep.subr.mxu0 %v820
    %1919 = vmatpush1.msra.mxu0 %v819
    %1920 = vmatprep.subr.mxu0 %v824
    %1921 = vmatpush1.msra.mxu0 %v823
    %1922 = vmatprep.subr.mxu0 %v828
    %1923 = vmatpush1.msra.mxu0 %v827
    %1924 = vmatprep.subr.mxu0 %v832
    %1925 = vmatpush1.msra.mxu0 %v831
    %1926 = vmatprep.subr.mxu0 %v836
    %1927 = vmatpush1.msra.mxu0 %v835
    %1928 = vmatprep.subr.mxu0 %v840
    %1929 = vmatpush1.msra.mxu0 %v839
    %1930 = vmatprep.subr.mxu0 %v844
    %1931 = vmatpush1.msra.mxu0 %v843
    %1932 = vmatprep.subr.mxu0 %v848
    %1933 = vmatpush1.msra.mxu0 %v847
    %1934 = vmatprep.subr.mxu0 %v852
    %1935 = vmatpush1.msra.mxu0 %v851
    %1936 = vmatprep.subr.mxu0 %v856
    %1937 = vmatpush1.msra.mxu0 %v855
    %1938 = vmatprep.subr.mxu0 %v860
    %1939 = vmatpush1.msra.mxu0 %v859
    %1940 = vmatprep.subr.mxu0 %v864
    %1941 = vmatpush1.msra.mxu0 %v863
    %1942 = vmatprep.subr.mxu0 %v868
    %1943 = vmatpush1.msra.mxu0 %v867
    %1944 = vmatprep.subr.mxu0 %v872
    %1945 = vmatpush1.msra.mxu0 %v871
    %1946 = vmatprep.subr.mxu0 0.0
    %1947 = vmatpush1.msra.mxu0 0.0
    %1948 = vmatprep.subr.mxu0 0.0
    %1949 = vmatpush1.msra.mxu0 0.0
    %1950 = vmatprep.subr.mxu0 0.0
    %1951 = vmatpush1.msra.mxu0 0.0
    %1952 = vmatprep.subr.mxu0 0.0
    %1953 = vmatpush1.msra.mxu0 0.0
    %1954 = vmatprep.subr.mxu0 0.0
    %1955 = vmatpush1.msra.mxu0 0.0
    %1956 = vmatprep.subr.mxu0 0.0
    %1957 = vmatpush1.msra.mxu0 0.0
    %1958 = vmatprep.subr.mxu0 0.0
    %1959 = vmatpush1.msra.mxu0 0.0
    %1960 = vmatprep.subr.mxu0 0.0
    %1961 = vmatpush1.msra.mxu0 0.0
    %1962 = vmatprep.subr.mxu0 0.0
    %1963 = vmatpush1.msra.mxu0 0.0
    %1964 = vmatprep.subr.mxu0 0.0
    %1965 = vmatpush1.msra.mxu0 0.0
    %1966 = vmatprep.subr.mxu0 0.0
    %1967 = vmatpush1.msra.mxu0 0.0
    %1968 = vmatprep.subr.mxu0 0.0
    %1969 = vmatpush1.msra.mxu0 0.0
    %1970 = vmatprep.subr.mxu0 0.0
    %1971 = vmatpush1.msra.mxu0 0.0
    %1972 = vmatprep.subr.mxu0 0.0
    %1973 = vmatpush1.msra.mxu0 0.0
    %1974 = vmatprep.subr.mxu0 0.0
    %1975 = vmatpush1.msra.mxu0 0.0
    %1976 = vmatprep.subr.mxu0 0.0
    %1977 = vmatpush1.msra.mxu0 0.0
    %1978 = vmatprep.mubr.f32.mxu0 0.0
    %1979 = vmatmul.mubr.f32.gmra.mrb[0].mxu0 %v1674
    %v1980 = vpop.f32.mrb[0].mxu0
    %v1981 = vadd.f32 0.0, %v1980
    %v1982 = vpop.f32.mrb[0].mxu0
    %v1983 = vadd.f32 0.0, %v1982
    %1984 = vdwg.mxu0
    %1985 = vmatprep.subr.mxu0 %v746
    %1986 = vmatpush1.msra.mxu0 %v745
    %1987 = vmatprep.subr.mxu0 %v750
    %1988 = vmatpush1.msra.mxu0 %v749
    %1989 = vmatprep.subr.mxu0 %v754
    %1990 = vmatpush1.msra.mxu0 %v753
    %1991 = vmatprep.subr.mxu0 %v758
    %1992 = vmatpush1.msra.mxu0 %v757
    %1993 = vmatprep.subr.mxu0 %v762
    %1994 = vmatpush1.msra.mxu0 %v761
    %1995 = vmatprep.subr.mxu0 %v766
    %1996 = vmatpush1.msra.mxu0 %v765
    %1997 = vmatprep.subr.mxu0 %v770
    %1998 = vmatpush1.msra.mxu0 %v769
    %1999 = vmatprep.subr.mxu0 %v774
    %2000 = vmatpush1.msra.mxu0 %v773
    %2001 = vmatprep.subr.mxu0 %v778
    %2002 = vmatpush1.msra.mxu0 %v777
    %2003 = vmatprep.subr.mxu0 %v782
    %2004 = vmatpush1.msra.mxu0 %v781
    %2005 = vmatprep.subr.mxu0 %v786
    %2006 = vmatpush1.msra.mxu0 %v785
    %2007 = vmatprep.subr.mxu0 %v790
    %2008 = vmatpush1.msra.mxu0 %v789
    %2009 = vmatprep.subr.mxu0 %v794
    %2010 = vmatpush1.msra.mxu0 %v793
    %2011 = vmatprep.subr.mxu0 %v798
    %2012 = vmatpush1.msra.mxu0 %v797
    %2013 = vmatprep.subr.mxu0 %v802
    %2014 = vmatpush1.msra.mxu0 %v801
    %2015 = vmatprep.subr.mxu0 %v806
    %2016 = vmatpush1.msra.mxu0 %v805
    %2017 = vmatprep.subr.mxu0 0.0
    %2018 = vmatpush1.msra.mxu0 0.0
    %2019 = vmatprep.subr.mxu0 0.0
    %2020 = vmatpush1.msra.mxu0 0.0
    %2021 = vmatprep.subr.mxu0 0.0
    %2022 = vmatpush1.msra.mxu0 0.0
    %2023 = vmatprep.subr.mxu0 0.0
    %2024 = vmatpush1.msra.mxu0 0.0
    %2025 = vmatprep.subr.mxu0 0.0
    %2026 = vmatpush1.msra.mxu0 0.0
    %2027 = vmatprep.subr.mxu0 0.0
    %2028 = vmatpush1.msra.mxu0 0.0
    %2029 = vmatprep.subr.mxu0 0.0
    %2030 = vmatpush1.msra.mxu0 0.0
    %2031 = vmatprep.subr.mxu0 0.0
    %2032 = vmatpush1.msra.mxu0 0.0
    %2033 = vmatprep.subr.mxu0 0.0
    %2034 = vmatpush1.msra.mxu0 0.0
    %2035 = vmatprep.subr.mxu0 0.0
    %2036 = vmatpush1.msra.mxu0 0.0
    %2037 = vmatprep.subr.mxu0 0.0
    %2038 = vmatpush1.msra.mxu0 0.0
    %2039 = vmatprep.subr.mxu0 0.0
    %2040 = vmatpush1.msra.mxu0 0.0
    %2041 = vmatprep.subr.mxu0 0.0
    %2042 = vmatpush1.msra.mxu0 0.0
    %2043 = vmatprep.subr.mxu0 0.0
    %2044 = vmatpush1.msra.mxu0 0.0
    %2045 = vmatprep.subr.mxu0 0.0
    %2046 = vmatpush1.msra.mxu0 0.0
    %2047 = vmatprep.subr.mxu0 0.0
    %2048 = vmatpush1.msra.mxu0 0.0
    %2049 = vmatprep.mubr.f32.mxu0 0.0
    %2050 = vmatmul.mubr.f32.gmra.mrb[0].mxu0 %v1842
    %v2051 = vpop.f32.mrb[0].mxu0
    %v2052 = vadd.f32 %v1910, %v2051
    %v2053 = vpop.f32.mrb[0].mxu0
    %v2054 = vadd.f32 %v1912, %v2053
    %2055 = vdwg.mxu0
    %2056 = vmatprep.subr.mxu0 %v748
    %2057 = vmatpush1.msra.mxu0 %v747
    %2058 = vmatprep.subr.mxu0 %v752
    %2059 = vmatpush1.msra.mxu0 %v751
    %2060 = vmatprep.subr.mxu0 %v756
    %2061 = vmatpush1.msra.mxu0 %v755
    %2062 = vmatprep.subr.mxu0 %v760
    %2063 = vmatpush1.msra.mxu0 %v759
    %2064 = vmatprep.subr.mxu0 %v764
    %2065 = vmatpush1.msra.mxu0 %v763
    %2066 = vmatprep.subr.mxu0 %v768
    %2067 = vmatpush1.msra.mxu0 %v767
    %2068 = vmatprep.subr.mxu0 %v772
    %2069 = vmatpush1.msra.mxu0 %v771
    %2070 = vmatprep.subr.mxu0 %v776
    %2071 = vmatpush1.msra.mxu0 %v775
    %2072 = vmatprep.subr.mxu0 %v780
    %2073 = vmatpush1.msra.mxu0 %v779
    %2074 = vmatprep.subr.mxu0 %v784
    %2075 = vmatpush1.msra.mxu0 %v783
    %2076 = vmatprep.subr.mxu0 %v788
    %2077 = vmatpush1.msra.mxu0 %v787
    %2078 = vmatprep.subr.mxu0 %v792
    %2079 = vmatpush1.msra.mxu0 %v791
    %2080 = vmatprep.subr.mxu0 %v796
    %2081 = vmatpush1.msra.mxu0 %v795
    %2082 = vmatprep.subr.mxu0 %v800
    %2083 = vmatpush1.msra.mxu0 %v799
    %2084 = vmatprep.subr.mxu0 %v804
    %2085 = vmatpush1.msra.mxu0 %v803
    %2086 = vmatprep.subr.mxu0 %v808
    %2087 = vmatpush1.msra.mxu0 %v807
    %2088 = vmatprep.subr.mxu0 0.0
    %2089 = vmatpush1.msra.mxu0 0.0
    %2090 = vmatprep.subr.mxu0 0.0
    %2091 = vmatpush1.msra.mxu0 0.0
    %2092 = vmatprep.subr.mxu0 0.0
    %2093 = vmatpush1.msra.mxu0 0.0
    %2094 = vmatprep.subr.mxu0 0.0
    %2095 = vmatpush1.msra.mxu0 0.0
    %2096 = vmatprep.subr.mxu0 0.0
    %2097 = vmatpush1.msra.mxu0 0.0
    %2098 = vmatprep.subr.mxu0 0.0
    %2099 = vmatpush1.msra.mxu0 0.0
    %2100 = vmatprep.subr.mxu0 0.0
    %2101 = vmatpush1.msra.mxu0 0.0
    %2102 = vmatprep.subr.mxu0 0.0
    %2103 = vmatpush1.msra.mxu0 0.0
    %2104 = vmatprep.subr.mxu0 0.0
    %2105 = vmatpush1.msra.mxu0 0.0
    %2106 = vmatprep.subr.mxu0 0.0
    %2107 = vmatpush1.msra.mxu0 0.0
    %2108 = vmatprep.subr.mxu0 0.0
    %2109 = vmatpush1.msra.mxu0 0.0
    %2110 = vmatprep.subr.mxu0 0.0
    %2111 = vmatpush1.msra.mxu0 0.0
    %2112 = vmatprep.subr.mxu0 0.0
    %2113 = vmatpush1.msra.mxu0 0.0
    %2114 = vmatprep.subr.mxu0 0.0
    %2115 = vmatpush1.msra.mxu0 0.0
    %2116 = vmatprep.subr.mxu0 0.0
    %2117 = vmatpush1.msra.mxu0 0.0
    %2118 = vmatprep.subr.mxu0 0.0
    %2119 = vmatpush1.msra.mxu0 0.0
    %2120 = vmatprep.mubr.f32.mxu0 0.0
    %2121 = vmatmul.mubr.f32.gmra.mrb[0].mxu0 %v1842
    %v2122 = vpop.f32.mrb[0].mxu0
    %v2123 = vadd.f32 %v1981, %v2122
    %v2124 = vpop.f32.mrb[0].mxu0
    %v2125 = vadd.f32 %v1983, %v2124
    %2126 = vdwg.mxu0
    %v2127 = vadd.f32 %v2052, %v1162
    %v2128 = vadd.f32 %v2054, %v1166
    %v2129 = vadd.f32 %v2123, %v1170
    %v2130 = vadd.f32 %v2125, %v1174
    %v2131 = vmul.f32 %v2127, 0.5
    %v2132 = vtanh.pop %v2131
    %v2133 = vmul.f32 %v2132, 0.5
    %v2134 = vadd.f32 %v2133, 0.5
    %v2135 = vmul.f32 %v2128, 0.5
    %v2136 = vtanh.pop %v2135
    %v2137 = vmul.f32 %v2136, 0.5
    %v2138 = vadd.f32 %v2137, 0.5
    %v2139 = vtanh.pop %v2129
    %v2140 = vmul.f32 %v2130, 0.5
    %v2141 = vtanh.pop %v2140
    %v2142 = vmul.f32 %v2141, 0.5
    %v2143 = vadd.f32 %v2142, 0.5
    %v2144 = vmul.f32 %v2138, %v1672
    %v2145 = vmul.f32 %v2134, %v2139
    %v2146 = vadd.f32 %v2144, %v2145
    %v2147 = vtanh.pop %v2146
    %v2148 = vmul.f32 %v2143, %v2147
    %v2149 = vld [vmem:[#allocation2 + $0x60] sm:$0xff]
    %v2150 = vld [vmem:[#allocation2 + $0x68] sm:$0xff]
    %v2151 = vld [vmem:[#allocation2 + $0x70] sm:$0xff]
    %v2152 = vld [vmem:[#allocation2 + $0x78] sm:$0xff]
    %2153 = vmatprep.subr.mxu0 %v518
    %2154 = vmatpush1.msra.mxu0 %v517
    %2155 = vmatprep.subr.mxu0 %v522
    %2156 = vmatpush1.msra.mxu0 %v521
    %2157 = vmatprep.subr.mxu0 %v526
    %2158 = vmatpush1.msra.mxu0 %v525
    %2159 = vmatprep.subr.mxu0 %v530
    %2160 = vmatpush1.msra.mxu0 %v529
    %2161 = vmatprep.subr.mxu0 %v534
    %2162 = vmatpush1.msra.mxu0 %v533
    %2163 = vmatprep.subr.mxu0 %v538
    %2164 = vmatpush1.msra.mxu0 %v537
    %2165 = vmatprep.subr.mxu0 %v542
    %2166 = vmatpush1.msra.mxu0 %v541
    %2167 = vmatprep.subr.mxu0 %v546
    %2168 = vmatpush1.msra.mxu0 %v545
    %2169 = vmatprep.subr.mxu0 %v550
    %2170 = vmatpush1.msra.mxu0 %v549
    %2171 = vmatprep.subr.mxu0 %v554
    %2172 = vmatpush1.msra.mxu0 %v553
    %2173 = vmatprep.subr.mxu0 %v558
    %2174 = vmatpush1.msra.mxu0 %v557
    %2175 = vmatprep.subr.mxu0 %v562
    %2176 = vmatpush1.msra.mxu0 %v561
    %2177 = vmatprep.subr.mxu0 %v566
    %2178 = vmatpush1.msra.mxu0 %v565
    %2179 = vmatprep.subr.mxu0 %v570
    %2180 = vmatpush1.msra.mxu0 %v569
    %2181 = vmatprep.subr.mxu0 %v574
    %2182 = vmatpush1.msra.mxu0 %v573
    %2183 = vmatprep.subr.mxu0 %v578
    %2184 = vmatpush1.msra.mxu0 %v577
    %2185 = vmatprep.subr.mxu0 0.0
    %2186 = vmatpush1.msra.mxu0 0.0
    %2187 = vmatprep.subr.mxu0 0.0
    %2188 = vmatpush1.msra.mxu0 0.0
    %2189 = vmatprep.subr.mxu0 0.0
    %2190 = vmatpush1.msra.mxu0 0.0
    %2191 = vmatprep.subr.mxu0 0.0
    %2192 = vmatpush1.msra.mxu0 0.0
    %2193 = vmatprep.subr.mxu0 0.0
    %2194 = vmatpush1.msra.mxu0 0.0
    %2195 = vmatprep.subr.mxu0 0.0
    %2196 = vmatpush1.msra.mxu0 0.0
    %2197 = vmatprep.subr.mxu0 0.0
    %2198 = vmatpush1.msra.mxu0 0.0
    %2199 = vmatprep.subr.mxu0 0.0
    %2200 = vmatpush1.msra.mxu0 0.0
    %2201 = vmatprep.subr.mxu0 0.0
    %2202 = vmatpush1.msra.mxu0 0.0
    %2203 = vmatprep.subr.mxu0 0.0
    %2204 = vmatpush1.msra.mxu0 0.0
    %2205 = vmatprep.subr.mxu0 0.0
    %2206 = vmatpush1.msra.mxu0 0.0
    %2207 = vmatprep.subr.mxu0 0.0
    %2208 = vmatpush1.msra.mxu0 0.0
    %2209 = vmatprep.subr.mxu0 0.0
    %2210 = vmatpush1.msra.mxu0 0.0
    %2211 = vmatprep.subr.mxu0 0.0
    %2212 = vmatpush1.msra.mxu0 0.0
    %2213 = vmatprep.subr.mxu0 0.0
    %2214 = vmatpush1.msra.mxu0 0.0
    %2215 = vmatprep.subr.mxu0 0.0
    %2216 = vmatpush1.msra.mxu0 0.0
    %2217 = vmatprep.mubr.f32.mxu0 0.0
    %2218 = vmatmul.mubr.f32.gmra.mrb[0].mxu0 %v1842
    %v2219 = vpop.f32.mrb[0].mxu0
    %v2220 = vadd.f32 0.0, %v2219
    %v2221 = vpop.f32.mrb[0].mxu0
    %v2222 = vadd.f32 0.0, %v2221
    %2223 = vdwg.mxu0
    %2224 = vmatprep.subr.mxu0 %v520
    %2225 = vmatpush1.msra.mxu0 %v519
    %2226 = vmatprep.subr.mxu0 %v524
    %2227 = vmatpush1.msra.mxu0 %v523
    %2228 = vmatprep.subr.mxu0 %v528
    %2229 = vmatpush1.msra.mxu0 %v527
    %2230 = vmatprep.subr.mxu0 %v532
    %2231 = vmatpush1.msra.mxu0 %v531
    %2232 = vmatprep.subr.mxu0 %v536
    %2233 = vmatpush1.msra.mxu0 %v535
    %2234 = vmatprep.subr.mxu0 %v540
    %2235 = vmatpush1.msra.mxu0 %v539
    %2236 = vmatprep.subr.mxu0 %v544
    %2237 = vmatpush1.msra.mxu0 %v543
    %2238 = vmatprep.subr.mxu0 %v548
    %2239 = vmatpush1.msra.mxu0 %v547
    %2240 = vmatprep.subr.mxu0 %v552
    %2241 = vmatpush1.msra.mxu0 %v551
    %2242 = vmatprep.subr.mxu0 %v556
    %2243 = vmatpush1.msra.mxu0 %v555
    %2244 = vmatprep.subr.mxu0 %v560
    %2245 = vmatpush1.msra.mxu0 %v559
    %2246 = vmatprep.subr.mxu0 %v564
    %2247 = vmatpush1.msra.mxu0 %v563
    %2248 = vmatprep.subr.mxu0 %v568
    %2249 = vmatpush1.msra.mxu0 %v567
    %2250 = vmatprep.subr.mxu0 %v572
    %2251 = vmatpush1.msra.mxu0 %v571
    %2252 = vmatprep.subr.mxu0 %v576
    %2253 = vmatpush1.msra.mxu0 %v575
    %2254 = vmatprep.subr.mxu0 %v580
    %2255 = vmatpush1.msra.mxu0 %v579
    %2256 = vmatprep.subr.mxu0 0.0
    %2257 = vmatpush1.msra.mxu0 0.0
    %2258 = vmatprep.subr.mxu0 0.0
    %2259 = vmatpush1.msra.mxu0 0.0
    %2260 = vmatprep.subr.mxu0 0.0
    %2261 = vmatpush1.msra.mxu0 0.0
    %2262 = vmatprep.subr.mxu0 0.0
    %2263 = vmatpush1.msra.mxu0 0.0
    %2264 = vmatprep.subr.mxu0 0.0
    %2265 = vmatpush1.msra.mxu0 0.0
    %2266 = vmatprep.subr.mxu0 0.0
    %2267 = vmatpush1.msra.mxu0 0.0
    %2268 = vmatprep.subr.mxu0 0.0
    %2269 = vmatpush1.msra.mxu0 0.0
    %2270 = vmatprep.subr.mxu0 0.0
    %2271 = vmatpush1.msra.mxu0 0.0
    %2272 = vmatprep.subr.mxu0 0.0
    %2273 = vmatpush1.msra.mxu0 0.0
    %2274 = vmatprep.subr.mxu0 0.0
    %2275 = vmatpush1.msra.mxu0 0.0
    %2276 = vmatprep.subr.mxu0 0.0
    %2277 = vmatpush1.msra.mxu0 0.0
    %2278 = vmatprep.subr.mxu0 0.0
    %2279 = vmatpush1.msra.mxu0 0.0
    %2280 = vmatprep.subr.mxu0 0.0
    %2281 = vmatpush1.msra.mxu0 0.0
    %2282 = vmatprep.subr.mxu0 0.0
    %2283 = vmatpush1.msra.mxu0 0.0
    %2284 = vmatprep.subr.mxu0 0.0
    %2285 = vmatpush1.msra.mxu0 0.0
    %2286 = vmatprep.subr.mxu0 0.0
    %2287 = vmatpush1.msra.mxu0 0.0
    %2288 = vmatprep.mubr.f32.mxu0 0.0
    %2289 = vmatmul.mubr.f32.gmra.mrb[0].mxu0 %v1842
    %v2290 = vpop.f32.mrb[0].mxu0
    %v2291 = vadd.f32 0.0, %v2290
    %v2292 = vpop.f32.mrb[0].mxu0
    %v2293 = vadd.f32 0.0, %v2292
    %2294 = vdwg.mxu0
    %v2295 = vadd.f32 %v2149, %v2220
    %v2296 = vadd.f32 %v2150, %v2222
    %v2297 = vadd.f32 %v2151, %v2291
    %v2298 = vadd.f32 %v2152, %v2293
    %v2299 = vmul.f32 %v2295, 0.5
    %v2300 = vtanh.pop %v2299
    %v2301 = vmul.f32 %v2300, 0.5
    %v2302 = vadd.f32 %v2301, 0.5
    %v2303 = vmul.f32 %v2296, 0.5
    %v2304 = vtanh.pop %v2303
    %v2305 = vmul.f32 %v2304, 0.5
    %v2306 = vadd.f32 %v2305, 0.5
    %v2307 = vtanh.pop %v2297
    %v2308 = vmul.f32 %v2298, 0.5
    %v2309 = vtanh.pop %v2308
    %v2310 = vmul.f32 %v2309, 0.5
    %v2311 = vadd.f32 %v2310, 0.5
    %v2312 = vmul.f32 %v2306, %v1840
    %v2313 = vmul.f32 %v2302, %v2307
    %v2314 = vadd.f32 %v2312, %v2313
    %v2315 = vtanh.pop %v2314
    %v2316 = vmul.f32 %v2311, %v2315
    %2317 = vmatprep.subr.mxu0 %v810
    %2318 = vmatpush1.msra.mxu0 %v809
    %2319 = vmatprep.subr.mxu0 %v814
    %2320 = vmatpush1.msra.mxu0 %v813
    %2321 = vmatprep.subr.mxu0 %v818
    %2322 = vmatpush1.msra.mxu0 %v817
    %2323 = vmatprep.subr.mxu0 %v822
    %2324 = vmatpush1.msra.mxu0 %v821
    %2325 = vmatprep.subr.mxu0 %v826
    %2326 = vmatpush1.msra.mxu0 %v825
    %2327 = vmatprep.subr.mxu0 %v830
    %2328 = vmatpush1.msra.mxu0 %v829
    %2329 = vmatprep.subr.mxu0 %v834
    %2330 = vmatpush1.msra.mxu0 %v833
    %2331 = vmatprep.subr.mxu0 %v838
    %2332 = vmatpush1.msra.mxu0 %v837
    %2333 = vmatprep.subr.mxu0 %v842
    %2334 = vmatpush1.msra.mxu0 %v841
    %2335 = vmatprep.subr.mxu0 %v846
    %2336 = vmatpush1.msra.mxu0 %v845
    %2337 = vmatprep.subr.mxu0 %v850
    %2338 = vmatpush1.msra.mxu0 %v849
    %2339 = vmatprep.subr.mxu0 %v854
    %2340 = vmatpush1.msra.mxu0 %v853
    %2341 = vmatprep.subr.mxu0 %v858
    %2342 = vmatpush1.msra.mxu0 %v857
    %2343 = vmatprep.subr.mxu0 %v862
    %2344 = vmatpush1.msra.mxu0 %v861
    %2345 = vmatprep.subr.mxu0 %v866
    %2346 = vmatpush1.msra.mxu0 %v865
    %2347 = vmatprep.subr.mxu0 %v870
    %2348 = vmatpush1.msra.mxu0 %v869
    %2349 = vmatprep.subr.mxu0 0.0
    %2350 = vmatpush1.msra.mxu0 0.0
    %2351 = vmatprep.subr.mxu0 0.0
    %2352 = vmatpush1.msra.mxu0 0.0
    %2353 = vmatprep.subr.mxu0 0.0
    %2354 = vmatpush1.msra.mxu0 0.0
    %2355 = vmatprep.subr.mxu0 0.0
    %2356 = vmatpush1.msra.mxu0 0.0
    %2357 = vmatprep.subr.mxu0 0.0
    %2358 = vmatpush1.msra.mxu0 0.0
    %2359 = vmatprep.subr.mxu0 0.0
    %2360 = vmatpush1.msra.mxu0 0.0
    %2361 = vmatprep.subr.mxu0 0.0
    %2362 = vmatpush1.msra.mxu0 0.0
    %2363 = vmatprep.subr.mxu0 0.0
    %2364 = vmatpush1.msra.mxu0 0.0
    %2365 = vmatprep.subr.mxu0 0.0
    %2366 = vmatpush1.msra.mxu0 0.0
    %2367 = vmatprep.subr.mxu0 0.0
    %2368 = vmatpush1.msra.mxu0 0.0
    %2369 = vmatprep.subr.mxu0 0.0
    %2370 = vmatpush1.msra.mxu0 0.0
    %2371 = vmatprep.subr.mxu0 0.0
    %2372 = vmatpush1.msra.mxu0 0.0
    %2373 = vmatprep.subr.mxu0 0.0
    %2374 = vmatpush1.msra.mxu0 0.0
    %2375 = vmatprep.subr.mxu0 0.0
    %2376 = vmatpush1.msra.mxu0 0.0
    %2377 = vmatprep.subr.mxu0 0.0
    %2378 = vmatpush1.msra.mxu0 0.0
    %2379 = vmatprep.subr.mxu0 0.0
    %2380 = vmatpush1.msra.mxu0 0.0
    %2381 = vmatprep.mubr.f32.mxu0 0.0
    %2382 = vmatmul.mubr.f32.gmra.mrb[0].mxu0 %v2148
    %v2383 = vpop.f32.mrb[0].mxu0
    %v2384 = vadd.f32 0.0, %v2383
    %v2385 = vpop.f32.mrb[0].mxu0
    %v2386 = vadd.f32 0.0, %v2385
    %2387 = vdwg.mxu0
    %2388 = vmatprep.subr.mxu0 %v812
    %2389 = vmatpush1.msra.mxu0 %v811
    %2390 = vmatprep.subr.mxu0 %v816
    %2391 = vmatpush1.msra.mxu0 %v815
    %2392 = vmatprep.subr.mxu0 %v820
    %2393 = vmatpush1.msra.mxu0 %v819
    %2394 = vmatprep.subr.mxu0 %v824
    %2395 = vmatpush1.msra.mxu0 %v823
    %2396 = vmatprep.subr.mxu0 %v828
    %2397 = vmatpush1.msra.mxu0 %v827
    %2398 = vmatprep.subr.mxu0 %v832
    %2399 = vmatpush1.msra.mxu0 %v831
    %2400 = vmatprep.subr.mxu0 %v836
    %2401 = vmatpush1.msra.mxu0 %v835
    %2402 = vmatprep.subr.mxu0 %v840
    %2403 = vmatpush1.msra.mxu0 %v839
    %2404 = vmatprep.subr.mxu0 %v844
    %2405 = vmatpush1.msra.mxu0 %v843
    %2406 = vmatprep.subr.mxu0 %v848
    %2407 = vmatpush1.msra.mxu0 %v847
    %2408 = vmatprep.subr.mxu0 %v852
    %2409 = vmatpush1.msra.mxu0 %v851
    %2410 = vmatprep.subr.mxu0 %v856
    %2411 = vmatpush1.msra.mxu0 %v855
    %2412 = vmatprep.subr.mxu0 %v860
    %2413 = vmatpush1.msra.mxu0 %v859
    %2414 = vmatprep.subr.mxu0 %v864
    %2415 = vmatpush1.msra.mxu0 %v863
    %2416 = vmatprep.subr.mxu0 %v868
    %2417 = vmatpush1.msra.mxu0 %v867
    %2418 = vmatprep.subr.mxu0 %v872
    %2419 = vmatpush1.msra.mxu0 %v871
    %2420 = vmatprep.subr.mxu0 0.0
    %2421 = vmatpush1.msra.mxu0 0.0
    %2422 = vmatprep.subr.mxu0 0.0
    %2423 = vmatpush1.msra.mxu0 0.0
    %2424 = vmatprep.subr.mxu0 0.0
    %2425 = vmatpush1.msra.mxu0 0.0
    %2426 = vmatprep.subr.mxu0 0.0
    %2427 = vmatpush1.msra.mxu0 0.0
    %2428 = vmatprep.subr.mxu0 0.0
    %2429 = vmatpush1.msra.mxu0 0.0
    %2430 = vmatprep.subr.mxu0 0.0
    %2431 = vmatpush1.msra.mxu0 0.0
    %2432 = vmatprep.subr.mxu0 0.0
    %2433 = vmatpush1.msra.mxu0 0.0
    %2434 = vmatprep.subr.mxu0 0.0
    %2435 = vmatpush1.msra.mxu0 0.0
    %2436 = vmatprep.subr.mxu0 0.0
    %2437 = vmatpush1.msra.mxu0 0.0
    %2438 = vmatprep.subr.mxu0 0.0
    %2439 = vmatpush1.msra.mxu0 0.0
    %2440 = vmatprep.subr.mxu0 0.0
    %2441 = vmatpush1.msra.mxu0 0.0
    %2442 = vmatprep.subr.mxu0 0.0
    %2443 = vmatpush1.msra.mxu0 0.0
    %2444 = vmatprep.subr.mxu0 0.0
    %2445 = vmatpush1.msra.mxu0 0.0
    %2446 = vmatprep.subr.mxu0 0.0
    %2447 = vmatpush1.msra.mxu0 0.0
    %2448 = vmatprep.subr.mxu0 0.0
    %2449 = vmatpush1.msra.mxu0 0.0
    %2450 = vmatprep.subr.mxu0 0.0
    %2451 = vmatpush1.msra.mxu0 0.0
    %2452 = vmatprep.mubr.f32.mxu0 0.0
    %2453 = vmatmul.mubr.f32.gmra.mrb[0].mxu0 %v2148
    %v2454 = vpop.f32.mrb[0].mxu0
    %v2455 = vadd.f32 0.0, %v2454
    %v2456 = vpop.f32.mrb[0].mxu0
    %v2457 = vadd.f32 0.0, %v2456
    %2458 = vdwg.mxu0
    %2459 = vmatprep.subr.mxu0 %v746
    %2460 = vmatpush1.msra.mxu0 %v745
    %2461 = vmatprep.subr.mxu0 %v750
    %2462 = vmatpush1.msra.mxu0 %v749
    %2463 = vmatprep.subr.mxu0 %v754
    %2464 = vmatpush1.msra.mxu0 %v753
    %2465 = vmatprep.subr.mxu0 %v758
    %2466 = vmatpush1.msra.mxu0 %v757
    %2467 = vmatprep.subr.mxu0 %v762
    %2468 = vmatpush1.msra.mxu0 %v761
    %2469 = vmatprep.subr.mxu0 %v766
    %2470 = vmatpush1.msra.mxu0 %v765
    %2471 = vmatprep.subr.mxu0 %v770
    %2472 = vmatpush1.msra.mxu0 %v769
    %2473 = vmatprep.subr.mxu0 %v774
    %2474 = vmatpush1.msra.mxu0 %v773
    %2475 = vmatprep.subr.mxu0 %v778
    %2476 = vmatpush1.msra.mxu0 %v777
    %2477 = vmatprep.subr.mxu0 %v782
    %2478 = vmatpush1.msra.mxu0 %v781
    %2479 = vmatprep.subr.mxu0 %v786
    %2480 = vmatpush1.msra.mxu0 %v785
    %2481 = vmatprep.subr.mxu0 %v790
    %2482 = vmatpush1.msra.mxu0 %v789
    %2483 = vmatprep.subr.mxu0 %v794
    %2484 = vmatpush1.msra.mxu0 %v793
    %2485 = vmatprep.subr.mxu0 %v798
    %2486 = vmatpush1.msra.mxu0 %v797
    %2487 = vmatprep.subr.mxu0 %v802
    %2488 = vmatpush1.msra.mxu0 %v801
    %2489 = vmatprep.subr.mxu0 %v806
    %2490 = vmatpush1.msra.mxu0 %v805
    %2491 = vmatprep.subr.mxu0 0.0
    %2492 = vmatpush1.msra.mxu0 0.0
    %2493 = vmatprep.subr.mxu0 0.0
    %2494 = vmatpush1.msra.mxu0 0.0
    %2495 = vmatprep.subr.mxu0 0.0
    %2496 = vmatpush1.msra.mxu0 0.0
    %2497 = vmatprep.subr.mxu0 0.0
    %2498 = vmatpush1.msra.mxu0 0.0
    %2499 = vmatprep.subr.mxu0 0.0
    %2500 = vmatpush1.msra.mxu0 0.0
    %2501 = vmatprep.subr.mxu0 0.0
    %2502 = vmatpush1.msra.mxu0 0.0
    %2503 = vmatprep.subr.mxu0 0.0
    %2504 = vmatpush1.msra.mxu0 0.0
    %2505 = vmatprep.subr.mxu0 0.0
    %2506 = vmatpush1.msra.mxu0 0.0
    %2507 = vmatprep.subr.mxu0 0.0
    %2508 = vmatpush1.msra.mxu0 0.0
    %2509 = vmatprep.subr.mxu0 0.0
    %2510 = vmatpush1.msra.mxu0 0.0
    %2511 = vmatprep.subr.mxu0 0.0
    %2512 = vmatpush1.msra.mxu0 0.0
    %2513 = vmatprep.subr.mxu0 0.0
    %2514 = vmatpush1.msra.mxu0 0.0
    %2515 = vmatprep.subr.mxu0 0.0
    %2516 = vmatpush1.msra.mxu0 0.0
    %2517 = vmatprep.subr.mxu0 0.0
    %2518 = vmatpush1.msra.mxu0 0.0
    %2519 = vmatprep.subr.mxu0 0.0
    %2520 = vmatpush1.msra.mxu0 0.0
    %2521 = vmatprep.subr.mxu0 0.0
    %2522 = vmatpush1.msra.mxu0 0.0
    %2523 = vmatprep.mubr.f32.mxu0 0.0
    %2524 = vmatmul.mubr.f32.gmra.mrb[0].mxu0 %v2316
    %v2525 = vpop.f32.mrb[0].mxu0
    %v2526 = vadd.f32 %v2384, %v2525
    %v2527 = vpop.f32.mrb[0].mxu0
    %v2528 = vadd.f32 %v2386, %v2527
    %2529 = vdwg.mxu0
    %2530 = vmatprep.subr.mxu0 %v748
    %2531 = vmatpush1.msra.mxu0 %v747
    %2532 = vmatprep.subr.mxu0 %v752
    %2533 = vmatpush1.msra.mxu0 %v751
    %2534 = vmatprep.subr.mxu0 %v756
    %2535 = vmatpush1.msra.mxu0 %v755
    %2536 = vmatprep.subr.mxu0 %v760
    %2537 = vmatpush1.msra.mxu0 %v759
    %2538 = vmatprep.subr.mxu0 %v764
    %2539 = vmatpush1.msra.mxu0 %v763
    %2540 = vmatprep.subr.mxu0 %v768
    %2541 = vmatpush1.msra.mxu0 %v767
    %2542 = vmatprep.subr.mxu0 %v772
    %2543 = vmatpush1.msra.mxu0 %v771
    %2544 = vmatprep.subr.mxu0 %v776
    %2545 = vmatpush1.msra.mxu0 %v775
    %2546 = vmatprep.subr.mxu0 %v780
    %2547 = vmatpush1.msra.mxu0 %v779
    %2548 = vmatprep.subr.mxu0 %v784
    %2549 = vmatpush1.msra.mxu0 %v783
    %2550 = vmatprep.subr.mxu0 %v788
    %2551 = vmatpush1.msra.mxu0 %v787
    %2552 = vmatprep.subr.mxu0 %v792
    %2553 = vmatpush1.msra.mxu0 %v791
    %2554 = vmatprep.subr.mxu0 %v796
    %2555 = vmatpush1.msra.mxu0 %v795
    %2556 = vmatprep.subr.mxu0 %v800
    %2557 = vmatpush1.msra.mxu0 %v799
    %2558 = vmatprep.subr.mxu0 %v804
    %2559 = vmatpush1.msra.mxu0 %v803
    %2560 = vmatprep.subr.mxu0 %v808
    %2561 = vmatpush1.msra.mxu0 %v807
    %2562 = vmatprep.subr.mxu0 0.0
    %2563 = vmatpush1.msra.mxu0 0.0
    %2564 = vmatprep.subr.mxu0 0.0
    %2565 = vmatpush1.msra.mxu0 0.0
    %2566 = vmatprep.subr.mxu0 0.0
    %2567 = vmatpush1.msra.mxu0 0.0
    %2568 = vmatprep.subr.mxu0 0.0
    %2569 = vmatpush1.msra.mxu0 0.0
    %2570 = vmatprep.subr.mxu0 0.0
    %2571 = vmatpush1.msra.mxu0 0.0
    %2572 = vmatprep.subr.mxu0 0.0
    %2573 = vmatpush1.msra.mxu0 0.0
    %2574 = vmatprep.subr.mxu0 0.0
    %2575 = vmatpush1.msra.mxu0 0.0
    %2576 = vmatprep.subr.mxu0 0.0
    %2577 = vmatpush1.msra.mxu0 0.0
    %2578 = vmatprep.subr.mxu0 0.0
    %2579 = vmatpush1.msra.mxu0 0.0
    %2580 = vmatprep.subr.mxu0 0.0
    %2581 = vmatpush1.msra.mxu0 0.0
    %2582 = vmatprep.subr.mxu0 0.0
    %2583 = vmatpush1.msra.mxu0 0.0
    %2584 = vmatprep.subr.mxu0 0.0
    %2585 = vmatpush1.msra.mxu0 0.0
    %2586 = vmatprep.subr.mxu0 0.0
    %2587 = vmatpush1.msra.mxu0 0.0
    %2588 = vmatprep.subr.mxu0 0.0
    %2589 = vmatpush1.msra.mxu0 0.0
    %2590 = vmatprep.subr.mxu0 0.0
    %2591 = vmatpush1.msra.mxu0 0.0
    %2592 = vmatprep.subr.mxu0 0.0
    %2593 = vmatpush1.msra.mxu0 0.0
    %2594 = vmatprep.mubr.f32.mxu0 0.0
    %2595 = vmatmul.mubr.f32.gmra.mrb[0].mxu0 %v2316
    %v2596 = vpop.f32.mrb[0].mxu0
    %v2597 = vadd.f32 %v2455, %v2596
    %v2598 = vpop.f32.mrb[0].mxu0
    %v2599 = vadd.f32 %v2457, %v2598
    %2600 = vdwg.mxu0
    %v2601 = vadd.f32 %v2526, %v1162
    %v2602 = vadd.f32 %v2528, %v1166
    %v2603 = vadd.f32 %v2597, %v1170
    %v2604 = vadd.f32 %v2599, %v1174
    %v2605 = vmul.f32 %v2601, 0.5
    %v2606 = vtanh.pop %v2605
    %v2607 = vmul.f32 %v2606, 0.5
    %v2608 = vadd.f32 %v2607, 0.5
    %v2609 = vmul.f32 %v2602, 0.5
    %v2610 = vtanh.pop %v2609
    %v2611 = vmul.f32 %v2610, 0.5
    %v2612 = vadd.f32 %v2611, 0.5
    %v2613 = vtanh.pop %v2603
    %v2614 = vmul.f32 %v2604, 0.5
    %v2615 = vtanh.pop %v2614
    %v2616 = vmul.f32 %v2615, 0.5
    %v2617 = vadd.f32 %v2616, 0.5
    %v2618 = vmul.f32 %v2612, %v2146
    %v2619 = vmul.f32 %v2608, %v2613
    %v2620 = vadd.f32 %v2618, %v2619
    %v2621 = vtanh.pop %v2620
    %v2622 = vmul.f32 %v2617, %v2621
    %v2623 = vld [vmem:[#allocation2 + $0x80] sm:$0xff]
    %v2624 = vld [vmem:[#allocation2 + $0x88] sm:$0xff]
    %v2625 = vld [vmem:[#allocation2 + $0x90] sm:$0xff]
    %v2626 = vld [vmem:[#allocation2 + $0x98] sm:$0xff]
    %2627 = vmatprep.subr.mxu0 %v518
    %2628 = vmatpush1.msra.mxu0 %v517
    %2629 = vmatprep.subr.mxu0 %v522
    %2630 = vmatpush1.msra.mxu0 %v521
    %2631 = vmatprep.subr.mxu0 %v526
    %2632 = vmatpush1.msra.mxu0 %v525
    %2633 = vmatprep.subr.mxu0 %v530
    %2634 = vmatpush1.msra.mxu0 %v529
    %2635 = vmatprep.subr.mxu0 %v534
    %2636 = vmatpush1.msra.mxu0 %v533
    %2637 = vmatprep.subr.mxu0 %v538
    %2638 = vmatpush1.msra.mxu0 %v537
    %2639 = vmatprep.subr.mxu0 %v542
    %2640 = vmatpush1.msra.mxu0 %v541
    %2641 = vmatprep.subr.mxu0 %v546
    %2642 = vmatpush1.msra.mxu0 %v545
    %2643 = vmatprep.subr.mxu0 %v550
    %2644 = vmatpush1.msra.mxu0 %v549
    %2645 = vmatprep.subr.mxu0 %v554
    %2646 = vmatpush1.msra.mxu0 %v553
    %2647 = vmatprep.subr.mxu0 %v558
    %2648 = vmatpush1.msra.mxu0 %v557
    %2649 = vmatprep.subr.mxu0 %v562
    %2650 = vmatpush1.msra.mxu0 %v561
    %2651 = vmatprep.subr.mxu0 %v566
    %2652 = vmatpush1.msra.mxu0 %v565
    %2653 = vmatprep.subr.mxu0 %v570
    %2654 = vmatpush1.msra.mxu0 %v569
    %2655 = vmatprep.subr.mxu0 %v574
    %2656 = vmatpush1.msra.mxu0 %v573
    %2657 = vmatprep.subr.mxu0 %v578
    %2658 = vmatpush1.msra.mxu0 %v577
    %2659 = vmatprep.subr.mxu0 0.0
    %2660 = vmatpush1.msra.mxu0 0.0
    %2661 = vmatprep.subr.mxu0 0.0
    %2662 = vmatpush1.msra.mxu0 0.0
    %2663 = vmatprep.subr.mxu0 0.0
    %2664 = vmatpush1.msra.mxu0 0.0
    %2665 = vmatprep.subr.mxu0 0.0
    %2666 = vmatpush1.msra.mxu0 0.0
    %2667 = vmatprep.subr.mxu0 0.0
    %2668 = vmatpush1.msra.mxu0 0.0
    %2669 = vmatprep.subr.mxu0 0.0
    %2670 = vmatpush1.msra.mxu0 0.0
    %2671 = vmatprep.subr.mxu0 0.0
    %2672 = vmatpush1.msra.mxu0 0.0
    %2673 = vmatprep.subr.mxu0 0.0
    %2674 = vmatpush1.msra.mxu0 0.0
    %2675 = vmatprep.subr.mxu0 0.0
    %2676 = vmatpush1.msra.mxu0 0.0
    %2677 = vmatprep.subr.mxu0 0.0
    %2678 = vmatpush1.msra.mxu0 0.0
    %2679 = vmatprep.subr.mxu0 0.0
    %2680 = vmatpush1.msra.mxu0 0.0
    %2681 = vmatprep.subr.mxu0 0.0
    %2682 = vmatpush1.msra.mxu0 0.0
    %2683 = vmatprep.subr.mxu0 0.0
    %2684 = vmatpush1.msra.mxu0 0.0
    %2685 = vmatprep.subr.mxu0 0.0
    %2686 = vmatpush1.msra.mxu0 0.0
    %2687 = vmatprep.subr.mxu0 0.0
    %2688 = vmatpush1.msra.mxu0 0.0
    %2689 = vmatprep.subr.mxu0 0.0
    %2690 = vmatpush1.msra.mxu0 0.0
    %2691 = vmatprep.mubr.f32.mxu0 0.0
    %2692 = vmatmul.mubr.f32.gmra.mrb[0].mxu0 %v2316
    %v2693 = vpop.f32.mrb[0].mxu0
    %v2694 = vadd.f32 0.0, %v2693
    %v2695 = vpop.f32.mrb[0].mxu0
    %v2696 = vadd.f32 0.0, %v2695
    %2697 = vdwg.mxu0
    %2698 = vmatprep.subr.mxu0 %v520
    %2699 = vmatpush1.msra.mxu0 %v519
    %2700 = vmatprep.subr.mxu0 %v524
    %2701 = vmatpush1.msra.mxu0 %v523
    %2702 = vmatprep.subr.mxu0 %v528
    %2703 = vmatpush1.msra.mxu0 %v527
    %2704 = vmatprep.subr.mxu0 %v532
    %2705 = vmatpush1.msra.mxu0 %v531
    %2706 = vmatprep.subr.mxu0 %v536
    %2707 = vmatpush1.msra.mxu0 %v535
    %2708 = vmatprep.subr.mxu0 %v540
    %2709 = vmatpush1.msra.mxu0 %v539
    %2710 = vmatprep.subr.mxu0 %v544
    %2711 = vmatpush1.msra.mxu0 %v543
    %2712 = vmatprep.subr.mxu0 %v548
    %2713 = vmatpush1.msra.mxu0 %v547
    %2714 = vmatprep.subr.mxu0 %v552
    %2715 = vmatpush1.msra.mxu0 %v551
    %2716 = vmatprep.subr.mxu0 %v556
    %2717 = vmatpush1.msra.mxu0 %v555
    %2718 = vmatprep.subr.mxu0 %v560
    %2719 = vmatpush1.msra.mxu0 %v559
    %2720 = vmatprep.subr.mxu0 %v564
    %2721 = vmatpush1.msra.mxu0 %v563
    %2722 = vmatprep.subr.mxu0 %v568
    %2723 = vmatpush1.msra.mxu0 %v567
    %2724 = vmatprep.subr.mxu0 %v572
    %2725 = vmatpush1.msra.mxu0 %v571
    %2726 = vmatprep.subr.mxu0 %v576
    %2727 = vmatpush1.msra.mxu0 %v575
    %2728 = vmatprep.subr.mxu0 %v580
    %2729 = vmatpush1.msra.mxu0 %v579
    %2730 = vmatprep.subr.mxu0 0.0
    %2731 = vmatpush1.msra.mxu0 0.0
    %2732 = vmatprep.subr.mxu0 0.0
    %2733 = vmatpush1.msra.mxu0 0.0
    %2734 = vmatprep.subr.mxu0 0.0
    %2735 = vmatpush1.msra.mxu0 0.0
    %2736 = vmatprep.subr.mxu0 0.0
    %2737 = vmatpush1.msra.mxu0 0.0
    %2738 = vmatprep.subr.mxu0 0.0
    %2739 = vmatpush1.msra.mxu0 0.0
    %2740 = vmatprep.subr.mxu0 0.0
    %2741 = vmatpush1.msra.mxu0 0.0
    %2742 = vmatprep.subr.mxu0 0.0
    %2743 = vmatpush1.msra.mxu0 0.0
    %2744 = vmatprep.subr.mxu0 0.0
    %2745 = vmatpush1.msra.mxu0 0.0
    %2746 = vmatprep.subr.mxu0 0.0
    %2747 = vmatpush1.msra.mxu0 0.0
    %2748 = vmatprep.subr.mxu0 0.0
    %2749 = vmatpush1.msra.mxu0 0.0
    %2750 = vmatprep.subr.mxu0 0.0
    %2751 = vmatpush1.msra.mxu0 0.0
    %2752 = vmatprep.subr.mxu0 0.0
    %2753 = vmatpush1.msra.mxu0 0.0
    %2754 = vmatprep.subr.mxu0 0.0
    %2755 = vmatpush1.msra.mxu0 0.0
    %2756 = vmatprep.subr.mxu0 0.0
    %2757 = vmatpush1.msra.mxu0 0.0
    %2758 = vmatprep.subr.mxu0 0.0
    %2759 = vmatpush1.msra.mxu0 0.0
    %2760 = vmatprep.subr.mxu0 0.0
    %2761 = vmatpush1.msra.mxu0 0.0
    %2762 = vmatprep.mubr.f32.mxu0 0.0
    %2763 = vmatmul.mubr.f32.gmra.mrb[0].mxu0 %v2316
    %v2764 = vpop.f32.mrb[0].mxu0
    %v2765 = vadd.f32 0.0, %v2764
    %v2766 = vpop.f32.mrb[0].mxu0
    %v2767 = vadd.f32 0.0, %v2766
    %2768 = vdwg.mxu0
    %v2769 = vadd.f32 %v2623, %v2694
    %v2770 = vadd.f32 %v2624, %v2696
    %v2771 = vadd.f32 %v2625, %v2765
    %v2772 = vadd.f32 %v2626, %v2767
    %v2773 = vmul.f32 %v2769, 0.5
    %v2774 = vtanh.pop %v2773
    %v2775 = vmul.f32 %v2774, 0.5
    %v2776 = vadd.f32 %v2775, 0.5
    %v2777 = vmul.f32 %v2770, 0.5
    %v2778 = vtanh.pop %v2777
    %v2779 = vmul.f32 %v2778, 0.5
    %v2780 = vadd.f32 %v2779, 0.5
    %v2781 = vtanh.pop %v2771
    %v2782 = vmul.f32 %v2772, 0.5
    %v2783 = vtanh.pop %v2782
    %v2784 = vmul.f32 %v2783, 0.5
    %v2785 = vadd.f32 %v2784, 0.5
    %v2786 = vmul.f32 %v2780, %v2314
    %v2787 = vmul.f32 %v2776, %v2781
    %v2788 = vadd.f32 %v2786, %v2787
    %v2789 = vtanh.pop %v2788
    %v2790 = vmul.f32 %v2785, %v2789
    %2791 = vmatprep.subr.mxu0 %v810
    %2792 = vmatpush1.msra.mxu0 %v809
    %2793 = vmatprep.subr.mxu0 %v814
    %2794 = vmatpush1.msra.mxu0 %v813
    %2795 = vmatprep.subr.mxu0 %v818
    %2796 = vmatpush1.msra.mxu0 %v817
    %2797 = vmatprep.subr.mxu0 %v822
    %2798 = vmatpush1.msra.mxu0 %v821
    %2799 = vmatprep.subr.mxu0 %v826
    %2800 = vmatpush1.msra.mxu0 %v825
    %2801 = vmatprep.subr.mxu0 %v830
    %2802 = vmatpush1.msra.mxu0 %v829
    %2803 = vmatprep.subr.mxu0 %v834
    %2804 = vmatpush1.msra.mxu0 %v833
    %2805 = vmatprep.subr.mxu0 %v838
    %2806 = vmatpush1.msra.mxu0 %v837
    %2807 = vmatprep.subr.mxu0 %v842
    %2808 = vmatpush1.msra.mxu0 %v841
    %2809 = vmatprep.subr.mxu0 %v846
    %2810 = vmatpush1.msra.mxu0 %v845
    %2811 = vmatprep.subr.mxu0 %v850
    %2812 = vmatpush1.msra.mxu0 %v849
    %2813 = vmatprep.subr.mxu0 %v854
    %2814 = vmatpush1.msra.mxu0 %v853
    %2815 = vmatprep.subr.mxu0 %v858
    %2816 = vmatpush1.msra.mxu0 %v857
    %2817 = vmatprep.subr.mxu0 %v862
    %2818 = vmatpush1.msra.mxu0 %v861
    %2819 = vmatprep.subr.mxu0 %v866
    %2820 = vmatpush1.msra.mxu0 %v865
    %2821 = vmatprep.subr.mxu0 %v870
    %2822 = vmatpush1.msra.mxu0 %v869
    %2823 = vmatprep.subr.mxu0 0.0
    %2824 = vmatpush1.msra.mxu0 0.0
    %2825 = vmatprep.subr.mxu0 0.0
    %2826 = vmatpush1.msra.mxu0 0.0
    %2827 = vmatprep.subr.mxu0 0.0
    %2828 = vmatpush1.msra.mxu0 0.0
    %2829 = vmatprep.subr.mxu0 0.0
    %2830 = vmatpush1.msra.mxu0 0.0
    %2831 = vmatprep.subr.mxu0 0.0
    %2832 = vmatpush1.msra.mxu0 0.0
    %2833 = vmatprep.subr.mxu0 0.0
    %2834 = vmatpush1.msra.mxu0 0.0
    %2835 = vmatprep.subr.mxu0 0.0
    %2836 = vmatpush1.msra.mxu0 0.0
    %2837 = vmatprep.subr.mxu0 0.0
    %2838 = vmatpush1.msra.mxu0 0.0
    %2839 = vmatprep.subr.mxu0 0.0
    %2840 = vmatpush1.msra.mxu0 0.0
    %2841 = vmatprep.subr.mxu0 0.0
    %2842 = vmatpush1.msra.mxu0 0.0
    %2843 = vmatprep.subr.mxu0 0.0
    %2844 = vmatpush1.msra.mxu0 0.0
    %2845 = vmatprep.subr.mxu0 0.0
    %2846 = vmatpush1.msra.mxu0 0.0
    %2847 = vmatprep.subr.mxu0 0.0
    %2848 = vmatpush1.msra.mxu0 0.0
    %2849 = vmatprep.subr.mxu0 0.0
    %2850 = vmatpush1.msra.mxu0 0.0
    %2851 = vmatprep.subr.mxu0 0.0
    %2852 = vmatpush1.msra.mxu0 0.0
    %2853 = vmatprep.subr.mxu0 0.0
    %2854 = vmatpush1.msra.mxu0 0.0
    %2855 = vmatprep.mubr.f32.mxu0 0.0
    %2856 = vmatmul.mubr.f32.gmra.mrb[0].mxu0 %v2622
    %v2857 = vpop.f32.mrb[0].mxu0
    %v2858 = vadd.f32 0.0, %v2857
    %v2859 = vpop.f32.mrb[0].mxu0
    %v2860 = vadd.f32 0.0, %v2859
    %2861 = vdwg.mxu0
    %2862 = vmatprep.subr.mxu0 %v812
    %2863 = vmatpush1.msra.mxu0 %v811
    %2864 = vmatprep.subr.mxu0 %v816
    %2865 = vmatpush1.msra.mxu0 %v815
    %2866 = vmatprep.subr.mxu0 %v820
    %2867 = vmatpush1.msra.mxu0 %v819
    %2868 = vmatprep.subr.mxu0 %v824
    %2869 = vmatpush1.msra.mxu0 %v823
    %2870 = vmatprep.subr.mxu0 %v828
    %2871 = vmatpush1.msra.mxu0 %v827
    %2872 = vmatprep.subr.mxu0 %v832
    %2873 = vmatpush1.msra.mxu0 %v831
    %2874 = vmatprep.subr.mxu0 %v836
    %2875 = vmatpush1.msra.mxu0 %v835
    %2876 = vmatprep.subr.mxu0 %v840
    %2877 = vmatpush1.msra.mxu0 %v839
    %2878 = vmatprep.subr.mxu0 %v844
    %2879 = vmatpush1.msra.mxu0 %v843
    %2880 = vmatprep.subr.mxu0 %v848
    %2881 = vmatpush1.msra.mxu0 %v847
    %2882 = vmatprep.subr.mxu0 %v852
    %2883 = vmatpush1.msra.mxu0 %v851
    %2884 = vmatprep.subr.mxu0 %v856
    %2885 = vmatpush1.msra.mxu0 %v855
    %2886 = vmatprep.subr.mxu0 %v860
    %2887 = vmatpush1.msra.mxu0 %v859
    %2888 = vmatprep.subr.mxu0 %v864
    %2889 = vmatpush1.msra.mxu0 %v863
    %2890 = vmatprep.subr.mxu0 %v868
    %2891 = vmatpush1.msra.mxu0 %v867
    %2892 = vmatprep.subr.mxu0 %v872
    %2893 = vmatpush1.msra.mxu0 %v871
    %2894 = vmatprep.subr.mxu0 0.0
    %2895 = vmatpush1.msra.mxu0 0.0
    %2896 = vmatprep.subr.mxu0 0.0
    %2897 = vmatpush1.msra.mxu0 0.0
    %2898 = vmatprep.subr.mxu0 0.0
    %2899 = vmatpush1.msra.mxu0 0.0
    %2900 = vmatprep.subr.mxu0 0.0
    %2901 = vmatpush1.msra.mxu0 0.0
    %2902 = vmatprep.subr.mxu0 0.0
    %2903 = vmatpush1.msra.mxu0 0.0
    %2904 = vmatprep.subr.mxu0 0.0
    %2905 = vmatpush1.msra.mxu0 0.0
    %2906 = vmatprep.subr.mxu0 0.0
    %2907 = vmatpush1.msra.mxu0 0.0
    %2908 = vmatprep.subr.mxu0 0.0
    %2909 = vmatpush1.msra.mxu0 0.0
    %2910 = vmatprep.subr.mxu0 0.0
    %2911 = vmatpush1.msra.mxu0 0.0
    %2912 = vmatprep.subr.mxu0 0.0
    %2913 = vmatpush1.msra.mxu0 0.0
    %2914 = vmatprep.subr.mxu0 0.0
    %2915 = vmatpush1.msra.mxu0 0.0
    %2916 = vmatprep.subr.mxu0 0.0
    %2917 = vmatpush1.msra.mxu0 0.0
    %2918 = vmatprep.subr.mxu0 0.0
    %2919 = vmatpush1.msra.mxu0 0.0
    %2920 = vmatprep.subr.mxu0 0.0
    %2921 = vmatpush1.msra.mxu0 0.0
    %2922 = vmatprep.subr.mxu0 0.0
    %2923 = vmatpush1.msra.mxu0 0.0
    %2924 = vmatprep.subr.mxu0 0.0
    %2925 = vmatpush1.msra.mxu0 0.0
    %2926 = vmatprep.mubr.f32.mxu0 0.0
    %2927 = vmatmul.mubr.f32.gmra.mrb[0].mxu0 %v2622
    %v2928 = vpop.f32.mrb[0].mxu0
    %v2929 = vadd.f32 0.0, %v2928
    %v2930 = vpop.f32.mrb[0].mxu0
    %v2931 = vadd.f32 0.0, %v2930
    %2932 = vdwg.mxu0
    %2933 = vmatprep.subr.mxu0 %v746
    %2934 = vmatpush1.msra.mxu0 %v745
    %2935 = vmatprep.subr.mxu0 %v750
    %2936 = vmatpush1.msra.mxu0 %v749
    %2937 = vmatprep.subr.mxu0 %v754
    %2938 = vmatpush1.msra.mxu0 %v753
    %2939 = vmatprep.subr.mxu0 %v758
    %2940 = vmatpush1.msra.mxu0 %v757
    %2941 = vmatprep.subr.mxu0 %v762
    %2942 = vmatpush1.msra.mxu0 %v761
    %2943 = vmatprep.subr.mxu0 %v766
    %2944 = vmatpush1.msra.mxu0 %v765
    %2945 = vmatprep.subr.mxu0 %v770
    %2946 = vmatpush1.msra.mxu0 %v769
    %2947 = vmatprep.subr.mxu0 %v774
    %2948 = vmatpush1.msra.mxu0 %v773
    %2949 = vmatprep.subr.mxu0 %v778
    %2950 = vmatpush1.msra.mxu0 %v777
    %2951 = vmatprep.subr.mxu0 %v782
    %2952 = vmatpush1.msra.mxu0 %v781
    %2953 = vmatprep.subr.mxu0 %v786
    %2954 = vmatpush1.msra.mxu0 %v785
    %2955 = vmatprep.subr.mxu0 %v790
    %2956 = vmatpush1.msra.mxu0 %v789
    %2957 = vmatprep.subr.mxu0 %v794
    %2958 = vmatpush1.msra.mxu0 %v793
    %2959 = vmatprep.subr.mxu0 %v798
    %2960 = vmatpush1.msra.mxu0 %v797
    %2961 = vmatprep.subr.mxu0 %v802
    %2962 = vmatpush1.msra.mxu0 %v801
    %2963 = vmatprep.subr.mxu0 %v806
    %2964 = vmatpush1.msra.mxu0 %v805
    %2965 = vmatprep.subr.mxu0 0.0
    %2966 = vmatpush1.msra.mxu0 0.0
    %2967 = vmatprep.subr.mxu0 0.0
    %2968 = vmatpush1.msra.mxu0 0.0
    %2969 = vmatprep.subr.mxu0 0.0
    %2970 = vmatpush1.msra.mxu0 0.0
    %2971 = vmatprep.subr.mxu0 0.0
    %2972 = vmatpush1.msra.mxu0 0.0
    %2973 = vmatprep.subr.mxu0 0.0
    %2974 = vmatpush1.msra.mxu0 0.0
    %2975 = vmatprep.subr.mxu0 0.0
    %2976 = vmatpush1.msra.mxu0 0.0
    %2977 = vmatprep.subr.mxu0 0.0
    %2978 = vmatpush1.msra.mxu0 0.0
    %2979 = vmatprep.subr.mxu0 0.0
    %2980 = vmatpush1.msra.mxu0 0.0
    %2981 = vmatprep.subr.mxu0 0.0
    %2982 = vmatpush1.msra.mxu0 0.0
    %2983 = vmatprep.subr.mxu0 0.0
    %2984 = vmatpush1.msra.mxu0 0.0
    %2985 = vmatprep.subr.mxu0 0.0
    %2986 = vmatpush1.msra.mxu0 0.0
    %2987 = vmatprep.subr.mxu0 0.0
    %2988 = vmatpush1.msra.mxu0 0.0
    %2989 = vmatprep.subr.mxu0 0.0
    %2990 = vmatpush1.msra.mxu0 0.0
    %2991 = vmatprep.subr.mxu0 0.0
    %2992 = vmatpush1.msra.mxu0 0.0
    %2993 = vmatprep.subr.mxu0 0.0
    %2994 = vmatpush1.msra.mxu0 0.0
    %2995 = vmatprep.subr.mxu0 0.0
    %2996 = vmatpush1.msra.mxu0 0.0
    %2997 = vmatprep.mubr.f32.mxu0 0.0
    %2998 = vmatmul.mubr.f32.gmra.mrb[0].mxu0 %v2790
    %v2999 = vpop.f32.mrb[0].mxu0
    %v3000 = vadd.f32 %v2858, %v2999
    %v3001 = vpop.f32.mrb[0].mxu0
    %v3002 = vadd.f32 %v2860, %v3001
    %3003 = vdwg.mxu0
    %3004 = vmatprep.subr.mxu0 %v748
    %3005 = vmatpush1.msra.mxu0 %v747
    %3006 = vmatprep.subr.mxu0 %v752
    %3007 = vmatpush1.msra.mxu0 %v751
    %3008 = vmatprep.subr.mxu0 %v756
    %3009 = vmatpush1.msra.mxu0 %v755
    %3010 = vmatprep.subr.mxu0 %v760
    %3011 = vmatpush1.msra.mxu0 %v759
    %3012 = vmatprep.subr.mxu0 %v764
    %3013 = vmatpush1.msra.mxu0 %v763
    %3014 = vmatprep.subr.mxu0 %v768
    %3015 = vmatpush1.msra.mxu0 %v767
    %3016 = vmatprep.subr.mxu0 %v772
    %3017 = vmatpush1.msra.mxu0 %v771
    %3018 = vmatprep.subr.mxu0 %v776
    %3019 = vmatpush1.msra.mxu0 %v775
    %3020 = vmatprep.subr.mxu0 %v780
    %3021 = vmatpush1.msra.mxu0 %v779
    %3022 = vmatprep.subr.mxu0 %v784
    %3023 = vmatpush1.msra.mxu0 %v783
    %3024 = vmatprep.subr.mxu0 %v788
    %3025 = vmatpush1.msra.mxu0 %v787
    %3026 = vmatprep.subr.mxu0 %v792
    %3027 = vmatpush1.msra.mxu0 %v791
    %3028 = vmatprep.subr.mxu0 %v796
    %3029 = vmatpush1.msra.mxu0 %v795
    %3030 = vmatprep.subr.mxu0 %v800
    %3031 = vmatpush1.msra.mxu0 %v799
    %3032 = vmatprep.subr.mxu0 %v804
    %3033 = vmatpush1.msra.mxu0 %v803
    %3034 = vmatprep.subr.mxu0 %v808
    %3035 = vmatpush1.msra.mxu0 %v807
    %3036 = vmatprep.subr.mxu0 0.0
    %3037 = vmatpush1.msra.mxu0 0.0
    %3038 = vmatprep.subr.mxu0 0.0
    %3039 = vmatpush1.msra.mxu0 0.0
    %3040 = vmatprep.subr.mxu0 0.0
    %3041 = vmatpush1.msra.mxu0 0.0
    %3042 = vmatprep.subr.mxu0 0.0
    %3043 = vmatpush1.msra.mxu0 0.0
    %3044 = vmatprep.subr.mxu0 0.0
    %3045 = vmatpush1.msra.mxu0 0.0
    %3046 = vmatprep.subr.mxu0 0.0
    %3047 = vmatpush1.msra.mxu0 0.0
    %3048 = vmatprep.subr.mxu0 0.0
    %3049 = vmatpush1.msra.mxu0 0.0
    %3050 = vmatprep.subr.mxu0 0.0
    %3051 = vmatpush1.msra.mxu0 0.0
    %3052 = vmatprep.subr.mxu0 0.0
    %3053 = vmatpush1.msra.mxu0 0.0
    %3054 = vmatprep.subr.mxu0 0.0
    %3055 = vmatpush1.msra.mxu0 0.0
    %3056 = vmatprep.subr.mxu0 0.0
    %3057 = vmatpush1.msra.mxu0 0.0
    %3058 = vmatprep.subr.mxu0 0.0
    %3059 = vmatpush1.msra.mxu0 0.0
    %3060 = vmatprep.subr.mxu0 0.0
    %3061 = vmatpush1.msra.mxu0 0.0
    %3062 = vmatprep.subr.mxu0 0.0
    %3063 = vmatpush1.msra.mxu0 0.0
    %3064 = vmatprep.subr.mxu0 0.0
    %3065 = vmatpush1.msra.mxu0 0.0
    %3066 = vmatprep.subr.mxu0 0.0
    %3067 = vmatpush1.msra.mxu0 0.0
    %3068 = vmatprep.mubr.f32.mxu0 0.0
    %3069 = vmatmul.mubr.f32.gmra.mrb[0].mxu0 %v2790
    %v3070 = vpop.f32.mrb[0].mxu0
    %v3071 = vadd.f32 %v2929, %v3070
    %v3072 = vpop.f32.mrb[0].mxu0
    %v3073 = vadd.f32 %v2931, %v3072
    %3074 = vdwg.mxu0
    %v3075 = vadd.f32 %v3000, %v1162
    %v3076 = vadd.f32 %v3002, %v1166
    %v3077 = vadd.f32 %v3071, %v1170
    %v3078 = vadd.f32 %v3073, %v1174
    %v3079 = vmul.f32 %v3075, 0.5
    %v3080 = vtanh.pop %v3079
    %v3081 = vmul.f32 %v3080, 0.5
    %v3082 = vadd.f32 %v3081, 0.5
    %v3083 = vmul.f32 %v3076, 0.5
    %v3084 = vtanh.pop %v3083
    %v3085 = vmul.f32 %v3084, 0.5
    %v3086 = vadd.f32 %v3085, 0.5
    %v3087 = vtanh.pop %v3077
    %v3088 = vmul.f32 %v3078, 0.5
    %v3089 = vtanh.pop %v3088
    %v3090 = vmul.f32 %v3089, 0.5
    %v3091 = vadd.f32 %v3090, 0.5
    %v3092 = vmul.f32 %v3086, %v2620
    %v3093 = vmul.f32 %v3082, %v3087
    %v3094 = vadd.f32 %v3092, %v3093
    %v3095 = vtanh.pop %v3094
    %v3096 = vmul.f32 %v3091, %v3095
    %v3097 = vld [vmem:[#allocation2 + $0xa0] sm:$0xff]
    %v3098 = vld [vmem:[#allocation2 + $0xa8] sm:$0xff]
    %v3099 = vld [vmem:[#allocation2 + $0xb0] sm:$0xff]
    %v3100 = vld [vmem:[#allocation2 + $0xb8] sm:$0xff]
    %3101 = vmatprep.subr.mxu0 %v518
    %3102 = vmatpush1.msra.mxu0 %v517
    %3103 = vmatprep.subr.mxu0 %v522
    %3104 = vmatpush1.msra.mxu0 %v521
    %3105 = vmatprep.subr.mxu0 %v526
    %3106 = vmatpush1.msra.mxu0 %v525
    %3107 = vmatprep.subr.mxu0 %v530
    %3108 = vmatpush1.msra.mxu0 %v529
    %3109 = vmatprep.subr.mxu0 %v534
    %3110 = vmatpush1.msra.mxu0 %v533
    %3111 = vmatprep.subr.mxu0 %v538
    %3112 = vmatpush1.msra.mxu0 %v537
    %3113 = vmatprep.subr.mxu0 %v542
    %3114 = vmatpush1.msra.mxu0 %v541
    %3115 = vmatprep.subr.mxu0 %v546
    %3116 = vmatpush1.msra.mxu0 %v545
    %3117 = vmatprep.subr.mxu0 %v550
    %3118 = vmatpush1.msra.mxu0 %v549
    %3119 = vmatprep.subr.mxu0 %v554
    %3120 = vmatpush1.msra.mxu0 %v553
    %3121 = vmatprep.subr.mxu0 %v558
    %3122 = vmatpush1.msra.mxu0 %v557
    %3123 = vmatprep.subr.mxu0 %v562
    %3124 = vmatpush1.msra.mxu0 %v561
    %3125 = vmatprep.subr.mxu0 %v566
    %3126 = vmatpush1.msra.mxu0 %v565
    %3127 = vmatprep.subr.mxu0 %v570
    %3128 = vmatpush1.msra.mxu0 %v569
    %3129 = vmatprep.subr.mxu0 %v574
    %3130 = vmatpush1.msra.mxu0 %v573
    %3131 = vmatprep.subr.mxu0 %v578
    %3132 = vmatpush1.msra.mxu0 %v577
    %3133 = vmatprep.subr.mxu0 0.0
    %3134 = vmatpush1.msra.mxu0 0.0
    %3135 = vmatprep.subr.mxu0 0.0
    %3136 = vmatpush1.msra.mxu0 0.0
    %3137 = vmatprep.subr.mxu0 0.0
    %3138 = vmatpush1.msra.mxu0 0.0
    %3139 = vmatprep.subr.mxu0 0.0
    %3140 = vmatpush1.msra.mxu0 0.0
    %3141 = vmatprep.subr.mxu0 0.0
    %3142 = vmatpush1.msra.mxu0 0.0
    %3143 = vmatprep.subr.mxu0 0.0
    %3144 = vmatpush1.msra.mxu0 0.0
    %3145 = vmatprep.subr.mxu0 0.0
    %3146 = vmatpush1.msra.mxu0 0.0
    %3147 = vmatprep.subr.mxu0 0.0
    %3148 = vmatpush1.msra.mxu0 0.0
    %3149 = vmatprep.subr.mxu0 0.0
    %3150 = vmatpush1.msra.mxu0 0.0
    %3151 = vmatprep.subr.mxu0 0.0
    %3152 = vmatpush1.msra.mxu0 0.0
    %3153 = vmatprep.subr.mxu0 0.0
    %3154 = vmatpush1.msra.mxu0 0.0
    %3155 = vmatprep.subr.mxu0 0.0
    %3156 = vmatpush1.msra.mxu0 0.0
    %3157 = vmatprep.subr.mxu0 0.0
    %3158 = vmatpush1.msra.mxu0 0.0
    %3159 = vmatprep.subr.mxu0 0.0
    %3160 = vmatpush1.msra.mxu0 0.0
    %3161 = vmatprep.subr.mxu0 0.0
    %3162 = vmatpush1.msra.mxu0 0.0
    %3163 = vmatprep.subr.mxu0 0.0
    %3164 = vmatpush1.msra.mxu0 0.0
    %3165 = vmatprep.mubr.f32.mxu0 0.0
    %3166 = vmatmul.mubr.f32.gmra.mrb[0].mxu0 %v2790
    %v3167 = vpop.f32.mrb[0].mxu0
    %v3168 = vadd.f32 0.0, %v3167
    %v3169 = vpop.f32.mrb[0].mxu0
    %v3170 = vadd.f32 0.0, %v3169
    %3171 = vdwg.mxu0
    %3172 = vmatprep.subr.mxu0 %v520
    %3173 = vmatpush1.msra.mxu0 %v519
    %3174 = vmatprep.subr.mxu0 %v524
    %3175 = vmatpush1.msra.mxu0 %v523
    %3176 = vmatprep.subr.mxu0 %v528
    %3177 = vmatpush1.msra.mxu0 %v527
    %3178 = vmatprep.subr.mxu0 %v532
    %3179 = vmatpush1.msra.mxu0 %v531
    %3180 = vmatprep.subr.mxu0 %v536
    %3181 = vmatpush1.msra.mxu0 %v535
    %3182 = vmatprep.subr.mxu0 %v540
    %3183 = vmatpush1.msra.mxu0 %v539
    %3184 = vmatprep.subr.mxu0 %v544
    %3185 = vmatpush1.msra.mxu0 %v543
    %3186 = vmatprep.subr.mxu0 %v548
    %3187 = vmatpush1.msra.mxu0 %v547
    %3188 = vmatprep.subr.mxu0 %v552
    %3189 = vmatpush1.msra.mxu0 %v551
    %3190 = vmatprep.subr.mxu0 %v556
    %3191 = vmatpush1.msra.mxu0 %v555
    %3192 = vmatprep.subr.mxu0 %v560
    %3193 = vmatpush1.msra.mxu0 %v559
    %3194 = vmatprep.subr.mxu0 %v564
    %3195 = vmatpush1.msra.mxu0 %v563
    %3196 = vmatprep.subr.mxu0 %v568
    %3197 = vmatpush1.msra.mxu0 %v567
    %3198 = vmatprep.subr.mxu0 %v572
    %3199 = vmatpush1.msra.mxu0 %v571
    %3200 = vmatprep.subr.mxu0 %v576
    %3201 = vmatpush1.msra.mxu0 %v575
    %3202 = vmatprep.subr.mxu0 %v580
    %3203 = vmatpush1.msra.mxu0 %v579
    %3204 = vmatprep.subr.mxu0 0.0
    %3205 = vmatpush1.msra.mxu0 0.0
    %3206 = vmatprep.subr.mxu0 0.0
    %3207 = vmatpush1.msra.mxu0 0.0
    %3208 = vmatprep.subr.mxu0 0.0
    %3209 = vmatpush1.msra.mxu0 0.0
    %3210 = vmatprep.subr.mxu0 0.0
    %3211 = vmatpush1.msra.mxu0 0.0
    %3212 = vmatprep.subr.mxu0 0.0
    %3213 = vmatpush1.msra.mxu0 0.0
    %3214 = vmatprep.subr.mxu0 0.0
    %3215 = vmatpush1.msra.mxu0 0.0
    %3216 = vmatprep.subr.mxu0 0.0
    %3217 = vmatpush1.msra.mxu0 0.0
    %3218 = vmatprep.subr.mxu0 0.0
    %3219 = vmatpush1.msra.mxu0 0.0
    %3220 = vmatprep.subr.mxu0 0.0
    %3221 = vmatpush1.msra.mxu0 0.0
    %3222 = vmatprep.subr.mxu0 0.0
    %3223 = vmatpush1.msra.mxu0 0.0
    %3224 = vmatprep.subr.mxu0 0.0
    %3225 = vmatpush1.msra.mxu0 0.0
    %3226 = vmatprep.subr.mxu0 0.0
    %3227 = vmatpush1.msra.mxu0 0.0
    %3228 = vmatprep.subr.mxu0 0.0
    %3229 = vmatpush1.msra.mxu0 0.0
    %3230 = vmatprep.subr.mxu0 0.0
    %3231 = vmatpush1.msra.mxu0 0.0
    %3232 = vmatprep.subr.mxu0 0.0
    %3233 = vmatpush1.msra.mxu0 0.0
    %3234 = vmatprep.subr.mxu0 0.0
    %3235 = vmatpush1.msra.mxu0 0.0
    %3236 = vmatprep.mubr.f32.mxu0 0.0
    %3237 = vmatmul.mubr.f32.gmra.mrb[0].mxu0 %v2790
    %v3238 = vpop.f32.mrb[0].mxu0
    %v3239 = vadd.f32 0.0, %v3238
    %v3240 = vpop.f32.mrb[0].mxu0
    %v3241 = vadd.f32 0.0, %v3240
    %3242 = vdwg.mxu0
    %v3243 = vadd.f32 %v3097, %v3168
    %v3244 = vadd.f32 %v3098, %v3170
    %v3245 = vadd.f32 %v3099, %v3239
    %v3246 = vadd.f32 %v3100, %v3241
    %v3247 = vmul.f32 %v3243, 0.5
    %v3248 = vtanh.pop %v3247
    %v3249 = vmul.f32 %v3248, 0.5
    %v3250 = vadd.f32 %v3249, 0.5
    %v3251 = vmul.f32 %v3244, 0.5
    %v3252 = vtanh.pop %v3251
    %v3253 = vmul.f32 %v3252, 0.5
    %v3254 = vadd.f32 %v3253, 0.5
    %v3255 = vtanh.pop %v3245
    %v3256 = vmul.f32 %v3246, 0.5
    %v3257 = vtanh.pop %v3256
    %v3258 = vmul.f32 %v3257, 0.5
    %v3259 = vadd.f32 %v3258, 0.5
    %v3260 = vmul.f32 %v3254, %v2788
    %v3261 = vmul.f32 %v3250, %v3255
    %v3262 = vadd.f32 %v3260, %v3261
    %v3263 = vtanh.pop %v3262
    %v3264 = vmul.f32 %v3259, %v3263
    %3265 = vmatprep.subr.mxu0 %v810
    %3266 = vmatpush1.msra.mxu0 %v809
    %3267 = vmatprep.subr.mxu0 %v814
    %3268 = vmatpush1.msra.mxu0 %v813
    %3269 = vmatprep.subr.mxu0 %v818
    %3270 = vmatpush1.msra.mxu0 %v817
    %3271 = vmatprep.subr.mxu0 %v822
    %3272 = vmatpush1.msra.mxu0 %v821
    %3273 = vmatprep.subr.mxu0 %v826
    %3274 = vmatpush1.msra.mxu0 %v825
    %3275 = vmatprep.subr.mxu0 %v830
    %3276 = vmatpush1.msra.mxu0 %v829
    %3277 = vmatprep.subr.mxu0 %v834
    %3278 = vmatpush1.msra.mxu0 %v833
    %3279 = vmatprep.subr.mxu0 %v838
    %3280 = vmatpush1.msra.mxu0 %v837
    %3281 = vmatprep.subr.mxu0 %v842
    %3282 = vmatpush1.msra.mxu0 %v841
    %3283 = vmatprep.subr.mxu0 %v846
    %3284 = vmatpush1.msra.mxu0 %v845
    %3285 = vmatprep.subr.mxu0 %v850
    %3286 = vmatpush1.msra.mxu0 %v849
    %3287 = vmatprep.subr.mxu0 %v854
    %3288 = vmatpush1.msra.mxu0 %v853
    %3289 = vmatprep.subr.mxu0 %v858
    %3290 = vmatpush1.msra.mxu0 %v857
    %3291 = vmatprep.subr.mxu0 %v862
    %3292 = vmatpush1.msra.mxu0 %v861
    %3293 = vmatprep.subr.mxu0 %v866
    %3294 = vmatpush1.msra.mxu0 %v865
    %3295 = vmatprep.subr.mxu0 %v870
    %3296 = vmatpush1.msra.mxu0 %v869
    %3297 = vmatprep.subr.mxu0 0.0
    %3298 = vmatpush1.msra.mxu0 0.0
    %3299 = vmatprep.subr.mxu0 0.0
    %3300 = vmatpush1.msra.mxu0 0.0
    %3301 = vmatprep.subr.mxu0 0.0
    %3302 = vmatpush1.msra.mxu0 0.0
    %3303 = vmatprep.subr.mxu0 0.0
    %3304 = vmatpush1.msra.mxu0 0.0
    %3305 = vmatprep.subr.mxu0 0.0
    %3306 = vmatpush1.msra.mxu0 0.0
    %3307 = vmatprep.subr.mxu0 0.0
    %3308 = vmatpush1.msra.mxu0 0.0
    %3309 = vmatprep.subr.mxu0 0.0
    %3310 = vmatpush1.msra.mxu0 0.0
    %3311 = vmatprep.subr.mxu0 0.0
    %3312 = vmatpush1.msra.mxu0 0.0
    %3313 = vmatprep.subr.mxu0 0.0
    %3314 = vmatpush1.msra.mxu0 0.0
    %3315 = vmatprep.subr.mxu0 0.0
    %3316 = vmatpush1.msra.mxu0 0.0
    %3317 = vmatprep.subr.mxu0 0.0
    %3318 = vmatpush1.msra.mxu0 0.0
    %3319 = vmatprep.subr.mxu0 0.0
    %3320 = vmatpush1.msra.mxu0 0.0
    %3321 = vmatprep.subr.mxu0 0.0
    %3322 = vmatpush1.msra.mxu0 0.0
    %3323 = vmatprep.subr.mxu0 0.0
    %3324 = vmatpush1.msra.mxu0 0.0
    %3325 = vmatprep.subr.mxu0 0.0
    %3326 = vmatpush1.msra.mxu0 0.0
    %3327 = vmatprep.subr.mxu0 0.0
    %3328 = vmatpush1.msra.mxu0 0.0
    %3329 = vmatprep.mubr.f32.mxu0 0.0
    %3330 = vmatmul.mubr.f32.gmra.mrb[0].mxu0 %v3096
    %v3331 = vpop.f32.mrb[0].mxu0
    %v3332 = vadd.f32 0.0, %v3331
    %v3333 = vpop.f32.mrb[0].mxu0
    %v3334 = vadd.f32 0.0, %v3333
    %3335 = vdwg.mxu0
    %3336 = vmatprep.subr.mxu0 %v812
    %3337 = vmatpush1.msra.mxu0 %v811
    %3338 = vmatprep.subr.mxu0 %v816
    %3339 = vmatpush1.msra.mxu0 %v815
    %3340 = vmatprep.subr.mxu0 %v820
    %3341 = vmatpush1.msra.mxu0 %v819
    %3342 = vmatprep.subr.mxu0 %v824
    %3343 = vmatpush1.msra.mxu0 %v823
    %3344 = vmatprep.subr.mxu0 %v828
    %3345 = vmatpush1.msra.mxu0 %v827
    %3346 = vmatprep.subr.mxu0 %v832
    %3347 = vmatpush1.msra.mxu0 %v831
    %3348 = vmatprep.subr.mxu0 %v836
    %3349 = vmatpush1.msra.mxu0 %v835
    %3350 = vmatprep.subr.mxu0 %v840
    %3351 = vmatpush1.msra.mxu0 %v839
    %3352 = vmatprep.subr.mxu0 %v844
    %3353 = vmatpush1.msra.mxu0 %v843
    %3354 = vmatprep.subr.mxu0 %v848
    %3355 = vmatpush1.msra.mxu0 %v847
    %3356 = vmatprep.subr.mxu0 %v852
    %3357 = vmatpush1.msra.mxu0 %v851
    %3358 = vmatprep.subr.mxu0 %v856
    %3359 = vmatpush1.msra.mxu0 %v855
    %3360 = vmatprep.subr.mxu0 %v860
    %3361 = vmatpush1.msra.mxu0 %v859
    %3362 = vmatprep.subr.mxu0 %v864
    %3363 = vmatpush1.msra.mxu0 %v863
    %3364 = vmatprep.subr.mxu0 %v868
    %3365 = vmatpush1.msra.mxu0 %v867
    %3366 = vmatprep.subr.mxu0 %v872
    %3367 = vmatpush1.msra.mxu0 %v871
    %3368 = vmatprep.subr.mxu0 0.0
    %3369 = vmatpush1.msra.mxu0 0.0
    %3370 = vmatprep.subr.mxu0 0.0
    %3371 = vmatpush1.msra.mxu0 0.0
    %3372 = vmatprep.subr.mxu0 0.0
    %3373 = vmatpush1.msra.mxu0 0.0
    %3374 = vmatprep.subr.mxu0 0.0
    %3375 = vmatpush1.msra.mxu0 0.0
    %3376 = vmatprep.subr.mxu0 0.0
    %3377 = vmatpush1.msra.mxu0 0.0
    %3378 = vmatprep.subr.mxu0 0.0
    %3379 = vmatpush1.msra.mxu0 0.0
    %3380 = vmatprep.subr.mxu0 0.0
    %3381 = vmatpush1.msra.mxu0 0.0
    %3382 = vmatprep.subr.mxu0 0.0
    %3383 = vmatpush1.msra.mxu0 0.0
    %3384 = vmatprep.subr.mxu0 0.0
    %3385 = vmatpush1.msra.mxu0 0.0
    %3386 = vmatprep.subr.mxu0 0.0
    %3387 = vmatpush1.msra.mxu0 0.0
    %3388 = vmatprep.subr.mxu0 0.0
    %3389 = vmatpush1.msra.mxu0 0.0
    %3390 = vmatprep.subr.mxu0 0.0
    %3391 = vmatpush1.msra.mxu0 0.0
    %3392 = vmatprep.subr.mxu0 0.0
    %3393 = vmatpush1.msra.mxu0 0.0
    %3394 = vmatprep.subr.mxu0 0.0
    %3395 = vmatpush1.msra.mxu0 0.0
    %3396 = vmatprep.subr.mxu0 0.0
    %3397 = vmatpush1.msra.mxu0 0.0
    %3398 = vmatprep.subr.mxu0 0.0
    %3399 = vmatpush1.msra.mxu0 0.0
    %3400 = vmatprep.mubr.f32.mxu0 0.0
    %3401 = vmatmul.mubr.f32.gmra.mrb[0].mxu0 %v3096
    %v3402 = vpop.f32.mrb[0].mxu0
    %v3403 = vadd.f32 0.0, %v3402
    %v3404 = vpop.f32.mrb[0].mxu0
    %v3405 = vadd.f32 0.0, %v3404
    %3406 = vdwg.mxu0
    %3407 = vmatprep.subr.mxu0 %v746
    %3408 = vmatpush1.msra.mxu0 %v745
    %3409 = vmatprep.subr.mxu0 %v750
    %3410 = vmatpush1.msra.mxu0 %v749
    %3411 = vmatprep.subr.mxu0 %v754
    %3412 = vmatpush1.msra.mxu0 %v753
    %3413 = vmatprep.subr.mxu0 %v758
    %3414 = vmatpush1.msra.mxu0 %v757
    %3415 = vmatprep.subr.mxu0 %v762
    %3416 = vmatpush1.msra.mxu0 %v761
    %3417 = vmatprep.subr.mxu0 %v766
    %3418 = vmatpush1.msra.mxu0 %v765
    %3419 = vmatprep.subr.mxu0 %v770
    %3420 = vmatpush1.msra.mxu0 %v769
    %3421 = vmatprep.subr.mxu0 %v774
    %3422 = vmatpush1.msra.mxu0 %v773
    %3423 = vmatprep.subr.mxu0 %v778
    %3424 = vmatpush1.msra.mxu0 %v777
    %3425 = vmatprep.subr.mxu0 %v782
    %3426 = vmatpush1.msra.mxu0 %v781
    %3427 = vmatprep.subr.mxu0 %v786
    %3428 = vmatpush1.msra.mxu0 %v785
    %3429 = vmatprep.subr.mxu0 %v790
    %3430 = vmatpush1.msra.mxu0 %v789
    %3431 = vmatprep.subr.mxu0 %v794
    %3432 = vmatpush1.msra.mxu0 %v793
    %3433 = vmatprep.subr.mxu0 %v798
    %3434 = vmatpush1.msra.mxu0 %v797
    %3435 = vmatprep.subr.mxu0 %v802
    %3436 = vmatpush1.msra.mxu0 %v801
    %3437 = vmatprep.subr.mxu0 %v806
    %3438 = vmatpush1.msra.mxu0 %v805
    %3439 = vmatprep.subr.mxu0 0.0
    %3440 = vmatpush1.msra.mxu0 0.0
    %3441 = vmatprep.subr.mxu0 0.0
    %3442 = vmatpush1.msra.mxu0 0.0
    %3443 = vmatprep.subr.mxu0 0.0
    %3444 = vmatpush1.msra.mxu0 0.0
    %3445 = vmatprep.subr.mxu0 0.0
    %3446 = vmatpush1.msra.mxu0 0.0
    %3447 = vmatprep.subr.mxu0 0.0
    %3448 = vmatpush1.msra.mxu0 0.0
    %3449 = vmatprep.subr.mxu0 0.0
    %3450 = vmatpush1.msra.mxu0 0.0
    %3451 = vmatprep.subr.mxu0 0.0
    %3452 = vmatpush1.msra.mxu0 0.0
    %3453 = vmatprep.subr.mxu0 0.0
    %3454 = vmatpush1.msra.mxu0 0.0
    %3455 = vmatprep.subr.mxu0 0.0
    %3456 = vmatpush1.msra.mxu0 0.0
    %3457 = vmatprep.subr.mxu0 0.0
    %3458 = vmatpush1.msra.mxu0 0.0
    %3459 = vmatprep.subr.mxu0 0.0
    %3460 = vmatpush1.msra.mxu0 0.0
    %3461 = vmatprep.subr.mxu0 0.0
    %3462 = vmatpush1.msra.mxu0 0.0
    %3463 = vmatprep.subr.mxu0 0.0
    %3464 = vmatpush1.msra.mxu0 0.0
    %3465 = vmatprep.subr.mxu0 0.0
    %3466 = vmatpush1.msra.mxu0 0.0
    %3467 = vmatprep.subr.mxu0 0.0
    %3468 = vmatpush1.msra.mxu0 0.0
    %3469 = vmatprep.subr.mxu0 0.0
    %3470 = vmatpush1.msra.mxu0 0.0
    %3471 = vmatprep.mubr.f32.mxu0 0.0
    %3472 = vmatmul.mubr.f32.gmra.mrb[0].mxu0 %v3264
    %v3473 = vpop.f32.mrb[0].mxu0
    %v3474 = vadd.f32 %v3332, %v3473
    %v3475 = vpop.f32.mrb[0].mxu0
    %v3476 = vadd.f32 %v3334, %v3475
    %3477 = vdwg.mxu0
    %3478 = vmatprep.subr.mxu0 %v748
    %3479 = vmatpush1.msra.mxu0 %v747
    %3480 = vmatprep.subr.mxu0 %v752
    %3481 = vmatpush1.msra.mxu0 %v751
    %3482 = vmatprep.subr.mxu0 %v756
    %3483 = vmatpush1.msra.mxu0 %v755
    %3484 = vmatprep.subr.mxu0 %v760
    %3485 = vmatpush1.msra.mxu0 %v759
    %3486 = vmatprep.subr.mxu0 %v764
    %3487 = vmatpush1.msra.mxu0 %v763
    %3488 = vmatprep.subr.mxu0 %v768
    %3489 = vmatpush1.msra.mxu0 %v767
    %3490 = vmatprep.subr.mxu0 %v772
    %3491 = vmatpush1.msra.mxu0 %v771
    %3492 = vmatprep.subr.mxu0 %v776
    %3493 = vmatpush1.msra.mxu0 %v775
    %3494 = vmatprep.subr.mxu0 %v780
    %3495 = vmatpush1.msra.mxu0 %v779
    %3496 = vmatprep.subr.mxu0 %v784
    %3497 = vmatpush1.msra.mxu0 %v783
    %3498 = vmatprep.subr.mxu0 %v788
    %3499 = vmatpush1.msra.mxu0 %v787
    %3500 = vmatprep.subr.mxu0 %v792
    %3501 = vmatpush1.msra.mxu0 %v791
    %3502 = vmatprep.subr.mxu0 %v796
    %3503 = vmatpush1.msra.mxu0 %v795
    %3504 = vmatprep.subr.mxu0 %v800
    %3505 = vmatpush1.msra.mxu0 %v799
    %3506 = vmatprep.subr.mxu0 %v804
    %3507 = vmatpush1.msra.mxu0 %v803
    %3508 = vmatprep.subr.mxu0 %v808
    %3509 = vmatpush1.msra.mxu0 %v807
    %3510 = vmatprep.subr.mxu0 0.0
    %3511 = vmatpush1.msra.mxu0 0.0
    %3512 = vmatprep.subr.mxu0 0.0
    %3513 = vmatpush1.msra.mxu0 0.0
    %3514 = vmatprep.subr.mxu0 0.0
    %3515 = vmatpush1.msra.mxu0 0.0
    %3516 = vmatprep.subr.mxu0 0.0
    %3517 = vmatpush1.msra.mxu0 0.0
    %3518 = vmatprep.subr.mxu0 0.0
    %3519 = vmatpush1.msra.mxu0 0.0
    %3520 = vmatprep.subr.mxu0 0.0
    %3521 = vmatpush1.msra.mxu0 0.0
    %3522 = vmatprep.subr.mxu0 0.0
    %3523 = vmatpush1.msra.mxu0 0.0
    %3524 = vmatprep.subr.mxu0 0.0
    %3525 = vmatpush1.msra.mxu0 0.0
    %3526 = vmatprep.subr.mxu0 0.0
    %3527 = vmatpush1.msra.mxu0 0.0
    %3528 = vmatprep.subr.mxu0 0.0
    %3529 = vmatpush1.msra.mxu0 0.0
    %3530 = vmatprep.subr.mxu0 0.0
    %3531 = vmatpush1.msra.mxu0 0.0
    %3532 = vmatprep.subr.mxu0 0.0
    %3533 = vmatpush1.msra.mxu0 0.0
    %3534 = vmatprep.subr.mxu0 0.0
    %3535 = vmatpush1.msra.mxu0 0.0
    %3536 = vmatprep.subr.mxu0 0.0
    %3537 = vmatpush1.msra.mxu0 0.0
    %3538 = vmatprep.subr.mxu0 0.0
    %3539 = vmatpush1.msra.mxu0 0.0
    %3540 = vmatprep.subr.mxu0 0.0
    %3541 = vmatpush1.msra.mxu0 0.0
    %3542 = vmatprep.mubr.f32.mxu0 0.0
    %3543 = vmatmul.mubr.f32.gmra.mrb[0].mxu0 %v3264
    %v3544 = vpop.f32.mrb[0].mxu0
    %v3545 = vadd.f32 %v3403, %v3544
    %v3546 = vpop.f32.mrb[0].mxu0
    %v3547 = vadd.f32 %v3405, %v3546
    %3548 = vdwg.mxu0
    %v3549 = vadd.f32 %v3474, %v1162
    %v3550 = vadd.f32 %v3476, %v1166
    %v3551 = vadd.f32 %v3545, %v1170
    %v3552 = vadd.f32 %v3547, %v1174
    %v3553 = vmul.f32 %v3549, 0.5
    %v3554 = vtanh.pop %v3553
    %v3555 = vmul.f32 %v3554, 0.5
    %v3556 = vadd.f32 %v3555, 0.5
    %v3557 = vmul.f32 %v3550, 0.5
    %v3558 = vtanh.pop %v3557
    %v3559 = vmul.f32 %v3558, 0.5
    %v3560 = vadd.f32 %v3559, 0.5
    %v3561 = vtanh.pop %v3551
    %v3562 = vmul.f32 %v3552, 0.5
    %v3563 = vtanh.pop %v3562
    %v3564 = vmul.f32 %v3563, 0.5
    %v3565 = vadd.f32 %v3564, 0.5
    %v3566 = vmul.f32 %v3560, %v3094
    %v3567 = vmul.f32 %v3556, %v3561
    %v3568 = vadd.f32 %v3566, %v3567
    %v3569 = vtanh.pop %v3568
    %v3570 = vmul.f32 %v3565, %v3569
    %v3571 = vld [vmem:[#allocation2 + $0xc0] sm:$0xff]
    %v3572 = vld [vmem:[#allocation2 + $0xc8] sm:$0xff]
    %v3573 = vld [vmem:[#allocation2 + $0xd0] sm:$0xff]
    %v3574 = vld [vmem:[#allocation2 + $0xd8] sm:$0xff]
    %3575 = vmatprep.subr.mxu0 %v518
    %3576 = vmatpush1.msra.mxu0 %v517
    %3577 = vmatprep.subr.mxu0 %v522
    %3578 = vmatpush1.msra.mxu0 %v521
    %3579 = vmatprep.subr.mxu0 %v526
    %3580 = vmatpush1.msra.mxu0 %v525
    %3581 = vmatprep.subr.mxu0 %v530
    %3582 = vmatpush1.msra.mxu0 %v529
    %3583 = vmatprep.subr.mxu0 %v534
    %3584 = vmatpush1.msra.mxu0 %v533
    %3585 = vmatprep.subr.mxu0 %v538
    %3586 = vmatpush1.msra.mxu0 %v537
    %3587 = vmatprep.subr.mxu0 %v542
    %3588 = vmatpush1.msra.mxu0 %v541
    %3589 = vmatprep.subr.mxu0 %v546
    %3590 = vmatpush1.msra.mxu0 %v545
    %3591 = vmatprep.subr.mxu0 %v550
    %3592 = vmatpush1.msra.mxu0 %v549
    %3593 = vmatprep.subr.mxu0 %v554
    %3594 = vmatpush1.msra.mxu0 %v553
    %3595 = vmatprep.subr.mxu0 %v558
    %3596 = vmatpush1.msra.mxu0 %v557
    %3597 = vmatprep.subr.mxu0 %v562
    %3598 = vmatpush1.msra.mxu0 %v561
    %3599 = vmatprep.subr.mxu0 %v566
    %3600 = vmatpush1.msra.mxu0 %v565
    %3601 = vmatprep.subr.mxu0 %v570
    %3602 = vmatpush1.msra.mxu0 %v569
    %3603 = vmatprep.subr.mxu0 %v574
    %3604 = vmatpush1.msra.mxu0 %v573
    %3605 = vmatprep.subr.mxu0 %v578
    %3606 = vmatpush1.msra.mxu0 %v577
    %3607 = vmatprep.subr.mxu0 0.0
    %3608 = vmatpush1.msra.mxu0 0.0
    %3609 = vmatprep.subr.mxu0 0.0
    %3610 = vmatpush1.msra.mxu0 0.0
    %3611 = vmatprep.subr.mxu0 0.0
    %3612 = vmatpush1.msra.mxu0 0.0
    %3613 = vmatprep.subr.mxu0 0.0
    %3614 = vmatpush1.msra.mxu0 0.0
    %3615 = vmatprep.subr.mxu0 0.0
    %3616 = vmatpush1.msra.mxu0 0.0
    %3617 = vmatprep.subr.mxu0 0.0
    %3618 = vmatpush1.msra.mxu0 0.0
    %3619 = vmatprep.subr.mxu0 0.0
    %3620 = vmatpush1.msra.mxu0 0.0
    %3621 = vmatprep.subr.mxu0 0.0
    %3622 = vmatpush1.msra.mxu0 0.0
    %3623 = vmatprep.subr.mxu0 0.0
    %3624 = vmatpush1.msra.mxu0 0.0
    %3625 = vmatprep.subr.mxu0 0.0
    %3626 = vmatpush1.msra.mxu0 0.0
    %3627 = vmatprep.subr.mxu0 0.0
    %3628 = vmatpush1.msra.mxu0 0.0
    %3629 = vmatprep.subr.mxu0 0.0
    %3630 = vmatpush1.msra.mxu0 0.0
    %3631 = vmatprep.subr.mxu0 0.0
    %3632 = vmatpush1.msra.mxu0 0.0
    %3633 = vmatprep.subr.mxu0 0.0
    %3634 = vmatpush1.msra.mxu0 0.0
    %3635 = vmatprep.subr.mxu0 0.0
    %3636 = vmatpush1.msra.mxu0 0.0
    %3637 = vmatprep.subr.mxu0 0.0
    %3638 = vmatpush1.msra.mxu0 0.0
    %3639 = vmatprep.mubr.f32.mxu0 0.0
    %3640 = vmatmul.mubr.f32.gmra.mrb[0].mxu0 %v3264
    %v3641 = vpop.f32.mrb[0].mxu0
    %v3642 = vadd.f32 0.0, %v3641
    %v3643 = vpop.f32.mrb[0].mxu0
    %v3644 = vadd.f32 0.0, %v3643
    %3645 = vdwg.mxu0
    %3646 = vmatprep.subr.mxu0 %v520
    %3647 = vmatpush1.msra.mxu0 %v519
    %3648 = vmatprep.subr.mxu0 %v524
    %3649 = vmatpush1.msra.mxu0 %v523
    %3650 = vmatprep.subr.mxu0 %v528
    %3651 = vmatpush1.msra.mxu0 %v527
    %3652 = vmatprep.subr.mxu0 %v532
    %3653 = vmatpush1.msra.mxu0 %v531
    %3654 = vmatprep.subr.mxu0 %v536
    %3655 = vmatpush1.msra.mxu0 %v535
    %3656 = vmatprep.subr.mxu0 %v540
    %3657 = vmatpush1.msra.mxu0 %v539
    %3658 = vmatprep.subr.mxu0 %v544
    %3659 = vmatpush1.msra.mxu0 %v543
    %3660 = vmatprep.subr.mxu0 %v548
    %3661 = vmatpush1.msra.mxu0 %v547
    %3662 = vmatprep.subr.mxu0 %v552
    %3663 = vmatpush1.msra.mxu0 %v551
    %3664 = vmatprep.subr.mxu0 %v556
    %3665 = vmatpush1.msra.mxu0 %v555
    %3666 = vmatprep.subr.mxu0 %v560
    %3667 = vmatpush1.msra.mxu0 %v559
    %3668 = vmatprep.subr.mxu0 %v564
    %3669 = vmatpush1.msra.mxu0 %v563
    %3670 = vmatprep.subr.mxu0 %v568
    %3671 = vmatpush1.msra.mxu0 %v567
    %3672 = vmatprep.subr.mxu0 %v572
    %3673 = vmatpush1.msra.mxu0 %v571
    %3674 = vmatprep.subr.mxu0 %v576
    %3675 = vmatpush1.msra.mxu0 %v575
    %3676 = vmatprep.subr.mxu0 %v580
    %3677 = vmatpush1.msra.mxu0 %v579
    %3678 = vmatprep.subr.mxu0 0.0
    %3679 = vmatpush1.msra.mxu0 0.0
    %3680 = vmatprep.subr.mxu0 0.0
    %3681 = vmatpush1.msra.mxu0 0.0
    %3682 = vmatprep.subr.mxu0 0.0
    %3683 = vmatpush1.msra.mxu0 0.0
    %3684 = vmatprep.subr.mxu0 0.0
    %3685 = vmatpush1.msra.mxu0 0.0
    %3686 = vmatprep.subr.mxu0 0.0
    %3687 = vmatpush1.msra.mxu0 0.0
    %3688 = vmatprep.subr.mxu0 0.0
    %3689 = vmatpush1.msra.mxu0 0.0
    %3690 = vmatprep.subr.mxu0 0.0
    %3691 = vmatpush1.msra.mxu0 0.0
    %3692 = vmatprep.subr.mxu0 0.0
    %3693 = vmatpush1.msra.mxu0 0.0
    %3694 = vmatprep.subr.mxu0 0.0
    %3695 = vmatpush1.msra.mxu0 0.0
    %3696 = vmatprep.subr.mxu0 0.0
    %3697 = vmatpush1.msra.mxu0 0.0
    %3698 = vmatprep.subr.mxu0 0.0
    %3699 = vmatpush1.msra.mxu0 0.0
    %3700 = vmatprep.subr.mxu0 0.0
    %3701 = vmatpush1.msra.mxu0 0.0
    %3702 = vmatprep.subr.mxu0 0.0
    %3703 = vmatpush1.msra.mxu0 0.0
    %3704 = vmatprep.subr.mxu0 0.0
    %3705 = vmatpush1.msra.mxu0 0.0
    %3706 = vmatprep.subr.mxu0 0.0
    %3707 = vmatpush1.msra.mxu0 0.0
    %3708 = vmatprep.subr.mxu0 0.0
    %3709 = vmatpush1.msra.mxu0 0.0
    %3710 = vmatprep.mubr.f32.mxu0 0.0
    %3711 = vmatmul.mubr.f32.gmra.mrb[0].mxu0 %v3264
    %v3712 = vpop.f32.mrb[0].mxu0
    %v3713 = vadd.f32 0.0, %v3712
    %v3714 = vpop.f32.mrb[0].mxu0
    %v3715 = vadd.f32 0.0, %v3714
    %3716 = vdwg.mxu0
    %v3717 = vadd.f32 %v3571, %v3642
    %v3718 = vadd.f32 %v3572, %v3644
    %v3719 = vadd.f32 %v3573, %v3713
    %v3720 = vadd.f32 %v3574, %v3715
    %v3721 = vmul.f32 %v3717, 0.5
    %v3722 = vtanh.pop %v3721
    %v3723 = vmul.f32 %v3722, 0.5
    %v3724 = vadd.f32 %v3723, 0.5
    %v3725 = vmul.f32 %v3718, 0.5
    %v3726 = vtanh.pop %v3725
    %v3727 = vmul.f32 %v3726, 0.5
    %v3728 = vadd.f32 %v3727, 0.5
    %v3729 = vtanh.pop %v3719
    %v3730 = vmul.f32 %v3720, 0.5
    %v3731 = vtanh.pop %v3730
    %v3732 = vmul.f32 %v3731, 0.5
    %v3733 = vadd.f32 %v3732, 0.5
    %v3734 = vmul.f32 %v3728, %v3262
    %v3735 = vmul.f32 %v3724, %v3729
    %v3736 = vadd.f32 %v3734, %v3735
    %v3737 = vtanh.pop %v3736
    %v3738 = vmul.f32 %v3733, %v3737
    %3739 = vmatprep.subr.mxu0 %v810
    %3740 = vmatpush1.msra.mxu0 %v809
    %3741 = vmatprep.subr.mxu0 %v814
    %3742 = vmatpush1.msra.mxu0 %v813
    %3743 = vmatprep.subr.mxu0 %v818
    %3744 = vmatpush1.msra.mxu0 %v817
    %3745 = vmatprep.subr.mxu0 %v822
    %3746 = vmatpush1.msra.mxu0 %v821
    %3747 = vmatprep.subr.mxu0 %v826
    %3748 = vmatpush1.msra.mxu0 %v825
    %3749 = vmatprep.subr.mxu0 %v830
    %3750 = vmatpush1.msra.mxu0 %v829
    %3751 = vmatprep.subr.mxu0 %v834
    %3752 = vmatpush1.msra.mxu0 %v833
    %3753 = vmatprep.subr.mxu0 %v838
    %3754 = vmatpush1.msra.mxu0 %v837
    %3755 = vmatprep.subr.mxu0 %v842
    %3756 = vmatpush1.msra.mxu0 %v841
    %3757 = vmatprep.subr.mxu0 %v846
    %3758 = vmatpush1.msra.mxu0 %v845
    %3759 = vmatprep.subr.mxu0 %v850
    %3760 = vmatpush1.msra.mxu0 %v849
    %3761 = vmatprep.subr.mxu0 %v854
    %3762 = vmatpush1.msra.mxu0 %v853
    %3763 = vmatprep.subr.mxu0 %v858
    %3764 = vmatpush1.msra.mxu0 %v857
    %3765 = vmatprep.subr.mxu0 %v862
    %3766 = vmatpush1.msra.mxu0 %v861
    %3767 = vmatprep.subr.mxu0 %v866
    %3768 = vmatpush1.msra.mxu0 %v865
    %3769 = vmatprep.subr.mxu0 %v870
    %3770 = vmatpush1.msra.mxu0 %v869
    %3771 = vmatprep.subr.mxu0 0.0
    %3772 = vmatpush1.msra.mxu0 0.0
    %3773 = vmatprep.subr.mxu0 0.0
    %3774 = vmatpush1.msra.mxu0 0.0
    %3775 = vmatprep.subr.mxu0 0.0
    %3776 = vmatpush1.msra.mxu0 0.0
    %3777 = vmatprep.subr.mxu0 0.0
    %3778 = vmatpush1.msra.mxu0 0.0
    %3779 = vmatprep.subr.mxu0 0.0
    %3780 = vmatpush1.msra.mxu0 0.0
    %3781 = vmatprep.subr.mxu0 0.0
    %3782 = vmatpush1.msra.mxu0 0.0
    %3783 = vmatprep.subr.mxu0 0.0
    %3784 = vmatpush1.msra.mxu0 0.0
    %3785 = vmatprep.subr.mxu0 0.0
    %3786 = vmatpush1.msra.mxu0 0.0
    %3787 = vmatprep.subr.mxu0 0.0
    %3788 = vmatpush1.msra.mxu0 0.0
    %3789 = vmatprep.subr.mxu0 0.0
    %3790 = vmatpush1.msra.mxu0 0.0
    %3791 = vmatprep.subr.mxu0 0.0
    %3792 = vmatpush1.msra.mxu0 0.0
    %3793 = vmatprep.subr.mxu0 0.0
    %3794 = vmatpush1.msra.mxu0 0.0
    %3795 = vmatprep.subr.mxu0 0.0
    %3796 = vmatpush1.msra.mxu0 0.0
    %3797 = vmatprep.subr.mxu0 0.0
    %3798 = vmatpush1.msra.mxu0 0.0
    %3799 = vmatprep.subr.mxu0 0.0
    %3800 = vmatpush1.msra.mxu0 0.0
    %3801 = vmatprep.subr.mxu0 0.0
    %3802 = vmatpush1.msra.mxu0 0.0
    %3803 = vmatprep.mubr.f32.mxu0 0.0
    %3804 = vmatmul.mubr.f32.gmra.mrb[0].mxu0 %v3570
    %v3805 = vpop.f32.mrb[0].mxu0
    %v3806 = vadd.f32 0.0, %v3805
    %v3807 = vpop.f32.mrb[0].mxu0
    %v3808 = vadd.f32 0.0, %v3807
    %3809 = vdwg.mxu0
    %3810 = vmatprep.subr.mxu0 %v812
    %3811 = vmatpush1.msra.mxu0 %v811
    %3812 = vmatprep.subr.mxu0 %v816
    %3813 = vmatpush1.msra.mxu0 %v815
    %3814 = vmatprep.subr.mxu0 %v820
    %3815 = vmatpush1.msra.mxu0 %v819
    %3816 = vmatprep.subr.mxu0 %v824
    %3817 = vmatpush1.msra.mxu0 %v823
    %3818 = vmatprep.subr.mxu0 %v828
    %3819 = vmatpush1.msra.mxu0 %v827
    %3820 = vmatprep.subr.mxu0 %v832
    %3821 = vmatpush1.msra.mxu0 %v831
    %3822 = vmatprep.subr.mxu0 %v836
    %3823 = vmatpush1.msra.mxu0 %v835
    %3824 = vmatprep.subr.mxu0 %v840
    %3825 = vmatpush1.msra.mxu0 %v839
    %3826 = vmatprep.subr.mxu0 %v844
    %3827 = vmatpush1.msra.mxu0 %v843
    %3828 = vmatprep.subr.mxu0 %v848
    %3829 = vmatpush1.msra.mxu0 %v847
    %3830 = vmatprep.subr.mxu0 %v852
    %3831 = vmatpush1.msra.mxu0 %v851
    %3832 = vmatprep.subr.mxu0 %v856
    %3833 = vmatpush1.msra.mxu0 %v855
    %3834 = vmatprep.subr.mxu0 %v860
    %3835 = vmatpush1.msra.mxu0 %v859
    %3836 = vmatprep.subr.mxu0 %v864
    %3837 = vmatpush1.msra.mxu0 %v863
    %3838 = vmatprep.subr.mxu0 %v868
    %3839 = vmatpush1.msra.mxu0 %v867
    %3840 = vmatprep.subr.mxu0 %v872
    %3841 = vmatpush1.msra.mxu0 %v871
    %3842 = vmatprep.subr.mxu0 0.0
    %3843 = vmatpush1.msra.mxu0 0.0
    %3844 = vmatprep.subr.mxu0 0.0
    %3845 = vmatpush1.msra.mxu0 0.0
    %3846 = vmatprep.subr.mxu0 0.0
    %3847 = vmatpush1.msra.mxu0 0.0
    %3848 = vmatprep.subr.mxu0 0.0
    %3849 = vmatpush1.msra.mxu0 0.0
    %3850 = vmatprep.subr.mxu0 0.0
    %3851 = vmatpush1.msra.mxu0 0.0
    %3852 = vmatprep.subr.mxu0 0.0
    %3853 = vmatpush1.msra.mxu0 0.0
    %3854 = vmatprep.subr.mxu0 0.0
    %3855 = vmatpush1.msra.mxu0 0.0
    %3856 = vmatprep.subr.mxu0 0.0
    %3857 = vmatpush1.msra.mxu0 0.0
    %3858 = vmatprep.subr.mxu0 0.0
    %3859 = vmatpush1.msra.mxu0 0.0
    %3860 = vmatprep.subr.mxu0 0.0
    %3861 = vmatpush1.msra.mxu0 0.0
    %3862 = vmatprep.subr.mxu0 0.0
    %3863 = vmatpush1.msra.mxu0 0.0
    %3864 = vmatprep.subr.mxu0 0.0
    %3865 = vmatpush1.msra.mxu0 0.0
    %3866 = vmatprep.subr.mxu0 0.0
    %3867 = vmatpush1.msra.mxu0 0.0
    %3868 = vmatprep.subr.mxu0 0.0
    %3869 = vmatpush1.msra.mxu0 0.0
    %3870 = vmatprep.subr.mxu0 0.0
    %3871 = vmatpush1.msra.mxu0 0.0
    %3872 = vmatprep.subr.mxu0 0.0
    %3873 = vmatpush1.msra.mxu0 0.0
    %3874 = vmatprep.mubr.f32.mxu0 0.0
    %3875 = vmatmul.mubr.f32.gmra.mrb[0].mxu0 %v3570
    %v3876 = vpop.f32.mrb[0].mxu0
    %v3877 = vadd.f32 0.0, %v3876
    %v3878 = vpop.f32.mrb[0].mxu0
    %v3879 = vadd.f32 0.0, %v3878
    %3880 = vdwg.mxu0
    %3881 = vmatprep.subr.mxu0 %v746
    %3882 = vmatpush1.msra.mxu0 %v745
    %3883 = vmatprep.subr.mxu0 %v750
    %3884 = vmatpush1.msra.mxu0 %v749
    %3885 = vmatprep.subr.mxu0 %v754
    %3886 = vmatpush1.msra.mxu0 %v753
    %3887 = vmatprep.subr.mxu0 %v758
    %3888 = vmatpush1.msra.mxu0 %v757
    %3889 = vmatprep.subr.mxu0 %v762
    %3890 = vmatpush1.msra.mxu0 %v761
    %3891 = vmatprep.subr.mxu0 %v766
    %3892 = vmatpush1.msra.mxu0 %v765
    %3893 = vmatprep.subr.mxu0 %v770
    %3894 = vmatpush1.msra.mxu0 %v769
    %3895 = vmatprep.subr.mxu0 %v774
    %3896 = vmatpush1.msra.mxu0 %v773
    %3897 = vmatprep.subr.mxu0 %v778
    %3898 = vmatpush1.msra.mxu0 %v777
    %3899 = vmatprep.subr.mxu0 %v782
    %3900 = vmatpush1.msra.mxu0 %v781
    %3901 = vmatprep.subr.mxu0 %v786
    %3902 = vmatpush1.msra.mxu0 %v785
    %3903 = vmatprep.subr.mxu0 %v790
    %3904 = vmatpush1.msra.mxu0 %v789
    %3905 = vmatprep.subr.mxu0 %v794
    %3906 = vmatpush1.msra.mxu0 %v793
    %3907 = vmatprep.subr.mxu0 %v798
    %3908 = vmatpush1.msra.mxu0 %v797
    %3909 = vmatprep.subr.mxu0 %v802
    %3910 = vmatpush1.msra.mxu0 %v801
    %3911 = vmatprep.subr.mxu0 %v806
    %3912 = vmatpush1.msra.mxu0 %v805
    %3913 = vmatprep.subr.mxu0 0.0
    %3914 = vmatpush1.msra.mxu0 0.0
    %3915 = vmatprep.subr.mxu0 0.0
    %3916 = vmatpush1.msra.mxu0 0.0
    %3917 = vmatprep.subr.mxu0 0.0
    %3918 = vmatpush1.msra.mxu0 0.0
    %3919 = vmatprep.subr.mxu0 0.0
    %3920 = vmatpush1.msra.mxu0 0.0
    %3921 = vmatprep.subr.mxu0 0.0
    %3922 = vmatpush1.msra.mxu0 0.0
    %3923 = vmatprep.subr.mxu0 0.0
    %3924 = vmatpush1.msra.mxu0 0.0
    %3925 = vmatprep.subr.mxu0 0.0
    %3926 = vmatpush1.msra.mxu0 0.0
    %3927 = vmatprep.subr.mxu0 0.0
    %3928 = vmatpush1.msra.mxu0 0.0
    %3929 = vmatprep.subr.mxu0 0.0
    %3930 = vmatpush1.msra.mxu0 0.0
    %3931 = vmatprep.subr.mxu0 0.0
    %3932 = vmatpush1.msra.mxu0 0.0
    %3933 = vmatprep.subr.mxu0 0.0
    %3934 = vmatpush1.msra.mxu0 0.0
    %3935 = vmatprep.subr.mxu0 0.0
    %3936 = vmatpush1.msra.mxu0 0.0
    %3937 = vmatprep.subr.mxu0 0.0
    %3938 = vmatpush1.msra.mxu0 0.0
    %3939 = vmatprep.subr.mxu0 0.0
    %3940 = vmatpush1.msra.mxu0 0.0
    %3941 = vmatprep.subr.mxu0 0.0
    %3942 = vmatpush1.msra.mxu0 0.0
    %3943 = vmatprep.subr.mxu0 0.0
    %3944 = vmatpush1.msra.mxu0 0.0
    %3945 = vmatprep.mubr.f32.mxu0 0.0
    %3946 = vmatmul.mubr.f32.gmra.mrb[0].mxu0 %v3738
    %v3947 = vpop.f32.mrb[0].mxu0
    %v3948 = vadd.f32 %v3806, %v3947
    %v3949 = vpop.f32.mrb[0].mxu0
    %v3950 = vadd.f32 %v3808, %v3949
    %3951 = vdwg.mxu0
    %3952 = vmatprep.subr.mxu0 %v748
    %3953 = vmatpush1.msra.mxu0 %v747
    %3954 = vmatprep.subr.mxu0 %v752
    %3955 = vmatpush1.msra.mxu0 %v751
    %3956 = vmatprep.subr.mxu0 %v756
    %3957 = vmatpush1.msra.mxu0 %v755
    %3958 = vmatprep.subr.mxu0 %v760
    %3959 = vmatpush1.msra.mxu0 %v759
    %3960 = vmatprep.subr.mxu0 %v764
    %3961 = vmatpush1.msra.mxu0 %v763
    %3962 = vmatprep.subr.mxu0 %v768
    %3963 = vmatpush1.msra.mxu0 %v767
    %3964 = vmatprep.subr.mxu0 %v772
    %3965 = vmatpush1.msra.mxu0 %v771
    %3966 = vmatprep.subr.mxu0 %v776
    %3967 = vmatpush1.msra.mxu0 %v775
    %3968 = vmatprep.subr.mxu0 %v780
    %3969 = vmatpush1.msra.mxu0 %v779
    %3970 = vmatprep.subr.mxu0 %v784
    %3971 = vmatpush1.msra.mxu0 %v783
    %3972 = vmatprep.subr.mxu0 %v788
    %3973 = vmatpush1.msra.mxu0 %v787
    %3974 = vmatprep.subr.mxu0 %v792
    %3975 = vmatpush1.msra.mxu0 %v791
    %3976 = vmatprep.subr.mxu0 %v796
    %3977 = vmatpush1.msra.mxu0 %v795
    %3978 = vmatprep.subr.mxu0 %v800
    %3979 = vmatpush1.msra.mxu0 %v799
    %3980 = vmatprep.subr.mxu0 %v804
    %3981 = vmatpush1.msra.mxu0 %v803
    %3982 = vmatprep.subr.mxu0 %v808
    %3983 = vmatpush1.msra.mxu0 %v807
    %3984 = vmatprep.subr.mxu0 0.0
    %3985 = vmatpush1.msra.mxu0 0.0
    %3986 = vmatprep.subr.mxu0 0.0
    %3987 = vmatpush1.msra.mxu0 0.0
    %3988 = vmatprep.subr.mxu0 0.0
    %3989 = vmatpush1.msra.mxu0 0.0
    %3990 = vmatprep.subr.mxu0 0.0
    %3991 = vmatpush1.msra.mxu0 0.0
    %3992 = vmatprep.subr.mxu0 0.0
    %3993 = vmatpush1.msra.mxu0 0.0
    %3994 = vmatprep.subr.mxu0 0.0
    %3995 = vmatpush1.msra.mxu0 0.0
    %3996 = vmatprep.subr.mxu0 0.0
    %3997 = vmatpush1.msra.mxu0 0.0
    %3998 = vmatprep.subr.mxu0 0.0
    %3999 = vmatpush1.msra.mxu0 0.0
    %4000 = vmatprep.subr.mxu0 0.0
    %4001 = vmatpush1.msra.mxu0 0.0
    %4002 = vmatprep.subr.mxu0 0.0
    %4003 = vmatpush1.msra.mxu0 0.0
    %4004 = vmatprep.subr.mxu0 0.0
    %4005 = vmatpush1.msra.mxu0 0.0
    %4006 = vmatprep.subr.mxu0 0.0
    %4007 = vmatpush1.msra.mxu0 0.0
    %4008 = vmatprep.subr.mxu0 0.0
    %4009 = vmatpush1.msra.mxu0 0.0
    %4010 = vmatprep.subr.mxu0 0.0
    %4011 = vmatpush1.msra.mxu0 0.0
    %4012 = vmatprep.subr.mxu0 0.0
    %4013 = vmatpush1.msra.mxu0 0.0
    %4014 = vmatprep.subr.mxu0 0.0
    %4015 = vmatpush1.msra.mxu0 0.0
    %4016 = vmatprep.mubr.f32.mxu0 0.0
    %4017 = vmatmul.mubr.f32.gmra.mrb[0].mxu0 %v3738
    %v4018 = vpop.f32.mrb[0].mxu0
    %v4019 = vadd.f32 %v3877, %v4018
    %v4020 = vpop.f32.mrb[0].mxu0
    %v4021 = vadd.f32 %v3879, %v4020
    %4022 = vdwg.mxu0
    %v4023 = vadd.f32 %v3948, %v1162
    %v4024 = vadd.f32 %v3950, %v1166
    %v4025 = vadd.f32 %v4019, %v1170
    %v4026 = vadd.f32 %v4021, %v1174
    %v4027 = vmul.f32 %v4023, 0.5
    %v4028 = vtanh.pop %v4027
    %v4029 = vmul.f32 %v4028, 0.5
    %v4030 = vadd.f32 %v4029, 0.5
    %v4031 = vmul.f32 %v4024, 0.5
    %v4032 = vtanh.pop %v4031
    %v4033 = vmul.f32 %v4032, 0.5
    %v4034 = vadd.f32 %v4033, 0.5
    %v4035 = vtanh.pop %v4025
    %v4036 = vmul.f32 %v4026, 0.5
    %v4037 = vtanh.pop %v4036
    %v4038 = vmul.f32 %v4037, 0.5
    %v4039 = vadd.f32 %v4038, 0.5
    %v4040 = vmul.f32 %v4034, %v3568
    %v4041 = vmul.f32 %v4030, %v4035
    %v4042 = vadd.f32 %v4040, %v4041
    %v4043 = vtanh.pop %v4042
    %v4044 = vmul.f32 %v4039, %v4043
    %v4045 = vld [vmem:[#allocation2 + $0xe0] sm:$0xff]
    %v4046 = vld [vmem:[#allocation2 + $0xe8] sm:$0xff]
    %v4047 = vld [vmem:[#allocation2 + $0xf0] sm:$0xff]
    %v4048 = vld [vmem:[#allocation2 + $0xf8] sm:$0xff]
    %4049 = vmatprep.subr.mxu0 %v518
    %4050 = vmatpush1.msra.mxu0 %v517
    %4051 = vmatprep.subr.mxu0 %v522
    %4052 = vmatpush1.msra.mxu0 %v521
    %4053 = vmatprep.subr.mxu0 %v526
    %4054 = vmatpush1.msra.mxu0 %v525
    %4055 = vmatprep.subr.mxu0 %v530
    %4056 = vmatpush1.msra.mxu0 %v529
    %4057 = vmatprep.subr.mxu0 %v534
    %4058 = vmatpush1.msra.mxu0 %v533
    %4059 = vmatprep.subr.mxu0 %v538
    %4060 = vmatpush1.msra.mxu0 %v537
    %4061 = vmatprep.subr.mxu0 %v542
    %4062 = vmatpush1.msra.mxu0 %v541
    %4063 = vmatprep.subr.mxu0 %v546
    %4064 = vmatpush1.msra.mxu0 %v545
    %4065 = vmatprep.subr.mxu0 %v550
    %4066 = vmatpush1.msra.mxu0 %v549
    %4067 = vmatprep.subr.mxu0 %v554
    %4068 = vmatpush1.msra.mxu0 %v553
    %4069 = vmatprep.subr.mxu0 %v558
    %4070 = vmatpush1.msra.mxu0 %v557
    %4071 = vmatprep.subr.mxu0 %v562
    %4072 = vmatpush1.msra.mxu0 %v561
    %4073 = vmatprep.subr.mxu0 %v566
    %4074 = vmatpush1.msra.mxu0 %v565
    %4075 = vmatprep.subr.mxu0 %v570
    %4076 = vmatpush1.msra.mxu0 %v569
    %4077 = vmatprep.subr.mxu0 %v574
    %4078 = vmatpush1.msra.mxu0 %v573
    %4079 = vmatprep.subr.mxu0 %v578
    %4080 = vmatpush1.msra.mxu0 %v577
    %4081 = vmatprep.subr.mxu0 0.0
    %4082 = vmatpush1.msra.mxu0 0.0
    %4083 = vmatprep.subr.mxu0 0.0
    %4084 = vmatpush1.msra.mxu0 0.0
    %4085 = vmatprep.subr.mxu0 0.0
    %4086 = vmatpush1.msra.mxu0 0.0
    %4087 = vmatprep.subr.mxu0 0.0
    %4088 = vmatpush1.msra.mxu0 0.0
    %4089 = vmatprep.subr.mxu0 0.0
    %4090 = vmatpush1.msra.mxu0 0.0
    %4091 = vmatprep.subr.mxu0 0.0
    %4092 = vmatpush1.msra.mxu0 0.0
    %4093 = vmatprep.subr.mxu0 0.0
    %4094 = vmatpush1.msra.mxu0 0.0
    %4095 = vmatprep.subr.mxu0 0.0
    %4096 = vmatpush1.msra.mxu0 0.0
    %4097 = vmatprep.subr.mxu0 0.0
    %4098 = vmatpush1.msra.mxu0 0.0
    %4099 = vmatprep.subr.mxu0 0.0
    %4100 = vmatpush1.msra.mxu0 0.0
    %4101 = vmatprep.subr.mxu0 0.0
    %4102 = vmatpush1.msra.mxu0 0.0
    %4103 = vmatprep.subr.mxu0 0.0
    %4104 = vmatpush1.msra.mxu0 0.0
    %4105 = vmatprep.subr.mxu0 0.0
    %4106 = vmatpush1.msra.mxu0 0.0
    %4107 = vmatprep.subr.mxu0 0.0
    %4108 = vmatpush1.msra.mxu0 0.0
    %4109 = vmatprep.subr.mxu0 0.0
    %4110 = vmatpush1.msra.mxu0 0.0
    %4111 = vmatprep.subr.mxu0 0.0
    %4112 = vmatpush1.msra.mxu0 0.0
    %4113 = vmatprep.mubr.f32.mxu0 0.0
    %4114 = vmatmul.mubr.f32.gmra.mrb[0].mxu0 %v3738
    %v4115 = vpop.f32.mrb[0].mxu0
    %v4116 = vadd.f32 0.0, %v4115
    %v4117 = vpop.f32.mrb[0].mxu0
    %v4118 = vadd.f32 0.0, %v4117
    %4119 = vdwg.mxu0
    %4120 = vmatprep.subr.mxu0 %v520
    %4121 = vmatpush1.msra.mxu0 %v519
    %4122 = vmatprep.subr.mxu0 %v524
    %4123 = vmatpush1.msra.mxu0 %v523
    %4124 = vmatprep.subr.mxu0 %v528
    %4125 = vmatpush1.msra.mxu0 %v527
    %4126 = vmatprep.subr.mxu0 %v532
    %4127 = vmatpush1.msra.mxu0 %v531
    %4128 = vmatprep.subr.mxu0 %v536
    %4129 = vmatpush1.msra.mxu0 %v535
    %4130 = vmatprep.subr.mxu0 %v540
    %4131 = vmatpush1.msra.mxu0 %v539
    %4132 = vmatprep.subr.mxu0 %v544
    %4133 = vmatpush1.msra.mxu0 %v543
    %4134 = vmatprep.subr.mxu0 %v548
    %4135 = vmatpush1.msra.mxu0 %v547
    %4136 = vmatprep.subr.mxu0 %v552
    %4137 = vmatpush1.msra.mxu0 %v551
    %4138 = vmatprep.subr.mxu0 %v556
    %4139 = vmatpush1.msra.mxu0 %v555
    %4140 = vmatprep.subr.mxu0 %v560
    %4141 = vmatpush1.msra.mxu0 %v559
    %4142 = vmatprep.subr.mxu0 %v564
    %4143 = vmatpush1.msra.mxu0 %v563
    %4144 = vmatprep.subr.mxu0 %v568
    %4145 = vmatpush1.msra.mxu0 %v567
    %4146 = vmatprep.subr.mxu0 %v572
    %4147 = vmatpush1.msra.mxu0 %v571
    %4148 = vmatprep.subr.mxu0 %v576
    %4149 = vmatpush1.msra.mxu0 %v575
    %4150 = vmatprep.subr.mxu0 %v580
    %4151 = vmatpush1.msra.mxu0 %v579
    %4152 = vmatprep.subr.mxu0 0.0
    %4153 = vmatpush1.msra.mxu0 0.0
    %4154 = vmatprep.subr.mxu0 0.0
    %4155 = vmatpush1.msra.mxu0 0.0
    %4156 = vmatprep.subr.mxu0 0.0
    %4157 = vmatpush1.msra.mxu0 0.0
    %4158 = vmatprep.subr.mxu0 0.0
    %4159 = vmatpush1.msra.mxu0 0.0
    %4160 = vmatprep.subr.mxu0 0.0
    %4161 = vmatpush1.msra.mxu0 0.0
    %4162 = vmatprep.subr.mxu0 0.0
    %4163 = vmatpush1.msra.mxu0 0.0
    %4164 = vmatprep.subr.mxu0 0.0
    %4165 = vmatpush1.msra.mxu0 0.0
    %4166 = vmatprep.subr.mxu0 0.0
    %4167 = vmatpush1.msra.mxu0 0.0
    %4168 = vmatprep.subr.mxu0 0.0
    %4169 = vmatpush1.msra.mxu0 0.0
    %4170 = vmatprep.subr.mxu0 0.0
    %4171 = vmatpush1.msra.mxu0 0.0
    %4172 = vmatprep.subr.mxu0 0.0
    %4173 = vmatpush1.msra.mxu0 0.0
    %4174 = vmatprep.subr.mxu0 0.0
    %4175 = vmatpush1.msra.mxu0 0.0
    %4176 = vmatprep.subr.mxu0 0.0
    %4177 = vmatpush1.msra.mxu0 0.0
    %4178 = vmatprep.subr.mxu0 0.0
    %4179 = vmatpush1.msra.mxu0 0.0
    %4180 = vmatprep.subr.mxu0 0.0
    %4181 = vmatpush1.msra.mxu0 0.0
    %4182 = vmatprep.subr.mxu0 0.0
    %4183 = vmatpush1.msra.mxu0 0.0
    %4184 = vmatprep.mubr.f32.mxu0 0.0
    %4185 = vmatmul.mubr.f32.gmra.mrb[0].mxu0 %v3738
    %v4186 = vpop.f32.mrb[0].mxu0
    %v4187 = vadd.f32 0.0, %v4186
    %v4188 = vpop.f32.mrb[0].mxu0
    %v4189 = vadd.f32 0.0, %v4188
    %4190 = vdwg.mxu0
    %v4191 = vadd.f32 %v4045, %v4116
    %v4192 = vadd.f32 %v4046, %v4118
    %v4193 = vadd.f32 %v4047, %v4187
    %v4194 = vadd.f32 %v4048, %v4189
    %v4195 = vmul.f32 %v4191, 0.5
    %v4196 = vtanh.pop %v4195
    %v4197 = vmul.f32 %v4196, 0.5
    %v4198 = vadd.f32 %v4197, 0.5
    %v4199 = vmul.f32 %v4192, 0.5
    %v4200 = vtanh.pop %v4199
    %v4201 = vmul.f32 %v4200, 0.5
    %v4202 = vadd.f32 %v4201, 0.5
    %v4203 = vtanh.pop %v4193
    %v4204 = vmul.f32 %v4194, 0.5
    %v4205 = vtanh.pop %v4204
    %v4206 = vmul.f32 %v4205, 0.5
    %v4207 = vadd.f32 %v4206, 0.5
    %v4208 = vmul.f32 %v4202, %v3736
    %v4209 = vmul.f32 %v4198, %v4203
    %v4210 = vadd.f32 %v4208, %v4209
    %v4211 = vtanh.pop %v4210
    %v4212 = vmul.f32 %v4207, %v4211
    %4213 = vmatprep.subr.mxu0 %v810
    %4214 = vmatpush1.msra.mxu0 %v809
    %4215 = vmatprep.subr.mxu0 %v814
    %4216 = vmatpush1.msra.mxu0 %v813
    %4217 = vmatprep.subr.mxu0 %v818
    %4218 = vmatpush1.msra.mxu0 %v817
    %4219 = vmatprep.subr.mxu0 %v822
    %4220 = vmatpush1.msra.mxu0 %v821
    %4221 = vmatprep.subr.mxu0 %v826
    %4222 = vmatpush1.msra.mxu0 %v825
    %4223 = vmatprep.subr.mxu0 %v830
    %4224 = vmatpush1.msra.mxu0 %v829
    %4225 = vmatprep.subr.mxu0 %v834
    %4226 = vmatpush1.msra.mxu0 %v833
    %4227 = vmatprep.subr.mxu0 %v838
    %4228 = vmatpush1.msra.mxu0 %v837
    %4229 = vmatprep.subr.mxu0 %v842
    %4230 = vmatpush1.msra.mxu0 %v841
    %4231 = vmatprep.subr.mxu0 %v846
    %4232 = vmatpush1.msra.mxu0 %v845
    %4233 = vmatprep.subr.mxu0 %v850
    %4234 = vmatpush1.msra.mxu0 %v849
    %4235 = vmatprep.subr.mxu0 %v854
    %4236 = vmatpush1.msra.mxu0 %v853
    %4237 = vmatprep.subr.mxu0 %v858
    %4238 = vmatpush1.msra.mxu0 %v857
    %4239 = vmatprep.subr.mxu0 %v862
    %4240 = vmatpush1.msra.mxu0 %v861
    %4241 = vmatprep.subr.mxu0 %v866
    %4242 = vmatpush1.msra.mxu0 %v865
    %4243 = vmatprep.subr.mxu0 %v870
    %4244 = vmatpush1.msra.mxu0 %v869
    %4245 = vmatprep.subr.mxu0 0.0
    %4246 = vmatpush1.msra.mxu0 0.0
    %4247 = vmatprep.subr.mxu0 0.0
    %4248 = vmatpush1.msra.mxu0 0.0
    %4249 = vmatprep.subr.mxu0 0.0
    %4250 = vmatpush1.msra.mxu0 0.0
    %4251 = vmatprep.subr.mxu0 0.0
    %4252 = vmatpush1.msra.mxu0 0.0
    %4253 = vmatprep.subr.mxu0 0.0
    %4254 = vmatpush1.msra.mxu0 0.0
    %4255 = vmatprep.subr.mxu0 0.0
    %4256 = vmatpush1.msra.mxu0 0.0
    %4257 = vmatprep.subr.mxu0 0.0
    %4258 = vmatpush1.msra.mxu0 0.0
    %4259 = vmatprep.subr.mxu0 0.0
    %4260 = vmatpush1.msra.mxu0 0.0
    %4261 = vmatprep.subr.mxu0 0.0
    %4262 = vmatpush1.msra.mxu0 0.0
    %4263 = vmatprep.subr.mxu0 0.0
    %4264 = vmatpush1.msra.mxu0 0.0
    %4265 = vmatprep.subr.mxu0 0.0
    %4266 = vmatpush1.msra.mxu0 0.0
    %4267 = vmatprep.subr.mxu0 0.0
    %4268 = vmatpush1.msra.mxu0 0.0
    %4269 = vmatprep.subr.mxu0 0.0
    %4270 = vmatpush1.msra.mxu0 0.0
    %4271 = vmatprep.subr.mxu0 0.0
    %4272 = vmatpush1.msra.mxu0 0.0
    %4273 = vmatprep.subr.mxu0 0.0
    %4274 = vmatpush1.msra.mxu0 0.0
    %4275 = vmatprep.subr.mxu0 0.0
    %4276 = vmatpush1.msra.mxu0 0.0
    %4277 = vmatprep.mubr.f32.mxu0 0.0
    %4278 = vmatmul.mubr.f32.gmra.mrb[0].mxu0 %v4044
    %v4279 = vpop.f32.mrb[0].mxu0
    %v4280 = vadd.f32 0.0, %v4279
    %v4281 = vpop.f32.mrb[0].mxu0
    %v4282 = vadd.f32 0.0, %v4281
    %4283 = vdwg.mxu0
    %4284 = vmatprep.subr.mxu0 %v812
    %4285 = vmatpush1.msra.mxu0 %v811
    %4286 = vmatprep.subr.mxu0 %v816
    %4287 = vmatpush1.msra.mxu0 %v815
    %4288 = vmatprep.subr.mxu0 %v820
    %4289 = vmatpush1.msra.mxu0 %v819
    %4290 = vmatprep.subr.mxu0 %v824
    %4291 = vmatpush1.msra.mxu0 %v823
    %4292 = vmatprep.subr.mxu0 %v828
    %4293 = vmatpush1.msra.mxu0 %v827
    %4294 = vmatprep.subr.mxu0 %v832
    %4295 = vmatpush1.msra.mxu0 %v831
    %4296 = vmatprep.subr.mxu0 %v836
    %4297 = vmatpush1.msra.mxu0 %v835
    %4298 = vmatprep.subr.mxu0 %v840
    %4299 = vmatpush1.msra.mxu0 %v839
    %4300 = vmatprep.subr.mxu0 %v844
    %4301 = vmatpush1.msra.mxu0 %v843
    %4302 = vmatprep.subr.mxu0 %v848
    %4303 = vmatpush1.msra.mxu0 %v847
    %4304 = vmatprep.subr.mxu0 %v852
    %4305 = vmatpush1.msra.mxu0 %v851
    %4306 = vmatprep.subr.mxu0 %v856
    %4307 = vmatpush1.msra.mxu0 %v855
    %4308 = vmatprep.subr.mxu0 %v860
    %4309 = vmatpush1.msra.mxu0 %v859
    %4310 = vmatprep.subr.mxu0 %v864
    %4311 = vmatpush1.msra.mxu0 %v863
    %4312 = vmatprep.subr.mxu0 %v868
    %4313 = vmatpush1.msra.mxu0 %v867
    %4314 = vmatprep.subr.mxu0 %v872
    %4315 = vmatpush1.msra.mxu0 %v871
    %4316 = vmatprep.subr.mxu0 0.0
    %4317 = vmatpush1.msra.mxu0 0.0
    %4318 = vmatprep.subr.mxu0 0.0
    %4319 = vmatpush1.msra.mxu0 0.0
    %4320 = vmatprep.subr.mxu0 0.0
    %4321 = vmatpush1.msra.mxu0 0.0
    %4322 = vmatprep.subr.mxu0 0.0
    %4323 = vmatpush1.msra.mxu0 0.0
    %4324 = vmatprep.subr.mxu0 0.0
    %4325 = vmatpush1.msra.mxu0 0.0
    %4326 = vmatprep.subr.mxu0 0.0
    %4327 = vmatpush1.msra.mxu0 0.0
    %4328 = vmatprep.subr.mxu0 0.0
    %4329 = vmatpush1.msra.mxu0 0.0
    %4330 = vmatprep.subr.mxu0 0.0
    %4331 = vmatpush1.msra.mxu0 0.0
    %4332 = vmatprep.subr.mxu0 0.0
    %4333 = vmatpush1.msra.mxu0 0.0
    %4334 = vmatprep.subr.mxu0 0.0
    %4335 = vmatpush1.msra.mxu0 0.0
    %4336 = vmatprep.subr.mxu0 0.0
    %4337 = vmatpush1.msra.mxu0 0.0
    %4338 = vmatprep.subr.mxu0 0.0
    %4339 = vmatpush1.msra.mxu0 0.0
    %4340 = vmatprep.subr.mxu0 0.0
    %4341 = vmatpush1.msra.mxu0 0.0
    %4342 = vmatprep.subr.mxu0 0.0
    %4343 = vmatpush1.msra.mxu0 0.0
    %4344 = vmatprep.subr.mxu0 0.0
    %4345 = vmatpush1.msra.mxu0 0.0
    %4346 = vmatprep.subr.mxu0 0.0
    %4347 = vmatpush1.msra.mxu0 0.0
    %4348 = vmatprep.mubr.f32.mxu0 0.0
    %4349 = vmatmul.mubr.f32.gmra.mrb[0].mxu0 %v4044
    %v4350 = vpop.f32.mrb[0].mxu0
    %v4351 = vadd.f32 0.0, %v4350
    %v4352 = vpop.f32.mrb[0].mxu0
    %v4353 = vadd.f32 0.0, %v4352
    %4354 = vdwg.mxu0
    %4355 = vmatprep.subr.mxu0 %v746
    %4356 = vmatpush1.msra.mxu0 %v745
    %4357 = vmatprep.subr.mxu0 %v750
    %4358 = vmatpush1.msra.mxu0 %v749
    %4359 = vmatprep.subr.mxu0 %v754
    %4360 = vmatpush1.msra.mxu0 %v753
    %4361 = vmatprep.subr.mxu0 %v758
    %4362 = vmatpush1.msra.mxu0 %v757
    %4363 = vmatprep.subr.mxu0 %v762
    %4364 = vmatpush1.msra.mxu0 %v761
    %4365 = vmatprep.subr.mxu0 %v766
    %4366 = vmatpush1.msra.mxu0 %v765
    %4367 = vmatprep.subr.mxu0 %v770
    %4368 = vmatpush1.msra.mxu0 %v769
    %4369 = vmatprep.subr.mxu0 %v774
    %4370 = vmatpush1.msra.mxu0 %v773
    %4371 = vmatprep.subr.mxu0 %v778
    %4372 = vmatpush1.msra.mxu0 %v777
    %4373 = vmatprep.subr.mxu0 %v782
    %4374 = vmatpush1.msra.mxu0 %v781
    %4375 = vmatprep.subr.mxu0 %v786
    %4376 = vmatpush1.msra.mxu0 %v785
    %4377 = vmatprep.subr.mxu0 %v790
    %4378 = vmatpush1.msra.mxu0 %v789
    %4379 = vmatprep.subr.mxu0 %v794
    %4380 = vmatpush1.msra.mxu0 %v793
    %4381 = vmatprep.subr.mxu0 %v798
    %4382 = vmatpush1.msra.mxu0 %v797
    %4383 = vmatprep.subr.mxu0 %v802
    %4384 = vmatpush1.msra.mxu0 %v801
    %4385 = vmatprep.subr.mxu0 %v806
    %4386 = vmatpush1.msra.mxu0 %v805
    %4387 = vmatprep.subr.mxu0 0.0
    %4388 = vmatpush1.msra.mxu0 0.0
    %4389 = vmatprep.subr.mxu0 0.0
    %4390 = vmatpush1.msra.mxu0 0.0
    %4391 = vmatprep.subr.mxu0 0.0
    %4392 = vmatpush1.msra.mxu0 0.0
    %4393 = vmatprep.subr.mxu0 0.0
    %4394 = vmatpush1.msra.mxu0 0.0
    %4395 = vmatprep.subr.mxu0 0.0
    %4396 = vmatpush1.msra.mxu0 0.0
    %4397 = vmatprep.subr.mxu0 0.0
    %4398 = vmatpush1.msra.mxu0 0.0
    %4399 = vmatprep.subr.mxu0 0.0
    %4400 = vmatpush1.msra.mxu0 0.0
    %4401 = vmatprep.subr.mxu0 0.0
    %4402 = vmatpush1.msra.mxu0 0.0
    %4403 = vmatprep.subr.mxu0 0.0
    %4404 = vmatpush1.msra.mxu0 0.0
    %4405 = vmatprep.subr.mxu0 0.0
    %4406 = vmatpush1.msra.mxu0 0.0
    %4407 = vmatprep.subr.mxu0 0.0
    %4408 = vmatpush1.msra.mxu0 0.0
    %4409 = vmatprep.subr.mxu0 0.0
    %4410 = vmatpush1.msra.mxu0 0.0
    %4411 = vmatprep.subr.mxu0 0.0
    %4412 = vmatpush1.msra.mxu0 0.0
    %4413 = vmatprep.subr.mxu0 0.0
    %4414 = vmatpush1.msra.mxu0 0.0
    %4415 = vmatprep.subr.mxu0 0.0
    %4416 = vmatpush1.msra.mxu0 0.0
    %4417 = vmatprep.subr.mxu0 0.0
    %4418 = vmatpush1.msra.mxu0 0.0
    %4419 = vmatprep.mubr.f32.mxu0 0.0
    %4420 = vmatmul.mubr.f32.gmra.mrb[0].mxu0 %v4212
    %v4421 = vpop.f32.mrb[0].mxu0
    %v4422 = vadd.f32 %v4280, %v4421
    %v4423 = vpop.f32.mrb[0].mxu0
    %v4424 = vadd.f32 %v4282, %v4423
    %4425 = vdwg.mxu0
    %4426 = vmatprep.subr.mxu0 %v748
    %4427 = vmatpush1.msra.mxu0 %v747
    %4428 = vmatprep.subr.mxu0 %v752
    %4429 = vmatpush1.msra.mxu0 %v751
    %4430 = vmatprep.subr.mxu0 %v756
    %4431 = vmatpush1.msra.mxu0 %v755
    %4432 = vmatprep.subr.mxu0 %v760
    %4433 = vmatpush1.msra.mxu0 %v759
    %4434 = vmatprep.subr.mxu0 %v764
    %4435 = vmatpush1.msra.mxu0 %v763
    %4436 = vmatprep.subr.mxu0 %v768
    %4437 = vmatpush1.msra.mxu0 %v767
    %4438 = vmatprep.subr.mxu0 %v772
    %4439 = vmatpush1.msra.mxu0 %v771
    %4440 = vmatprep.subr.mxu0 %v776
    %4441 = vmatpush1.msra.mxu0 %v775
    %4442 = vmatprep.subr.mxu0 %v780
    %4443 = vmatpush1.msra.mxu0 %v779
    %4444 = vmatprep.subr.mxu0 %v784
    %4445 = vmatpush1.msra.mxu0 %v783
    %4446 = vmatprep.subr.mxu0 %v788
    %4447 = vmatpush1.msra.mxu0 %v787
    %4448 = vmatprep.subr.mxu0 %v792
    %4449 = vmatpush1.msra.mxu0 %v791
    %4450 = vmatprep.subr.mxu0 %v796
    %4451 = vmatpush1.msra.mxu0 %v795
    %4452 = vmatprep.subr.mxu0 %v800
    %4453 = vmatpush1.msra.mxu0 %v799
    %4454 = vmatprep.subr.mxu0 %v804
    %4455 = vmatpush1.msra.mxu0 %v803
    %4456 = vmatprep.subr.mxu0 %v808
    %4457 = vmatpush1.msra.mxu0 %v807
    %4458 = vmatprep.subr.mxu0 0.0
    %4459 = vmatpush1.msra.mxu0 0.0
    %4460 = vmatprep.subr.mxu0 0.0
    %4461 = vmatpush1.msra.mxu0 0.0
    %4462 = vmatprep.subr.mxu0 0.0
    %4463 = vmatpush1.msra.mxu0 0.0
    %4464 = vmatprep.subr.mxu0 0.0
    %4465 = vmatpush1.msra.mxu0 0.0
    %4466 = vmatprep.subr.mxu0 0.0
    %4467 = vmatpush1.msra.mxu0 0.0
    %4468 = vmatprep.subr.mxu0 0.0
    %4469 = vmatpush1.msra.mxu0 0.0
    %4470 = vmatprep.subr.mxu0 0.0
    %4471 = vmatpush1.msra.mxu0 0.0
    %4472 = vmatprep.subr.mxu0 0.0
    %4473 = vmatpush1.msra.mxu0 0.0
    %4474 = vmatprep.subr.mxu0 0.0
    %4475 = vmatpush1.msra.mxu0 0.0
    %4476 = vmatprep.subr.mxu0 0.0
    %4477 = vmatpush1.msra.mxu0 0.0
    %4478 = vmatprep.subr.mxu0 0.0
    %4479 = vmatpush1.msra.mxu0 0.0
    %4480 = vmatprep.subr.mxu0 0.0
    %4481 = vmatpush1.msra.mxu0 0.0
    %4482 = vmatprep.subr.mxu0 0.0
    %4483 = vmatpush1.msra.mxu0 0.0
    %4484 = vmatprep.subr.mxu0 0.0
    %4485 = vmatpush1.msra.mxu0 0.0
    %4486 = vmatprep.subr.mxu0 0.0
    %4487 = vmatpush1.msra.mxu0 0.0
    %4488 = vmatprep.subr.mxu0 0.0
    %4489 = vmatpush1.msra.mxu0 0.0
    %4490 = vmatprep.mubr.f32.mxu0 0.0
    %4491 = vmatmul.mubr.f32.gmra.mrb[0].mxu0 %v4212
    %v4492 = vpop.f32.mrb[0].mxu0
    %v4493 = vadd.f32 %v4351, %v4492
    %v4494 = vpop.f32.mrb[0].mxu0
    %v4495 = vadd.f32 %v4353, %v4494
    %4496 = vdwg.mxu0
    %v4497 = vadd.f32 %v4422, %v1162
    %v4498 = vadd.f32 %v4424, %v1166
    %v4499 = vadd.f32 %v4493, %v1170
    %v4500 = vadd.f32 %v4495, %v1174
    %v4501 = vmul.f32 %v4497, 0.5
    %v4502 = vtanh.pop %v4501
    %v4503 = vmul.f32 %v4502, 0.5
    %v4504 = vadd.f32 %v4503, 0.5
    %v4505 = vmul.f32 %v4498, 0.5
    %v4506 = vtanh.pop %v4505
    %v4507 = vmul.f32 %v4506, 0.5
    %v4508 = vadd.f32 %v4507, 0.5
    %v4509 = vtanh.pop %v4499
    %v4510 = vmul.f32 %v4500, 0.5
    %v4511 = vtanh.pop %v4510
    %v4512 = vmul.f32 %v4511, 0.5
    %v4513 = vadd.f32 %v4512, 0.5
    %v4514 = vmul.f32 %v4508, %v4042
    %v4515 = vmul.f32 %v4504, %v4509
    %v4516 = vadd.f32 %v4514, %v4515
    %v4517 = vtanh.pop %v4516
    %v4518 = vmul.f32 %v4513, %v4517
    %v4519 = vld [vmem:[#allocation14] sm:$0xff]
    %v4520 = vld [vmem:[#allocation14 + $0x8] sm:$0xff]
    %v4521 = vld [vmem:[#allocation14 + $0x10] sm:$0xff]
    %v4522 = vld [vmem:[#allocation14 + $0x18] sm:$0xff]
    %v4523 = vld [vmem:[#allocation14 + $0x20] sm:$0xff]
    %v4524 = vld [vmem:[#allocation14 + $0x28] sm:$0xff]
    %v4525 = vld [vmem:[#allocation14 + $0x30] sm:$0xff]
    %v4526 = vld [vmem:[#allocation14 + $0x38] sm:$0xff]
    %v4527 = vld [vmem:[#allocation14 + $0x40] sm:$0xff]
    %v4528 = vld [vmem:[#allocation14 + $0x48] sm:$0xff]
    %v4529 = vld [vmem:[#allocation14 + $0x50] sm:$0xff]
    %v4530 = vld [vmem:[#allocation14 + $0x58] sm:$0xff]
    %v4531 = vld [vmem:[#allocation14 + $0x60] sm:$0xff]
    %v4532 = vld [vmem:[#allocation14 + $0x68] sm:$0xff]
    %v4533 = vld [vmem:[#allocation14 + $0x70] sm:$0xff]
    %v4534 = vld [vmem:[#allocation14 + $0x78] sm:$0xff]
    %v4535 = vld [vmem:[#allocation14 + $0x80] sm:$0xff]
    %v4536 = vld [vmem:[#allocation14 + $0x88] sm:$0xff]
    %v4537 = vld [vmem:[#allocation14 + $0x90] sm:$0xff]
    %v4538 = vld [vmem:[#allocation14 + $0x98] sm:$0xff]
    %v4539 = vld [vmem:[#allocation14 + $0xa0] sm:$0xff]
    %v4540 = vld [vmem:[#allocation14 + $0xa8] sm:$0xff]
    %v4541 = vld [vmem:[#allocation14 + $0xb0] sm:$0xff]
    %v4542 = vld [vmem:[#allocation14 + $0xb8] sm:$0xff]
    %v4543 = vld [vmem:[#allocation14 + $0xc0] sm:$0xff]
    %v4544 = vld [vmem:[#allocation14 + $0xc8] sm:$0xff]
    %v4545 = vld [vmem:[#allocation14 + $0xd0] sm:$0xff]
    %v4546 = vld [vmem:[#allocation14 + $0xd8] sm:$0xff]
    %v4547 = vld [vmem:[#allocation14 + $0xe0] sm:$0xff]
    %v4548 = vld [vmem:[#allocation14 + $0xe8] sm:$0xff]
    %v4549 = vld [vmem:[#allocation14 + $0xf0] sm:$0xff]
    %v4550 = vld [vmem:[#allocation14 + $0xf8] sm:$0xff]
    %v4551 = vld [vmem:[#allocation14 + $0x100] sm:$0xff]
    %v4552 = vld [vmem:[#allocation14 + $0x108] sm:$0xff]
    %v4553 = vld [vmem:[#allocation14 + $0x110] sm:$0xff]
    %v4554 = vld [vmem:[#allocation14 + $0x118] sm:$0xff]
    %v4555 = vld [vmem:[#allocation14 + $0x120] sm:$0xff]
    %v4556 = vld [vmem:[#allocation14 + $0x128] sm:$0xff]
    %v4557 = vld [vmem:[#allocation14 + $0x130] sm:$0xff]
    %v4558 = vld [vmem:[#allocation14 + $0x138] sm:$0xff]
    %v4559 = vld [vmem:[#allocation14 + $0x140] sm:$0xff]
    %v4560 = vld [vmem:[#allocation14 + $0x148] sm:$0xff]
    %v4561 = vld [vmem:[#allocation14 + $0x150] sm:$0xff]
    %v4562 = vld [vmem:[#allocation14 + $0x158] sm:$0xff]
    %v4563 = vld [vmem:[#allocation14 + $0x160] sm:$0xff]
    %v4564 = vld [vmem:[#allocation14 + $0x168] sm:$0xff]
    %v4565 = vld [vmem:[#allocation14 + $0x170] sm:$0xff]
    %v4566 = vld [vmem:[#allocation14 + $0x178] sm:$0xff]
    %v4567 = vld [vmem:[#allocation15] sm:$0x7]
    %v4569 = vlaneseq
    %v4570 = vshrl.u32 %v4569, 7
    %v4571 = vsub.s32 0, %v4570
    %v4572 = vrot.slane %v4567, %v4571
    %v4573 = vlaneseq
    %v4574 = vshrl.u32 %v4573, 7
    %v4575 = vsub.s32 1, %v4574
    %v4576 = vrot.slane %v4567, %v4575
    %v4577 = vlaneseq
    %v4578 = vshrl.u32 %v4577, 7
    %v4579 = vsub.s32 2, %v4578
    %v4580 = vrot.slane %v4567, %v4579
    %4584 = vmatprep.subr.mxu0 %v4520
    %4585 = vmatpush1.msra.mxu0 %v4519
    %4586 = vmatprep.subr.mxu0 %v4523
    %4587 = vmatpush1.msra.mxu0 %v4522
    %4588 = vmatprep.subr.mxu0 %v4526
    %4589 = vmatpush1.msra.mxu0 %v4525
    %4590 = vmatprep.subr.mxu0 %v4529
    %4591 = vmatpush1.msra.mxu0 %v4528
    %4592 = vmatprep.subr.mxu0 %v4532
    %4593 = vmatpush1.msra.mxu0 %v4531
    %4594 = vmatprep.subr.mxu0 %v4535
    %4595 = vmatpush1.msra.mxu0 %v4534
    %4596 = vmatprep.subr.mxu0 %v4538
    %4597 = vmatpush1.msra.mxu0 %v4537
    %4598 = vmatprep.subr.mxu0 %v4541
    %4599 = vmatpush1.msra.mxu0 %v4540
    %4600 = vmatprep.subr.mxu0 %v4544
    %4601 = vmatpush1.msra.mxu0 %v4543
    %4602 = vmatprep.subr.mxu0 %v4547
    %4603 = vmatpush1.msra.mxu0 %v4546
    %4604 = vmatprep.subr.mxu0 %v4550
    %4605 = vmatpush1.msra.mxu0 %v4549
    %4606 = vmatprep.subr.mxu0 %v4553
    %4607 = vmatpush1.msra.mxu0 %v4552
    %4608 = vmatprep.subr.mxu0 %v4556
    %4609 = vmatpush1.msra.mxu0 %v4555
    %4610 = vmatprep.subr.mxu0 %v4559
    %4611 = vmatpush1.msra.mxu0 %v4558
    %4612 = vmatprep.subr.mxu0 %v4562
    %4613 = vmatpush1.msra.mxu0 %v4561
    %4614 = vmatprep.subr.mxu0 %v4565
    %4615 = vmatpush1.msra.mxu0 %v4564
    %4616 = vmatprep.subr.mxu0 0.0
    %4617 = vmatpush1.msra.mxu0 0.0
    %4618 = vmatprep.subr.mxu0 0.0
    %4619 = vmatpush1.msra.mxu0 0.0
    %4620 = vmatprep.subr.mxu0 0.0
    %4621 = vmatpush1.msra.mxu0 0.0
    %4622 = vmatprep.subr.mxu0 0.0
    %4623 = vmatpush1.msra.mxu0 0.0
    %4624 = vmatprep.subr.mxu0 0.0
    %4625 = vmatpush1.msra.mxu0 0.0
    %4626 = vmatprep.subr.mxu0 0.0
    %4627 = vmatpush1.msra.mxu0 0.0
    %4628 = vmatprep.subr.mxu0 0.0
    %4629 = vmatpush1.msra.mxu0 0.0
    %4630 = vmatprep.subr.mxu0 0.0
    %4631 = vmatpush1.msra.mxu0 0.0
    %4632 = vmatprep.subr.mxu0 0.0
    %4633 = vmatpush1.msra.mxu0 0.0
    %4634 = vmatprep.subr.mxu0 0.0
    %4635 = vmatpush1.msra.mxu0 0.0
    %4636 = vmatprep.subr.mxu0 0.0
    %4637 = vmatpush1.msra.mxu0 0.0
    %4638 = vmatprep.subr.mxu0 0.0
    %4639 = vmatpush1.msra.mxu0 0.0
    %4640 = vmatprep.subr.mxu0 0.0
    %4641 = vmatpush1.msra.mxu0 0.0
    %4642 = vmatprep.subr.mxu0 0.0
    %4643 = vmatpush1.msra.mxu0 0.0
    %4644 = vmatprep.subr.mxu0 0.0
    %4645 = vmatpush1.msra.mxu0 0.0
    %4646 = vmatprep.subr.mxu0 0.0
    %4647 = vmatpush1.msra.mxu0 0.0
    %4648 = vmatprep.mubr.f32.mxu0 0.0
    %4649 = vmatmul.mubr.f32.gmra.mrb[0].mxu0 %v4518
    %v4650 = vpop.f32.mrb[0].mxu0
    %v4651 = vadd.f32 %v4572, %v4650
    %v4652 = vpop.f32.mrb[0].mxu0
    %v4653 = vadd.f32 %v4576, %v4652
    %4654 = vdwg.mxu0
    %4655 = vmatprep.subr.mxu0 0.0
    %4656 = vmatpush1.msra.mxu0 %v4521
    %4657 = vmatprep.subr.mxu0 0.0
    %4658 = vmatpush1.msra.mxu0 %v4524
    %4659 = vmatprep.subr.mxu0 0.0
    %4660 = vmatpush1.msra.mxu0 %v4527
    %4661 = vmatprep.subr.mxu0 0.0
    %4662 = vmatpush1.msra.mxu0 %v4530
    %4663 = vmatprep.subr.mxu0 0.0
    %4664 = vmatpush1.msra.mxu0 %v4533
    %4665 = vmatprep.subr.mxu0 0.0
    %4666 = vmatpush1.msra.mxu0 %v4536
    %4667 = vmatprep.subr.mxu0 0.0
    %4668 = vmatpush1.msra.mxu0 %v4539
    %4669 = vmatprep.subr.mxu0 0.0
    %4670 = vmatpush1.msra.mxu0 %v4542
    %4671 = vmatprep.subr.mxu0 0.0
    %4672 = vmatpush1.msra.mxu0 %v4545
    %4673 = vmatprep.subr.mxu0 0.0
    %4674 = vmatpush1.msra.mxu0 %v4548
    %4675 = vmatprep.subr.mxu0 0.0
    %4676 = vmatpush1.msra.mxu0 %v4551
    %4677 = vmatprep.subr.mxu0 0.0
    %4678 = vmatpush1.msra.mxu0 %v4554
    %4679 = vmatprep.subr.mxu0 0.0
    %4680 = vmatpush1.msra.mxu0 %v4557
    %4681 = vmatprep.subr.mxu0 0.0
    %4682 = vmatpush1.msra.mxu0 %v4560
    %4683 = vmatprep.subr.mxu0 0.0
    %4684 = vmatpush1.msra.mxu0 %v4563
    %4685 = vmatprep.subr.mxu0 0.0
    %4686 = vmatpush1.msra.mxu0 %v4566
    %4687 = vmatprep.subr.mxu0 0.0
    %4688 = vmatpush1.msra.mxu0 0.0
    %4689 = vmatprep.subr.mxu0 0.0
    %4690 = vmatpush1.msra.mxu0 0.0
    %4691 = vmatprep.subr.mxu0 0.0
    %4692 = vmatpush1.msra.mxu0 0.0
    %4693 = vmatprep.subr.mxu0 0.0
    %4694 = vmatpush1.msra.mxu0 0.0
    %4695 = vmatprep.subr.mxu0 0.0
    %4696 = vmatpush1.msra.mxu0 0.0
    %4697 = vmatprep.subr.mxu0 0.0
    %4698 = vmatpush1.msra.mxu0 0.0
    %4699 = vmatprep.subr.mxu0 0.0
    %4700 = vmatpush1.msra.mxu0 0.0
    %4701 = vmatprep.subr.mxu0 0.0
    %4702 = vmatpush1.msra.mxu0 0.0
    %4703 = vmatprep.subr.mxu0 0.0
    %4704 = vmatpush1.msra.mxu0 0.0
    %4705 = vmatprep.subr.mxu0 0.0
    %4706 = vmatpush1.msra.mxu0 0.0
    %4707 = vmatprep.subr.mxu0 0.0
    %4708 = vmatpush1.msra.mxu0 0.0
    %4709 = vmatprep.subr.mxu0 0.0
    %4710 = vmatpush1.msra.mxu0 0.0
    %4711 = vmatprep.subr.mxu0 0.0
    %4712 = vmatpush1.msra.mxu0 0.0
    %4713 = vmatprep.subr.mxu0 0.0
    %4714 = vmatpush1.msra.mxu0 0.0
    %4715 = vmatprep.subr.mxu0 0.0
    %4716 = vmatpush1.msra.mxu0 0.0
    %4717 = vmatprep.subr.mxu0 0.0
    %4718 = vmatpush1.msra.mxu0 0.0
    %4719 = vmatprep.mubr.f32.mxu0 0.0
    %4720 = vmatmul.mubr.f32.gmra.mrb[0].mxu0 %v4518
    %v4721 = vpop.f32.mrb[0].mxu0
    %v4722 = vadd.f32 %v4580, %v4721
    %v4723 = vpop.f32.mrb[0].mxu0
    %4724 = vdwg.mxu0
    %v4725 = vlaneseq
    %v4726 = vand.u32 %v4725, 127
    %vm4727 = vcmp.lt.s32.totalorder %v4726, 2
    %v4728 = vld [vmem:[%s10] sm:$0x1]
    %v4730 = vlaneseq
    %v4731 = vshrl.u32 %v4730, 7
    %v4732 = vsub.s32 0, %v4731
    %v4733 = vrot.slane %v4728, %v4732
    %vm4735 = vcmp.ge.s32.totalorder %v4726, 0
    %vm4736 = vcmp.lt.s32.totalorder %v4726, 32
    %vm4737 = vmand %vm4735, %vm4736
    %v4738 = vsel %vm4737, 1, 0
    %v4739 = vcvt.s32.f32 %v4738
    %v4740 = vmul.f32 %v4651, %v4739
    %4741 = vmatprep.subr.mxu0 0.0
    %4742 = vmatpush1.xpose.msra.mxu0 %v4653
    %4743 = vmatprep.subr.mxu0 0.0
    %4744 = vmatpush1.xpose.msra.mxu0 0.0
    %4745 = vmatprep.subr.mxu0 0.0
    %4746 = vmatpush1.xpose.msra.mxu0 0.0
    %4747 = vmatprep.subr.mxu0 0.0
    %4748 = vmatpush1.xpose.msra.mxu0 0.0
    %4749 = vmatprep.subr.mxu0 0.0
    %4750 = vmatpush1.xpose.msra.mxu0 0.0
    %4751 = vmatprep.subr.mxu0 0.0
    %4752 = vmatpush1.xpose.msra.mxu0 0.0
    %4753 = vmatprep.subr.mxu0 0.0
    %4754 = vmatpush1.xpose.msra.mxu0 0.0
    %4755 = vmatprep.subr.mxu0 0.0
    %4756 = vmatpush1.xpose.msra.mxu0 0.0
    %4757 = vmatprep.subr.mxu0 0.0
    %4758 = vmatpush1.xpose.msra.mxu0 0.0
    %4759 = vmatprep.subr.mxu0 0.0
    %4760 = vmatpush1.xpose.msra.mxu0 0.0
    %4761 = vmatprep.subr.mxu0 0.0
    %4762 = vmatpush1.xpose.msra.mxu0 0.0
    %4763 = vmatprep.subr.mxu0 0.0
    %4764 = vmatpush1.xpose.msra.mxu0 0.0
    %4765 = vmatprep.subr.mxu0 0.0
    %4766 = vmatpush1.xpose.msra.mxu0 0.0
    %4767 = vmatprep.subr.mxu0 0.0
    %4768 = vmatpush1.xpose.msra.mxu0 0.0
    %4769 = vmatprep.subr.mxu0 0.0
    %4770 = vmatpush1.xpose.msra.mxu0 0.0
    %4771 = vmatprep.subr.mxu0 0.0
    %4772 = vmatpush1.xpose.msra.mxu0 0.0
    %4773 = vmatprep.subr.mxu0 0.0
    %4774 = vmatpush1.xpose.msra.mxu0 0.0
    %4775 = vmatprep.subr.mxu0 0.0
    %4776 = vmatpush1.xpose.msra.mxu0 0.0
    %4777 = vmatprep.subr.mxu0 0.0
    %4778 = vmatpush1.xpose.msra.mxu0 0.0
    %4779 = vmatprep.subr.mxu0 0.0
    %4780 = vmatpush1.xpose.msra.mxu0 0.0
    %4781 = vmatprep.subr.mxu0 0.0
    %4782 = vmatpush1.xpose.msra.mxu0 0.0
    %4783 = vmatprep.subr.mxu0 0.0
    %4784 = vmatpush1.xpose.msra.mxu0 0.0
    %4785 = vmatprep.subr.mxu0 0.0
    %4786 = vmatpush1.xpose.msra.mxu0 0.0
    %4787 = vmatprep.subr.mxu0 0.0
    %4788 = vmatpush1.xpose.msra.mxu0 0.0
    %4789 = vmatprep.subr.mxu0 0.0
    %4790 = vmatpush1.xpose.msra.mxu0 0.0
    %4791 = vmatprep.subr.mxu0 0.0
    %4792 = vmatpush1.xpose.msra.mxu0 0.0
    %4793 = vmatprep.subr.mxu0 0.0
    %4794 = vmatpush1.xpose.msra.mxu0 0.0
    %4795 = vmatprep.subr.mxu0 0.0
    %4796 = vmatpush1.xpose.msra.mxu0 0.0
    %4797 = vmatprep.subr.mxu0 0.0
    %4798 = vmatpush1.xpose.msra.mxu0 0.0
    %4799 = vmatprep.subr.mxu0 0.0
    %4800 = vmatpush1.xpose.msra.mxu0 0.0
    %4801 = vmatprep.subr.mxu0 0.0
    %4802 = vmatpush1.xpose.msra.mxu0 0.0
    %4803 = vmatprep.subr.mxu0 0.0
    %4804 = vmatpush1.xpose.msra.mxu0 0.0
    %4805 = vmatprep.mubr.f32.mxu0 0.0
    %4806 = vmatmul.mubr.f32.gmra.mrb[0].mxu0 %v4740
    %v4807 = vpop.f32.mrb[0].mxu0
    %v4808 = vadd.f32 0.0, %v4807
    %v4809 = vpop.f32.mrb[0].mxu0
    %4810 = vdwg.mxu0
    %v4811 = vsel %vm4727, %v4808, -1e+30
    %vm4812 = vcmask 64512
    %v4813 = vsel %vm4812, %v4811, -inf
    %4814 = vmax.xlane.f32.xlu0 %v4813
    %v4815 = vpop.xlane.xlu0 %4814
    %v4816 = vsub.f32 %v4811, %v4815
    %v4817 = vmul.f32 %v4816, 1.442695
    %v4818 = vpow.pop %v4817
    %v4819 = vsel %vm4812, %v4818, 0.0
    %4820 = vadd.xlane.f32.xlu0 %v4819
    %v4821 = vpop.xlane.xlu0 %4820
    %v4822 = vrcp.pop %v4821
    %v4823 = vmul.f32 %v4818, %v4822
    %v4824 = vmul.f32 %v4722, %v4739
    %v4826 = vsel %vm4812, %v4823, 0
    %4828 = vmatprep.subr.mxu0 0.0
    %4829 = vmatpush1.msra.mxu0 %v4824
    %4830 = vmatprep.subr.mxu0 0.0
    %4831 = vmatpush1.msra.mxu0 0.0
    %4832 = vmatprep.subr.mxu0 0.0
    %4833 = vmatpush1.msra.mxu0 0.0
    %4834 = vmatprep.subr.mxu0 0.0
    %4835 = vmatpush1.msra.mxu0 0.0
    %4836 = vmatprep.subr.mxu0 0.0
    %4837 = vmatpush1.msra.mxu0 0.0
    %4838 = vmatprep.subr.mxu0 0.0
    %4839 = vmatpush1.msra.mxu0 0.0
    %4840 = vmatprep.subr.mxu0 0.0
    %4841 = vmatpush1.msra.mxu0 0.0
    %4842 = vmatprep.subr.mxu0 0.0
    %4843 = vmatpush1.msra.mxu0 0.0
    %4844 = vmatprep.subr.mxu0 0.0
    %4845 = vmatpush1.msra.mxu0 0.0
    %4846 = vmatprep.subr.mxu0 0.0
    %4847 = vmatpush1.msra.mxu0 0.0
    %4848 = vmatprep.subr.mxu0 0.0
    %4849 = vmatpush1.msra.mxu0 0.0
    %4850 = vmatprep.subr.mxu0 0.0
    %4851 = vmatpush1.msra.mxu0 0.0
    %4852 = vmatprep.subr.mxu0 0.0
    %4853 = vmatpush1.msra.mxu0 0.0
    %4854 = vmatprep.subr.mxu0 0.0
    %4855 = vmatpush1.msra.mxu0 0.0
    %4856 = vmatprep.subr.mxu0 0.0
    %4857 = vmatpush1.msra.mxu0 0.0
    %4858 = vmatprep.subr.mxu0 0.0
    %4859 = vmatpush1.msra.mxu0 0.0
    %4860 = vmatprep.subr.mxu0 0.0
    %4861 = vmatpush1.msra.mxu0 0.0
    %4862 = vmatprep.subr.mxu0 0.0
    %4863 = vmatpush1.msra.mxu0 0.0
    %4864 = vmatprep.subr.mxu0 0.0
    %4865 = vmatpush1.msra.mxu0 0.0
    %4866 = vmatprep.subr.mxu0 0.0
    %4867 = vmatpush1.msra.mxu0 0.0
    %4868 = vmatprep.subr.mxu0 0.0
    %4869 = vmatpush1.msra.mxu0 0.0
    %4870 = vmatprep.subr.mxu0 0.0
    %4871 = vmatpush1.msra.mxu0 0.0
    %4872 = vmatprep.subr.mxu0 0.0
    %4873 = vmatpush1.msra.mxu0 0.0
    %4874 = vmatprep.subr.mxu0 0.0
    %4875 = vmatpush1.msra.mxu0 0.0
    %4876 = vmatprep.subr.mxu0 0.0
    %4877 = vmatpush1.msra.mxu0 0.0
    %4878 = vmatprep.subr.mxu0 0.0
    %4879 = vmatpush1.msra.mxu0 0.0
    %4880 = vmatprep.subr.mxu0 0.0
    %4881 = vmatpush1.msra.mxu0 0.0
    %4882 = vmatprep.subr.mxu0 0.0
    %4883 = vmatpush1.msra.mxu0 0.0
    %4884 = vmatprep.subr.mxu0 0.0
    %4885 = vmatpush1.msra.mxu0 0.0
    %4886 = vmatprep.subr.mxu0 0.0
    %4887 = vmatpush1.msra.mxu0 0.0
    %4888 = vmatprep.subr.mxu0 0.0
    %4889 = vmatpush1.msra.mxu0 0.0
    %4890 = vmatprep.subr.mxu0 0.0
    %4891 = vmatpush1.msra.mxu0 0.0
    %4892 = vmatprep.mubr.f32.mxu0 0.0
    %4893 = vmatmul.mubr.f32.gmra.mrb[0].mxu0 %v4826
    %v4894 = vpop.f32.mrb[0].mxu0
    %v4895 = vadd.f32 0.0, %v4894
    %v4896 = vpop.f32.mrb[0].mxu0
    %4897 = vdwg.mxu0
    %v4898 = vld [vmem:[#allocation17] sm:$0xff]
    %v4899 = vld [vmem:[#allocation17 + $0x8] sm:$0xff]
    %v4900 = vld [vmem:[#allocation17 + $0x10] sm:$0xff]
    %v4901 = vld [vmem:[#allocation17 + $0x18] sm:$0xff]
    %v4902 = vld [vmem:[#allocation17 + $0x20] sm:$0xff]
    %v4903 = vld [vmem:[#allocation17 + $0x28] sm:$0xff]
    %v4904 = vld [vmem:[#allocation17 + $0x30] sm:$0xff]
    %v4905 = vld [vmem:[#allocation17 + $0x38] sm:$0xff]
    %v4906 = vld [vmem:[#allocation17 + $0x40] sm:$0xff]
    %v4907 = vld [vmem:[#allocation17 + $0x48] sm:$0xff]
    %v4908 = vld [vmem:[#allocation17 + $0x50] sm:$0xff]
    %v4909 = vld [vmem:[#allocation17 + $0x58] sm:$0xff]
    %v4910 = vld [vmem:[#allocation17 + $0x60] sm:$0xff]
    %v4911 = vld [vmem:[#allocation17 + $0x68] sm:$0xff]
    %v4912 = vld [vmem:[#allocation17 + $0x70] sm:$0xff]
    %v4913 = vld [vmem:[#allocation17 + $0x78] sm:$0xff]
    %4914 = vmatprep.subr.mxu0 0.0
    %4915 = vmatpush1.msra.mxu0 %v4898
    %4916 = vmatprep.subr.mxu0 0.0
    %4917 = vmatpush1.msra.mxu0 %v4899
    %4918 = vmatprep.subr.mxu0 0.0
    %4919 = vmatpush1.msra.mxu0 %v4900
    %4920 = vmatprep.subr.mxu0 0.0
    %4921 = vmatpush1.msra.mxu0 %v4901
    %4922 = vmatprep.subr.mxu0 0.0
    %4923 = vmatpush1.msra.mxu0 %v4902
    %4924 = vmatprep.subr.mxu0 0.0
    %4925 = vmatpush1.msra.mxu0 %v4903
    %4926 = vmatprep.subr.mxu0 0.0
    %4927 = vmatpush1.msra.mxu0 %v4904
    %4928 = vmatprep.subr.mxu0 0.0
    %4929 = vmatpush1.msra.mxu0 %v4905
    %4930 = vmatprep.subr.mxu0 0.0
    %4931 = vmatpush1.msra.mxu0 %v4906
    %4932 = vmatprep.subr.mxu0 0.0
    %4933 = vmatpush1.msra.mxu0 %v4907
    %4934 = vmatprep.subr.mxu0 0.0
    %4935 = vmatpush1.msra.mxu0 %v4908
    %4936 = vmatprep.subr.mxu0 0.0
    %4937 = vmatpush1.msra.mxu0 %v4909
    %4938 = vmatprep.subr.mxu0 0.0
    %4939 = vmatpush1.msra.mxu0 %v4910
    %4940 = vmatprep.subr.mxu0 0.0
    %4941 = vmatpush1.msra.mxu0 %v4911
    %4942 = vmatprep.subr.mxu0 0.0
    %4943 = vmatpush1.msra.mxu0 %v4912
    %4944 = vmatprep.subr.mxu0 0.0
    %4945 = vmatpush1.msra.mxu0 %v4913
    %4946 = vmatprep.subr.mxu0 0.0
    %4947 = vmatpush1.msra.mxu0 0.0
    %4948 = vmatprep.subr.mxu0 0.0
    %4949 = vmatpush1.msra.mxu0 0.0
    %4950 = vmatprep.subr.mxu0 0.0
    %4951 = vmatpush1.msra.mxu0 0.0
    %4952 = vmatprep.subr.mxu0 0.0
    %4953 = vmatpush1.msra.mxu0 0.0
    %4954 = vmatprep.subr.mxu0 0.0
    %4955 = vmatpush1.msra.mxu0 0.0
    %4956 = vmatprep.subr.mxu0 0.0
    %4957 = vmatpush1.msra.mxu0 0.0
    %4958 = vmatprep.subr.mxu0 0.0
    %4959 = vmatpush1.msra.mxu0 0.0
    %4960 = vmatprep.subr.mxu0 0.0
    %4961 = vmatpush1.msra.mxu0 0.0
    %4962 = vmatprep.subr.mxu0 0.0
    %4963 = vmatpush1.msra.mxu0 0.0
    %4964 = vmatprep.subr.mxu0 0.0
    %4965 = vmatpush1.msra.mxu0 0.0
    %4966 = vmatprep.subr.mxu0 0.0
    %4967 = vmatpush1.msra.mxu0 0.0
    %4968 = vmatprep.subr.mxu0 0.0
    %4969 = vmatpush1.msra.mxu0 0.0
    %4970 = vmatprep.subr.mxu0 0.0
    %4971 = vmatpush1.msra.mxu0 0.0
    %4972 = vmatprep.subr.mxu0 0.0
    %4973 = vmatpush1.msra.mxu0 0.0
    %4974 = vmatprep.subr.mxu0 0.0
    %4975 = vmatpush1.msra.mxu0 0.0
    %4976 = vmatprep.subr.mxu0 0.0
    %4977 = vmatpush1.msra.mxu0 0.0
    %4978 = vmatprep.mubr.f32.mxu0 0.0
    %4979 = vmatmul.mubr.f32.gmra.mrb[0].mxu0 %v4895
    %v4980 = vpop.f32.mrb[0].mxu0
    %v4981 = vadd.f32 0.0, %v4980
    %v4982 = vpop.f32.mrb[0].mxu0
    %4983 = vdwg.mxu0
    %v4984 = vadd.f32 %v4733, %v4981
    %vm4985 = vcmp.ge.s32.totalorder %v4726, 32
    %vm4986 = vcmp.lt.s32.totalorder %v4726, 64
    %vm4987 = vmand %vm4985, %vm4986
    %v4988 = vsel %vm4987, 1, 0
    %v4989 = vcvt.s32.f32 %v4988
    %v4990 = vmul.f32 %v4651, %v4989
    %4991 = vmatprep.subr.mxu0 0.0
    %4992 = vmatpush1.xpose.msra.mxu0 %v4653
    %4993 = vmatprep.subr.mxu0 0.0
    %4994 = vmatpush1.xpose.msra.mxu0 0.0
    %4995 = vmatprep.subr.mxu0 0.0
    %4996 = vmatpush1.xpose.msra.mxu0 0.0
    %4997 = vmatprep.subr.mxu0 0.0
    %4998 = vmatpush1.xpose.msra.mxu0 0.0
    %4999 = vmatprep.subr.mxu0 0.0
    %5000 = vmatpush1.xpose.msra.mxu0 0.0
    %5001 = vmatprep.subr.mxu0 0.0
    %5002 = vmatpush1.xpose.msra.mxu0 0.0
    %5003 = vmatprep.subr.mxu0 0.0
    %5004 = vmatpush1.xpose.msra.mxu0 0.0
    %5005 = vmatprep.subr.mxu0 0.0
    %5006 = vmatpush1.xpose.msra.mxu0 0.0
    %5007 = vmatprep.subr.mxu0 0.0
    %5008 = vmatpush1.xpose.msra.mxu0 0.0
    %5009 = vmatprep.subr.mxu0 0.0
    %5010 = vmatpush1.xpose.msra.mxu0 0.0
    %5011 = vmatprep.subr.mxu0 0.0
    %5012 = vmatpush1.xpose.msra.mxu0 0.0
    %5013 = vmatprep.subr.mxu0 0.0
    %5014 = vmatpush1.xpose.msra.mxu0 0.0
    %5015 = vmatprep.subr.mxu0 0.0
    %5016 = vmatpush1.xpose.msra.mxu0 0.0
    %5017 = vmatprep.subr.mxu0 0.0
    %5018 = vmatpush1.xpose.msra.mxu0 0.0
    %5019 = vmatprep.subr.mxu0 0.0
    %5020 = vmatpush1.xpose.msra.mxu0 0.0
    %5021 = vmatprep.subr.mxu0 0.0
    %5022 = vmatpush1.xpose.msra.mxu0 0.0
    %5023 = vmatprep.subr.mxu0 0.0
    %5024 = vmatpush1.xpose.msra.mxu0 0.0
    %5025 = vmatprep.subr.mxu0 0.0
    %5026 = vmatpush1.xpose.msra.mxu0 0.0
    %5027 = vmatprep.subr.mxu0 0.0
    %5028 = vmatpush1.xpose.msra.mxu0 0.0
    %5029 = vmatprep.subr.mxu0 0.0
    %5030 = vmatpush1.xpose.msra.mxu0 0.0
    %5031 = vmatprep.subr.mxu0 0.0
    %5032 = vmatpush1.xpose.msra.mxu0 0.0
    %5033 = vmatprep.subr.mxu0 0.0
    %5034 = vmatpush1.xpose.msra.mxu0 0.0
    %5035 = vmatprep.subr.mxu0 0.0
    %5036 = vmatpush1.xpose.msra.mxu0 0.0
    %5037 = vmatprep.subr.mxu0 0.0
    %5038 = vmatpush1.xpose.msra.mxu0 0.0
    %5039 = vmatprep.subr.mxu0 0.0
    %5040 = vmatpush1.xpose.msra.mxu0 0.0
    %5041 = vmatprep.subr.mxu0 0.0
    %5042 = vmatpush1.xpose.msra.mxu0 0.0
    %5043 = vmatprep.subr.mxu0 0.0
    %5044 = vmatpush1.xpose.msra.mxu0 0.0
    %5045 = vmatprep.subr.mxu0 0.0
    %5046 = vmatpush1.xpose.msra.mxu0 0.0
    %5047 = vmatprep.subr.mxu0 0.0
    %5048 = vmatpush1.xpose.msra.mxu0 0.0
    %5049 = vmatprep.subr.mxu0 0.0
    %5050 = vmatpush1.xpose.msra.mxu0 0.0
    %5051 = vmatprep.subr.mxu0 0.0
    %5052 = vmatpush1.xpose.msra.mxu0 0.0
    %5053 = vmatprep.subr.mxu0 0.0
    %5054 = vmatpush1.xpose.msra.mxu0 0.0
    %5055 = vmatprep.mubr.f32.mxu0 0.0
    %5056 = vmatmul.mubr.f32.gmra.mrb[0].mxu0 %v4990
    %v5057 = vpop.f32.mrb[0].mxu0
    %v5058 = vadd.f32 0.0, %v5057
    %v5059 = vpop.f32.mrb[0].mxu0
    %5060 = vdwg.mxu0
    %v5061 = vsel %vm4727, %v5058, -1e+30
    %v5062 = vsel %vm4812, %v5061, -inf
    %5063 = vmax.xlane.f32.xlu0 %v5062
    %v5064 = vpop.xlane.xlu0 %5063
    %v5065 = vsub.f32 %v5061, %v5064
    %v5066 = vmul.f32 %v5065, 1.442695
    %v5067 = vpow.pop %v5066
    %v5068 = vsel %vm4812, %v5067, 0.0
    %5069 = vadd.xlane.f32.xlu0 %v5068
    %v5070 = vpop.xlane.xlu0 %5069
    %v5071 = vrcp.pop %v5070
    %v5072 = vmul.f32 %v5067, %v5071
    %v5073 = vmul.f32 %v4722, %v4989
    %v5075 = vsel %vm4812, %v5072, 0
    %5077 = vmatprep.subr.mxu0 0.0
    %5078 = vmatpush1.msra.mxu0 %v5073
    %5079 = vmatprep.subr.mxu0 0.0
    %5080 = vmatpush1.msra.mxu0 0.0
    %5081 = vmatprep.subr.mxu0 0.0
    %5082 = vmatpush1.msra.mxu0 0.0
    %5083 = vmatprep.subr.mxu0 0.0
    %5084 = vmatpush1.msra.mxu0 0.0
    %5085 = vmatprep.subr.mxu0 0.0
    %5086 = vmatpush1.msra.mxu0 0.0
    %5087 = vmatprep.subr.mxu0 0.0
    %5088 = vmatpush1.msra.mxu0 0.0
    %5089 = vmatprep.subr.mxu0 0.0
    %5090 = vmatpush1.msra.mxu0 0.0
    %5091 = vmatprep.subr.mxu0 0.0
    %5092 = vmatpush1.msra.mxu0 0.0
    %5093 = vmatprep.subr.mxu0 0.0
    %5094 = vmatpush1.msra.mxu0 0.0
    %5095 = vmatprep.subr.mxu0 0.0
    %5096 = vmatpush1.msra.mxu0 0.0
    %5097 = vmatprep.subr.mxu0 0.0
    %5098 = vmatpush1.msra.mxu0 0.0
    %5099 = vmatprep.subr.mxu0 0.0
    %5100 = vmatpush1.msra.mxu0 0.0
    %5101 = vmatprep.subr.mxu0 0.0
    %5102 = vmatpush1.msra.mxu0 0.0
    %5103 = vmatprep.subr.mxu0 0.0
    %5104 = vmatpush1.msra.mxu0 0.0
    %5105 = vmatprep.subr.mxu0 0.0
    %5106 = vmatpush1.msra.mxu0 0.0
    %5107 = vmatprep.subr.mxu0 0.0
    %5108 = vmatpush1.msra.mxu0 0.0
    %5109 = vmatprep.subr.mxu0 0.0
    %5110 = vmatpush1.msra.mxu0 0.0
    %5111 = vmatprep.subr.mxu0 0.0
    %5112 = vmatpush1.msra.mxu0 0.0
    %5113 = vmatprep.subr.mxu0 0.0
    %5114 = vmatpush1.msra.mxu0 0.0
    %5115 = vmatprep.subr.mxu0 0.0
    %5116 = vmatpush1.msra.mxu0 0.0
    %5117 = vmatprep.subr.mxu0 0.0
    %5118 = vmatpush1.msra.mxu0 0.0
    %5119 = vmatprep.subr.mxu0 0.0
    %5120 = vmatpush1.msra.mxu0 0.0
    %5121 = vmatprep.subr.mxu0 0.0
    %5122 = vmatpush1.msra.mxu0 0.0
    %5123 = vmatprep.subr.mxu0 0.0
    %5124 = vmatpush1.msra.mxu0 0.0
    %5125 = vmatprep.subr.mxu0 0.0
    %5126 = vmatpush1.msra.mxu0 0.0
    %5127 = vmatprep.subr.mxu0 0.0
    %5128 = vmatpush1.msra.mxu0 0.0
    %5129 = vmatprep.subr.mxu0 0.0
    %5130 = vmatpush1.msra.mxu0 0.0
    %5131 = vmatprep.subr.mxu0 0.0
    %5132 = vmatpush1.msra.mxu0 0.0
    %5133 = vmatprep.subr.mxu0 0.0
    %5134 = vmatpush1.msra.mxu0 0.0
    %5135 = vmatprep.subr.mxu0 0.0
    %5136 = vmatpush1.msra.mxu0 0.0
    %5137 = vmatprep.subr.mxu0 0.0
    %5138 = vmatpush1.msra.mxu0 0.0
    %5139 = vmatprep.subr.mxu0 0.0
    %5140 = vmatpush1.msra.mxu0 0.0
    %5141 = vmatprep.mubr.f32.mxu0 0.0
    %5142 = vmatmul.mubr.f32.gmra.mrb[0].mxu0 %v5075
    %v5143 = vpop.f32.mrb[0].mxu0
    %v5144 = vadd.f32 0.0, %v5143
    %v5145 = vpop.f32.mrb[0].mxu0
    %5146 = vdwg.mxu0
    %5147 = vmatprep.subr.mxu0 0.0
    %5148 = vmatpush1.msra.mxu0 %v4898
    %5149 = vmatprep.subr.mxu0 0.0
    %5150 = vmatpush1.msra.mxu0 %v4899
    %5151 = vmatprep.subr.mxu0 0.0
    %5152 = vmatpush1.msra.mxu0 %v4900
    %5153 = vmatprep.subr.mxu0 0.0
    %5154 = vmatpush1.msra.mxu0 %v4901
    %5155 = vmatprep.subr.mxu0 0.0
    %5156 = vmatpush1.msra.mxu0 %v4902
    %5157 = vmatprep.subr.mxu0 0.0
    %5158 = vmatpush1.msra.mxu0 %v4903
    %5159 = vmatprep.subr.mxu0 0.0
    %5160 = vmatpush1.msra.mxu0 %v4904
    %5161 = vmatprep.subr.mxu0 0.0
    %5162 = vmatpush1.msra.mxu0 %v4905
    %5163 = vmatprep.subr.mxu0 0.0
    %5164 = vmatpush1.msra.mxu0 %v4906
    %5165 = vmatprep.subr.mxu0 0.0
    %5166 = vmatpush1.msra.mxu0 %v4907
    %5167 = vmatprep.subr.mxu0 0.0
    %5168 = vmatpush1.msra.mxu0 %v4908
    %5169 = vmatprep.subr.mxu0 0.0
    %5170 = vmatpush1.msra.mxu0 %v4909
    %5171 = vmatprep.subr.mxu0 0.0
    %5172 = vmatpush1.msra.mxu0 %v4910
    %5173 = vmatprep.subr.mxu0 0.0
    %5174 = vmatpush1.msra.mxu0 %v4911
    %5175 = vmatprep.subr.mxu0 0.0
    %5176 = vmatpush1.msra.mxu0 %v4912
    %5177 = vmatprep.subr.mxu0 0.0
    %5178 = vmatpush1.msra.mxu0 %v4913
    %5179 = vmatprep.subr.mxu0 0.0
    %5180 = vmatpush1.msra.mxu0 0.0
    %5181 = vmatprep.subr.mxu0 0.0
    %5182 = vmatpush1.msra.mxu0 0.0
    %5183 = vmatprep.subr.mxu0 0.0
    %5184 = vmatpush1.msra.mxu0 0.0
    %5185 = vmatprep.subr.mxu0 0.0
    %5186 = vmatpush1.msra.mxu0 0.0
    %5187 = vmatprep.subr.mxu0 0.0
    %5188 = vmatpush1.msra.mxu0 0.0
    %5189 = vmatprep.subr.mxu0 0.0
    %5190 = vmatpush1.msra.mxu0 0.0
    %5191 = vmatprep.subr.mxu0 0.0
    %5192 = vmatpush1.msra.mxu0 0.0
    %5193 = vmatprep.subr.mxu0 0.0
    %5194 = vmatpush1.msra.mxu0 0.0
    %5195 = vmatprep.subr.mxu0 0.0
    %5196 = vmatpush1.msra.mxu0 0.0
    %5197 = vmatprep.subr.mxu0 0.0
    %5198 = vmatpush1.msra.mxu0 0.0
    %5199 = vmatprep.subr.mxu0 0.0
    %5200 = vmatpush1.msra.mxu0 0.0
    %5201 = vmatprep.subr.mxu0 0.0
    %5202 = vmatpush1.msra.mxu0 0.0
    %5203 = vmatprep.subr.mxu0 0.0
    %5204 = vmatpush1.msra.mxu0 0.0
    %5205 = vmatprep.subr.mxu0 0.0
    %5206 = vmatpush1.msra.mxu0 0.0
    %5207 = vmatprep.subr.mxu0 0.0
    %5208 = vmatpush1.msra.mxu0 0.0
    %5209 = vmatprep.subr.mxu0 0.0
    %5210 = vmatpush1.msra.mxu0 0.0
    %5211 = vmatprep.mubr.f32.mxu0 0.0
    %5212 = vmatmul.mubr.f32.gmra.mrb[0].mxu0 %v5144
    %v5213 = vpop.f32.mrb[0].mxu0
    %v5214 = vadd.f32 0.0, %v5213
    %v5215 = vpop.f32.mrb[0].mxu0
    %5216 = vdwg.mxu0
    %v5217 = vadd.f32 %v4984, %v5214
    %vm5218 = vcmp.ge.s32.totalorder %v4726, 64
    %vm5219 = vcmp.lt.s32.totalorder %v4726, 96
    %vm5220 = vmand %vm5218, %vm5219
    %v5221 = vsel %vm5220, 1, 0
    %v5222 = vcvt.s32.f32 %v5221
    %v5223 = vmul.f32 %v4651, %v5222
    %5224 = vmatprep.subr.mxu0 0.0
    %5225 = vmatpush1.xpose.msra.mxu0 %v4653
    %5226 = vmatprep.subr.mxu0 0.0
    %5227 = vmatpush1.xpose.msra.mxu0 0.0
    %5228 = vmatprep.subr.mxu0 0.0
    %5229 = vmatpush1.xpose.msra.mxu0 0.0
    %5230 = vmatprep.subr.mxu0 0.0
    %5231 = vmatpush1.xpose.msra.mxu0 0.0
    %5232 = vmatprep.subr.mxu0 0.0
    %5233 = vmatpush1.xpose.msra.mxu0 0.0
    %5234 = vmatprep.subr.mxu0 0.0
    %5235 = vmatpush1.xpose.msra.mxu0 0.0
    %5236 = vmatprep.subr.mxu0 0.0
    %5237 = vmatpush1.xpose.msra.mxu0 0.0
    %5238 = vmatprep.subr.mxu0 0.0
    %5239 = vmatpush1.xpose.msra.mxu0 0.0
    %5240 = vmatprep.subr.mxu0 0.0
    %5241 = vmatpush1.xpose.msra.mxu0 0.0
    %5242 = vmatprep.subr.mxu0 0.0
    %5243 = vmatpush1.xpose.msra.mxu0 0.0
    %5244 = vmatprep.subr.mxu0 0.0
    %5245 = vmatpush1.xpose.msra.mxu0 0.0
    %5246 = vmatprep.subr.mxu0 0.0
    %5247 = vmatpush1.xpose.msra.mxu0 0.0
    %5248 = vmatprep.subr.mxu0 0.0
    %5249 = vmatpush1.xpose.msra.mxu0 0.0
    %5250 = vmatprep.subr.mxu0 0.0
    %5251 = vmatpush1.xpose.msra.mxu0 0.0
    %5252 = vmatprep.subr.mxu0 0.0
    %5253 = vmatpush1.xpose.msra.mxu0 0.0
    %5254 = vmatprep.subr.mxu0 0.0
    %5255 = vmatpush1.xpose.msra.mxu0 0.0
    %5256 = vmatprep.subr.mxu0 0.0
    %5257 = vmatpush1.xpose.msra.mxu0 0.0
    %5258 = vmatprep.subr.mxu0 0.0
    %5259 = vmatpush1.xpose.msra.mxu0 0.0
    %5260 = vmatprep.subr.mxu0 0.0
    %5261 = vmatpush1.xpose.msra.mxu0 0.0
    %5262 = vmatprep.subr.mxu0 0.0
    %5263 = vmatpush1.xpose.msra.mxu0 0.0
    %5264 = vmatprep.subr.mxu0 0.0
    %5265 = vmatpush1.xpose.msra.mxu0 0.0
    %5266 = vmatprep.subr.mxu0 0.0
    %5267 = vmatpush1.xpose.msra.mxu0 0.0
    %5268 = vmatprep.subr.mxu0 0.0
    %5269 = vmatpush1.xpose.msra.mxu0 0.0
    %5270 = vmatprep.subr.mxu0 0.0
    %5271 = vmatpush1.xpose.msra.mxu0 0.0
    %5272 = vmatprep.subr.mxu0 0.0
    %5273 = vmatpush1.xpose.msra.mxu0 0.0
    %5274 = vmatprep.subr.mxu0 0.0
    %5275 = vmatpush1.xpose.msra.mxu0 0.0
    %5276 = vmatprep.subr.mxu0 0.0
    %5277 = vmatpush1.xpose.msra.mxu0 0.0
    %5278 = vmatprep.subr.mxu0 0.0
    %5279 = vmatpush1.xpose.msra.mxu0 0.0
    %5280 = vmatprep.subr.mxu0 0.0
    %5281 = vmatpush1.xpose.msra.mxu0 0.0
    %5282 = vmatprep.subr.mxu0 0.0
    %5283 = vmatpush1.xpose.msra.mxu0 0.0
    %5284 = vmatprep.subr.mxu0 0.0
    %5285 = vmatpush1.xpose.msra.mxu0 0.0
    %5286 = vmatprep.subr.mxu0 0.0
    %5287 = vmatpush1.xpose.msra.mxu0 0.0
    %5288 = vmatprep.mubr.f32.mxu0 0.0
    %5289 = vmatmul.mubr.f32.gmra.mrb[0].mxu0 %v5223
    %v5290 = vpop.f32.mrb[0].mxu0
    %v5291 = vadd.f32 0.0, %v5290
    %v5292 = vpop.f32.mrb[0].mxu0
    %5293 = vdwg.mxu0
    %v5294 = vsel %vm4727, %v5291, -1e+30
    %v5295 = vsel %vm4812, %v5294, -inf
    %5296 = vmax.xlane.f32.xlu0 %v5295
    %v5297 = vpop.xlane.xlu0 %5296
    %v5298 = vsub.f32 %v5294, %v5297
    %v5299 = vmul.f32 %v5298, 1.442695
    %v5300 = vpow.pop %v5299
    %v5301 = vsel %vm4812, %v5300, 0.0
    %5302 = vadd.xlane.f32.xlu0 %v5301
    %v5303 = vpop.xlane.xlu0 %5302
    %v5304 = vrcp.pop %v5303
    %v5305 = vmul.f32 %v5300, %v5304
    %v5306 = vmul.f32 %v4722, %v5222
    %v5308 = vsel %vm4812, %v5305, 0
    %5310 = vmatprep.subr.mxu0 0.0
    %5311 = vmatpush1.msra.mxu0 %v5306
    %5312 = vmatprep.subr.mxu0 0.0
    %5313 = vmatpush1.msra.mxu0 0.0
    %5314 = vmatprep.subr.mxu0 0.0
    %5315 = vmatpush1.msra.mxu0 0.0
    %5316 = vmatprep.subr.mxu0 0.0
    %5317 = vmatpush1.msra.mxu0 0.0
    %5318 = vmatprep.subr.mxu0 0.0
    %5319 = vmatpush1.msra.mxu0 0.0
    %5320 = vmatprep.subr.mxu0 0.0
    %5321 = vmatpush1.msra.mxu0 0.0
    %5322 = vmatprep.subr.mxu0 0.0
    %5323 = vmatpush1.msra.mxu0 0.0
    %5324 = vmatprep.subr.mxu0 0.0
    %5325 = vmatpush1.msra.mxu0 0.0
    %5326 = vmatprep.subr.mxu0 0.0
    %5327 = vmatpush1.msra.mxu0 0.0
    %5328 = vmatprep.subr.mxu0 0.0
    %5329 = vmatpush1.msra.mxu0 0.0
    %5330 = vmatprep.subr.mxu0 0.0
    %5331 = vmatpush1.msra.mxu0 0.0
    %5332 = vmatprep.subr.mxu0 0.0
    %5333 = vmatpush1.msra.mxu0 0.0
    %5334 = vmatprep.subr.mxu0 0.0
    %5335 = vmatpush1.msra.mxu0 0.0
    %5336 = vmatprep.subr.mxu0 0.0
    %5337 = vmatpush1.msra.mxu0 0.0
    %5338 = vmatprep.subr.mxu0 0.0
    %5339 = vmatpush1.msra.mxu0 0.0
    %5340 = vmatprep.subr.mxu0 0.0
    %5341 = vmatpush1.msra.mxu0 0.0
    %5342 = vmatprep.subr.mxu0 0.0
    %5343 = vmatpush1.msra.mxu0 0.0
    %5344 = vmatprep.subr.mxu0 0.0
    %5345 = vmatpush1.msra.mxu0 0.0
    %5346 = vmatprep.subr.mxu0 0.0
    %5347 = vmatpush1.msra.mxu0 0.0
    %5348 = vmatprep.subr.mxu0 0.0
    %5349 = vmatpush1.msra.mxu0 0.0
    %5350 = vmatprep.subr.mxu0 0.0
    %5351 = vmatpush1.msra.mxu0 0.0
    %5352 = vmatprep.subr.mxu0 0.0
    %5353 = vmatpush1.msra.mxu0 0.0
    %5354 = vmatprep.subr.mxu0 0.0
    %5355 = vmatpush1.msra.mxu0 0.0
    %5356 = vmatprep.subr.mxu0 0.0
    %5357 = vmatpush1.msra.mxu0 0.0
    %5358 = vmatprep.subr.mxu0 0.0
    %5359 = vmatpush1.msra.mxu0 0.0
    %5360 = vmatprep.subr.mxu0 0.0
    %5361 = vmatpush1.msra.mxu0 0.0
    %5362 = vmatprep.subr.mxu0 0.0
    %5363 = vmatpush1.msra.mxu0 0.0
    %5364 = vmatprep.subr.mxu0 0.0
    %5365 = vmatpush1.msra.mxu0 0.0
    %5366 = vmatprep.subr.mxu0 0.0
    %5367 = vmatpush1.msra.mxu0 0.0
    %5368 = vmatprep.subr.mxu0 0.0
    %5369 = vmatpush1.msra.mxu0 0.0
    %5370 = vmatprep.subr.mxu0 0.0
    %5371 = vmatpush1.msra.mxu0 0.0
    %5372 = vmatprep.subr.mxu0 0.0
    %5373 = vmatpush1.msra.mxu0 0.0
    %5374 = vmatprep.mubr.f32.mxu0 0.0
    %5375 = vmatmul.mubr.f32.gmra.mrb[0].mxu0 %v5308
    %v5376 = vpop.f32.mrb[0].mxu0
    %v5377 = vadd.f32 0.0, %v5376
    %v5378 = vpop.f32.mrb[0].mxu0
    %5379 = vdwg.mxu0
    %5380 = vmatprep.subr.mxu0 0.0
    %5381 = vmatpush1.msra.mxu0 %v4898
    %5382 = vmatprep.subr.mxu0 0.0
    %5383 = vmatpush1.msra.mxu0 %v4899
    %5384 = vmatprep.subr.mxu0 0.0
    %5385 = vmatpush1.msra.mxu0 %v4900
    %5386 = vmatprep.subr.mxu0 0.0
    %5387 = vmatpush1.msra.mxu0 %v4901
    %5388 = vmatprep.subr.mxu0 0.0
    %5389 = vmatpush1.msra.mxu0 %v4902
    %5390 = vmatprep.subr.mxu0 0.0
    %5391 = vmatpush1.msra.mxu0 %v4903
    %5392 = vmatprep.subr.mxu0 0.0
    %5393 = vmatpush1.msra.mxu0 %v4904
    %5394 = vmatprep.subr.mxu0 0.0
    %5395 = vmatpush1.msra.mxu0 %v4905
    %5396 = vmatprep.subr.mxu0 0.0
    %5397 = vmatpush1.msra.mxu0 %v4906
    %5398 = vmatprep.subr.mxu0 0.0
    %5399 = vmatpush1.msra.mxu0 %v4907
    %5400 = vmatprep.subr.mxu0 0.0
    %5401 = vmatpush1.msra.mxu0 %v4908
    %5402 = vmatprep.subr.mxu0 0.0
    %5403 = vmatpush1.msra.mxu0 %v4909
    %5404 = vmatprep.subr.mxu0 0.0
    %5405 = vmatpush1.msra.mxu0 %v4910
    %5406 = vmatprep.subr.mxu0 0.0
    %5407 = vmatpush1.msra.mxu0 %v4911
    %5408 = vmatprep.subr.mxu0 0.0
    %5409 = vmatpush1.msra.mxu0 %v4912
    %5410 = vmatprep.subr.mxu0 0.0
    %5411 = vmatpush1.msra.mxu0 %v4913
    %5412 = vmatprep.subr.mxu0 0.0
    %5413 = vmatpush1.msra.mxu0 0.0
    %5414 = vmatprep.subr.mxu0 0.0
    %5415 = vmatpush1.msra.mxu0 0.0
    %5416 = vmatprep.subr.mxu0 0.0
    %5417 = vmatpush1.msra.mxu0 0.0
    %5418 = vmatprep.subr.mxu0 0.0
    %5419 = vmatpush1.msra.mxu0 0.0
    %5420 = vmatprep.subr.mxu0 0.0
    %5421 = vmatpush1.msra.mxu0 0.0
    %5422 = vmatprep.subr.mxu0 0.0
    %5423 = vmatpush1.msra.mxu0 0.0
    %5424 = vmatprep.subr.mxu0 0.0
    %5425 = vmatpush1.msra.mxu0 0.0
    %5426 = vmatprep.subr.mxu0 0.0
    %5427 = vmatpush1.msra.mxu0 0.0
    %5428 = vmatprep.subr.mxu0 0.0
    %5429 = vmatpush1.msra.mxu0 0.0
    %5430 = vmatprep.subr.mxu0 0.0
    %5431 = vmatpush1.msra.mxu0 0.0
    %5432 = vmatprep.subr.mxu0 0.0
    %5433 = vmatpush1.msra.mxu0 0.0
    %5434 = vmatprep.subr.mxu0 0.0
    %5435 = vmatpush1.msra.mxu0 0.0
    %5436 = vmatprep.subr.mxu0 0.0
    %5437 = vmatpush1.msra.mxu0 0.0
    %5438 = vmatprep.subr.mxu0 0.0
    %5439 = vmatpush1.msra.mxu0 0.0
    %5440 = vmatprep.subr.mxu0 0.0
    %5441 = vmatpush1.msra.mxu0 0.0
    %5442 = vmatprep.subr.mxu0 0.0
    %5443 = vmatpush1.msra.mxu0 0.0
    %5444 = vmatprep.mubr.f32.mxu0 0.0
    %5445 = vmatmul.mubr.f32.gmra.mrb[0].mxu0 %v5377
    %v5446 = vpop.f32.mrb[0].mxu0
    %v5447 = vadd.f32 0.0, %v5446
    %v5448 = vpop.f32.mrb[0].mxu0
    %5449 = vdwg.mxu0
    %v5450 = vadd.f32 %v5217, %v5447
    %vm5451 = vcmp.ge.s32.totalorder %v4726, 96
    %vm5452 = vcmp.lt.s32.totalorder %v4726, 128
    %vm5453 = vmand %vm5451, %vm5452
    %v5454 = vsel %vm5453, 1, 0
    %v5455 = vcvt.s32.f32 %v5454
    %v5456 = vmul.f32 %v4651, %v5455
    %5457 = vmatprep.subr.mxu0 0.0
    %5458 = vmatpush1.xpose.msra.mxu0 %v4653
    %5459 = vmatprep.subr.mxu0 0.0
    %5460 = vmatpush1.xpose.msra.mxu0 0.0
    %5461 = vmatprep.subr.mxu0 0.0
    %5462 = vmatpush1.xpose.msra.mxu0 0.0
    %5463 = vmatprep.subr.mxu0 0.0
    %5464 = vmatpush1.xpose.msra.mxu0 0.0
    %5465 = vmatprep.subr.mxu0 0.0
    %5466 = vmatpush1.xpose.msra.mxu0 0.0
    %5467 = vmatprep.subr.mxu0 0.0
    %5468 = vmatpush1.xpose.msra.mxu0 0.0
    %5469 = vmatprep.subr.mxu0 0.0
    %5470 = vmatpush1.xpose.msra.mxu0 0.0
    %5471 = vmatprep.subr.mxu0 0.0
    %5472 = vmatpush1.xpose.msra.mxu0 0.0
    %5473 = vmatprep.subr.mxu0 0.0
    %5474 = vmatpush1.xpose.msra.mxu0 0.0
    %5475 = vmatprep.subr.mxu0 0.0
    %5476 = vmatpush1.xpose.msra.mxu0 0.0
    %5477 = vmatprep.subr.mxu0 0.0
    %5478 = vmatpush1.xpose.msra.mxu0 0.0
    %5479 = vmatprep.subr.mxu0 0.0
    %5480 = vmatpush1.xpose.msra.mxu0 0.0
    %5481 = vmatprep.subr.mxu0 0.0
    %5482 = vmatpush1.xpose.msra.mxu0 0.0
    %5483 = vmatprep.subr.mxu0 0.0
    %5484 = vmatpush1.xpose.msra.mxu0 0.0
    %5485 = vmatprep.subr.mxu0 0.0
    %5486 = vmatpush1.xpose.msra.mxu0 0.0
    %5487 = vmatprep.subr.mxu0 0.0
    %5488 = vmatpush1.xpose.msra.mxu0 0.0
    %5489 = vmatprep.subr.mxu0 0.0
    %5490 = vmatpush1.xpose.msra.mxu0 0.0
    %5491 = vmatprep.subr.mxu0 0.0
    %5492 = vmatpush1.xpose.msra.mxu0 0.0
    %5493 = vmatprep.subr.mxu0 0.0
    %5494 = vmatpush1.xpose.msra.mxu0 0.0
    %5495 = vmatprep.subr.mxu0 0.0
    %5496 = vmatpush1.xpose.msra.mxu0 0.0
    %5497 = vmatprep.subr.mxu0 0.0
    %5498 = vmatpush1.xpose.msra.mxu0 0.0
    %5499 = vmatprep.subr.mxu0 0.0
    %5500 = vmatpush1.xpose.msra.mxu0 0.0
    %5501 = vmatprep.subr.mxu0 0.0
    %5502 = vmatpush1.xpose.msra.mxu0 0.0
    %5503 = vmatprep.subr.mxu0 0.0
    %5504 = vmatpush1.xpose.msra.mxu0 0.0
    %5505 = vmatprep.subr.mxu0 0.0
    %5506 = vmatpush1.xpose.msra.mxu0 0.0
    %5507 = vmatprep.subr.mxu0 0.0
    %5508 = vmatpush1.xpose.msra.mxu0 0.0
    %5509 = vmatprep.subr.mxu0 0.0
    %5510 = vmatpush1.xpose.msra.mxu0 0.0
    %5511 = vmatprep.subr.mxu0 0.0
    %5512 = vmatpush1.xpose.msra.mxu0 0.0
    %5513 = vmatprep.subr.mxu0 0.0
    %5514 = vmatpush1.xpose.msra.mxu0 0.0
    %5515 = vmatprep.subr.mxu0 0.0
    %5516 = vmatpush1.xpose.msra.mxu0 0.0
    %5517 = vmatprep.subr.mxu0 0.0
    %5518 = vmatpush1.xpose.msra.mxu0 0.0
    %5519 = vmatprep.subr.mxu0 0.0
    %5520 = vmatpush1.xpose.msra.mxu0 0.0
    %5521 = vmatprep.mubr.f32.mxu0 0.0
    %5522 = vmatmul.mubr.f32.gmra.mrb[0].mxu0 %v5456
    %v5523 = vpop.f32.mrb[0].mxu0
    %v5524 = vadd.f32 0.0, %v5523
    %v5525 = vpop.f32.mrb[0].mxu0
    %5526 = vdwg.mxu0
    %v5527 = vsel %vm4727, %v5524, -1e+30
    %v5528 = vsel %vm4812, %v5527, -inf
    %5529 = vmax.xlane.f32.xlu0 %v5528
    %v5530 = vpop.xlane.xlu0 %5529
    %v5531 = vsub.f32 %v5527, %v5530
    %v5532 = vmul.f32 %v5531, 1.442695
    %v5533 = vpow.pop %v5532
    %v5534 = vsel %vm4812, %v5533, 0.0
    %5535 = vadd.xlane.f32.xlu0 %v5534
    %v5536 = vpop.xlane.xlu0 %5535
    %v5537 = vrcp.pop %v5536
    %v5538 = vmul.f32 %v5533, %v5537
    %v5539 = vmul.f32 %v4722, %v5455
    %v5541 = vsel %vm4812, %v5538, 0
    %5543 = vmatprep.subr.mxu0 0.0
    %5544 = vmatpush1.msra.mxu0 %v5539
    %5545 = vmatprep.subr.mxu0 0.0
    %5546 = vmatpush1.msra.mxu0 0.0
    %5547 = vmatprep.subr.mxu0 0.0
    %5548 = vmatpush1.msra.mxu0 0.0
    %5549 = vmatprep.subr.mxu0 0.0
    %5550 = vmatpush1.msra.mxu0 0.0
    %5551 = vmatprep.subr.mxu0 0.0
    %5552 = vmatpush1.msra.mxu0 0.0
    %5553 = vmatprep.subr.mxu0 0.0
    %5554 = vmatpush1.msra.mxu0 0.0
    %5555 = vmatprep.subr.mxu0 0.0
    %5556 = vmatpush1.msra.mxu0 0.0
    %5557 = vmatprep.subr.mxu0 0.0
    %5558 = vmatpush1.msra.mxu0 0.0
    %5559 = vmatprep.subr.mxu0 0.0
    %5560 = vmatpush1.msra.mxu0 0.0
    %5561 = vmatprep.subr.mxu0 0.0
    %5562 = vmatpush1.msra.mxu0 0.0
    %5563 = vmatprep.subr.mxu0 0.0
    %5564 = vmatpush1.msra.mxu0 0.0
    %5565 = vmatprep.subr.mxu0 0.0
    %5566 = vmatpush1.msra.mxu0 0.0
    %5567 = vmatprep.subr.mxu0 0.0
    %5568 = vmatpush1.msra.mxu0 0.0
    %5569 = vmatprep.subr.mxu0 0.0
    %5570 = vmatpush1.msra.mxu0 0.0
    %5571 = vmatprep.subr.mxu0 0.0
    %5572 = vmatpush1.msra.mxu0 0.0
    %5573 = vmatprep.subr.mxu0 0.0
    %5574 = vmatpush1.msra.mxu0 0.0
    %5575 = vmatprep.subr.mxu0 0.0
    %5576 = vmatpush1.msra.mxu0 0.0
    %5577 = vmatprep.subr.mxu0 0.0
    %5578 = vmatpush1.msra.mxu0 0.0
    %5579 = vmatprep.subr.mxu0 0.0
    %5580 = vmatpush1.msra.mxu0 0.0
    %5581 = vmatprep.subr.mxu0 0.0
    %5582 = vmatpush1.msra.mxu0 0.0
    %5583 = vmatprep.subr.mxu0 0.0
    %5584 = vmatpush1.msra.mxu0 0.0
    %5585 = vmatprep.subr.mxu0 0.0
    %5586 = vmatpush1.msra.mxu0 0.0
    %5587 = vmatprep.subr.mxu0 0.0
    %5588 = vmatpush1.msra.mxu0 0.0
    %5589 = vmatprep.subr.mxu0 0.0
    %5590 = vmatpush1.msra.mxu0 0.0
    %5591 = vmatprep.subr.mxu0 0.0
    %5592 = vmatpush1.msra.mxu0 0.0
    %5593 = vmatprep.subr.mxu0 0.0
    %5594 = vmatpush1.msra.mxu0 0.0
    %5595 = vmatprep.subr.mxu0 0.0
    %5596 = vmatpush1.msra.mxu0 0.0
    %5597 = vmatprep.subr.mxu0 0.0
    %5598 = vmatpush1.msra.mxu0 0.0
    %5599 = vmatprep.subr.mxu0 0.0
    %5600 = vmatpush1.msra.mxu0 0.0
    %5601 = vmatprep.subr.mxu0 0.0
    %5602 = vmatpush1.msra.mxu0 0.0
    %5603 = vmatprep.subr.mxu0 0.0
    %5604 = vmatpush1.msra.mxu0 0.0
    %5605 = vmatprep.subr.mxu0 0.0
    %5606 = vmatpush1.msra.mxu0 0.0
    %5607 = vmatprep.mubr.f32.mxu0 0.0
    %5608 = vmatmul.mubr.f32.gmra.mrb[0].mxu0 %v5541
    %v5609 = vpop.f32.mrb[0].mxu0
    %v5610 = vadd.f32 0.0, %v5609
    %v5611 = vpop.f32.mrb[0].mxu0
    %5612 = vdwg.mxu0
    %5613 = vmatprep.subr.mxu0 0.0
    %5614 = vmatpush1.msra.mxu0 %v4898
    %5615 = vmatprep.subr.mxu0 0.0
    %5616 = vmatpush1.msra.mxu0 %v4899
    %5617 = vmatprep.subr.mxu0 0.0
    %5618 = vmatpush1.msra.mxu0 %v4900
    %5619 = vmatprep.subr.mxu0 0.0
    %5620 = vmatpush1.msra.mxu0 %v4901
    %5621 = vmatprep.subr.mxu0 0.0
    %5622 = vmatpush1.msra.mxu0 %v4902
    %5623 = vmatprep.subr.mxu0 0.0
    %5624 = vmatpush1.msra.mxu0 %v4903
    %5625 = vmatprep.subr.mxu0 0.0
    %5626 = vmatpush1.msra.mxu0 %v4904
    %5627 = vmatprep.subr.mxu0 0.0
    %5628 = vmatpush1.msra.mxu0 %v4905
    %5629 = vmatprep.subr.mxu0 0.0
    %5630 = vmatpush1.msra.mxu0 %v4906
    %5631 = vmatprep.subr.mxu0 0.0
    %5632 = vmatpush1.msra.mxu0 %v4907
    %5633 = vmatprep.subr.mxu0 0.0
    %5634 = vmatpush1.msra.mxu0 %v4908
    %5635 = vmatprep.subr.mxu0 0.0
    %5636 = vmatpush1.msra.mxu0 %v4909
    %5637 = vmatprep.subr.mxu0 0.0
    %5638 = vmatpush1.msra.mxu0 %v4910
    %5639 = vmatprep.subr.mxu0 0.0
    %5640 = vmatpush1.msra.mxu0 %v4911
    %5641 = vmatprep.subr.mxu0 0.0
    %5642 = vmatpush1.msra.mxu0 %v4912
    %5643 = vmatprep.subr.mxu0 0.0
    %5644 = vmatpush1.msra.mxu0 %v4913
    %5645 = vmatprep.subr.mxu0 0.0
    %5646 = vmatpush1.msra.mxu0 0.0
    %5647 = vmatprep.subr.mxu0 0.0
    %5648 = vmatpush1.msra.mxu0 0.0
    %5649 = vmatprep.subr.mxu0 0.0
    %5650 = vmatpush1.msra.mxu0 0.0
    %5651 = vmatprep.subr.mxu0 0.0
    %5652 = vmatpush1.msra.mxu0 0.0
    %5653 = vmatprep.subr.mxu0 0.0
    %5654 = vmatpush1.msra.mxu0 0.0
    %5655 = vmatprep.subr.mxu0 0.0
    %5656 = vmatpush1.msra.mxu0 0.0
    %5657 = vmatprep.subr.mxu0 0.0
    %5658 = vmatpush1.msra.mxu0 0.0
    %5659 = vmatprep.subr.mxu0 0.0
    %5660 = vmatpush1.msra.mxu0 0.0
    %5661 = vmatprep.subr.mxu0 0.0
    %5662 = vmatpush1.msra.mxu0 0.0
    %5663 = vmatprep.subr.mxu0 0.0
    %5664 = vmatpush1.msra.mxu0 0.0
    %5665 = vmatprep.subr.mxu0 0.0
    %5666 = vmatpush1.msra.mxu0 0.0
    %5667 = vmatprep.subr.mxu0 0.0
    %5668 = vmatpush1.msra.mxu0 0.0
    %5669 = vmatprep.subr.mxu0 0.0
    %5670 = vmatpush1.msra.mxu0 0.0
    %5671 = vmatprep.subr.mxu0 0.0
    %5672 = vmatpush1.msra.mxu0 0.0
    %5673 = vmatprep.subr.mxu0 0.0
    %5674 = vmatpush1.msra.mxu0 0.0
    %5675 = vmatprep.subr.mxu0 0.0
    %5676 = vmatpush1.msra.mxu0 0.0
    %5677 = vmatprep.mubr.f32.mxu0 0.0
    %5678 = vmatmul.mubr.f32.gmra.mrb[0].mxu0 %v5610
    %v5679 = vpop.f32.mrb[0].mxu0
    %v5680 = vadd.f32 0.0, %v5679
    %v5681 = vpop.f32.mrb[0].mxu0
    %5682 = vdwg.mxu0
    %v5683 = vadd.f32 %v5450, %v5680
    %v5684 = vld [vmem:[#allocation18] sm:$0xff]
    %v5685 = vld [vmem:[#allocation18 + $0x8] sm:$0xff]
    %v5686 = vld [vmem:[#allocation18 + $0x10] sm:$0xff]
    %v5687 = vld [vmem:[#allocation18 + $0x18] sm:$0xff]
    %v5688 = vld [vmem:[#allocation18 + $0x20] sm:$0xff]
    %v5689 = vld [vmem:[#allocation18 + $0x28] sm:$0xff]
    %v5690 = vld [vmem:[#allocation18 + $0x30] sm:$0xff]
    %v5691 = vld [vmem:[#allocation18 + $0x38] sm:$0xff]
    %v5692 = vld [vmem:[#allocation18 + $0x40] sm:$0xff]
    %v5693 = vld [vmem:[#allocation18 + $0x48] sm:$0xff]
    %v5694 = vld [vmem:[#allocation18 + $0x50] sm:$0xff]
    %v5695 = vld [vmem:[#allocation18 + $0x58] sm:$0xff]
    %v5696 = vld [vmem:[#allocation18 + $0x60] sm:$0xff]
    %v5697 = vld [vmem:[#allocation18 + $0x68] sm:$0xff]
    %v5698 = vld [vmem:[#allocation18 + $0x70] sm:$0xff]
    %v5699 = vld [vmem:[#allocation18 + $0x78] sm:$0xff]
    %v5700 = vld [vmem:[#allocation20] sm:$0x1]
    %v5702 = vlaneseq
    %v5703 = vshrl.u32 %v5702, 7
    %v5704 = vsub.s32 0, %v5703
    %v5705 = vrot.slane %v5700, %v5704
    %5707 = vmatprep.subr.mxu0 0.0
    %5708 = vmatpush1.msra.mxu0 %v5684
    %5709 = vmatprep.subr.mxu0 0.0
    %5710 = vmatpush1.msra.mxu0 %v5685
    %5711 = vmatprep.subr.mxu0 0.0
    %5712 = vmatpush1.msra.mxu0 %v5686
    %5713 = vmatprep.subr.mxu0 0.0
    %5714 = vmatpush1.msra.mxu0 %v5687
    %5715 = vmatprep.subr.mxu0 0.0
    %5716 = vmatpush1.msra.mxu0 %v5688
    %5717 = vmatprep.subr.mxu0 0.0
    %5718 = vmatpush1.msra.mxu0 %v5689
    %5719 = vmatprep.subr.mxu0 0.0
    %5720 = vmatpush1.msra.mxu0 %v5690
    %5721 = vmatprep.subr.mxu0 0.0
    %5722 = vmatpush1.msra.mxu0 %v5691
    %5723 = vmatprep.subr.mxu0 0.0
    %5724 = vmatpush1.msra.mxu0 %v5692
    %5725 = vmatprep.subr.mxu0 0.0
    %5726 = vmatpush1.msra.mxu0 %v5693
    %5727 = vmatprep.subr.mxu0 0.0
    %5728 = vmatpush1.msra.mxu0 %v5694
    %5729 = vmatprep.subr.mxu0 0.0
    %5730 = vmatpush1.msra.mxu0 %v5695
    %5731 = vmatprep.subr.mxu0 0.0
    %5732 = vmatpush1.msra.mxu0 %v5696
    %5733 = vmatprep.subr.mxu0 0.0
    %5734 = vmatpush1.msra.mxu0 %v5697
    %5735 = vmatprep.subr.mxu0 0.0
    %5736 = vmatpush1.msra.mxu0 %v5698
    %5737 = vmatprep.subr.mxu0 0.0
    %5738 = vmatpush1.msra.mxu0 %v5699
    %5739 = vmatprep.subr.mxu0 0.0
    %5740 = vmatpush1.msra.mxu0 0.0
    %5741 = vmatprep.subr.mxu0 0.0
    %5742 = vmatpush1.msra.mxu0 0.0
    %5743 = vmatprep.subr.mxu0 0.0
    %5744 = vmatpush1.msra.mxu0 0.0
    %5745 = vmatprep.subr.mxu0 0.0
    %5746 = vmatpush1.msra.mxu0 0.0
    %5747 = vmatprep.subr.mxu0 0.0
    %5748 = vmatpush1.msra.mxu0 0.0
    %5749 = vmatprep.subr.mxu0 0.0
    %5750 = vmatpush1.msra.mxu0 0.0
    %5751 = vmatprep.subr.mxu0 0.0
    %5752 = vmatpush1.msra.mxu0 0.0
    %5753 = vmatprep.subr.mxu0 0.0
    %5754 = vmatpush1.msra.mxu0 0.0
    %5755 = vmatprep.subr.mxu0 0.0
    %5756 = vmatpush1.msra.mxu0 0.0
    %5757 = vmatprep.subr.mxu0 0.0
    %5758 = vmatpush1.msra.mxu0 0.0
    %5759 = vmatprep.subr.mxu0 0.0
    %5760 = vmatpush1.msra.mxu0 0.0
    %5761 = vmatprep.subr.mxu0 0.0
    %5762 = vmatpush1.msra.mxu0 0.0
    %5763 = vmatprep.subr.mxu0 0.0
    %5764 = vmatpush1.msra.mxu0 0.0
    %5765 = vmatprep.subr.mxu0 0.0
    %5766 = vmatpush1.msra.mxu0 0.0
    %5767 = vmatprep.subr.mxu0 0.0
    %5768 = vmatpush1.msra.mxu0 0.0
    %5769 = vmatprep.subr.mxu0 0.0
    %5770 = vmatpush1.msra.mxu0 0.0
    %5771 = vmatprep.mubr.f32.mxu0 0.0
    %5772 = vmatmul.mubr.f32.gmra.mrb[0].mxu0 %v5683
    %v5773 = vpop.f32.mrb[0].mxu0
    %v5774 = vadd.f32 %v5705, %v5773
    %v5775 = vpop.f32.mrb[0].mxu0
    %5776 = vdwg.mxu0
    %v5777 = vmax.f32 %v5774, 0.0
    %v5778 = vld [vmem:[%s13] sm:$0xff]
    %v5779 = vld [vmem:[%s13 + $0x8] sm:$0xff]
    %v5780 = vld [vmem:[%s13 + $0x10] sm:$0xff]
    %v5781 = vld [vmem:[%s13 + $0x18] sm:$0xff]
    %v5782 = vld [vmem:[%s13 + $0x20] sm:$0xff]
    %v5783 = vld [vmem:[%s13 + $0x28] sm:$0xff]
    %v5784 = vld [vmem:[%s13 + $0x30] sm:$0xff]
    %v5785 = vld [vmem:[%s13 + $0x38] sm:$0xff]
    %v5786 = vld [vmem:[%s13 + $0x40] sm:$0xff]
    %v5787 = vld [vmem:[%s13 + $0x48] sm:$0xff]
    %v5788 = vld [vmem:[%s13 + $0x50] sm:$0xff]
    %v5789 = vld [vmem:[%s13 + $0x58] sm:$0xff]
    %v5790 = vld [vmem:[%s13 + $0x60] sm:$0xff]
    %v5791 = vld [vmem:[%s13 + $0x68] sm:$0xff]
    %v5792 = vld [vmem:[%s13 + $0x70] sm:$0xff]
    %v5793 = vld [vmem:[%s13 + $0x78] sm:$0xff]
    %v5794 = vld [vmem:[%s14] sm:$0x1]
    %v5796 = vlaneseq
    %v5797 = vshrl.u32 %v5796, 7
    %v5798 = vsub.s32 0, %v5797
    %v5799 = vrot.slane %v5794, %v5798
    %5801 = vmatprep.subr.mxu0 0.0
    %5802 = vmatpush1.msra.mxu0 %v5778
    %5803 = vmatprep.subr.mxu0 0.0
    %5804 = vmatpush1.msra.mxu0 %v5779
    %5805 = vmatprep.subr.mxu0 0.0
    %5806 = vmatpush1.msra.mxu0 %v5780
    %5807 = vmatprep.subr.mxu0 0.0
    %5808 = vmatpush1.msra.mxu0 %v5781
    %5809 = vmatprep.subr.mxu0 0.0
    %5810 = vmatpush1.msra.mxu0 %v5782
    %5811 = vmatprep.subr.mxu0 0.0
    %5812 = vmatpush1.msra.mxu0 %v5783
    %5813 = vmatprep.subr.mxu0 0.0
    %5814 = vmatpush1.msra.mxu0 %v5784
    %5815 = vmatprep.subr.mxu0 0.0
    %5816 = vmatpush1.msra.mxu0 %v5785
    %5817 = vmatprep.subr.mxu0 0.0
    %5818 = vmatpush1.msra.mxu0 %v5786
    %5819 = vmatprep.subr.mxu0 0.0
    %5820 = vmatpush1.msra.mxu0 %v5787
    %5821 = vmatprep.subr.mxu0 0.0
    %5822 = vmatpush1.msra.mxu0 %v5788
    %5823 = vmatprep.subr.mxu0 0.0
    %5824 = vmatpush1.msra.mxu0 %v5789
    %5825 = vmatprep.subr.mxu0 0.0
    %5826 = vmatpush1.msra.mxu0 %v5790
    %5827 = vmatprep.subr.mxu0 0.0
    %5828 = vmatpush1.msra.mxu0 %v5791
    %5829 = vmatprep.subr.mxu0 0.0
    %5830 = vmatpush1.msra.mxu0 %v5792
    %5831 = vmatprep.subr.mxu0 0.0
    %5832 = vmatpush1.msra.mxu0 %v5793
    %5833 = vmatprep.subr.mxu0 0.0
    %5834 = vmatpush1.msra.mxu0 0.0
    %5835 = vmatprep.subr.mxu0 0.0
    %5836 = vmatpush1.msra.mxu0 0.0
    %5837 = vmatprep.subr.mxu0 0.0
    %5838 = vmatpush1.msra.mxu0 0.0
    %5839 = vmatprep.subr.mxu0 0.0
    %5840 = vmatpush1.msra.mxu0 0.0
    %5841 = vmatprep.subr.mxu0 0.0
    %5842 = vmatpush1.msra.mxu0 0.0
    %5843 = vmatprep.subr.mxu0 0.0
    %5844 = vmatpush1.msra.mxu0 0.0
    %5845 = vmatprep.subr.mxu0 0.0
    %5846 = vmatpush1.msra.mxu0 0.0
    %5847 = vmatprep.subr.mxu0 0.0
    %5848 = vmatpush1.msra.mxu0 0.0
    %5849 = vmatprep.subr.mxu0 0.0
    %5850 = vmatpush1.msra.mxu0 0.0
    %5851 = vmatprep.subr.mxu0 0.0
    %5852 = vmatpush1.msra.mxu0 0.0
    %5853 = vmatprep.subr.mxu0 0.0
    %5854 = vmatpush1.msra.mxu0 0.0
    %5855 = vmatprep.subr.mxu0 0.0
    %5856 = vmatpush1.msra.mxu0 0.0
    %5857 = vmatprep.subr.mxu0 0.0
    %5858 = vmatpush1.msra.mxu0 0.0
    %5859 = vmatprep.subr.mxu0 0.0
    %5860 = vmatpush1.msra.mxu0 0.0
    %5861 = vmatprep.subr.mxu0 0.0
    %5862 = vmatpush1.msra.mxu0 0.0
    %5863 = vmatprep.subr.mxu0 0.0
    %5864 = vmatpush1.msra.mxu0 0.0
    %5865 = vmatprep.mubr.f32.mxu0 0.0
    %5866 = vmatmul.mubr.f32.gmra.mrb[0].mxu0 %v5777
    %v5867 = vpop.f32.mrb[0].mxu0
    %v5868 = vadd.f32 %v5799, %v5867
    %v5869 = vpop.f32.mrb[0].mxu0
    %5870 = vdwg.mxu0
    %5871 = vst [vmem:[#allocation21] sm:$0xff] %v5868
    // Predicated region
    $region106: #{tpu_custom_call.1} parent=1 // pred_check
      _
    $region107: #{tpu_custom_call.1} parent=1 // pred_check_branch
      %5873 = sbr.rel (0) target = $region109
    $region108: #{tpu_custom_call.1} parent=1 // pred_region
      %s5875 = ssub.s32 128, 128
      %5876 = vsyncadd [#allocation5], %s5875
      %s5878 = sshll.u32 [#allocation21], 4
      %s5879 = int_to_ptr.vmem [resolvable:$true] %s5878
      %5881 = dma.vmem_to_hbm [thread:$0]  %s5879, 128, %s15, [#allocation5]
    $region109: #{tpu_custom_call.1} parent=1 // pred_fallthru
      _
    // Predicated region
    $region110: #{tpu_custom_call.1} parent=1 // pred_check
      _
    $region111: #{tpu_custom_call.1} parent=1 // pred_check_branch
      %5883 = sbr.rel (0) target = $region113
    $region112: #{tpu_custom_call.1} parent=1 // pred_region
      %5884 = dma.done [#allocation5], 128
    $region113: #{tpu_custom_call.1} parent=1 // pred_fallthru
      _
    %5885 = vsyncpa [#allocation4], 1
    %5886 = vsyncpa [#allocation7], 1
    %5887 = vsyncpa [#allocation10], 1
    %5888 = vsyncpa [#allocation13], 1
    %5889 = vsyncpa [#allocation16], 1
    %5890 = vsyncpa [#allocation19], 1
    %5891 = vsyncpa [#allocation5], 1

</llo_original>
